<compile_context>
chip_gen: v5e
topology: v5e:2x2
jax: 0.10.0
libtpu: 0.0.40
codegen_flags: <defaults>
</compile_context>

<pallas_src>
import numpy as np

import jax
import jax.numpy as jnp
from jax import lax
from jax.experimental import pallas as pl
from jax.experimental.pallas import tpu as pltpu


# -----------------------------------------------------------------------------
# Pallas kernel 1: temporal conv + spatial conv + covariance pool + BiMap
# (one grid step = one tile of `block_b` samples; batch dim carried through all
#  contractions so the MXU sees lane-dense (.., T) tiles)
# -----------------------------------------------------------------------------
def _feature_kernel(x_ref, wt_ref, ws_ref, bse_ref, wbt_ref, wb_ref, out_ref):
    # x_ref  : (Bb, C, T+K-1)  reflect-padded EEG block            (VMEM)
    # wt_ref : (Ft, K)         temporal filters                    (SMEM, scalar reads)
    # ws_ref : (Ft, S, C)      spatial filters per temporal filter (VMEM)
    # bse_ref: (S, 1)          effective spatial bias (temporal bias folded in)
    # wbt_ref: (d, S)          BiMap W^T
    # wb_ref : (S, d)          BiMap W
    # out_ref: (Bb, d, d)      W^T Cov W per sample
    Ft, K = wt_ref.shape
    Bb, C, Tp = x_ref.shape
    S = ws_ref.shape[1]
    d = wb_ref.shape[1]
    T = Tp - (K - 1)
    hp = jax.lax.Precision.HIGHEST

    x = x_ref[...]                                                # (Bb, C, Tp)

    # --- temporal conv (1,K), 'same' (padding already applied): K shifted VPU
    #     multiply-accumulates per temporal filter -> exact conv FLOPs, no im2col.
    hf = [None] * Ft                                              # Ft x (Bb, C, T)
    for k in range(K):
        xk = x[:, :, k:k + T]                                     # shifted slice in VMEM
        for f in range(Ft):
            contrib = wt_ref[f, k] * xk                           # SMEM scalar * tile
            hf[f] = contrib if hf[f] is None else hf[f] + contrib

    # --- spatial conv (C,1): contract channels on the MXU, batched over samples.
    h2 = None                                                     # (Bb, S, T)
    for f in range(Ft):
        wsf = jnp.broadcast_to(ws_ref[f][None], (Bb, S, C))
        part = jnp.einsum('bsc,bct->bst', wsf, hf[f],
                          preferred_element_type=jnp.float32)
        h2 = part if h2 is None else h2 + part
    h2 = h2 + bse_ref[...][None, :, :]                            # folded bias

    # --- CovariancePool: center over time, Cov = X0 X0^T / T
    # TODO(synk): reference CovariancePool normalization (1/T vs 1/(T-1)) unverified.
    h0 = h2 - jnp.mean(h2, axis=-1, keepdims=True)
    cov = jnp.einsum('bit,bjt->bij', h0, h0,
                     preferred_element_type=jnp.float32, precision=hp) * (1.0 / T)

    # --- BiMap: W^T Cov W, both contractions in canonical NN form (no transposes;
    #     W^T is passed pre-transposed from the wrapper).
    wbt = jnp.broadcast_to(wbt_ref[...][None], (Bb, d, S))
    wb = jnp.broadcast_to(wb_ref[...][None], (Bb, S, d))
    a = jnp.einsum('bds,bsu->bdu', wbt, cov,
                   preferred_element_type=jnp.float32, precision=hp)
    out_ref[...] = jnp.einsum('bdu,buj->bdj', a, wb,
                              preferred_element_type=jnp.float32, precision=hp)


def feature_pallas(xpad, wt, ws_t, bs_eff, w_bimap, *, block_b):
    """xpad: (B, C, T+K-1); returns (B, d, d) = W^T Cov(cnn(x)) W per sample."""
    B, C, Tp = xpad.shape
    Ft, S, _ = ws_t.shape
    d = w_bimap.shape[1]
    # NOTE: size block_b against VMEM (v7x has 64 MiB physical / ~32 MiB scoped and
    # BlockSpec double-buffers the input block); at realistic EEG sizes keep
    # block_b * C * Tp * 4B * 2 well under the scoped limit.
    bb = min(B, block_b)
    return pl.pallas_call(
        _feature_kernel,
        out_shape=jax.ShapeDtypeStruct((B, d, d), jnp.float32),
        grid_spec=pltpu.PrefetchScalarGridSpec(
            num_scalar_prefetch=0,
            grid=(pl.cdiv(B, bb),),
            in_specs=[
                pl.BlockSpec((bb, C, Tp), lambda i: (i, 0, 0)),
                pl.BlockSpec(memory_space=pltpu.MemorySpace.SMEM),  # wt: scalar reads
                pl.BlockSpec((Ft, S, C), lambda i: (0, 0, 0)),
                pl.BlockSpec((S, 1), lambda i: (0, 0)),
                pl.BlockSpec((d, S), lambda i: (0, 0)),
                pl.BlockSpec((S, d), lambda i: (0, 0)),
            ],
            out_specs=pl.BlockSpec((bb, d, d), lambda i: (i, 0, 0)),
        ),
        compiler_params=pltpu.CompilerParams(
            dimension_semantics=("parallel",)),   # batch tiles split across v7x cores
    )(xpad, wt, ws_t, bs_eff, w_bimap.T, w_bimap)


# -----------------------------------------------------------------------------
# Pallas kernel 2: final Linear classifier (batch-tiled, parallel grid axis)
# -----------------------------------------------------------------------------
def _linear_kernel(x_ref, w_ref, b_ref, o_ref):
    o_ref[...] = jnp.dot(x_ref[...], w_ref[...],
                         preferred_element_type=jnp.float32) + b_ref[...]


def linear_pallas(x, w, b, *, block_b=128):
    B, Din = x.shape
    Dout = w.shape[1]
    bb = min(B, block_b)
    return pl.pallas_call(
        _linear_kernel,
        out_shape=jax.ShapeDtypeStruct((B, Dout), jnp.float32),
        grid_spec=pltpu.PrefetchScalarGridSpec(
            num_scalar_prefetch=0,
            grid=(pl.cdiv(B, bb),),
            in_specs=[
                pl.BlockSpec((bb, Din), lambda i: (i, 0)),
                pl.BlockSpec((Din, Dout), lambda i: (0, 0)),
                pl.BlockSpec((1, Dout), lambda i: (0, 0)),
            ],
            out_specs=pl.BlockSpec((bb, Dout), lambda i: (i, 0)),
        ),
        compiler_params=pltpu.CompilerParams(dimension_semantics=("parallel",)),
    )(x, w, b)


# -----------------------------------------------------------------------------
# SPD helpers (plain JAX; eigh has no Pallas equivalent).  float32 stands in for
# the module's torch.double SPD path (no practical float64 on TPU).
# -----------------------------------------------------------------------------
def _sym_apply(X, fn):
    w, V = jnp.linalg.eigh(X)
    return jnp.einsum('...ij,...j,...kj->...ik', V, fn(w), V)


def _sym_sqrt_and_invsqrt(X):
    w, V = jnp.linalg.eigh(X)                     # one eigh for both
    sq = jnp.sqrt(w)
    Xs = jnp.einsum('...ij,...j,...kj->...ik', V, sq, V)
    Xis = jnp.einsum('...ij,...j,...kj->...ik', V, 1.0 / sq, V)
    return Xs, Xis


def _karcher_means(X, Wd, n_iter=10):
    """Weighted Karcher means, batched over domains.  X: (B,d,d); Wd: (G,B)."""
    G0 = jnp.einsum('gb,bij->gij', Wd, X)         # arithmetic-mean init
    def body(_, Gm):
        Gs, Gis = _sym_sqrt_and_invsqrt(Gm)                        # (G,d,d)
        Y = jnp.einsum('gik,bkl,glj->gbij', Gis, X, Gis)           # (G,B,d,d)
        L = _sym_apply(Y, jnp.log)
        M = jnp.einsum('gb,gbij->gij', Wd, L)
        E = _sym_apply(M, jnp.exp)
        return jnp.einsum('gik,gkl,glj->gij', Gs, E, Gs)
    return lax.fori_loop(0, n_iter, body, G0)


def spd_domain_batchnorm(X, domains, domain_ids, std, parameter_t, fm_mean,
                         eps=1e-5, karcher_iters=10):
    # TODO(synk): exact AdaMomDomainSPDBatchNorm momentum / running-stat schedule is
    # not reproduced (bn module source unavailable); this is the training-mode path
    # for eta=1.0, learn_mean=False, learn_std=True, SCALAR dispersion: per-domain
    # Karcher-mean whitening + scalar dispersion rescaling (bias = identity).
    dom = jnp.asarray(domain_ids, jnp.int32)                      # (G,)
    onehot = (domains[None, :] == dom[:, None]).astype(X.dtype)   # (G,B)
    Wd = onehot / jnp.maximum(onehot.sum(axis=1, keepdims=True), 1.0)
    Gm = _karcher_means(X, Wd, karcher_iters)                     # (G,d,d)
    if fm_mean is not None:
        # geodesic blend of provided Frechet mean with batch mean, weight parameter_t
        Fs, Fis = _sym_sqrt_and_invsqrt(fm_mean)
        Z = jnp.einsum('ik,gkl,lj->gij', Fis, Gm, Fis)
        Zp = _sym_apply(Z, lambda e: jnp.power(e, parameter_t))
        Gm = jnp.einsum('ik,gkl,lj->gij', Fs, Zp, Fs)
    _, Gis = _sym_sqrt_and_invsqrt(Gm)
    Y = jnp.einsum('gik,bkl,glj->gbij', Gis, X, Gis)              # (G,B,d,d)
    L = _sym_apply(Y, jnp.log)
    var = jnp.einsum('gb,gb->g', Wd, jnp.sum(L * L, axis=(-2, -1)))
    scale = std / jnp.sqrt(var + eps)                             # (G,)
    Xr = _sym_apply(L * scale[:, None, None, None], jnp.exp)      # (G,B,d,d)
    return jnp.einsum('gb,gbij->bij', onehot, Xr)                 # own-domain select


def logeig_vec(X, d):
    # LogEig + tril embedding: [diag, sqrt(2)*lower-off-diag], then Flatten(1)
    # TODO(synk): ordering must match the reference tangent-space vectorization.
    L = _sym_apply(X, jnp.log)
    di = np.arange(d)
    r, c = np.tril_indices(d, k=-1)
    diag = L[:, di, di]
    off = L[:, r, c] * np.float32(np.sqrt(2.0))
    return jnp.concatenate([diag, off], axis=-1)


# -----------------------------------------------------------------------------
# Full forward pass (mirrors TSMNet.forward)
# -----------------------------------------------------------------------------
def tsmnet_forward(params, inputs, domains, parameter_t, fm_mean, *, cfg):
    B, C, T = inputs.shape
    K, d = cfg['K'], cfg['d']

    # reflect 'same' padding along time (Conv2d padding='same', padding_mode='reflect')
    pad_l = (K - 1) // 2
    pad_r = K - 1 - pad_l
    xpad = jnp.pad(inputs, ((0, 0), (0, 0), (pad_l, pad_r)), mode='reflect')

    # fold temporal-conv bias through the spatial conv (exact, linear):
    # bs_eff[s] = bs[s] + sum_{f,c} ws[s,f,c] * bt[f]
    bs_eff = params['bs'] + jnp.einsum('sfc,f->s', params['ws'], params['bt'])
    ws_t = jnp.transpose(params['ws'], (1, 0, 2))                 # (Ft, S, C)

    # hot path: CNN + covariance pool + BiMap (single batched Pallas kernel)
    Cspd = feature_pallas(xpad, params['wt'], ws_t, bs_eff[:, None],
                          params['w_bimap'], block_b=cfg['block_b'])

    # ReEig (eigenvalue clamp at 1e-4)
    l = _sym_apply(Cspd, lambda e: jnp.maximum(e, 1e-4))

    # domain-adaptive SPD batchnorm (batched over domains)
    l = spd_domain_batchnorm(l, domains, cfg['domain_ids'], params['spd_std'],
                             parameter_t, fm_mean)

    # LogEig + flatten to tangent-space vector
    feats = logeig_vec(l, d).astype(jnp.float32)

    # classifier (Pallas)
    return linear_pallas(feats, params['wc_T'], params['bc_2d'])


# -----------------------------------------------------------------------------
# Deterministic parameter construction + run
# -----------------------------------------------------------------------------
if __name__ == "__main__":
    B = 8              # batch
    C = 4              # nchannels
    T = 32             # nsamples
    Ft = 4             # temporal_filters
    S = 8              # spatial_filters
    d = 4              # subspacedims
    K = 5              # temp_cnn_kernel (odd -> symmetric 'same' padding)
    ncls = 3           # nclasses
    tsdim = d * (d + 1) // 2
    block_b = 4        # samples per feature-kernel grid step (>=4 per review)

    key = jax.random.PRNGKey(0)
    kx, k1, k2, k3, k4, k5, k6 = jax.random.split(key, 7)

    # Conv2d(1, Ft, (1,K)) weights/bias
    wt = jax.random.normal(k1, (Ft, K), jnp.float32) / np.sqrt(K)
    bt = 0.1 * jax.random.normal(k2, (Ft,), jnp.float32)
    # Conv2d(Ft, S, (C,1)) weights/bias
    ws = jax.random.normal(k3, (S, Ft, C), jnp.float32) / np.sqrt(Ft * C)
    bs = 0.1 * jax.random.normal(k4, (S,), jnp.float32)
    # BiMap Stiefel parameter (orthonormal columns), (S, d)
    w_bimap, _ = jnp.linalg.qr(jax.random.normal(k5, (S, d), jnp.float32))
    # classifier Linear(tsdim, ncls)
    wc = jax.random.normal(k6, (ncls, tsdim), jnp.float32) / np.sqrt(tsdim)
    bc = jnp.zeros((ncls,), jnp.float32)

    params = dict(
        wt=wt.astype(jnp.float32),
        bt=bt.astype(jnp.float32),
        ws=ws.astype(jnp.float32),
        bs=bs.astype(jnp.float32),
        w_bimap=w_bimap.astype(jnp.float32),
        spd_std=jnp.float32(1.0),                  # learn_std=True, init 1.0
        wc_T=wc.T.astype(jnp.float32),             # (tsdim, ncls)
        bc_2d=bc[None, :].astype(jnp.float32),     # (1, ncls)
    )

    cfg = dict(K=K, d=d, domain_ids=[0, 1], block_b=block_b)

    x = jax.random.normal(kx, (B, C, T), jnp.float32)
    domains = jnp.array([0, 0, 0, 0, 1, 1, 1, 1], jnp.int32)

    fwd = jax.jit(lambda p, xx, dm: tsmnet_forward(
        p, xx, dm, parameter_t=1.0, fm_mean=None, cfg=cfg))
    logits = fwd(params, x, domains)
    logits = jax.block_until_ready(logits)
    assert logits.shape == (B, ncls) and bool(jnp.all(jnp.isfinite(logits)))
    print("KERNEL_OK")
</pallas_src>

<mosaic_0001>
module attributes {stable_mosaic.version = 11 : i64} {
  func.func @_feature_kernel(%arg0: i32, %arg1: memref<4x4x36xf32, #tpu.memory_space<vmem>>, %arg2: memref<4x5xf32, #tpu.memory_space<smem>>, %arg3: memref<4x8x4xf32, #tpu.memory_space<vmem>>, %arg4: memref<8x1xf32, #tpu.memory_space<vmem>>, %arg5: memref<4x8xf32, #tpu.memory_space<vmem>>, %arg6: memref<8x4xf32, #tpu.memory_space<vmem>>, %arg7: memref<4x4x4xf32, #tpu.memory_space<vmem>>) attributes {dimension_semantics = [#tpu.dimension_semantics<parallel>], iteration_bounds = array<i64: 2>, scalar_prefetch = 0 : i64, scratch_operands = 0 : i64, tpu.core_type = #tpu.core_type<tc>, window_params = [{transform_indices = @transform_0, window_bounds = array<i64: 4, 4, 36>}, {transform_indices = @transform_1, window_bounds = array<i64: 4, 5>}, {pipeline_mode = #tpu.pipeline_mode<synchronous>, transform_indices = @transform_2, window_bounds = array<i64: 4, 8, 4>}, {pipeline_mode = #tpu.pipeline_mode<synchronous>, transform_indices = @transform_3, window_bounds = array<i64: 8, 1>}, {pipeline_mode = #tpu.pipeline_mode<synchronous>, transform_indices = @transform_4, window_bounds = array<i64: 4, 8>}, {pipeline_mode = #tpu.pipeline_mode<synchronous>, transform_indices = @transform_5, window_bounds = array<i64: 8, 4>}, {transform_indices = @transform_6, window_bounds = array<i64: 4, 4, 4>}]} {
    %c0 = arith.constant 0 : index
    %c0_0 = arith.constant 0 : index
    %c0_1 = arith.constant 0 : index
    %0 = vector.load %arg1[%c0, %c0_0, %c0_1] : memref<4x4x36xf32, #tpu.memory_space<vmem>>, vector<4x4x36xf32>
    %1 = vector.extract_strided_slice %0 {offsets = [0, 0, 0], sizes = [4, 4, 32], strides = [1, 1, 1]} : vector<4x4x36xf32> to vector<4x4x32xf32>
    %c0_2 = arith.constant 0 : index
    %c0_3 = arith.constant 0 : index
    %2 = memref.load %arg2[%c0_2, %c0_3] : memref<4x5xf32, #tpu.memory_space<smem>>
    %3 = vector.broadcast %2 : f32 to vector<4x4x32xf32>
    %4 = arith.mulf %3, %1 : vector<4x4x32xf32>
    %c1 = arith.constant 1 : index
    %c0_4 = arith.constant 0 : index
    %5 = memref.load %arg2[%c1, %c0_4] : memref<4x5xf32, #tpu.memory_space<smem>>
    %6 = vector.broadcast %5 : f32 to vector<4x4x32xf32>
    %7 = arith.mulf %6, %1 : vector<4x4x32xf32>
    %c2 = arith.constant 2 : index
    %c0_5 = arith.constant 0 : index
    %8 = memref.load %arg2[%c2, %c0_5] : memref<4x5xf32, #tpu.memory_space<smem>>
    %9 = vector.broadcast %8 : f32 to vector<4x4x32xf32>
    %10 = arith.mulf %9, %1 : vector<4x4x32xf32>
    %c3 = arith.constant 3 : index
    %c0_6 = arith.constant 0 : index
    %11 = memref.load %arg2[%c3, %c0_6] : memref<4x5xf32, #tpu.memory_space<smem>>
    %12 = vector.broadcast %11 : f32 to vector<4x4x32xf32>
    %13 = arith.mulf %12, %1 : vector<4x4x32xf32>
    %14 = vector.extract_strided_slice %0 {offsets = [0, 0, 1], sizes = [4, 4, 32], strides = [1, 1, 1]} : vector<4x4x36xf32> to vector<4x4x32xf32>
    %c0_7 = arith.constant 0 : index
    %c1_8 = arith.constant 1 : index
    %15 = memref.load %arg2[%c0_7, %c1_8] : memref<4x5xf32, #tpu.memory_space<smem>>
    %16 = vector.broadcast %15 : f32 to vector<4x4x32xf32>
    %17 = arith.mulf %16, %14 : vector<4x4x32xf32>
    %18 = arith.addf %4, %17 : vector<4x4x32xf32>
    %c1_9 = arith.constant 1 : index
    %c1_10 = arith.constant 1 : index
    %19 = memref.load %arg2[%c1_9, %c1_10] : memref<4x5xf32, #tpu.memory_space<smem>>
    %20 = vector.broadcast %19 : f32 to vector<4x4x32xf32>
    %21 = arith.mulf %20, %14 : vector<4x4x32xf32>
    %22 = arith.addf %7, %21 : vector<4x4x32xf32>
    %c2_11 = arith.constant 2 : index
    %c1_12 = arith.constant 1 : index
    %23 = memref.load %arg2[%c2_11, %c1_12] : memref<4x5xf32, #tpu.memory_space<smem>>
    %24 = vector.broadcast %23 : f32 to vector<4x4x32xf32>
    %25 = arith.mulf %24, %14 : vector<4x4x32xf32>
    %26 = arith.addf %10, %25 : vector<4x4x32xf32>
    %c3_13 = arith.constant 3 : index
    %c1_14 = arith.constant 1 : index
    %27 = memref.load %arg2[%c3_13, %c1_14] : memref<4x5xf32, #tpu.memory_space<smem>>
    %28 = vector.broadcast %27 : f32 to vector<4x4x32xf32>
    %29 = arith.mulf %28, %14 : vector<4x4x32xf32>
    %30 = arith.addf %13, %29 : vector<4x4x32xf32>
    %31 = vector.extract_strided_slice %0 {offsets = [0, 0, 2], sizes = [4, 4, 32], strides = [1, 1, 1]} : vector<4x4x36xf32> to vector<4x4x32xf32>
    %c0_15 = arith.constant 0 : index
    %c2_16 = arith.constant 2 : index
    %32 = memref.load %arg2[%c0_15, %c2_16] : memref<4x5xf32, #tpu.memory_space<smem>>
    %33 = vector.broadcast %32 : f32 to vector<4x4x32xf32>
    %34 = arith.mulf %33, %31 : vector<4x4x32xf32>
    %35 = arith.addf %18, %34 : vector<4x4x32xf32>
    %c1_17 = arith.constant 1 : index
    %c2_18 = arith.constant 2 : index
    %36 = memref.load %arg2[%c1_17, %c2_18] : memref<4x5xf32, #tpu.memory_space<smem>>
    %37 = vector.broadcast %36 : f32 to vector<4x4x32xf32>
    %38 = arith.mulf %37, %31 : vector<4x4x32xf32>
    %39 = arith.addf %22, %38 : vector<4x4x32xf32>
    %c2_19 = arith.constant 2 : index
    %c2_20 = arith.constant 2 : index
    %40 = memref.load %arg2[%c2_19, %c2_20] : memref<4x5xf32, #tpu.memory_space<smem>>
    %41 = vector.broadcast %40 : f32 to vector<4x4x32xf32>
    %42 = arith.mulf %41, %31 : vector<4x4x32xf32>
    %43 = arith.addf %26, %42 : vector<4x4x32xf32>
    %c3_21 = arith.constant 3 : index
    %c2_22 = arith.constant 2 : index
    %44 = memref.load %arg2[%c3_21, %c2_22] : memref<4x5xf32, #tpu.memory_space<smem>>
    %45 = vector.broadcast %44 : f32 to vector<4x4x32xf32>
    %46 = arith.mulf %45, %31 : vector<4x4x32xf32>
    %47 = arith.addf %30, %46 : vector<4x4x32xf32>
    %48 = vector.extract_strided_slice %0 {offsets = [0, 0, 3], sizes = [4, 4, 32], strides = [1, 1, 1]} : vector<4x4x36xf32> to vector<4x4x32xf32>
    %c0_23 = arith.constant 0 : index
    %c3_24 = arith.constant 3 : index
    %49 = memref.load %arg2[%c0_23, %c3_24] : memref<4x5xf32, #tpu.memory_space<smem>>
    %50 = vector.broadcast %49 : f32 to vector<4x4x32xf32>
    %51 = arith.mulf %50, %48 : vector<4x4x32xf32>
    %52 = arith.addf %35, %51 : vector<4x4x32xf32>
    %c1_25 = arith.constant 1 : index
    %c3_26 = arith.constant 3 : index
    %53 = memref.load %arg2[%c1_25, %c3_26] : memref<4x5xf32, #tpu.memory_space<smem>>
    %54 = vector.broadcast %53 : f32 to vector<4x4x32xf32>
    %55 = arith.mulf %54, %48 : vector<4x4x32xf32>
    %56 = arith.addf %39, %55 : vector<4x4x32xf32>
    %c2_27 = arith.constant 2 : index
    %c3_28 = arith.constant 3 : index
    %57 = memref.load %arg2[%c2_27, %c3_28] : memref<4x5xf32, #tpu.memory_space<smem>>
    %58 = vector.broadcast %57 : f32 to vector<4x4x32xf32>
    %59 = arith.mulf %58, %48 : vector<4x4x32xf32>
    %60 = arith.addf %43, %59 : vector<4x4x32xf32>
    %c3_29 = arith.constant 3 : index
    %c3_30 = arith.constant 3 : index
    %61 = memref.load %arg2[%c3_29, %c3_30] : memref<4x5xf32, #tpu.memory_space<smem>>
    %62 = vector.broadcast %61 : f32 to vector<4x4x32xf32>
    %63 = arith.mulf %62, %48 : vector<4x4x32xf32>
    %64 = arith.addf %47, %63 : vector<4x4x32xf32>
    %65 = vector.extract_strided_slice %0 {offsets = [0, 0, 4], sizes = [4, 4, 32], strides = [1, 1, 1]} : vector<4x4x36xf32> to vector<4x4x32xf32>
    %c0_31 = arith.constant 0 : index
    %c4 = arith.constant 4 : index
    %66 = memref.load %arg2[%c0_31, %c4] : memref<4x5xf32, #tpu.memory_space<smem>>
    %67 = vector.broadcast %66 : f32 to vector<4x4x32xf32>
    %68 = arith.mulf %67, %65 : vector<4x4x32xf32>
    %69 = arith.addf %52, %68 : vector<4x4x32xf32>
    %c1_32 = arith.constant 1 : index
    %c4_33 = arith.constant 4 : index
    %70 = memref.load %arg2[%c1_32, %c4_33] : memref<4x5xf32, #tpu.memory_space<smem>>
    %71 = vector.broadcast %70 : f32 to vector<4x4x32xf32>
    %72 = arith.mulf %71, %65 : vector<4x4x32xf32>
    %73 = arith.addf %56, %72 : vector<4x4x32xf32>
    %c2_34 = arith.constant 2 : index
    %c4_35 = arith.constant 4 : index
    %74 = memref.load %arg2[%c2_34, %c4_35] : memref<4x5xf32, #tpu.memory_space<smem>>
    %75 = vector.broadcast %74 : f32 to vector<4x4x32xf32>
    %76 = arith.mulf %75, %65 : vector<4x4x32xf32>
    %77 = arith.addf %60, %76 : vector<4x4x32xf32>
    %c3_36 = arith.constant 3 : index
    %c4_37 = arith.constant 4 : index
    %78 = memref.load %arg2[%c3_36, %c4_37] : memref<4x5xf32, #tpu.memory_space<smem>>
    %79 = vector.broadcast %78 : f32 to vector<4x4x32xf32>
    %80 = arith.mulf %79, %65 : vector<4x4x32xf32>
    %81 = arith.addf %64, %80 : vector<4x4x32xf32>
    %c0_38 = arith.constant 0 : index
    %c0_39 = arith.constant 0 : index
    %c0_40 = arith.constant 0 : index
    %82 = vector.load %arg3[%c0_38, %c0_39, %c0_40] : memref<4x8x4xf32, #tpu.memory_space<vmem>>, vector<1x8x4xf32>
    %83 = vector.shape_cast %82 : vector<1x8x4xf32> to vector<8x4xf32>
    %84 = vector.shape_cast %83 : vector<8x4xf32> to vector<1x8x4xf32>
    %85 = vector.shape_cast %84 : vector<1x8x4xf32> to vector<1x8x4xf32>
    %86 = vector.broadcast %85 : vector<1x8x4xf32> to vector<4x8x4xf32>
    "tpu.trace_start"() <{level = 10 : i32, message = "bsc,bct->bst"}> : () -> ()
    %cst = arith.constant dense<0.000000e+00> : vector<4x8x32xf32>
    %87 = tpu.matmul %86, %69, %cst {dimension_numbers = #tpu.dot_dimension_numbers<[2], [1], [1], [2], [0, 0, 0, 1, 1, 2], [0], [0]>} : vector<4x8x4xf32>, vector<4x4x32xf32>, vector<4x8x32xf32> -> vector<4x8x32xf32>
    "tpu.trace_stop"() : () -> ()
    %c1_41 = arith.constant 1 : index
    %c0_42 = arith.constant 0 : index
    %c0_43 = arith.constant 0 : index
    %88 = vector.load %arg3[%c1_41, %c0_42, %c0_43] : memref<4x8x4xf32, #tpu.memory_space<vmem>>, vector<1x8x4xf32>
    %89 = vector.shape_cast %88 : vector<1x8x4xf32> to vector<8x4xf32>
    %90 = vector.shape_cast %89 : vector<8x4xf32> to vector<1x8x4xf32>
    %91 = vector.shape_cast %90 : vector<1x8x4xf32> to vector<1x8x4xf32>
    %92 = vector.broadcast %91 : vector<1x8x4xf32> to vector<4x8x4xf32>
    "tpu.trace_start"() <{level = 10 : i32, message = "bsc,bct->bst"}> : () -> ()
    %cst_44 = arith.constant dense<0.000000e+00> : vector<4x8x32xf32>
    %93 = tpu.matmul %92, %73, %cst_44 {dimension_numbers = #tpu.dot_dimension_numbers<[2], [1], [1], [2], [0, 0, 0, 1, 1, 2], [0], [0]>} : vector<4x8x4xf32>, vector<4x4x32xf32>, vector<4x8x32xf32> -> vector<4x8x32xf32>
    "tpu.trace_stop"() : () -> ()
    %94 = arith.addf %87, %93 : vector<4x8x32xf32>
    %c2_45 = arith.constant 2 : index
    %c0_46 = arith.constant 0 : index
    %c0_47 = arith.constant 0 : index
    %95 = vector.load %arg3[%c2_45, %c0_46, %c0_47] : memref<4x8x4xf32, #tpu.memory_space<vmem>>, vector<1x8x4xf32>
    %96 = vector.shape_cast %95 : vector<1x8x4xf32> to vector<8x4xf32>
    %97 = vector.shape_cast %96 : vector<8x4xf32> to vector<1x8x4xf32>
    %98 = vector.shape_cast %97 : vector<1x8x4xf32> to vector<1x8x4xf32>
    %99 = vector.broadcast %98 : vector<1x8x4xf32> to vector<4x8x4xf32>
    "tpu.trace_start"() <{level = 10 : i32, message = "bsc,bct->bst"}> : () -> ()
    %cst_48 = arith.constant dense<0.000000e+00> : vector<4x8x32xf32>
    %100 = tpu.matmul %99, %77, %cst_48 {dimension_numbers = #tpu.dot_dimension_numbers<[2], [1], [1], [2], [0, 0, 0, 1, 1, 2], [0], [0]>} : vector<4x8x4xf32>, vector<4x4x32xf32>, vector<4x8x32xf32> -> vector<4x8x32xf32>
    "tpu.trace_stop"() : () -> ()
    %101 = arith.addf %94, %100 : vector<4x8x32xf32>
    %c3_49 = arith.constant 3 : index
    %c0_50 = arith.constant 0 : index
    %c0_51 = arith.constant 0 : index
    %102 = vector.load %arg3[%c3_49, %c0_50, %c0_51] : memref<4x8x4xf32, #tpu.memory_space<vmem>>, vector<1x8x4xf32>
    %103 = vector.shape_cast %102 : vector<1x8x4xf32> to vector<8x4xf32>
    %104 = vector.shape_cast %103 : vector<8x4xf32> to vector<1x8x4xf32>
    %105 = vector.shape_cast %104 : vector<1x8x4xf32> to vector<1x8x4xf32>
    %106 = vector.broadcast %105 : vector<1x8x4xf32> to vector<4x8x4xf32>
    "tpu.trace_start"() <{level = 10 : i32, message = "bsc,bct->bst"}> : () -> ()
    %cst_52 = arith.constant dense<0.000000e+00> : vector<4x8x32xf32>
    %107 = tpu.matmul %106, %81, %cst_52 {dimension_numbers = #tpu.dot_dimension_numbers<[2], [1], [1], [2], [0, 0, 0, 1, 1, 2], [0], [0]>} : vector<4x8x4xf32>, vector<4x4x32xf32>, vector<4x8x32xf32> -> vector<4x8x32xf32>
    "tpu.trace_stop"() : () -> ()
    %108 = arith.addf %101, %107 : vector<4x8x32xf32>
    %c0_53 = arith.constant 0 : index
    %c0_54 = arith.constant 0 : index
    %109 = vector.load %arg4[%c0_53, %c0_54] : memref<8x1xf32, #tpu.memory_space<vmem>>, vector<8x1xf32>
    %110 = vector.shape_cast %109 : vector<8x1xf32> to vector<1x8x1xf32>
    %111 = vector.broadcast %110 : vector<1x8x1xf32> to vector<4x8x32xf32>
    %112 = arith.addf %108, %111 : vector<4x8x32xf32>
    %cst_55 = arith.constant dense<0.000000e+00> : vector<4x8xf32>
    %113 = vector.multi_reduction <add>, %112, %cst_55 [2] : vector<4x8x32xf32> to vector<4x8xf32>
    %114 = vector.shape_cast %113 : vector<4x8xf32> to vector<4x8x1xf32>
    %cst_56 = arith.constant 3.200000e+01 : f32
    %115 = vector.broadcast %cst_56 : f32 to vector<4x8x1xf32>
    %116 = arith.divf %114, %115 : vector<4x8x1xf32>
    %117 = vector.broadcast %116 : vector<4x8x1xf32> to vector<4x8x32xf32>
    %118 = arith.subf %112, %117 : vector<4x8x32xf32>
    "tpu.trace_start"() <{level = 10 : i32, message = "bit,bjt->bij"}> : () -> ()
    %cst_57 = arith.constant dense<0.000000e+00> : vector<4x8x8xf32>
    %119 = tpu.matmul %118, %118, %cst_57 {dimension_numbers = #tpu.dot_dimension_numbers<[2], [2], [1], [1], [0, 0, 0, 1, 1, 1], [0], [0]>, precision = #tpu.contract_precision<fp32>} : vector<4x8x32xf32>, vector<4x8x32xf32>, vector<4x8x8xf32> -> vector<4x8x8xf32>
    "tpu.trace_stop"() : () -> ()
    %cst_58 = arith.constant 3.125000e-02 : f32
    %120 = vector.broadcast %cst_58 : f32 to vector<4x8x8xf32>
    %121 = arith.mulf %119, %120 : vector<4x8x8xf32>
    %c0_59 = arith.constant 0 : index
    %c0_60 = arith.constant 0 : index
    %122 = vector.load %arg5[%c0_59, %c0_60] : memref<4x8xf32, #tpu.memory_space<vmem>>, vector<4x8xf32>
    %123 = vector.shape_cast %122 : vector<4x8xf32> to vector<1x4x8xf32>
    %124 = vector.shape_cast %123 : vector<1x4x8xf32> to vector<1x4x8xf32>
    %125 = vector.broadcast %124 : vector<1x4x8xf32> to vector<4x4x8xf32>
    %c0_61 = arith.constant 0 : index
    %c0_62 = arith.constant 0 : index
    %126 = vector.load %arg6[%c0_61, %c0_62] : memref<8x4xf32, #tpu.memory_space<vmem>>, vector<8x4xf32>
    %127 = vector.shape_cast %126 : vector<8x4xf32> to vector<1x8x4xf32>
    %128 = vector.shape_cast %127 : vector<1x8x4xf32> to vector<1x8x4xf32>
    %129 = vector.broadcast %128 : vector<1x8x4xf32> to vector<4x8x4xf32>
    "tpu.trace_start"() <{level = 10 : i32, message = "bds,bsu->bdu"}> : () -> ()
    %cst_63 = arith.constant dense<0.000000e+00> : vector<4x4x8xf32>
    %130 = tpu.matmul %125, %121, %cst_63 {dimension_numbers = #tpu.dot_dimension_numbers<[2], [1], [1], [2], [0, 0, 0, 1, 1, 2], [0], [0]>, precision = #tpu.contract_precision<fp32>} : vector<4x4x8xf32>, vector<4x8x8xf32>, vector<4x4x8xf32> -> vector<4x4x8xf32>
    "tpu.trace_stop"() : () -> ()
    "tpu.trace_start"() <{level = 10 : i32, message = "bdu,buj->bdj"}> : () -> ()
    %cst_64 = arith.constant dense<0.000000e+00> : vector<4x4x4xf32>
    %131 = tpu.matmul %130, %129, %cst_64 {dimension_numbers = #tpu.dot_dimension_numbers<[2], [1], [1], [2], [0, 0, 0, 1, 1, 2], [0], [0]>, precision = #tpu.contract_precision<fp32>} : vector<4x4x8xf32>, vector<4x8x4xf32>, vector<4x4x4xf32> -> vector<4x4x4xf32>
    "tpu.trace_stop"() : () -> ()
    %c0_65 = arith.constant 0 : index
    %c0_66 = arith.constant 0 : index
    %c0_67 = arith.constant 0 : index
    %132 = vector.load %arg7[%c0_65, %c0_66, %c0_67] : memref<4x4x4xf32, #tpu.memory_space<vmem>>, vector<4x4x4xf32>
    tpu.vector_store %arg7[%c0_65, %c0_66, %c0_67], %131 {strides = array<i32>} : memref<4x4x4xf32, #tpu.memory_space<vmem>>, vector<4x4x4xf32>,
    return
  }
  func.func @transform_0(%arg0: i32) -> (i32, i32, i32) {
    %c0_i32 = arith.constant 0 : i32
    %c0_i32_0 = arith.constant 0 : i32
    %c0_i32_1 = arith.constant 0 : i32
    return %arg0, %c0_i32, %c0_i32_0 : i32, i32, i32
  }
  func.func @transform_1(%arg0: i32) -> (i32, i32) {
    %c0_i32 = arith.constant 0 : i32
    %c0_i32_0 = arith.constant 0 : i32
    %c0_i32_1 = arith.constant 0 : i32
    return %c0_i32, %c0_i32_0 : i32, i32
  }
  func.func @transform_2(%arg0: i32) -> (i32, i32, i32) {
    %c0_i32 = arith.constant 0 : i32
    %c0_i32_0 = arith.constant 0 : i32
    %c0_i32_1 = arith.constant 0 : i32
    %c0_i32_2 = arith.constant 0 : i32
    return %c0_i32, %c0_i32_0, %c0_i32_1 : i32, i32, i32
  }
  func.func @transform_3(%arg0: i32) -> (i32, i32) {
    %c0_i32 = arith.constant 0 : i32
    %c0_i32_0 = arith.constant 0 : i32
    %c0_i32_1 = arith.constant 0 : i32
    return %c0_i32, %c0_i32_0 : i32, i32
  }
  func.func @transform_4(%arg0: i32) -> (i32, i32) {
    %c0_i32 = arith.constant 0 : i32
    %c0_i32_0 = arith.constant 0 : i32
    %c0_i32_1 = arith.constant 0 : i32
    return %c0_i32, %c0_i32_0 : i32, i32
  }
  func.func @transform_5(%arg0: i32) -> (i32, i32) {
    %c0_i32 = arith.constant 0 : i32
    %c0_i32_0 = arith.constant 0 : i32
    %c0_i32_1 = arith.constant 0 : i32
    return %c0_i32, %c0_i32_0 : i32, i32
  }
  func.func @transform_6(%arg0: i32) -> (i32, i32, i32) {
    %c0_i32 = arith.constant 0 : i32
    %c0_i32_0 = arith.constant 0 : i32
    %c0_i32_1 = arith.constant 0 : i32
    return %arg0, %c0_i32, %c0_i32_0 : i32, i32, i32
  }
}

module attributes {stable_mosaic.version = 11 : i64} {
  func.func @_linear_kernel(%arg0: i32, %arg1: memref<8x10xf32, #tpu.memory_space<vmem>>, %arg2: memref<10x3xf32, #tpu.memory_space<vmem>>, %arg3: memref<1x3xf32, #tpu.memory_space<vmem>>, %arg4: memref<8x3xf32, #tpu.memory_space<vmem>>) attributes {dimension_semantics = [#tpu.dimension_semantics<parallel>], iteration_bounds = array<i64: 1>, scalar_prefetch = 0 : i64, scratch_operands = 0 : i64, tpu.core_type = #tpu.core_type<tc>, window_params = [{transform_indices = @transform_0, window_bounds = array<i64: 8, 10>}, {pipeline_mode = #tpu.pipeline_mode<synchronous>, transform_indices = @transform_1, window_bounds = array<i64: 10, 3>}, {pipeline_mode = #tpu.pipeline_mode<synchronous>, transform_indices = @transform_2, window_bounds = array<i64: 1, 3>}, {transform_indices = @transform_3, window_bounds = array<i64: 8, 3>}]} {
    %c0 = arith.constant 0 : index
    %c0_0 = arith.constant 0 : index
    %0 = vector.load %arg1[%c0, %c0_0] : memref<8x10xf32, #tpu.memory_space<vmem>>, vector<8x10xf32>
    %c0_1 = arith.constant 0 : index
    %c0_2 = arith.constant 0 : index
    %1 = vector.load %arg2[%c0_1, %c0_2] : memref<10x3xf32, #tpu.memory_space<vmem>>, vector<10x3xf32>
    %cst = arith.constant dense<0.000000e+00> : vector<8x3xf32>
    %2 = tpu.matmul %0, %1, %cst {dimension_numbers = #tpu.dot_dimension_numbers<[1], [0], [0], [1], [0, 0, 1, 1], [], []>} : vector<8x10xf32>, vector<10x3xf32>, vector<8x3xf32> -> vector<8x3xf32>
    %c0_3 = arith.constant 0 : index
    %c0_4 = arith.constant 0 : index
    %3 = vector.load %arg3[%c0_3, %c0_4] : memref<1x3xf32, #tpu.memory_space<vmem>>, vector<1x3xf32>
    %4 = vector.broadcast %3 : vector<1x3xf32> to vector<8x3xf32>
    %5 = arith.addf %2, %4 : vector<8x3xf32>
    %c0_5 = arith.constant 0 : index
    %c0_6 = arith.constant 0 : index
    %6 = vector.load %arg4[%c0_5, %c0_6] : memref<8x3xf32, #tpu.memory_space<vmem>>, vector<8x3xf32>
    tpu.vector_store %arg4[%c0_5, %c0_6], %5 {strides = array<i32>} : memref<8x3xf32, #tpu.memory_space<vmem>>, vector<8x3xf32>,
    return
  }
  func.func @transform_0(%arg0: i32) -> (i32, i32) {
    %c0_i32 = arith.constant 0 : i32
    %c0_i32_0 = arith.constant 0 : i32
    return %arg0, %c0_i32 : i32, i32
  }
  func.func @transform_1(%arg0: i32) -> (i32, i32) {
    %c0_i32 = arith.constant 0 : i32
    %c0_i32_0 = arith.constant 0 : i32
    %c0_i32_1 = arith.constant 0 : i32
    return %c0_i32, %c0_i32_0 : i32, i32
  }
  func.func @transform_2(%arg0: i32) -> (i32, i32) {
    %c0_i32 = arith.constant 0 : i32
    %c0_i32_0 = arith.constant 0 : i32
    %c0_i32_1 = arith.constant 0 : i32
    return %c0_i32, %c0_i32_0 : i32, i32
  }
  func.func @transform_3(%arg0: i32) -> (i32, i32) {
    %c0_i32 = arith.constant 0 : i32
    %c0_i32_0 = arith.constant 0 : i32
    return %arg0, %c0_i32 : i32, i32
  }
}

</mosaic_0001>

<llo_original>
// kernel: custom-call.18
$region0: #{custom-call.18}
  %s0 = inlined_call_operand.vmem [shape: f32[8,2,2], index: 0, kind: input, shape index: {}]
  %s1 = inlined_call_operand.vmem [shape: f32[8,2,2], index: 1, kind: input, shape index: {}]
  %s2 = inlined_call_operand.vmem [shape: f32[8,2,2], index: 2, kind: input, shape index: {}]
  %s3 = inlined_call_operand.vmem [shape: f32[8,2,2], index: 3, kind: input, shape index: {}]
  %s4 = inlined_call_operand.vmem [shape: f32[8,2], index: 4, kind: output, shape index: {0}]
  %s5 = inlined_call_operand.vmem [shape: f32[8,2], index: 5, kind: output, shape index: {1}]
  %s6 = inlined_call_operand.vmem [shape: f32[8,2,2], index: 6, kind: output, shape index: {2}]
  %s7 = inlined_call_operand.vmem [shape: f32[8,2,2], index: 7, kind: output, shape index: {3}]
  %s8 = inlined_call_operand.vmem [shape: f32[8,2,2], index: 8, kind: output, shape index: {4}]
  %s9 = inlined_call_operand.vmem [shape: f32[8,2,2], index: 9, kind: output, shape index: {5}]
  %10 = xla_tuple %s4, %s5, %s6, %s7, %s8, %s9
  $region1: #{custom-call.18} parent=0
    #allocation0 [shape = 'u8[4096]{0}', space=vmem, size = 0x1000, scoped, tag = 'operand span for operand 0']
    #allocation1 [shape = 'u8[2048]{0}', space=vmem, size = 0x800, scoped, tag = 'packed  for operand 0']
    #allocation2 [shape = 'u8[4096]{0}', space=vmem, size = 0x1000, scoped, tag = 'operand span for operand 1']
    #allocation3 [shape = 'u8[2048]{0}', space=vmem, size = 0x800, scoped, tag = 'packed  for operand 1']
    #allocation4 [shape = 'u8[4096]{0}', space=vmem, size = 0x1000, scoped, tag = 'operand span for operand 2']
    #allocation5 [shape = 'u8[2048]{0}', space=vmem, size = 0x800, scoped, tag = 'packed  for operand 2']
    #allocation6 [shape = 'u8[4096]{0}', space=vmem, size = 0x1000, scoped, tag = 'operand span for operand 3']
    #allocation7 [shape = 'u8[2048]{0}', space=vmem, size = 0x800, scoped, tag = 'packed  for operand 3']
    #allocation8 [shape = 'u8[8192]{0}', space=vmem, size = 0x2000, scoped, tag = 'operand span for operand 4']
    #allocation9 [shape = 'u8[8192]{0}', space=vmem, size = 0x2000, scoped, tag = 'operand span for operand 5']
    #allocation10 [shape = 'u8[4096]{0}', space=vmem, size = 0x1000, scoped, tag = 'operand span for operand 6']
    #allocation11 [shape = 'u8[2048]{0}', space=vmem, size = 0x800, scoped, tag = 'packed  for operand 6']
    #allocation12 [shape = 'u8[4096]{0}', space=vmem, size = 0x1000, scoped, tag = 'operand span for operand 7']
    #allocation13 [shape = 'u8[2048]{0}', space=vmem, size = 0x800, scoped, tag = 'packed  for operand 7']
    #allocation14 [shape = 'u8[4096]{0}', space=vmem, size = 0x1000, scoped, tag = 'operand span for operand 8']
    #allocation15 [shape = 'u8[2048]{0}', space=vmem, size = 0x800, scoped, tag = 'packed  for operand 8']
    #allocation16 [shape = 'u8[4096]{0}', space=vmem, size = 0x1000, scoped, tag = 'operand span for operand 9']
    #allocation17 [shape = 'u8[2048]{0}', space=vmem, size = 0x800, scoped, tag = 'packed  for operand 9']
    loop: start=0, step=1, limit=10
    $region2: #{custom-call.18} parent=1 // loop_pre_header
      _
    $region3: #{custom-call.18} parent=1 // loop_header
      %s12 = sphi 0, %s16
      %p13 = scmp.ge.s32.totalorder %s12, 10
      %s24 = sphi 0, %s26
      %s27 = sphi 0, %s24
      %s28 = sphi 0, %s27
      %s44 = sphi 0, %s28
      %s52 = sphi 0, %s54
      %s55 = sphi 0, %s52
      %s56 = sphi 0, %s55
      %s72 = sphi 0, %s56
    $region4: #{custom-call.18} parent=1 // loop_header_branch
      %15 = sbr.rel (%p13) target = $region8
    $region5: #{custom-call.18} parent=1 // loop_body
      %s17 = ssub.s32 %s12, 1
      %s18 = ssub.s32 %s12, 2
      %s19 = sadd.s32 %s12, 1
      %s20 = sshrl.u32 %s12, 3
      %s21 = sshrl.u32 %s19, 3
      %s22 = ssub.s32 %s20, %s21
      %p23 = scmp.eq.s32.totalorder %s22, 0
      %s25 = sadd.s32 %s24, 1
      %s26 = scalar_select %p23, %s24, %s25
      %p29 = pneg %p23
      %p30 = scmp.eq.s32.totalorder %s12, 7
      %p31 = por %p29, %p30
      %p32 = scmp.ne.s32.totalorder %s24, %s27
      %p33 = scmp.eq.s32.totalorder %s12, 0
      %p34 = por %p32, %p33
      %p35 = scmp.ne.s32.totalorder %s24, %s27
      %p36 = scmp.eq.s32.totalorder %s17, 7
      %p37 = por %p35, %p36
      %p38 = scmp.ne.s32.totalorder %s27, %s28
      %p39 = scmp.eq.s32.totalorder %s17, 0
      %p40 = por %p38, %p39
      %p41 = scmp.ne.s32.totalorder %s27, %s28
      %p42 = scmp.eq.s32.totalorder %s18, 7
      %p43 = por %p41, %p42
      %p45 = scmp.ne.s32.totalorder %s28, %s44
      %p46 = scmp.eq.s32.totalorder %s18, 0
      %p47 = por %p45, %p46
      %s48 = sshrl.u32 %s12, 3
      %s49 = sshrl.u32 %s19, 3
      %s50 = ssub.s32 %s48, %s49
      %p51 = scmp.eq.s32.totalorder %s50, 0
      %s53 = sadd.s32 %s52, 1
      %s54 = scalar_select %p51, %s52, %s53
      %p57 = pneg %p51
      %p58 = scmp.eq.s32.totalorder %s12, 7
      %p59 = por %p57, %p58
      %p60 = scmp.ne.s32.totalorder %s52, %s55
      %p61 = scmp.eq.s32.totalorder %s12, 0
      %p62 = por %p60, %p61
      %p63 = scmp.ne.s32.totalorder %s52, %s55
      %p64 = scmp.eq.s32.totalorder %s17, 7
      %p65 = por %p63, %p64
      %p66 = scmp.ne.s32.totalorder %s55, %s56
      %p67 = scmp.eq.s32.totalorder %s17, 0
      %p68 = por %p66, %p67
      %p69 = scmp.ne.s32.totalorder %s55, %s56
      %p70 = scmp.eq.s32.totalorder %s18, 7
      %p71 = por %p69, %p70
      %p73 = scmp.ne.s32.totalorder %s56, %s72
      %p74 = scmp.eq.s32.totalorder %s18, 0
      %p75 = por %p73, %p74
      %p76 = scmp.le.s32.totalorder 1, %s12
      %p77 = scmp.lt.s32.totalorder %s12, 9
      %p78 = pnand %p76, %p77
      %p79 = pneg %p78
      // Predicated region
      $region9: #{custom-call.18} parent=5 // pred_check
        _
      $region10: #{custom-call.18} parent=5 // pred_check_branch
        %81 = sbr.rel (%p78) target = $region12
      $region11: #{custom-call.18} parent=5 // pred_region
        %s82 = ssub.s32 %s12, 1
      $region12: #{custom-call.18} parent=5 // pred_fallthru
        _
      %p83 = scmp.lt.s32.totalorder %s12, 8
      // Predicated region
      $region13: #{custom-call.18} parent=5 // pred_check
        %p84 = pneg %p83
      $region14: #{custom-call.18} parent=5 // pred_check_branch
        %86 = sbr.rel (%p84) target = $region16
      $region15: #{custom-call.18} parent=5 // pred_region
        %s87 = sand.u32 %s12, 1
        %s88 = sand.u32 %s12, 1
        %s89 = smul.addr %s88, 2
        %s90 = scalar_lea.vmem [#allocation1], %s89
        %s91 = smul.addr %s12, 2
        %s92 = scalar_lea.vmem %s0, %s91
        // Predicated region
        $region17: #{custom-call.18} parent=15 // pred_check
          _
        $region18: #{custom-call.18} parent=15 // pred_check_branch
          %94 = sbr.rel (0) target = $region20
        $region19: #{custom-call.18} parent=15 // pred_region
          // Predicated region
          $region21: #{custom-call.18} parent=19 // pred_check
            _
          $region22: #{custom-call.18} parent=19 // pred_check_branch
            %96 = sbr.rel target = $region24
          $region23: #{custom-call.18} parent=19 // pred_region
            // Predicated region
            $region36: #{custom-call.18} parent=23 // pred_check
              _
            $region37: #{custom-call.18} parent=23 // pred_check_branch
              %112 = sbr.rel (0) target = $region39
            $region38: #{custom-call.18} parent=23 // pred_region
              %s114 = ssub.s32 4, 1
              loop: start=0, step=1, limit=1
              $region40: #{custom-call.18} parent=38 // loop_pre_header
                _
              $region41: #{custom-call.18} parent=38 // loop_header
                %s116 = sphi 0, %s120
                %p117 = scmp.ge.s32.totalorder %s116, 1
                %s121 = sphi %s92, %s92
                %s122 = sphi %s90, %s90
              $region42: #{custom-call.18} parent=38 // loop_header_branch
                %119 = sbr.rel (%p117) target = $region46
              $region43: #{custom-call.18} parent=38 // loop_body
                %v123 = vld [vmem:[%s121] sm:%s114]
                %124 = vst [vmem:[%s122] sm:%s114] %v123
              $region44: #{custom-call.18} parent=38 // loop_footer
                %s120 = sadd.s32 1, %s116
              $region45: #{custom-call.18} parent=38 // loop_footer_branch
                %115 = sbr.rel target = $region41
              $region46: #{custom-call.18} parent=38 // loop_exit
                _
            $region39: #{custom-call.18} parent=23 // pred_fallthru
              _
          $region24: #{custom-call.18} parent=19 // pred_fallthru
            _
          // Predicated region
          $region25: #{custom-call.18} parent=19 // pred_check
            _
          $region26: #{custom-call.18} parent=19 // pred_check_branch
            %98 = sbr.rel (0) target = $region28
          $region27: #{custom-call.18} parent=19 // pred_region
            %s100 = ssub.s32 4, 1
            loop: start=0, step=1, limit=1
            $region29: #{custom-call.18} parent=27 // loop_pre_header
              _
            $region30: #{custom-call.18} parent=27 // loop_header
              %s102 = sphi 0, %s106
              %p103 = scmp.ge.s32.totalorder %s102, 1
              %s107 = sphi %s92, %s92
              %s108 = sphi %s90, %s90
            $region31: #{custom-call.18} parent=27 // loop_header_branch
              %105 = sbr.rel (%p103) target = $region35
            $region32: #{custom-call.18} parent=27 // loop_body
              %v109 = vld [vmem:[%s107] sm:%s100]
              %110 = vst [vmem:[%s108] sm:%s100] %v109
            $region33: #{custom-call.18} parent=27 // loop_footer
              %s106 = sadd.s32 1, %s102
            $region34: #{custom-call.18} parent=27 // loop_footer_branch
              %101 = sbr.rel target = $region30
            $region35: #{custom-call.18} parent=27 // loop_exit
              _
          $region28: #{custom-call.18} parent=19 // pred_fallthru
            _
        $region20: #{custom-call.18} parent=15 // pred_fallthru
          _
        %125 = vnop
        %s126 = sand.u32 %s12, 1
        %s127 = sand.u32 %s12, 1
        %s128 = smul.addr %s127, 2
        %s129 = scalar_lea.vmem [#allocation3], %s128
        %s130 = smul.addr %s12, 2
        %s131 = scalar_lea.vmem %s1, %s130
        // Predicated region
        $region47: #{custom-call.18} parent=15 // pred_check
          _
        $region48: #{custom-call.18} parent=15 // pred_check_branch
          %133 = sbr.rel (0) target = $region50
        $region49: #{custom-call.18} parent=15 // pred_region
          // Predicated region
          $region51: #{custom-call.18} parent=49 // pred_check
            _
          $region52: #{custom-call.18} parent=49 // pred_check_branch
            %135 = sbr.rel target = $region54
          $region53: #{custom-call.18} parent=49 // pred_region
            // Predicated region
            $region66: #{custom-call.18} parent=53 // pred_check
              _
            $region67: #{custom-call.18} parent=53 // pred_check_branch
              %151 = sbr.rel (0) target = $region69
            $region68: #{custom-call.18} parent=53 // pred_region
              %s153 = ssub.s32 4, 1
              loop: start=0, step=1, limit=1
              $region70: #{custom-call.18} parent=68 // loop_pre_header
                _
              $region71: #{custom-call.18} parent=68 // loop_header
                %s155 = sphi 0, %s159
                %p156 = scmp.ge.s32.totalorder %s155, 1
                %s160 = sphi %s131, %s131
                %s161 = sphi %s129, %s129
              $region72: #{custom-call.18} parent=68 // loop_header_branch
                %158 = sbr.rel (%p156) target = $region76
              $region73: #{custom-call.18} parent=68 // loop_body
                %v162 = vld [vmem:[%s160] sm:%s153]
                %163 = vst [vmem:[%s161] sm:%s153] %v162
              $region74: #{custom-call.18} parent=68 // loop_footer
                %s159 = sadd.s32 1, %s155
              $region75: #{custom-call.18} parent=68 // loop_footer_branch
                %154 = sbr.rel target = $region71
              $region76: #{custom-call.18} parent=68 // loop_exit
                _
            $region69: #{custom-call.18} parent=53 // pred_fallthru
              _
          $region54: #{custom-call.18} parent=49 // pred_fallthru
            _
          // Predicated region
          $region55: #{custom-call.18} parent=49 // pred_check
            _
          $region56: #{custom-call.18} parent=49 // pred_check_branch
            %137 = sbr.rel (0) target = $region58
          $region57: #{custom-call.18} parent=49 // pred_region
            %s139 = ssub.s32 4, 1
            loop: start=0, step=1, limit=1
            $region59: #{custom-call.18} parent=57 // loop_pre_header
              _
            $region60: #{custom-call.18} parent=57 // loop_header
              %s141 = sphi 0, %s145
              %p142 = scmp.ge.s32.totalorder %s141, 1
              %s146 = sphi %s131, %s131
              %s147 = sphi %s129, %s129
            $region61: #{custom-call.18} parent=57 // loop_header_branch
              %144 = sbr.rel (%p142) target = $region65
            $region62: #{custom-call.18} parent=57 // loop_body
              %v148 = vld [vmem:[%s146] sm:%s139]
              %149 = vst [vmem:[%s147] sm:%s139] %v148
            $region63: #{custom-call.18} parent=57 // loop_footer
              %s145 = sadd.s32 1, %s141
            $region64: #{custom-call.18} parent=57 // loop_footer_branch
              %140 = sbr.rel target = $region60
            $region65: #{custom-call.18} parent=57 // loop_exit
              _
          $region58: #{custom-call.18} parent=49 // pred_fallthru
            _
        $region50: #{custom-call.18} parent=15 // pred_fallthru
          _
        %164 = vnop
        %s165 = sand.u32 %s12, 1
        %s166 = sand.u32 %s12, 1
        %s167 = smul.addr %s166, 2
        %s168 = scalar_lea.vmem [#allocation5], %s167
        %s169 = smul.addr %s12, 2
        %s170 = scalar_lea.vmem %s2, %s169
        // Predicated region
        $region77: #{custom-call.18} parent=15 // pred_check
          _
        $region78: #{custom-call.18} parent=15 // pred_check_branch
          %172 = sbr.rel (0) target = $region80
        $region79: #{custom-call.18} parent=15 // pred_region
          // Predicated region
          $region81: #{custom-call.18} parent=79 // pred_check
            _
          $region82: #{custom-call.18} parent=79 // pred_check_branch
            %174 = sbr.rel target = $region84
          $region83: #{custom-call.18} parent=79 // pred_region
            // Predicated region
            $region96: #{custom-call.18} parent=83 // pred_check
              _
            $region97: #{custom-call.18} parent=83 // pred_check_branch
              %190 = sbr.rel (0) target = $region99
            $region98: #{custom-call.18} parent=83 // pred_region
              %s192 = ssub.s32 4, 1
              loop: start=0, step=1, limit=1
              $region100: #{custom-call.18} parent=98 // loop_pre_header
                _
              $region101: #{custom-call.18} parent=98 // loop_header
                %s194 = sphi 0, %s198
                %p195 = scmp.ge.s32.totalorder %s194, 1
                %s199 = sphi %s170, %s170
                %s200 = sphi %s168, %s168
              $region102: #{custom-call.18} parent=98 // loop_header_branch
                %197 = sbr.rel (%p195) target = $region106
              $region103: #{custom-call.18} parent=98 // loop_body
                %v201 = vld [vmem:[%s199] sm:%s192]
                %202 = vst [vmem:[%s200] sm:%s192] %v201
              $region104: #{custom-call.18} parent=98 // loop_footer
                %s198 = sadd.s32 1, %s194
              $region105: #{custom-call.18} parent=98 // loop_footer_branch
                %193 = sbr.rel target = $region101
              $region106: #{custom-call.18} parent=98 // loop_exit
                _
            $region99: #{custom-call.18} parent=83 // pred_fallthru
              _
          $region84: #{custom-call.18} parent=79 // pred_fallthru
            _
          // Predicated region
          $region85: #{custom-call.18} parent=79 // pred_check
            _
          $region86: #{custom-call.18} parent=79 // pred_check_branch
            %176 = sbr.rel (0) target = $region88
          $region87: #{custom-call.18} parent=79 // pred_region
            %s178 = ssub.s32 4, 1
            loop: start=0, step=1, limit=1
            $region89: #{custom-call.18} parent=87 // loop_pre_header
              _
            $region90: #{custom-call.18} parent=87 // loop_header
              %s180 = sphi 0, %s184
              %p181 = scmp.ge.s32.totalorder %s180, 1
              %s185 = sphi %s170, %s170
              %s186 = sphi %s168, %s168
            $region91: #{custom-call.18} parent=87 // loop_header_branch
              %183 = sbr.rel (%p181) target = $region95
            $region92: #{custom-call.18} parent=87 // loop_body
              %v187 = vld [vmem:[%s185] sm:%s178]
              %188 = vst [vmem:[%s186] sm:%s178] %v187
            $region93: #{custom-call.18} parent=87 // loop_footer
              %s184 = sadd.s32 1, %s180
            $region94: #{custom-call.18} parent=87 // loop_footer_branch
              %179 = sbr.rel target = $region90
            $region95: #{custom-call.18} parent=87 // loop_exit
              _
          $region88: #{custom-call.18} parent=79 // pred_fallthru
            _
        $region80: #{custom-call.18} parent=15 // pred_fallthru
          _
        %203 = vnop
        %s204 = sand.u32 %s12, 1
        %s205 = sand.u32 %s12, 1
        %s206 = smul.addr %s205, 2
        %s207 = scalar_lea.vmem [#allocation7], %s206
        %s208 = smul.addr %s12, 2
        %s209 = scalar_lea.vmem %s3, %s208
        // Predicated region
        $region107: #{custom-call.18} parent=15 // pred_check
          _
        $region108: #{custom-call.18} parent=15 // pred_check_branch
          %211 = sbr.rel (0) target = $region110
        $region109: #{custom-call.18} parent=15 // pred_region
          // Predicated region
          $region111: #{custom-call.18} parent=109 // pred_check
            _
          $region112: #{custom-call.18} parent=109 // pred_check_branch
            %213 = sbr.rel target = $region114
          $region113: #{custom-call.18} parent=109 // pred_region
            // Predicated region
            $region126: #{custom-call.18} parent=113 // pred_check
              _
            $region127: #{custom-call.18} parent=113 // pred_check_branch
              %229 = sbr.rel (0) target = $region129
            $region128: #{custom-call.18} parent=113 // pred_region
              %s231 = ssub.s32 4, 1
              loop: start=0, step=1, limit=1
              $region130: #{custom-call.18} parent=128 // loop_pre_header
                _
              $region131: #{custom-call.18} parent=128 // loop_header
                %s233 = sphi 0, %s237
                %p234 = scmp.ge.s32.totalorder %s233, 1
                %s238 = sphi %s209, %s209
                %s239 = sphi %s207, %s207
              $region132: #{custom-call.18} parent=128 // loop_header_branch
                %236 = sbr.rel (%p234) target = $region136
              $region133: #{custom-call.18} parent=128 // loop_body
                %v240 = vld [vmem:[%s238] sm:%s231]
                %241 = vst [vmem:[%s239] sm:%s231] %v240
              $region134: #{custom-call.18} parent=128 // loop_footer
                %s237 = sadd.s32 1, %s233
              $region135: #{custom-call.18} parent=128 // loop_footer_branch
                %232 = sbr.rel target = $region131
              $region136: #{custom-call.18} parent=128 // loop_exit
                _
            $region129: #{custom-call.18} parent=113 // pred_fallthru
              _
          $region114: #{custom-call.18} parent=109 // pred_fallthru
            _
          // Predicated region
          $region115: #{custom-call.18} parent=109 // pred_check
            _
          $region116: #{custom-call.18} parent=109 // pred_check_branch
            %215 = sbr.rel (0) target = $region118
          $region117: #{custom-call.18} parent=109 // pred_region
            %s217 = ssub.s32 4, 1
            loop: start=0, step=1, limit=1
            $region119: #{custom-call.18} parent=117 // loop_pre_header
              _
            $region120: #{custom-call.18} parent=117 // loop_header
              %s219 = sphi 0, %s223
              %p220 = scmp.ge.s32.totalorder %s219, 1
              %s224 = sphi %s209, %s209
              %s225 = sphi %s207, %s207
            $region121: #{custom-call.18} parent=117 // loop_header_branch
              %222 = sbr.rel (%p220) target = $region125
            $region122: #{custom-call.18} parent=117 // loop_body
              %v226 = vld [vmem:[%s224] sm:%s217]
              %227 = vst [vmem:[%s225] sm:%s217] %v226
            $region123: #{custom-call.18} parent=117 // loop_footer
              %s223 = sadd.s32 1, %s219
            $region124: #{custom-call.18} parent=117 // loop_footer_branch
              %218 = sbr.rel target = $region120
            $region125: #{custom-call.18} parent=117 // loop_exit
              _
          $region118: #{custom-call.18} parent=109 // pred_fallthru
            _
        $region110: #{custom-call.18} parent=15 // pred_fallthru
          _
        %242 = vnop
      $region16: #{custom-call.18} parent=5 // pred_fallthru
        _
      %p243 = scmp.le.s32.totalorder 1, %s12
      %p244 = scmp.lt.s32.totalorder %s12, 9
      %p245 = pnand %p243, %p244
      %p246 = pneg %p245
      // Predicated region
      $region137: #{custom-call.18} parent=5 // pred_check
        _
      $region138: #{custom-call.18} parent=5 // pred_check_branch
        %248 = sbr.rel (%p245) target = $region140
      $region139: #{custom-call.18} parent=5 // pred_region
        #allocation18 [shape = 'f32[2,2]{1,0}', space=vmem, size = 0x1000, scoped, tag = 'a top-left matrix']
        #allocation19 [shape = 'f32[2,2]{1,0}', space=vmem, size = 0x1000, scoped, tag = 'a top-right matrix']
        #allocation20 [shape = 'f32[2,2]{1,0}', space=vmem, size = 0x1000, scoped, tag = 'a bottom-left matrix']
        #allocation21 [shape = 'f32[2,2]{1,0}', space=vmem, size = 0x1000, scoped, tag = 'a bottom-right matrix']
        %s249 = ssub.s32 %s12, 1
        %s250 = sand.u32 %s17, 1
        %s251 = sand.u32 %s17, 1
        %s252 = smul.addr %s251, 2
        %s253 = scalar_lea.vmem [#allocation1], %s252
        %s254 = sand.u32 %s17, 1
        %s255 = sand.u32 %s17, 1
        %s256 = smul.addr %s255, 2
        %s257 = scalar_lea.vmem [#allocation3], %s256
        %s258 = sand.u32 %s17, 1
        %s259 = sand.u32 %s17, 1
        %s260 = smul.addr %s259, 2
        %s261 = scalar_lea.vmem [#allocation5], %s260
        %s262 = sand.u32 %s17, 1
        %s263 = sand.u32 %s17, 1
        %s264 = smul.addr %s263, 2
        %s265 = scalar_lea.vmem [#allocation7], %s264
        %s266 = sand.u32 %s17, 1
        %s267 = sand.u32 %s17, 1
        %s268 = smul.addr %s267, 2
        %s269 = scalar_lea.vmem [#allocation1], %s268
        %s270 = sand.u32 %s17, 1
        %s271 = sand.u32 %s17, 1
        %s272 = smul.addr %s271, 2
        %s273 = scalar_lea.vmem [#allocation3], %s272
        %s274 = sand.u32 %s17, 1
        %s275 = sand.u32 %s17, 1
        %s276 = smul.addr %s275, 2
        %s277 = scalar_lea.vmem [#allocation5], %s276
        %s278 = sand.u32 %s17, 1
        %s279 = sand.u32 %s17, 1
        %s280 = smul.addr %s279, 2
        %s281 = scalar_lea.vmem [#allocation7], %s280
        %p282 = pneg %p40
        %p283 = pneg %p37
        %s284 = sand.u32 %s27, 1
        %s285 = sand.u32 %s27, 1
        %s286 = smul.addr %s285, 8
        %s287 = scalar_lea.vmem [#allocation8], %s286
        %p288 = pneg %p68
        %p289 = pneg %p65
        %s290 = sand.u32 %s55, 1
        %s291 = sand.u32 %s55, 1
        %s292 = smul.addr %s291, 8
        %s293 = scalar_lea.vmem [#allocation9], %s292
        %s294 = sand.u32 %s17, 1
        %s295 = sand.u32 %s17, 1
        %s296 = smul.addr %s295, 2
        %s297 = scalar_lea.vmem [#allocation11], %s296
        %s298 = sand.u32 %s17, 1
        %s299 = sand.u32 %s17, 1
        %s300 = smul.addr %s299, 2
        %s301 = scalar_lea.vmem [#allocation13], %s300
        %s302 = sand.u32 %s17, 1
        %s303 = sand.u32 %s17, 1
        %s304 = smul.addr %s303, 2
        %s305 = scalar_lea.vmem [#allocation15], %s304
        %s306 = sand.u32 %s17, 1
        %s307 = sand.u32 %s17, 1
        %s308 = smul.addr %s307, 2
        %s309 = scalar_lea.vmem [#allocation17], %s308
        %s311 = ssub.s32 4, 1
        %v312 = vld [vmem:[%s269] sm:%s311]
        %313 = vst [vmem:[#allocation0] sm:%s311] %v312
        %s315 = ssub.s32 4, 1
        %v316 = vld [vmem:[%s273] sm:%s315]
        %317 = vst [vmem:[#allocation2] sm:%s315] %v316
        %s319 = ssub.s32 4, 1
        %v320 = vld [vmem:[%s277] sm:%s319]
        %321 = vst [vmem:[#allocation4] sm:%s319] %v320
        %s323 = ssub.s32 4, 1
        %v324 = vld [vmem:[%s281] sm:%s323]
        %325 = vst [vmem:[#allocation6] sm:%s323] %v324
        %s326 = sshrl.u32 %s17, 3
        %s327 = sshrl.u32 %s17, 3
        %s328 = smov [#allocation18]
        %v329 = vld [vmem:[#allocation0] sm:$0xff]
        %330 = vst [vmem:[%s328] sm:$0xff] %v329
        %s331 = smov [#allocation19]
        %v332 = vld [vmem:[#allocation2] sm:$0xff]
        %333 = vst [vmem:[%s331] sm:$0xff] %v332
        %s334 = smov [#allocation20]
        %v335 = vld [vmem:[#allocation4] sm:$0xff]
        %336 = vst [vmem:[%s334] sm:$0xff] %v335
        %s337 = smov [#allocation21]
        %v338 = vld [vmem:[#allocation6] sm:$0xff]
        %339 = vst [vmem:[%s337] sm:$0xff] %v338
        %340 = vst [vmem:[#allocation10] sm:$0xff] 0.0
        %341 = vst [vmem:[#allocation12] sm:$0xff] 0.0
        %342 = vst [vmem:[#allocation14] sm:$0xff] 0.0
        %343 = vst [vmem:[#allocation16] sm:$0xff] 0.0
        %s344 = smov [#allocation10]
        %v345 = vlaneseq
        %v346 = vand.u32 %v345, 127
        %v347 = vmov %v346
        %v348 = vlaneseq
        %v349 = vshrl.u32 %v348, 7
        %v350 = vmov %v349
        %v351 = vld [vmem:[%s344] sm:$0x3]
        %vm354 = vcmp.eq.s32.totalorder %v350, %v347
        %v355 = vsel %vm354, 1.0, %v351
        %356 = vst [vmem:[%s344] sm:$0x3] %v355
        %s357 = smov [#allocation16]
        %v358 = vlaneseq
        %v359 = vand.u32 %v358, 127
        %v360 = vmov %v359
        %v361 = vlaneseq
        %v362 = vshrl.u32 %v361, 7
        %v363 = vmov %v362
        %v364 = vld [vmem:[%s357] sm:$0x3]
        %vm367 = vcmp.eq.s32.totalorder %v363, %v360
        %v368 = vsel %vm367, 1.0, %v364
        %369 = vst [vmem:[%s357] sm:$0x3] %v368
        // While loop
        $region141: #{custom-call.18} parent=139 // loop_pre_header
          _
        $region142: #{custom-call.18} parent=139 // loop_header
          %s371 = sphi 0, %s953
          %v372 = vlaneseq
          %v373 = vand.u32 %v372, 127
          %v374 = vmov %v373
          %v375 = vlaneseq
          %v376 = vshrl.u32 %v375, 7
          %v377 = vmov %v376
          %s378 = smov [#allocation18]
          %v379 = vlaneseq
          %v380 = vand.u32 %v379, 127
          %vm381 = vcmp.ge.s32.totalorder %v380, 0
          %vm382 = vcmp.lt.s32.totalorder %v380, 2
          %vm383 = vmand %vm381, %vm382
          %v384 = vld [vmem:[%s378] sm:$0x3]
          %v385 = vsel %vm383, %v384, 0.0
          %v386 = vmul.f32 %v385, %v385
          %vm389 = vcmp.eq.s32.totalorder %v377, %v374
          %v390 = vsel %vm389, 0.0, %v386
          %v391 = vlaneseq
          %v392 = vand.u32 %v391, 127
          %v393 = vmov %v392
          %v394 = vlaneseq
          %v395 = vshrl.u32 %v394, 7
          %v396 = vmov %v395
          %s397 = smov [#allocation19]
          %v398 = vlaneseq
          %v399 = vand.u32 %v398, 127
          %vm400 = vcmp.ge.s32.totalorder %v399, 0
          %vm401 = vcmp.lt.s32.totalorder %v399, 2
          %vm402 = vmand %vm400, %vm401
          %v403 = vld [vmem:[%s397] sm:$0x3]
          %v404 = vsel %vm402, %v403, 0.0
          %v405 = vmul.f32 %v404, %v404
          %v406 = vadd.f32 %v390, %v405
          %v407 = vadd.f32 %v386, %v405
          %v408 = vlaneseq
          %v409 = vand.u32 %v408, 127
          %v410 = vmov %v409
          %v411 = vlaneseq
          %v412 = vshrl.u32 %v411, 7
          %v413 = vmov %v412
          %s414 = smov [#allocation20]
          %v415 = vlaneseq
          %v416 = vand.u32 %v415, 127
          %vm417 = vcmp.ge.s32.totalorder %v416, 0
          %vm418 = vcmp.lt.s32.totalorder %v416, 2
          %vm419 = vmand %vm417, %vm418
          %v420 = vld [vmem:[%s414] sm:$0x3]
          %v421 = vsel %vm419, %v420, 0.0
          %v422 = vmul.f32 %v421, %v421
          %v423 = vadd.f32 %v406, %v422
          %v424 = vadd.f32 %v407, %v422
          %v425 = vlaneseq
          %v426 = vand.u32 %v425, 127
          %v427 = vmov %v426
          %v428 = vlaneseq
          %v429 = vshrl.u32 %v428, 7
          %v430 = vmov %v429
          %s431 = smov [#allocation21]
          %v432 = vlaneseq
          %v433 = vand.u32 %v432, 127
          %vm434 = vcmp.ge.s32.totalorder %v433, 0
          %vm435 = vcmp.lt.s32.totalorder %v433, 2
          %vm436 = vmand %vm434, %vm435
          %v437 = vld [vmem:[%s431] sm:$0x3]
          %v438 = vsel %vm436, %v437, 0.0
          %v439 = vmul.f32 %v438, %v438
          %vm442 = vcmp.eq.s32.totalorder %v430, %v427
          %v443 = vsel %vm442, 0.0, %v439
          %v444 = vadd.f32 %v423, %v443
          %v445 = vadd.f32 %v424, %v439
          %446 = vadd.xlane.f32.xlu0 %v445
          %v447 = vpop.xlane.xlu0 %446
          %v448 = vrot.slane %v447, 4
          %v449 = vadd.f32 %v447, %v448
          %v450 = vrot.slane %v449, 2
          %v451 = vadd.f32 %v449, %v450
          %v452 = vrot.slane %v451, 1
          %v453 = vadd.f32 %v451, %v452
          %454 = vadd.xlane.f32.xlu0 %v444
          %v455 = vpop.xlane.xlu0 %454
          %v456 = vrot.slane %v455, 4
          %v457 = vadd.f32 %v455, %v456
          %v458 = vrot.slane %v457, 2
          %v459 = vadd.f32 %v457, %v458
          %v460 = vrot.slane %v459, 1
          %v461 = vadd.f32 %v459, %v460
          %s462 = vtos %v461
          %s463 = vtos %v453
          %s464 = smul.f32 1e-10, %s463
          %p465 = scmp.le.f32.partialorder %s462, %s464
          %p466 = scmp.ge.s32.totalorder %s371, 15
          %p467 = por %p465, %p466
        $region143: #{custom-call.18} parent=139 // loop_header_branch
          %955 = sbr.rel (%p467) target = $region147
        $region144: #{custom-call.18} parent=139 // loop_body
          loop: start=0, step=1, limit=3
          $region148: #{custom-call.18} parent=144 // loop_pre_header
            _
          $region149: #{custom-call.18} parent=144 // loop_header
            %s469 = sphi 0, %s473
            %p470 = scmp.ge.s32.totalorder %s469, 3
          $region150: #{custom-call.18} parent=144 // loop_header_branch
            %472 = sbr.rel (%p470) target = $region154
          $region151: #{custom-call.18} parent=144 // loop_body
            #allocation22 [shape = 'f32[1024]{0}', space=vmem, size = 0x1000, scoped, tag = 'a_tl_diag vmem']
            #allocation23 [shape = 'f32[1024]{0}', space=vmem, size = 0x1000, scoped, tag = 'a_tr_diag vmem']
            #allocation24 [shape = 'f32[1024]{0}', space=vmem, size = 0x1000, scoped, tag = 'a_br_diag vmem']
            #allocation25 [shape = 'f32[1024]{0}', space=vmem, size = 0x1000, scoped, tag = 'rt1 vmem']
            #allocation26 [shape = 'f32[1024]{0}', space=vmem, size = 0x1000, scoped, tag = 'rt2 vmem']
            #allocation27 [shape = 'f32[1024]{0}', space=vmem, size = 0x1000, scoped, tag = 'c vmem']
            #allocation28 [shape = 'f32[1024]{0}', space=vmem, size = 0x1000, scoped, tag = 's vmem']
            #allocation29 [shape = 'f32[4096]{0}', space=vmem, size = 0x4000, scoped, tag = 'c broadcast']
            #allocation30 [shape = 'f32[4096]{0}', space=vmem, size = 0x4000, scoped, tag = 's broadcast']
            %s474 = smov [#allocation18]
            %s475 = smov [#allocation22]
            %v476 = vlaneseq
            %v477 = vand.u32 %v476, 127
            %v478 = vmov %v477
            %v479 = vlaneseq
            %v480 = vshrl.u32 %v479, 7
            %v481 = vmov %v480
            %v482 = vld [vmem:[%s474] sm:$0x3]
            %vm485 = vcmp.eq.s32.totalorder %v481, %v478
            %v486 = vsel %vm485, %v482, 0.0
            %v487 = vrot.slane %v486, 4
            %v488 = vadd.f32 %v486, %v487
            %v489 = vrot.slane %v488, 2
            %v490 = vadd.f32 %v488, %v489
            %v491 = vrot.slane %v490, 1
            %v492 = vadd.f32 %v490, %v491
            %493 = vst [vmem:[%s475] sm:$0x1] %v492
            %s494 = smov [#allocation19]
            %s495 = smov [#allocation23]
            %v496 = vlaneseq
            %v497 = vand.u32 %v496, 127
            %v498 = vmov %v497
            %v499 = vlaneseq
            %v500 = vshrl.u32 %v499, 7
            %v501 = vmov %v500
            %v502 = vld [vmem:[%s494] sm:$0x3]
            %vm505 = vcmp.eq.s32.totalorder %v501, %v498
            %v506 = vsel %vm505, %v502, 0.0
            %v507 = vrot.slane %v506, 4
            %v508 = vadd.f32 %v506, %v507
            %v509 = vrot.slane %v508, 2
            %v510 = vadd.f32 %v508, %v509
            %v511 = vrot.slane %v510, 1
            %v512 = vadd.f32 %v510, %v511
            %513 = vst [vmem:[%s495] sm:$0x1] %v512
            %s514 = smov [#allocation21]
            %s515 = smov [#allocation24]
            %v516 = vlaneseq
            %v517 = vand.u32 %v516, 127
            %v518 = vmov %v517
            %v519 = vlaneseq
            %v520 = vshrl.u32 %v519, 7
            %v521 = vmov %v520
            %v522 = vld [vmem:[%s514] sm:$0x3]
            %vm525 = vcmp.eq.s32.totalorder %v521, %v518
            %v526 = vsel %vm525, %v522, 0.0
            %v527 = vrot.slane %v526, 4
            %v528 = vadd.f32 %v526, %v527
            %v529 = vrot.slane %v528, 2
            %v530 = vadd.f32 %v528, %v529
            %v531 = vrot.slane %v530, 1
            %v532 = vadd.f32 %v530, %v531
            %533 = vst [vmem:[%s515] sm:$0x1] %v532
            %s534 = smov [#allocation27]
            %s535 = smov [#allocation28]
            %s536 = smov [#allocation22]
            %v537 = vld [vmem:[%s536] sm:$0xff]
            %s538 = smov [#allocation23]
            %v539 = vld [vmem:[%s538] sm:$0xff]
            %s540 = smov [#allocation24]
            %v541 = vld [vmem:[%s540] sm:$0xff]
            %v542 = vsub.f32 %v541, %v537
            %v543 = vmul.f32 2.0, %v539
            %v544 = vrcp.pop %v543
            %v545 = vmul.f32 %v543, %v544
            %v546 = vsub.f32 1.0, %v545
            %v547 = vmul.f32 %v544, %v546
            %v548 = vadd.f32 %v544, %v547
            %vm549 = vweird.f32 %v543
            %vm550 = vweird.f32 %v544
            %vm551 = vmor %vm549, %vm550
            %v552 = vsel %vm551, %v544, %v548
            %v553 = vand.u32 2147483647, %v543
            %vm554 = vcmp.eq.f32.partialorder %v553, 8.507059e+37
            %v555 = vand.u32 %v543, 2147483648
            %v556 = vor.u32 1.1754944e-38, %v555
            %v557 = vsel %vm554, %v556, %v552
            %v558 = vmul.f32 %v542, %v557
            %vm559 = vcmp.ge.f32.partialorder %v558, 0.0
            %v560 = vmul.f32 %v558, %v558
            %v561 = vadd.f32 1.0, %v560
            %v562 = vrsqrt.pop %v561
            %v563 = vmul.f32 %v562, %v561
            %v564 = vmul.f32 %v563, %v562
            %v565 = vmul.f32 0.5, %v564
            %v566 = vsub.f32 1.5, %v565
            %v567 = vmul.f32 %v562, %v566
            %v568 = vmul.f32 %v561, %v567
            %vm569 = vcmp.eq.f32.partialorder %v561, inf
            %v570 = vsel %vm569, %v561, %v568
            %vm571 = vcmp.eq.f32.partialorder %v561, 0.0
            %v572 = vand.u32 %v561, 2147483648
            %v573 = vsel %vm571, %v572, %v570
            %v574 = vxor.u32 %v573, 2147483648
            %v575 = vsel %vm559, %v573, %v574
            %v576 = vadd.f32 %v558, %v575
            %v577 = vrcp.pop %v576
            %v578 = vmul.f32 %v576, %v577
            %v579 = vsub.f32 1.0, %v578
            %v580 = vmul.f32 %v577, %v579
            %v581 = vadd.f32 %v577, %v580
            %vm582 = vweird.f32 %v576
            %vm583 = vweird.f32 %v577
            %vm584 = vmor %vm582, %vm583
            %v585 = vsel %vm584, %v577, %v581
            %v586 = vand.u32 2147483647, %v576
            %vm587 = vcmp.eq.f32.partialorder %v586, 8.507059e+37
            %v588 = vand.u32 %v576, 2147483648
            %v589 = vor.u32 1.1754944e-38, %v588
            %v590 = vsel %vm587, %v589, %v585
            %v591 = vand.u32 2147483647, %v537
            %v592 = vand.u32 2147483647, %v539
            %v593 = vand.u32 2147483647, %v541
            %v594 = vmin.f32 %v591, %v593
            %v595 = vmul.f32 1.1920929e-08, %v594
            %vm596 = vcmp.le.f32.partialorder %v592, %v595
            %v597 = vsel %vm596, 0.0, %v590
            %v598 = vmul.f32 %v597, %v597
            %v599 = vadd.f32 1.0, %v598
            %v600 = vrsqrt.pop %v599
            %v601 = vmul.f32 %v600, %v599
            %v602 = vmul.f32 %v601, %v600
            %v603 = vmul.f32 0.5, %v602
            %v604 = vsub.f32 1.5, %v603
            %v605 = vmul.f32 %v600, %v604
            %vm606 = vweird.f32 %v599
            %vm607 = vweird.f32 %v600
            %vm608 = vmor %vm606, %vm607
            %v609 = vsel %vm608, %v600, %v605
            %v610 = vmul.f32 %v597, %v609
            %v611 = vmul.f32 %v597, %v539
            %v612 = vsub.f32 %v537, %v611
            %v613 = vmul.f32 %v597, %v539
            %v614 = vadd.f32 %v541, %v613
            %s615 = smov [#allocation25]
            %616 = vst [vmem:[%s615] sm:$0xff] %v612
            %s617 = smov [#allocation26]
            %618 = vst [vmem:[%s617] sm:$0xff] %v614
            %s619 = smov %s534
            %620 = vst [vmem:[%s619] sm:$0xff] %v609
            %s621 = smov %s535
            %622 = vst [vmem:[%s621] sm:$0xff] %v610
            %s623 = smov [#allocation27]
            %v624 = vld [vmem:[%s623] ss:$0 sm:$0xff]
            %v625 = vlaneseq
            %v626 = vand.u32 %v625, 127
            %v627 = vmov %v626
            %v628 = vlaneseq
            %v629 = vshrl.u32 %v628, 7
            %v630 = vmov %v629
            %vm632 = vcmp.eq.s32.totalorder %v630, %v627
            %v633 = vsel %vm632, %v624, 0.0
            %634 = vadd.xlane.f32.xlu0 %v633
            %v635 = vpop.xlane.xlu0 %634
            %s636 = smov [#allocation29]
            %637 = vst [vmem:[%s636] sm:$0xff] %v635
            %s638 = smov [#allocation28]
            %v639 = vld [vmem:[%s638] ss:$0 sm:$0xff]
            %v640 = vlaneseq
            %v641 = vand.u32 %v640, 127
            %v642 = vmov %v641
            %v643 = vlaneseq
            %v644 = vshrl.u32 %v643, 7
            %v645 = vmov %v644
            %vm647 = vcmp.eq.s32.totalorder %v645, %v642
            %v648 = vsel %vm647, %v639, 0.0
            %649 = vadd.xlane.f32.xlu0 %v648
            %v650 = vpop.xlane.xlu0 %649
            %s651 = smov [#allocation30]
            %652 = vst [vmem:[%s651] sm:$0xff] %v650
            %s653 = smov [#allocation29]
            %v654 = vld [vmem:[%s653] sm:$0xff]
            %s655 = smov [#allocation30]
            %v656 = vld [vmem:[%s655] sm:$0xff]
            %s657 = smov [#allocation18]
            %s658 = smov [#allocation19]
            %s659 = smov [#allocation20]
            %s660 = smov [#allocation21]
            %v661 = vld [vmem:[%s657] sm:$0x3]
            %v662 = vld [vmem:[%s658] sm:$0x3]
            %v663 = vld [vmem:[%s659] sm:$0x3]
            %v664 = vld [vmem:[%s660] sm:$0x3]
            %v665 = vmul.f32 %v654, %v661
            %v666 = vmul.f32 %v656, %v663
            %v667 = vsub.f32 %v665, %v666
            %v668 = vmul.f32 %v654, %v662
            %v669 = vmul.f32 %v656, %v664
            %v670 = vsub.f32 %v668, %v669
            %v671 = vmul.f32 %v656, %v661
            %v672 = vmul.f32 %v654, %v663
            %v673 = vadd.f32 %v671, %v672
            %v674 = vmul.f32 %v656, %v662
            %v675 = vmul.f32 %v654, %v664
            %v676 = vadd.f32 %v674, %v675
            %677 = vst [vmem:[%s657] sm:$0x3] %v667
            %678 = vst [vmem:[%s658] sm:$0x3] %v670
            %679 = vst [vmem:[%s659] sm:$0x3] %v673
            %680 = vst [vmem:[%s660] sm:$0x3] %v676
            %s681 = smov [#allocation27]
            %v682 = vld [vmem:[%s681] ss:$0 sm:$0xff]
            %s683 = smov [#allocation28]
            %v684 = vld [vmem:[%s683] ss:$0 sm:$0xff]
            %s685 = smov [#allocation18]
            %s686 = smov [#allocation19]
            %s687 = smov [#allocation20]
            %s688 = smov [#allocation21]
            %v689 = vld [vmem:[%s685] sm:$0x3]
            %v690 = vld [vmem:[%s686] sm:$0x3]
            %v691 = vld [vmem:[%s687] sm:$0x3]
            %v692 = vld [vmem:[%s688] sm:$0x3]
            %v693 = vmul.f32 %v682, %v689
            %v694 = vmul.f32 %v684, %v690
            %v695 = vsub.f32 %v693, %v694
            %v696 = vmul.f32 %v684, %v689
            %v697 = vmul.f32 %v682, %v690
            %v698 = vadd.f32 %v696, %v697
            %v699 = vmul.f32 %v682, %v691
            %v700 = vmul.f32 %v684, %v692
            %v701 = vsub.f32 %v699, %v700
            %v702 = vmul.f32 %v684, %v691
            %v703 = vmul.f32 %v682, %v692
            %v704 = vadd.f32 %v702, %v703
            %705 = vst [vmem:[%s685] sm:$0x3] %v695
            %706 = vst [vmem:[%s686] sm:$0x3] %v698
            %707 = vst [vmem:[%s687] sm:$0x3] %v701
            %708 = vst [vmem:[%s688] sm:$0x3] %v704
            %s709 = smov [#allocation18]
            %s710 = smov [#allocation25]
            %v711 = vlaneseq
            %v712 = vand.u32 %v711, 127
            %v713 = vmov %v712
            %v714 = vlaneseq
            %v715 = vshrl.u32 %v714, 7
            %v716 = vmov %v715
            %v717 = vld [vmem:[%s710] ss:$0 sm:$0xff]
            %v718 = vld [vmem:[%s709] sm:$0x3]
            %vm721 = vcmp.eq.s32.totalorder %v716, %v713
            %v722 = vsel %vm721, %v717, %v718
            %723 = vst [vmem:[%s709] sm:$0x3] %v722
            %s724 = smov [#allocation19]
            %v725 = vlaneseq
            %v726 = vand.u32 %v725, 127
            %v727 = vmov %v726
            %v728 = vlaneseq
            %v729 = vshrl.u32 %v728, 7
            %v730 = vmov %v729
            %v731 = vld [vmem:[%s724] sm:$0x3]
            %vm734 = vcmp.eq.s32.totalorder %v730, %v727
            %v735 = vsel %vm734, 0.0, %v731
            %736 = vst [vmem:[%s724] sm:$0x3] %v735
            %s737 = smov [#allocation20]
            %v738 = vlaneseq
            %v739 = vand.u32 %v738, 127
            %v740 = vmov %v739
            %v741 = vlaneseq
            %v742 = vshrl.u32 %v741, 7
            %v743 = vmov %v742
            %v744 = vld [vmem:[%s737] sm:$0x3]
            %vm747 = vcmp.eq.s32.totalorder %v743, %v740
            %v748 = vsel %vm747, 0.0, %v744
            %749 = vst [vmem:[%s737] sm:$0x3] %v748
            %s750 = smov [#allocation21]
            %s751 = smov [#allocation26]
            %v752 = vlaneseq
            %v753 = vand.u32 %v752, 127
            %v754 = vmov %v753
            %v755 = vlaneseq
            %v756 = vshrl.u32 %v755, 7
            %v757 = vmov %v756
            %v758 = vld [vmem:[%s751] ss:$0 sm:$0xff]
            %v759 = vld [vmem:[%s750] sm:$0x3]
            %vm762 = vcmp.eq.s32.totalorder %v757, %v754
            %v763 = vsel %vm762, %v758, %v759
            %764 = vst [vmem:[%s750] sm:$0x3] %v763
            %s765 = smov [#allocation18]
            %s766 = smov [#allocation19]
            %v767 = vld [vmem:[%s766] sm:$0x3]
            %768 = vrot.lane.b32.xlu0 %v767, 1
            %v769 = vpop.permute.xlu0 %768
            %v770 = vld [vmem:[%s765] sm:$0x3]
            %v771 = vld [vmem:[%s765] sm:$0x3]
            %772 = vrot.lane.b32.xlu0 %v771, 1
            %v773 = vpop.permute.xlu0 %772
            %v774 = vlaneseq
            %v775 = vand.u32 %v774, 127
            %vm776 = vcmp.eq.s32.totalorder %v775, 0
            %v777 = vsel %vm776, %v771, %v773
            %v778 = vlaneseq
            %v779 = vand.u32 %v778, 127
            %vm780 = vcmp.eq.s32.totalorder %v779, 1
            %v781 = vsel %vm780, %v769, %v777
            %v782 = vlaneseq
            %v783 = vand.u32 %v782, 127
            %vm784 = vcmp.ge.s32.totalorder %v783, 0
            %vm785 = vcmp.lt.s32.totalorder %v783, 2
            %vm786 = vmand %vm784, %vm785
            %v787 = vsel %vm786, %v781, 0.0
            %v788 = vld [vmem:[%s766] sm:$0x3]
            %789 = vrot.lane.b32.xlu0 %v788, 127
            %v790 = vpop.permute.xlu0 %789
            %v791 = vlaneseq
            %v792 = vand.u32 %v791, 127
            %vm793 = vcmp.eq.s32.totalorder %v792, 1
            %v794 = vsel %vm793, %v770, %v790
            %795 = vst [vmem:[%s765] sm:$0x3] %v787
            %796 = vst [vmem:[%s766] sm:$0x3] %v794
            %s797 = smov [#allocation20]
            %s798 = smov [#allocation21]
            %v799 = vld [vmem:[%s798] sm:$0x3]
            %800 = vrot.lane.b32.xlu0 %v799, 1
            %v801 = vpop.permute.xlu0 %800
            %v802 = vld [vmem:[%s797] sm:$0x3]
            %v803 = vld [vmem:[%s797] sm:$0x3]
            %804 = vrot.lane.b32.xlu0 %v803, 1
            %v805 = vpop.permute.xlu0 %804
            %v806 = vlaneseq
            %v807 = vand.u32 %v806, 127
            %vm808 = vcmp.eq.s32.totalorder %v807, 0
            %v809 = vsel %vm808, %v803, %v805
            %v810 = vlaneseq
            %v811 = vand.u32 %v810, 127
            %vm812 = vcmp.eq.s32.totalorder %v811, 1
            %v813 = vsel %vm812, %v801, %v809
            %v814 = vlaneseq
            %v815 = vand.u32 %v814, 127
            %vm816 = vcmp.ge.s32.totalorder %v815, 0
            %vm817 = vcmp.lt.s32.totalorder %v815, 2
            %vm818 = vmand %vm816, %vm817
            %v819 = vsel %vm818, %v813, 0.0
            %v820 = vld [vmem:[%s798] sm:$0x3]
            %821 = vrot.lane.b32.xlu0 %v820, 127
            %v822 = vpop.permute.xlu0 %821
            %v823 = vlaneseq
            %v824 = vand.u32 %v823, 127
            %vm825 = vcmp.eq.s32.totalorder %v824, 1
            %v826 = vsel %vm825, %v802, %v822
            %827 = vst [vmem:[%s797] sm:$0x3] %v819
            %828 = vst [vmem:[%s798] sm:$0x3] %v826
            %s829 = smov [#allocation18]
            %s830 = smov [#allocation20]
            %v831 = vld [vmem:[%s829] ss:$0 sm:$0xff]
            %s833 = scalar_lea.vmem %s829, 4294967295
            %v834 = vld [vmem:[%s833] sm:$0x2]
            %v835 = vlaneseq
            %v836 = vshrl.u32 %v835, 7
            %vm837 = vcmp.eq.s32.totalorder %v836, 0
            %v838 = vsel %vm837, %v831, %v834
            %s839 = scalar_lea.vmem %s829, 1
            %v840 = vld [vmem:[%s839] ss:$0 sm:$0xff]
            %841 = vst [vmem:[%s829] sm:$0x3] %v838
            %v842 = vld [vmem:[%s830] ss:$0 sm:$0xff]
            %s843 = scalar_lea.vmem %s829, 1
            %844 = vst [vmem:[%s843] sm:$0x1] %v842
            %s845 = scalar_lea.vmem %s830, 1
            %v846 = vld [vmem:[%s845] sm:$0x1]
            %v847 = vlaneseq
            %v848 = vshrl.u32 %v847, 7
            %vm849 = vcmp.eq.s32.totalorder %v848, 1
            %v850 = vsel %vm849, %v840, %v846
            %v851 = vld [vmem:[%s830] ss:$0 sm:$0xff]
            %852 = vst [vmem:[%s830] sm:$0x3] %v850
            %s853 = smov [#allocation19]
            %s854 = smov [#allocation21]
            %v855 = vld [vmem:[%s853] ss:$0 sm:$0xff]
            %s857 = scalar_lea.vmem %s853, 4294967295
            %v858 = vld [vmem:[%s857] sm:$0x2]
            %v859 = vlaneseq
            %v860 = vshrl.u32 %v859, 7
            %vm861 = vcmp.eq.s32.totalorder %v860, 0
            %v862 = vsel %vm861, %v855, %v858
            %s863 = scalar_lea.vmem %s853, 1
            %v864 = vld [vmem:[%s863] ss:$0 sm:$0xff]
            %865 = vst [vmem:[%s853] sm:$0x3] %v862
            %v866 = vld [vmem:[%s854] ss:$0 sm:$0xff]
            %s867 = scalar_lea.vmem %s853, 1
            %868 = vst [vmem:[%s867] sm:$0x1] %v866
            %s869 = scalar_lea.vmem %s854, 1
            %v870 = vld [vmem:[%s869] sm:$0x1]
            %v871 = vlaneseq
            %v872 = vshrl.u32 %v871, 7
            %vm873 = vcmp.eq.s32.totalorder %v872, 1
            %v874 = vsel %vm873, %v864, %v870
            %v875 = vld [vmem:[%s854] ss:$0 sm:$0xff]
            %876 = vst [vmem:[%s854] sm:$0x3] %v874
            %s877 = smov [#allocation29]
            %v878 = vld [vmem:[%s877] sm:$0xff]
            %s879 = smov [#allocation30]
            %v880 = vld [vmem:[%s879] sm:$0xff]
            %s881 = smov [#allocation10]
            %s882 = smov [#allocation12]
            %s883 = smov [#allocation14]
            %s884 = smov [#allocation16]
            %v885 = vld [vmem:[%s881] sm:$0x3]
            %v886 = vld [vmem:[%s882] sm:$0x3]
            %v887 = vld [vmem:[%s883] sm:$0x3]
            %v888 = vld [vmem:[%s884] sm:$0x3]
            %v889 = vmul.f32 %v878, %v885
            %v890 = vmul.f32 %v880, %v887
            %v891 = vsub.f32 %v889, %v890
            %v892 = vmul.f32 %v878, %v886
            %v893 = vmul.f32 %v880, %v888
            %v894 = vsub.f32 %v892, %v893
            %v895 = vmul.f32 %v880, %v885
            %v896 = vmul.f32 %v878, %v887
            %v897 = vadd.f32 %v895, %v896
            %v898 = vmul.f32 %v880, %v886
            %v899 = vmul.f32 %v878, %v888
            %v900 = vadd.f32 %v898, %v899
            %901 = vst [vmem:[%s881] sm:$0x3] %v891
            %902 = vst [vmem:[%s882] sm:$0x3] %v894
            %903 = vst [vmem:[%s883] sm:$0x3] %v897
            %904 = vst [vmem:[%s884] sm:$0x3] %v900
            %s905 = smov [#allocation10]
            %s906 = smov [#allocation14]
            %v907 = vld [vmem:[%s905] ss:$0 sm:$0xff]
            %s909 = scalar_lea.vmem %s905, 4294967295
            %v910 = vld [vmem:[%s909] sm:$0x2]
            %v911 = vlaneseq
            %v912 = vshrl.u32 %v911, 7
            %vm913 = vcmp.eq.s32.totalorder %v912, 0
            %v914 = vsel %vm913, %v907, %v910
            %s915 = scalar_lea.vmem %s905, 1
            %v916 = vld [vmem:[%s915] ss:$0 sm:$0xff]
            %917 = vst [vmem:[%s905] sm:$0x3] %v914
            %v918 = vld [vmem:[%s906] ss:$0 sm:$0xff]
            %s919 = scalar_lea.vmem %s905, 1
            %920 = vst [vmem:[%s919] sm:$0x1] %v918
            %s921 = scalar_lea.vmem %s906, 1
            %v922 = vld [vmem:[%s921] sm:$0x1]
            %v923 = vlaneseq
            %v924 = vshrl.u32 %v923, 7
            %vm925 = vcmp.eq.s32.totalorder %v924, 1
            %v926 = vsel %vm925, %v916, %v922
            %v927 = vld [vmem:[%s906] ss:$0 sm:$0xff]
            %928 = vst [vmem:[%s906] sm:$0x3] %v926
            %s929 = smov [#allocation12]
            %s930 = smov [#allocation16]
            %v931 = vld [vmem:[%s929] ss:$0 sm:$0xff]
            %s933 = scalar_lea.vmem %s929, 4294967295
            %v934 = vld [vmem:[%s933] sm:$0x2]
            %v935 = vlaneseq
            %v936 = vshrl.u32 %v935, 7
            %vm937 = vcmp.eq.s32.totalorder %v936, 0
            %v938 = vsel %vm937, %v931, %v934
            %s939 = scalar_lea.vmem %s929, 1
            %v940 = vld [vmem:[%s939] ss:$0 sm:$0xff]
            %941 = vst [vmem:[%s929] sm:$0x3] %v938
            %v942 = vld [vmem:[%s930] ss:$0 sm:$0xff]
            %s943 = scalar_lea.vmem %s929, 1
            %944 = vst [vmem:[%s943] sm:$0x1] %v942
            %s945 = scalar_lea.vmem %s930, 1
            %v946 = vld [vmem:[%s945] sm:$0x1]
            %v947 = vlaneseq
            %v948 = vshrl.u32 %v947, 7
            %vm949 = vcmp.eq.s32.totalorder %v948, 1
            %v950 = vsel %vm949, %v940, %v946
            %v951 = vld [vmem:[%s930] ss:$0 sm:$0xff]
            %952 = vst [vmem:[%s930] sm:$0x3] %v950
          $region152: #{custom-call.18} parent=144 // loop_footer
            %s473 = sadd.s32 1, %s469
          $region153: #{custom-call.18} parent=144 // loop_footer_branch
            %468 = sbr.rel target = $region149
          $region154: #{custom-call.18} parent=144 // loop_exit
            _
          %s953 = sadd.s32 %s371, 1
        $region145: #{custom-call.18} parent=139 // loop_footer
          _
        $region146: #{custom-call.18} parent=139 // loop_footer_branch
          %370 = sbr.rel target = $region142
        $region147: #{custom-call.18} parent=139 // loop_exit
          _
        %s956 = sand.u32 %s17, 7
        %s957 = scalar_lea.vmem %s287, %s956 [#allocation8]
        %s958 = sand.u32 %s17, 7
        %s959 = scalar_lea.vmem %s293, %s958 [#allocation9]
        %s960 = smov [#allocation18]
        %s961 = smov %s957
        %v962 = vlaneseq
        %v963 = vand.u32 %v962, 127
        %v964 = vmov %v963
        %v965 = vlaneseq
        %v966 = vshrl.u32 %v965, 7
        %v967 = vmov %v966
        %v968 = vld [vmem:[%s960] sm:$0x3]
        %vm971 = vcmp.eq.s32.totalorder %v967, %v964
        %v972 = vsel %vm971, %v968, 0.0
        %v973 = vrot.slane %v972, 4
        %v974 = vadd.f32 %v972, %v973
        %v975 = vrot.slane %v974, 2
        %v976 = vadd.f32 %v974, %v975
        %v977 = vrot.slane %v976, 1
        %v978 = vadd.f32 %v976, %v977
        %979 = vst [vmem:[%s961] sm:$0x1] %v978
        %s980 = smov [#allocation21]
        %s981 = smov %s959
        %v982 = vlaneseq
        %v983 = vand.u32 %v982, 127
        %v984 = vmov %v983
        %v985 = vlaneseq
        %v986 = vshrl.u32 %v985, 7
        %v987 = vmov %v986
        %v988 = vld [vmem:[%s980] sm:$0x3]
        %vm991 = vcmp.eq.s32.totalorder %v987, %v984
        %v992 = vsel %vm991, %v988, 0.0
        %v993 = vrot.slane %v992, 4
        %v994 = vadd.f32 %v992, %v993
        %v995 = vrot.slane %v994, 2
        %v996 = vadd.f32 %v994, %v995
        %v997 = vrot.slane %v996, 1
        %v998 = vadd.f32 %v996, %v997
        %999 = vst [vmem:[%s981] sm:$0x1] %v998
        %s1001 = ssub.s32 4, 1
        %v1002 = vld [vmem:[#allocation10] sm:%s1001]
        %s1004 = ssub.s32 4, 1
        %1005 = vst [vmem:[%s297] sm:%s1004] %v1002
        %s1007 = ssub.s32 4, 1
        %v1008 = vld [vmem:[#allocation12] sm:%s1007]
        %s1010 = ssub.s32 4, 1
        %1011 = vst [vmem:[%s301] sm:%s1010] %v1008
        %s1013 = ssub.s32 4, 1
        %v1014 = vld [vmem:[#allocation14] sm:%s1013]
        %s1016 = ssub.s32 4, 1
        %1017 = vst [vmem:[%s305] sm:%s1016] %v1014
        %s1019 = ssub.s32 4, 1
        %v1020 = vld [vmem:[#allocation16] sm:%s1019]
        %s1022 = ssub.s32 4, 1
        %1023 = vst [vmem:[%s309] sm:%s1022] %v1020
        %s1024 = sand.u32 %s27, 1
        %s1025 = sand.u32 %s27, 1
        %s1026 = smul.addr %s1025, 8
        %s1027 = scalar_lea.vmem [#allocation8], %s1026
        %s1028 = sand.u32 %s55, 1
        %s1029 = sand.u32 %s55, 1
        %s1030 = smul.addr %s1029, 8
        %s1031 = scalar_lea.vmem [#allocation9], %s1030
        %s1032 = sand.u32 %s17, 1
        %s1033 = sand.u32 %s17, 1
        %s1034 = smul.addr %s1033, 2
        %s1035 = scalar_lea.vmem [#allocation11], %s1034
        %s1036 = sand.u32 %s17, 1
        %s1037 = sand.u32 %s17, 1
        %s1038 = smul.addr %s1037, 2
        %s1039 = scalar_lea.vmem [#allocation13], %s1038
        %s1040 = sand.u32 %s17, 1
        %s1041 = sand.u32 %s17, 1
        %s1042 = smul.addr %s1041, 2
        %s1043 = scalar_lea.vmem [#allocation15], %s1042
        %s1044 = sand.u32 %s17, 1
        %s1045 = sand.u32 %s17, 1
        %s1046 = smul.addr %s1045, 2
        %s1047 = scalar_lea.vmem [#allocation17], %s1046
        // Predicated region
        $region155: #{custom-call.18} parent=139 // pred_check
          %p1048 = pneg %p37
        $region156: #{custom-call.18} parent=139 // pred_check_branch
          %1050 = sbr.rel (%p1048) target = $region158
        $region157: #{custom-call.18} parent=139 // pred_region
          %s1051 = sshrl.u32 %s17, 3
          %s1052 = smul.addr %s1051, 8
          %s1053 = scalar_lea.vmem %s4, %s1052
          // Predicated region
          $region159: #{custom-call.18} parent=157 // pred_check
            _
          $region160: #{custom-call.18} parent=157 // pred_check_branch
            %1055 = sbr.rel (0) target = $region162
          $region161: #{custom-call.18} parent=157 // pred_region
            // Predicated region
            $region163: #{custom-call.18} parent=161 // pred_check
              _
            $region164: #{custom-call.18} parent=161 // pred_check_branch
              %1057 = sbr.rel (0) target = $region166
            $region165: #{custom-call.18} parent=161 // pred_region
              // Predicated region
              $region178: #{custom-call.18} parent=165 // pred_check
                _
              $region179: #{custom-call.18} parent=165 // pred_check_branch
                %1073 = sbr.rel (0) target = $region181
              $region180: #{custom-call.18} parent=165 // pred_region
                loop: start=0, step=1, limit=1
                $region182: #{custom-call.18} parent=180 // loop_pre_header
                  _
                $region183: #{custom-call.18} parent=180 // loop_header
                  %s1075 = sphi 0, %s1079
                  %p1076 = scmp.ge.s32.totalorder %s1075, 1
                  %s1080 = sphi %s1027, %s1027
                  %s1081 = sphi %s1053, %s1053
                $region184: #{custom-call.18} parent=180 // loop_header_branch
                  %1078 = sbr.rel (%p1076) target = $region188
                $region185: #{custom-call.18} parent=180 // loop_body
                  %v1082 = vld [vmem:[%s1080] sm:$0xff]
                  %1083 = vst [vmem:[%s1081] sm:$0xff] %v1082
                $region186: #{custom-call.18} parent=180 // loop_footer
                  %s1079 = sadd.s32 1, %s1075
                $region187: #{custom-call.18} parent=180 // loop_footer_branch
                  %1074 = sbr.rel target = $region183
                $region188: #{custom-call.18} parent=180 // loop_exit
                  _
              $region181: #{custom-call.18} parent=165 // pred_fallthru
                _
              // Predicated region
              $region189: #{custom-call.18} parent=165 // pred_check
                _
              $region190: #{custom-call.18} parent=165 // pred_check_branch
                %1085 = sbr.rel target = $region192
              $region191: #{custom-call.18} parent=165 // pred_region
                _
              $region192: #{custom-call.18} parent=165 // pred_fallthru
                _
            $region166: #{custom-call.18} parent=161 // pred_fallthru
              _
            // Predicated region
            $region167: #{custom-call.18} parent=161 // pred_check
              _
            $region168: #{custom-call.18} parent=161 // pred_check_branch
              %1059 = sbr.rel target = $region170
            $region169: #{custom-call.18} parent=161 // pred_region
              %s1061 = ssub.s32 256, 1
              loop: start=0, step=1, limit=1
              $region171: #{custom-call.18} parent=169 // loop_pre_header
                _
              $region172: #{custom-call.18} parent=169 // loop_header
                %s1063 = sphi 0, %s1067
                %p1064 = scmp.ge.s32.totalorder %s1063, 1
                %s1068 = sphi %s1027, %s1027
                %s1069 = sphi %s1053, %s1053
              $region173: #{custom-call.18} parent=169 // loop_header_branch
                %1066 = sbr.rel (%p1064) target = $region177
              $region174: #{custom-call.18} parent=169 // loop_body
                %v1070 = vld [vmem:[%s1068] sm:%s1061]
                %1071 = vst [vmem:[%s1069] sm:%s1061] %v1070
              $region175: #{custom-call.18} parent=169 // loop_footer
                %s1067 = sadd.s32 1, %s1063
              $region176: #{custom-call.18} parent=169 // loop_footer_branch
                %1062 = sbr.rel target = $region172
              $region177: #{custom-call.18} parent=169 // loop_exit
                _
            $region170: #{custom-call.18} parent=161 // pred_fallthru
              _
          $region162: #{custom-call.18} parent=157 // pred_fallthru
            _
          %1086 = vnop
        $region158: #{custom-call.18} parent=139 // pred_fallthru
          _
        // Predicated region
        $region193: #{custom-call.18} parent=139 // pred_check
          %p1087 = pneg %p65
        $region194: #{custom-call.18} parent=139 // pred_check_branch
          %1089 = sbr.rel (%p1087) target = $region196
        $region195: #{custom-call.18} parent=139 // pred_region
          %s1090 = sshrl.u32 %s17, 3
          %s1091 = smul.addr %s1090, 8
          %s1092 = scalar_lea.vmem %s5, %s1091
          // Predicated region
          $region197: #{custom-call.18} parent=195 // pred_check
            _
          $region198: #{custom-call.18} parent=195 // pred_check_branch
            %1094 = sbr.rel (0) target = $region200
          $region199: #{custom-call.18} parent=195 // pred_region
            // Predicated region
            $region201: #{custom-call.18} parent=199 // pred_check
              _
            $region202: #{custom-call.18} parent=199 // pred_check_branch
              %1096 = sbr.rel (0) target = $region204
            $region203: #{custom-call.18} parent=199 // pred_region
              // Predicated region
              $region216: #{custom-call.18} parent=203 // pred_check
                _
              $region217: #{custom-call.18} parent=203 // pred_check_branch
                %1112 = sbr.rel (0) target = $region219
              $region218: #{custom-call.18} parent=203 // pred_region
                loop: start=0, step=1, limit=1
                $region220: #{custom-call.18} parent=218 // loop_pre_header
                  _
                $region221: #{custom-call.18} parent=218 // loop_header
                  %s1114 = sphi 0, %s1118
                  %p1115 = scmp.ge.s32.totalorder %s1114, 1
                  %s1119 = sphi %s1031, %s1031
                  %s1120 = sphi %s1092, %s1092
                $region222: #{custom-call.18} parent=218 // loop_header_branch
                  %1117 = sbr.rel (%p1115) target = $region226
                $region223: #{custom-call.18} parent=218 // loop_body
                  %v1121 = vld [vmem:[%s1119] sm:$0xff]
                  %1122 = vst [vmem:[%s1120] sm:$0xff] %v1121
                $region224: #{custom-call.18} parent=218 // loop_footer
                  %s1118 = sadd.s32 1, %s1114
                $region225: #{custom-call.18} parent=218 // loop_footer_branch
                  %1113 = sbr.rel target = $region221
                $region226: #{custom-call.18} parent=218 // loop_exit
                  _
              $region219: #{custom-call.18} parent=203 // pred_fallthru
                _
              // Predicated region
              $region227: #{custom-call.18} parent=203 // pred_check
                _
              $region228: #{custom-call.18} parent=203 // pred_check_branch
                %1124 = sbr.rel target = $region230
              $region229: #{custom-call.18} parent=203 // pred_region
                _
              $region230: #{custom-call.18} parent=203 // pred_fallthru
                _
            $region204: #{custom-call.18} parent=199 // pred_fallthru
              _
            // Predicated region
            $region205: #{custom-call.18} parent=199 // pred_check
              _
            $region206: #{custom-call.18} parent=199 // pred_check_branch
              %1098 = sbr.rel target = $region208
            $region207: #{custom-call.18} parent=199 // pred_region
              %s1100 = ssub.s32 256, 1
              loop: start=0, step=1, limit=1
              $region209: #{custom-call.18} parent=207 // loop_pre_header
                _
              $region210: #{custom-call.18} parent=207 // loop_header
                %s1102 = sphi 0, %s1106
                %p1103 = scmp.ge.s32.totalorder %s1102, 1
                %s1107 = sphi %s1031, %s1031
                %s1108 = sphi %s1092, %s1092
              $region211: #{custom-call.18} parent=207 // loop_header_branch
                %1105 = sbr.rel (%p1103) target = $region215
              $region212: #{custom-call.18} parent=207 // loop_body
                %v1109 = vld [vmem:[%s1107] sm:%s1100]
                %1110 = vst [vmem:[%s1108] sm:%s1100] %v1109
              $region213: #{custom-call.18} parent=207 // loop_footer
                %s1106 = sadd.s32 1, %s1102
              $region214: #{custom-call.18} parent=207 // loop_footer_branch
                %1101 = sbr.rel target = $region210
              $region215: #{custom-call.18} parent=207 // loop_exit
                _
            $region208: #{custom-call.18} parent=199 // pred_fallthru
              _
          $region200: #{custom-call.18} parent=195 // pred_fallthru
            _
          %1125 = vnop
        $region196: #{custom-call.18} parent=139 // pred_fallthru
          _
        %s1126 = smul.addr %s17, 2
        %s1127 = scalar_lea.vmem %s6, %s1126
        // Predicated region
        $region231: #{custom-call.18} parent=139 // pred_check
          _
        $region232: #{custom-call.18} parent=139 // pred_check_branch
          %1129 = sbr.rel (0) target = $region234
        $region233: #{custom-call.18} parent=139 // pred_region
          // Predicated region
          $region235: #{custom-call.18} parent=233 // pred_check
            _
          $region236: #{custom-call.18} parent=233 // pred_check_branch
            %1131 = sbr.rel target = $region238
          $region237: #{custom-call.18} parent=233 // pred_region
            // Predicated region
            $region250: #{custom-call.18} parent=237 // pred_check
              _
            $region251: #{custom-call.18} parent=237 // pred_check_branch
              %1147 = sbr.rel (0) target = $region253
            $region252: #{custom-call.18} parent=237 // pred_region
              %s1149 = ssub.s32 4, 1
              loop: start=0, step=1, limit=1
              $region254: #{custom-call.18} parent=252 // loop_pre_header
                _
              $region255: #{custom-call.18} parent=252 // loop_header
                %s1151 = sphi 0, %s1155
                %p1152 = scmp.ge.s32.totalorder %s1151, 1
                %s1156 = sphi %s1035, %s1035
                %s1157 = sphi %s1127, %s1127
              $region256: #{custom-call.18} parent=252 // loop_header_branch
                %1154 = sbr.rel (%p1152) target = $region260
              $region257: #{custom-call.18} parent=252 // loop_body
                %v1158 = vld [vmem:[%s1156] sm:%s1149]
                %1159 = vst [vmem:[%s1157] sm:%s1149] %v1158
              $region258: #{custom-call.18} parent=252 // loop_footer
                %s1155 = sadd.s32 1, %s1151
              $region259: #{custom-call.18} parent=252 // loop_footer_branch
                %1150 = sbr.rel target = $region255
              $region260: #{custom-call.18} parent=252 // loop_exit
                _
            $region253: #{custom-call.18} parent=237 // pred_fallthru
              _
          $region238: #{custom-call.18} parent=233 // pred_fallthru
            _
          // Predicated region
          $region239: #{custom-call.18} parent=233 // pred_check
            _
          $region240: #{custom-call.18} parent=233 // pred_check_branch
            %1133 = sbr.rel (0) target = $region242
          $region241: #{custom-call.18} parent=233 // pred_region
            %s1135 = ssub.s32 4, 1
            loop: start=0, step=1, limit=1
            $region243: #{custom-call.18} parent=241 // loop_pre_header
              _
            $region244: #{custom-call.18} parent=241 // loop_header
              %s1137 = sphi 0, %s1141
              %p1138 = scmp.ge.s32.totalorder %s1137, 1
              %s1142 = sphi %s1035, %s1035
              %s1143 = sphi %s1127, %s1127
            $region245: #{custom-call.18} parent=241 // loop_header_branch
              %1140 = sbr.rel (%p1138) target = $region249
            $region246: #{custom-call.18} parent=241 // loop_body
              %v1144 = vld [vmem:[%s1142] sm:%s1135]
              %1145 = vst [vmem:[%s1143] sm:%s1135] %v1144
            $region247: #{custom-call.18} parent=241 // loop_footer
              %s1141 = sadd.s32 1, %s1137
            $region248: #{custom-call.18} parent=241 // loop_footer_branch
              %1136 = sbr.rel target = $region244
            $region249: #{custom-call.18} parent=241 // loop_exit
              _
          $region242: #{custom-call.18} parent=233 // pred_fallthru
            _
        $region234: #{custom-call.18} parent=139 // pred_fallthru
          _
        %1160 = vnop
        %s1161 = smul.addr %s17, 2
        %s1162 = scalar_lea.vmem %s7, %s1161
        // Predicated region
        $region261: #{custom-call.18} parent=139 // pred_check
          _
        $region262: #{custom-call.18} parent=139 // pred_check_branch
          %1164 = sbr.rel (0) target = $region264
        $region263: #{custom-call.18} parent=139 // pred_region
          // Predicated region
          $region265: #{custom-call.18} parent=263 // pred_check
            _
          $region266: #{custom-call.18} parent=263 // pred_check_branch
            %1166 = sbr.rel target = $region268
          $region267: #{custom-call.18} parent=263 // pred_region
            // Predicated region
            $region280: #{custom-call.18} parent=267 // pred_check
              _
            $region281: #{custom-call.18} parent=267 // pred_check_branch
              %1182 = sbr.rel (0) target = $region283
            $region282: #{custom-call.18} parent=267 // pred_region
              %s1184 = ssub.s32 4, 1
              loop: start=0, step=1, limit=1
              $region284: #{custom-call.18} parent=282 // loop_pre_header
                _
              $region285: #{custom-call.18} parent=282 // loop_header
                %s1186 = sphi 0, %s1190
                %p1187 = scmp.ge.s32.totalorder %s1186, 1
                %s1191 = sphi %s1039, %s1039
                %s1192 = sphi %s1162, %s1162
              $region286: #{custom-call.18} parent=282 // loop_header_branch
                %1189 = sbr.rel (%p1187) target = $region290
              $region287: #{custom-call.18} parent=282 // loop_body
                %v1193 = vld [vmem:[%s1191] sm:%s1184]
                %1194 = vst [vmem:[%s1192] sm:%s1184] %v1193
              $region288: #{custom-call.18} parent=282 // loop_footer
                %s1190 = sadd.s32 1, %s1186
              $region289: #{custom-call.18} parent=282 // loop_footer_branch
                %1185 = sbr.rel target = $region285
              $region290: #{custom-call.18} parent=282 // loop_exit
                _
            $region283: #{custom-call.18} parent=267 // pred_fallthru
              _
          $region268: #{custom-call.18} parent=263 // pred_fallthru
            _
          // Predicated region
          $region269: #{custom-call.18} parent=263 // pred_check
            _
          $region270: #{custom-call.18} parent=263 // pred_check_branch
            %1168 = sbr.rel (0) target = $region272
          $region271: #{custom-call.18} parent=263 // pred_region
            %s1170 = ssub.s32 4, 1
            loop: start=0, step=1, limit=1
            $region273: #{custom-call.18} parent=271 // loop_pre_header
              _
            $region274: #{custom-call.18} parent=271 // loop_header
              %s1172 = sphi 0, %s1176
              %p1173 = scmp.ge.s32.totalorder %s1172, 1
              %s1177 = sphi %s1039, %s1039
              %s1178 = sphi %s1162, %s1162
            $region275: #{custom-call.18} parent=271 // loop_header_branch
              %1175 = sbr.rel (%p1173) target = $region279
            $region276: #{custom-call.18} parent=271 // loop_body
              %v1179 = vld [vmem:[%s1177] sm:%s1170]
              %1180 = vst [vmem:[%s1178] sm:%s1170] %v1179
            $region277: #{custom-call.18} parent=271 // loop_footer
              %s1176 = sadd.s32 1, %s1172
            $region278: #{custom-call.18} parent=271 // loop_footer_branch
              %1171 = sbr.rel target = $region274
            $region279: #{custom-call.18} parent=271 // loop_exit
              _
          $region272: #{custom-call.18} parent=263 // pred_fallthru
            _
        $region264: #{custom-call.18} parent=139 // pred_fallthru
          _
        %1195 = vnop
        %s1196 = smul.addr %s17, 2
        %s1197 = scalar_lea.vmem %s8, %s1196
        // Predicated region
        $region291: #{custom-call.18} parent=139 // pred_check
          _
        $region292: #{custom-call.18} parent=139 // pred_check_branch
          %1199 = sbr.rel (0) target = $region294
        $region293: #{custom-call.18} parent=139 // pred_region
          // Predicated region
          $region295: #{custom-call.18} parent=293 // pred_check
            _
          $region296: #{custom-call.18} parent=293 // pred_check_branch
            %1201 = sbr.rel target = $region298
          $region297: #{custom-call.18} parent=293 // pred_region
            // Predicated region
            $region310: #{custom-call.18} parent=297 // pred_check
              _
            $region311: #{custom-call.18} parent=297 // pred_check_branch
              %1217 = sbr.rel (0) target = $region313
            $region312: #{custom-call.18} parent=297 // pred_region
              %s1219 = ssub.s32 4, 1
              loop: start=0, step=1, limit=1
              $region314: #{custom-call.18} parent=312 // loop_pre_header
                _
              $region315: #{custom-call.18} parent=312 // loop_header
                %s1221 = sphi 0, %s1225
                %p1222 = scmp.ge.s32.totalorder %s1221, 1
                %s1226 = sphi %s1043, %s1043
                %s1227 = sphi %s1197, %s1197
              $region316: #{custom-call.18} parent=312 // loop_header_branch
                %1224 = sbr.rel (%p1222) target = $region320
              $region317: #{custom-call.18} parent=312 // loop_body
                %v1228 = vld [vmem:[%s1226] sm:%s1219]
                %1229 = vst [vmem:[%s1227] sm:%s1219] %v1228
              $region318: #{custom-call.18} parent=312 // loop_footer
                %s1225 = sadd.s32 1, %s1221
              $region319: #{custom-call.18} parent=312 // loop_footer_branch
                %1220 = sbr.rel target = $region315
              $region320: #{custom-call.18} parent=312 // loop_exit
                _
            $region313: #{custom-call.18} parent=297 // pred_fallthru
              _
          $region298: #{custom-call.18} parent=293 // pred_fallthru
            _
          // Predicated region
          $region299: #{custom-call.18} parent=293 // pred_check
            _
          $region300: #{custom-call.18} parent=293 // pred_check_branch
            %1203 = sbr.rel (0) target = $region302
          $region301: #{custom-call.18} parent=293 // pred_region
            %s1205 = ssub.s32 4, 1
            loop: start=0, step=1, limit=1
            $region303: #{custom-call.18} parent=301 // loop_pre_header
              _
            $region304: #{custom-call.18} parent=301 // loop_header
              %s1207 = sphi 0, %s1211
              %p1208 = scmp.ge.s32.totalorder %s1207, 1
              %s1212 = sphi %s1043, %s1043
              %s1213 = sphi %s1197, %s1197
            $region305: #{custom-call.18} parent=301 // loop_header_branch
              %1210 = sbr.rel (%p1208) target = $region309
            $region306: #{custom-call.18} parent=301 // loop_body
              %v1214 = vld [vmem:[%s1212] sm:%s1205]
              %1215 = vst [vmem:[%s1213] sm:%s1205] %v1214
            $region307: #{custom-call.18} parent=301 // loop_footer
              %s1211 = sadd.s32 1, %s1207
            $region308: #{custom-call.18} parent=301 // loop_footer_branch
              %1206 = sbr.rel target = $region304
            $region309: #{custom-call.18} parent=301 // loop_exit
              _
          $region302: #{custom-call.18} parent=293 // pred_fallthru
            _
        $region294: #{custom-call.18} parent=139 // pred_fallthru
          _
        %1230 = vnop
        %s1231 = smul.addr %s17, 2
        %s1232 = scalar_lea.vmem %s9, %s1231
        // Predicated region
        $region321: #{custom-call.18} parent=139 // pred_check
          _
        $region322: #{custom-call.18} parent=139 // pred_check_branch
          %1234 = sbr.rel (0) target = $region324
        $region323: #{custom-call.18} parent=139 // pred_region
          // Predicated region
          $region325: #{custom-call.18} parent=323 // pred_check
            _
          $region326: #{custom-call.18} parent=323 // pred_check_branch
            %1236 = sbr.rel target = $region328
          $region327: #{custom-call.18} parent=323 // pred_region
            // Predicated region
            $region340: #{custom-call.18} parent=327 // pred_check
              _
            $region341: #{custom-call.18} parent=327 // pred_check_branch
              %1252 = sbr.rel (0) target = $region343
            $region342: #{custom-call.18} parent=327 // pred_region
              %s1254 = ssub.s32 4, 1
              loop: start=0, step=1, limit=1
              $region344: #{custom-call.18} parent=342 // loop_pre_header
                _
              $region345: #{custom-call.18} parent=342 // loop_header
                %s1256 = sphi 0, %s1260
                %p1257 = scmp.ge.s32.totalorder %s1256, 1
                %s1261 = sphi %s1047, %s1047
                %s1262 = sphi %s1232, %s1232
              $region346: #{custom-call.18} parent=342 // loop_header_branch
                %1259 = sbr.rel (%p1257) target = $region350
              $region347: #{custom-call.18} parent=342 // loop_body
                %v1263 = vld [vmem:[%s1261] sm:%s1254]
                %1264 = vst [vmem:[%s1262] sm:%s1254] %v1263
              $region348: #{custom-call.18} parent=342 // loop_footer
                %s1260 = sadd.s32 1, %s1256
              $region349: #{custom-call.18} parent=342 // loop_footer_branch
                %1255 = sbr.rel target = $region345
              $region350: #{custom-call.18} parent=342 // loop_exit
                _
            $region343: #{custom-call.18} parent=327 // pred_fallthru
              _
          $region328: #{custom-call.18} parent=323 // pred_fallthru
            _
          // Predicated region
          $region329: #{custom-call.18} parent=323 // pred_check
            _
          $region330: #{custom-call.18} parent=323 // pred_check_branch
            %1238 = sbr.rel (0) target = $region332
          $region331: #{custom-call.18} parent=323 // pred_region
            %s1240 = ssub.s32 4, 1
            loop: start=0, step=1, limit=1
            $region333: #{custom-call.18} parent=331 // loop_pre_header
              _
            $region334: #{custom-call.18} parent=331 // loop_header
              %s1242 = sphi 0, %s1246
              %p1243 = scmp.ge.s32.totalorder %s1242, 1
              %s1247 = sphi %s1047, %s1047
              %s1248 = sphi %s1232, %s1232
            $region335: #{custom-call.18} parent=331 // loop_header_branch
              %1245 = sbr.rel (%p1243) target = $region339
            $region336: #{custom-call.18} parent=331 // loop_body
              %v1249 = vld [vmem:[%s1247] sm:%s1240]
              %1250 = vst [vmem:[%s1248] sm:%s1240] %v1249
            $region337: #{custom-call.18} parent=331 // loop_footer
              %s1246 = sadd.s32 1, %s1242
            $region338: #{custom-call.18} parent=331 // loop_footer_branch
              %1241 = sbr.rel target = $region334
            $region339: #{custom-call.18} parent=331 // loop_exit
              _
          $region332: #{custom-call.18} parent=323 // pred_fallthru
            _
        $region324: #{custom-call.18} parent=139 // pred_fallthru
          _
        %1265 = vnop
      $region140: #{custom-call.18} parent=5 // pred_fallthru
        _
      %p1266 = scmp.le.s32.totalorder 2, %s12
      // Predicated region
      $region351: #{custom-call.18} parent=5 // pred_check
        %p1267 = pneg %p1266
      $region352: #{custom-call.18} parent=5 // pred_check_branch
        %1269 = sbr.rel (%p1267) target = $region354
      $region353: #{custom-call.18} parent=5 // pred_region
        %s1270 = ssub.s32 %s12, 2
        // Predicated region
        $region355: #{custom-call.18} parent=353 // pred_check
          %p1271 = pneg %p43
        $region356: #{custom-call.18} parent=353 // pred_check_branch
          %1273 = sbr.rel (%p1271) target = $region358
        $region357: #{custom-call.18} parent=353 // pred_region
          %s1274 = sand.u32 %s28, 1
          %s1275 = sand.u32 %s28, 1
          %s1276 = smul.addr %s1275, 8
          %s1277 = scalar_lea.vmem [#allocation8], %s1276
        $region358: #{custom-call.18} parent=353 // pred_fallthru
          _
        // Predicated region
        $region359: #{custom-call.18} parent=353 // pred_check
          %p1278 = pneg %p71
        $region360: #{custom-call.18} parent=353 // pred_check_branch
          %1280 = sbr.rel (%p1278) target = $region362
        $region361: #{custom-call.18} parent=353 // pred_region
          %s1281 = sand.u32 %s56, 1
          %s1282 = sand.u32 %s56, 1
          %s1283 = smul.addr %s1282, 8
          %s1284 = scalar_lea.vmem [#allocation9], %s1283
        $region362: #{custom-call.18} parent=353 // pred_fallthru
          _
        %s1285 = sand.u32 %s18, 1
        %s1286 = sand.u32 %s18, 1
        %s1287 = smul.addr %s1286, 2
        %s1288 = scalar_lea.vmem [#allocation11], %s1287
        %s1289 = sand.u32 %s18, 1
        %s1290 = sand.u32 %s18, 1
        %s1291 = smul.addr %s1290, 2
        %s1292 = scalar_lea.vmem [#allocation13], %s1291
        %s1293 = sand.u32 %s18, 1
        %s1294 = sand.u32 %s18, 1
        %s1295 = smul.addr %s1294, 2
        %s1296 = scalar_lea.vmem [#allocation15], %s1295
        %s1297 = sand.u32 %s18, 1
        %s1298 = sand.u32 %s18, 1
        %s1299 = smul.addr %s1298, 2
        %s1300 = scalar_lea.vmem [#allocation17], %s1299
      $region354: #{custom-call.18} parent=5 // pred_fallthru
        _
    $region6: #{custom-call.18} parent=1 // loop_footer
      %s16 = sadd.s32 1, %s12
    $region7: #{custom-call.18} parent=1 // loop_footer_branch
      %11 = sbr.rel target = $region3
    $region8: #{custom-call.18} parent=1 // loop_exit
      _

// kernel: custom-call.26
$region0: #{custom-call.26}
  %s0 = inlined_call_operand.vmem [shape: f32[2,2,2], index: 0, kind: input, shape index: {}]
  %s1 = inlined_call_operand.vmem [shape: f32[2,2,2], index: 1, kind: input, shape index: {}]
  %s2 = inlined_call_operand.vmem [shape: f32[2,2,2], index: 2, kind: input, shape index: {}]
  %s3 = inlined_call_operand.vmem [shape: f32[2,2,2], index: 3, kind: input, shape index: {}]
  %s4 = inlined_call_operand.vmem [shape: f32[2,2], index: 4, kind: output, shape index: {0}]
  %s5 = inlined_call_operand.vmem [shape: f32[2,2], index: 5, kind: output, shape index: {1}]
  %s6 = inlined_call_operand.vmem [shape: f32[2,2,2], index: 6, kind: output, shape index: {2}]
  %s7 = inlined_call_operand.vmem [shape: f32[2,2,2], index: 7, kind: output, shape index: {3}]
  %s8 = inlined_call_operand.vmem [shape: f32[2,2,2], index: 8, kind: output, shape index: {4}]
  %s9 = inlined_call_operand.vmem [shape: f32[2,2,2], index: 9, kind: output, shape index: {5}]
  %10 = xla_tuple %s4, %s5, %s6, %s7, %s8, %s9
  $region1: #{custom-call.26} parent=0
    #allocation0 [shape = 'u8[4096]{0}', space=vmem, size = 0x1000, scoped, tag = 'operand span for operand 0']
    #allocation1 [shape = 'u8[2048]{0}', space=vmem, size = 0x800, scoped, tag = 'packed  for operand 0']
    #allocation2 [shape = 'u8[4096]{0}', space=vmem, size = 0x1000, scoped, tag = 'operand span for operand 1']
    #allocation3 [shape = 'u8[2048]{0}', space=vmem, size = 0x800, scoped, tag = 'packed  for operand 1']
    #allocation4 [shape = 'u8[4096]{0}', space=vmem, size = 0x1000, scoped, tag = 'operand span for operand 2']
    #allocation5 [shape = 'u8[2048]{0}', space=vmem, size = 0x800, scoped, tag = 'packed  for operand 2']
    #allocation6 [shape = 'u8[4096]{0}', space=vmem, size = 0x1000, scoped, tag = 'operand span for operand 3']
    #allocation7 [shape = 'u8[2048]{0}', space=vmem, size = 0x800, scoped, tag = 'packed  for operand 3']
    #allocation8 [shape = 'u8[4096]{0}', space=vmem, size = 0x1000, scoped, tag = 'operand span for operand 4']
    #allocation9 [shape = 'u8[2048]{0}', space=vmem, size = 0x800, scoped, tag = 'packed  for operand 4']
    #allocation10 [shape = 'u8[4096]{0}', space=vmem, size = 0x1000, scoped, tag = 'operand span for operand 5']
    #allocation11 [shape = 'u8[2048]{0}', space=vmem, size = 0x800, scoped, tag = 'packed  for operand 5']
    #allocation12 [shape = 'u8[4096]{0}', space=vmem, size = 0x1000, scoped, tag = 'operand span for operand 6']
    #allocation13 [shape = 'u8[2048]{0}', space=vmem, size = 0x800, scoped, tag = 'packed  for operand 6']
    #allocation14 [shape = 'u8[4096]{0}', space=vmem, size = 0x1000, scoped, tag = 'operand span for operand 7']
    #allocation15 [shape = 'u8[2048]{0}', space=vmem, size = 0x800, scoped, tag = 'packed  for operand 7']
    #allocation16 [shape = 'u8[4096]{0}', space=vmem, size = 0x1000, scoped, tag = 'operand span for operand 8']
    #allocation17 [shape = 'u8[2048]{0}', space=vmem, size = 0x800, scoped, tag = 'packed  for operand 8']
    #allocation18 [shape = 'u8[4096]{0}', space=vmem, size = 0x1000, scoped, tag = 'operand span for operand 9']
    #allocation19 [shape = 'u8[2048]{0}', space=vmem, size = 0x800, scoped, tag = 'packed  for operand 9']
    loop: start=0, step=1, limit=4
    $region2: #{custom-call.26} parent=1 // loop_pre_header
      _
    $region3: #{custom-call.26} parent=1 // loop_header
      %s12 = sphi 0, %s16
      %p13 = scmp.ge.s32.totalorder %s12, 4
      %s24 = sphi 0, %s26
      %s27 = sphi 0, %s24
      %s28 = sphi 0, %s27
      %s44 = sphi 0, %s28
      %s52 = sphi 0, %s54
      %s55 = sphi 0, %s52
      %s56 = sphi 0, %s55
      %s72 = sphi 0, %s56
    $region4: #{custom-call.26} parent=1 // loop_header_branch
      %15 = sbr.rel (%p13) target = $region8
    $region5: #{custom-call.26} parent=1 // loop_body
      %s17 = ssub.s32 %s12, 1
      %s18 = ssub.s32 %s12, 2
      %s19 = sadd.s32 %s12, 1
      %s20 = sshrl.u32 %s12, 3
      %s21 = sshrl.u32 %s19, 3
      %s22 = ssub.s32 %s20, %s21
      %p23 = scmp.eq.s32.totalorder %s22, 0
      %s25 = sadd.s32 %s24, 1
      %s26 = scalar_select %p23, %s24, %s25
      %p29 = pneg %p23
      %p30 = scmp.eq.s32.totalorder %s12, 1
      %p31 = por %p29, %p30
      %p32 = scmp.ne.s32.totalorder %s24, %s27
      %p33 = scmp.eq.s32.totalorder %s12, 0
      %p34 = por %p32, %p33
      %p35 = scmp.ne.s32.totalorder %s24, %s27
      %p36 = scmp.eq.s32.totalorder %s17, 1
      %p37 = por %p35, %p36
      %p38 = scmp.ne.s32.totalorder %s27, %s28
      %p39 = scmp.eq.s32.totalorder %s17, 0
      %p40 = por %p38, %p39
      %p41 = scmp.ne.s32.totalorder %s27, %s28
      %p42 = scmp.eq.s32.totalorder %s18, 1
      %p43 = por %p41, %p42
      %p45 = scmp.ne.s32.totalorder %s28, %s44
      %p46 = scmp.eq.s32.totalorder %s18, 0
      %p47 = por %p45, %p46
      %s48 = sshrl.u32 %s12, 3
      %s49 = sshrl.u32 %s19, 3
      %s50 = ssub.s32 %s48, %s49
      %p51 = scmp.eq.s32.totalorder %s50, 0
      %s53 = sadd.s32 %s52, 1
      %s54 = scalar_select %p51, %s52, %s53
      %p57 = pneg %p51
      %p58 = scmp.eq.s32.totalorder %s12, 1
      %p59 = por %p57, %p58
      %p60 = scmp.ne.s32.totalorder %s52, %s55
      %p61 = scmp.eq.s32.totalorder %s12, 0
      %p62 = por %p60, %p61
      %p63 = scmp.ne.s32.totalorder %s52, %s55
      %p64 = scmp.eq.s32.totalorder %s17, 1
      %p65 = por %p63, %p64
      %p66 = scmp.ne.s32.totalorder %s55, %s56
      %p67 = scmp.eq.s32.totalorder %s17, 0
      %p68 = por %p66, %p67
      %p69 = scmp.ne.s32.totalorder %s55, %s56
      %p70 = scmp.eq.s32.totalorder %s18, 1
      %p71 = por %p69, %p70
      %p73 = scmp.ne.s32.totalorder %s56, %s72
      %p74 = scmp.eq.s32.totalorder %s18, 0
      %p75 = por %p73, %p74
      %p76 = scmp.le.s32.totalorder 1, %s12
      %p77 = scmp.lt.s32.totalorder %s12, 3
      %p78 = pnand %p76, %p77
      %p79 = pneg %p78
      // Predicated region
      $region9: #{custom-call.26} parent=5 // pred_check
        _
      $region10: #{custom-call.26} parent=5 // pred_check_branch
        %81 = sbr.rel (%p78) target = $region12
      $region11: #{custom-call.26} parent=5 // pred_region
        %s82 = ssub.s32 %s12, 1
      $region12: #{custom-call.26} parent=5 // pred_fallthru
        _
      %p83 = scmp.lt.s32.totalorder %s12, 2
      // Predicated region
      $region13: #{custom-call.26} parent=5 // pred_check
        %p84 = pneg %p83
      $region14: #{custom-call.26} parent=5 // pred_check_branch
        %86 = sbr.rel (%p84) target = $region16
      $region15: #{custom-call.26} parent=5 // pred_region
        %s87 = sand.u32 %s12, 1
        %s88 = sand.u32 %s12, 1
        %s89 = smul.addr %s88, 2
        %s90 = scalar_lea.vmem [#allocation1], %s89
        %s91 = smul.addr %s12, 2
        %s92 = scalar_lea.vmem %s0, %s91
        // Predicated region
        $region17: #{custom-call.26} parent=15 // pred_check
          _
        $region18: #{custom-call.26} parent=15 // pred_check_branch
          %94 = sbr.rel (0) target = $region20
        $region19: #{custom-call.26} parent=15 // pred_region
          // Predicated region
          $region21: #{custom-call.26} parent=19 // pred_check
            _
          $region22: #{custom-call.26} parent=19 // pred_check_branch
            %96 = sbr.rel target = $region24
          $region23: #{custom-call.26} parent=19 // pred_region
            // Predicated region
            $region36: #{custom-call.26} parent=23 // pred_check
              _
            $region37: #{custom-call.26} parent=23 // pred_check_branch
              %112 = sbr.rel (0) target = $region39
            $region38: #{custom-call.26} parent=23 // pred_region
              %s114 = ssub.s32 4, 1
              loop: start=0, step=1, limit=1
              $region40: #{custom-call.26} parent=38 // loop_pre_header
                _
              $region41: #{custom-call.26} parent=38 // loop_header
                %s116 = sphi 0, %s120
                %p117 = scmp.ge.s32.totalorder %s116, 1
                %s121 = sphi %s92, %s92
                %s122 = sphi %s90, %s90
              $region42: #{custom-call.26} parent=38 // loop_header_branch
                %119 = sbr.rel (%p117) target = $region46
              $region43: #{custom-call.26} parent=38 // loop_body
                %v123 = vld [vmem:[%s121] sm:%s114]
                %124 = vst [vmem:[%s122] sm:%s114] %v123
              $region44: #{custom-call.26} parent=38 // loop_footer
                %s120 = sadd.s32 1, %s116
              $region45: #{custom-call.26} parent=38 // loop_footer_branch
                %115 = sbr.rel target = $region41
              $region46: #{custom-call.26} parent=38 // loop_exit
                _
            $region39: #{custom-call.26} parent=23 // pred_fallthru
              _
          $region24: #{custom-call.26} parent=19 // pred_fallthru
            _
          // Predicated region
          $region25: #{custom-call.26} parent=19 // pred_check
            _
          $region26: #{custom-call.26} parent=19 // pred_check_branch
            %98 = sbr.rel (0) target = $region28
          $region27: #{custom-call.26} parent=19 // pred_region
            %s100 = ssub.s32 4, 1
            loop: start=0, step=1, limit=1
            $region29: #{custom-call.26} parent=27 // loop_pre_header
              _
            $region30: #{custom-call.26} parent=27 // loop_header
              %s102 = sphi 0, %s106
              %p103 = scmp.ge.s32.totalorder %s102, 1
              %s107 = sphi %s92, %s92
              %s108 = sphi %s90, %s90
            $region31: #{custom-call.26} parent=27 // loop_header_branch
              %105 = sbr.rel (%p103) target = $region35
            $region32: #{custom-call.26} parent=27 // loop_body
              %v109 = vld [vmem:[%s107] sm:%s100]
              %110 = vst [vmem:[%s108] sm:%s100] %v109
            $region33: #{custom-call.26} parent=27 // loop_footer
              %s106 = sadd.s32 1, %s102
            $region34: #{custom-call.26} parent=27 // loop_footer_branch
              %101 = sbr.rel target = $region30
            $region35: #{custom-call.26} parent=27 // loop_exit
              _
          $region28: #{custom-call.26} parent=19 // pred_fallthru
            _
        $region20: #{custom-call.26} parent=15 // pred_fallthru
          _
        %125 = vnop
        %s126 = sand.u32 %s12, 1
        %s127 = sand.u32 %s12, 1
        %s128 = smul.addr %s127, 2
        %s129 = scalar_lea.vmem [#allocation3], %s128
        %s130 = smul.addr %s12, 2
        %s131 = scalar_lea.vmem %s1, %s130
        // Predicated region
        $region47: #{custom-call.26} parent=15 // pred_check
          _
        $region48: #{custom-call.26} parent=15 // pred_check_branch
          %133 = sbr.rel (0) target = $region50
        $region49: #{custom-call.26} parent=15 // pred_region
          // Predicated region
          $region51: #{custom-call.26} parent=49 // pred_check
            _
          $region52: #{custom-call.26} parent=49 // pred_check_branch
            %135 = sbr.rel target = $region54
          $region53: #{custom-call.26} parent=49 // pred_region
            // Predicated region
            $region66: #{custom-call.26} parent=53 // pred_check
              _
            $region67: #{custom-call.26} parent=53 // pred_check_branch
              %151 = sbr.rel (0) target = $region69
            $region68: #{custom-call.26} parent=53 // pred_region
              %s153 = ssub.s32 4, 1
              loop: start=0, step=1, limit=1
              $region70: #{custom-call.26} parent=68 // loop_pre_header
                _
              $region71: #{custom-call.26} parent=68 // loop_header
                %s155 = sphi 0, %s159
                %p156 = scmp.ge.s32.totalorder %s155, 1
                %s160 = sphi %s131, %s131
                %s161 = sphi %s129, %s129
              $region72: #{custom-call.26} parent=68 // loop_header_branch
                %158 = sbr.rel (%p156) target = $region76
              $region73: #{custom-call.26} parent=68 // loop_body
                %v162 = vld [vmem:[%s160] sm:%s153]
                %163 = vst [vmem:[%s161] sm:%s153] %v162
              $region74: #{custom-call.26} parent=68 // loop_footer
                %s159 = sadd.s32 1, %s155
              $region75: #{custom-call.26} parent=68 // loop_footer_branch
                %154 = sbr.rel target = $region71
              $region76: #{custom-call.26} parent=68 // loop_exit
                _
            $region69: #{custom-call.26} parent=53 // pred_fallthru
              _
          $region54: #{custom-call.26} parent=49 // pred_fallthru
            _
          // Predicated region
          $region55: #{custom-call.26} parent=49 // pred_check
            _
          $region56: #{custom-call.26} parent=49 // pred_check_branch
            %137 = sbr.rel (0) target = $region58
          $region57: #{custom-call.26} parent=49 // pred_region
            %s139 = ssub.s32 4, 1
            loop: start=0, step=1, limit=1
            $region59: #{custom-call.26} parent=57 // loop_pre_header
              _
            $region60: #{custom-call.26} parent=57 // loop_header
              %s141 = sphi 0, %s145
              %p142 = scmp.ge.s32.totalorder %s141, 1
              %s146 = sphi %s131, %s131
              %s147 = sphi %s129, %s129
            $region61: #{custom-call.26} parent=57 // loop_header_branch
              %144 = sbr.rel (%p142) target = $region65
            $region62: #{custom-call.26} parent=57 // loop_body
              %v148 = vld [vmem:[%s146] sm:%s139]
              %149 = vst [vmem:[%s147] sm:%s139] %v148
            $region63: #{custom-call.26} parent=57 // loop_footer
              %s145 = sadd.s32 1, %s141
            $region64: #{custom-call.26} parent=57 // loop_footer_branch
              %140 = sbr.rel target = $region60
            $region65: #{custom-call.26} parent=57 // loop_exit
              _
          $region58: #{custom-call.26} parent=49 // pred_fallthru
            _
        $region50: #{custom-call.26} parent=15 // pred_fallthru
          _
        %164 = vnop
        %s165 = sand.u32 %s12, 1
        %s166 = sand.u32 %s12, 1
        %s167 = smul.addr %s166, 2
        %s168 = scalar_lea.vmem [#allocation5], %s167
        %s169 = smul.addr %s12, 2
        %s170 = scalar_lea.vmem %s2, %s169
        // Predicated region
        $region77: #{custom-call.26} parent=15 // pred_check
          _
        $region78: #{custom-call.26} parent=15 // pred_check_branch
          %172 = sbr.rel (0) target = $region80
        $region79: #{custom-call.26} parent=15 // pred_region
          // Predicated region
          $region81: #{custom-call.26} parent=79 // pred_check
            _
          $region82: #{custom-call.26} parent=79 // pred_check_branch
            %174 = sbr.rel target = $region84
          $region83: #{custom-call.26} parent=79 // pred_region
            // Predicated region
            $region96: #{custom-call.26} parent=83 // pred_check
              _
            $region97: #{custom-call.26} parent=83 // pred_check_branch
              %190 = sbr.rel (0) target = $region99
            $region98: #{custom-call.26} parent=83 // pred_region
              %s192 = ssub.s32 4, 1
              loop: start=0, step=1, limit=1
              $region100: #{custom-call.26} parent=98 // loop_pre_header
                _
              $region101: #{custom-call.26} parent=98 // loop_header
                %s194 = sphi 0, %s198
                %p195 = scmp.ge.s32.totalorder %s194, 1
                %s199 = sphi %s170, %s170
                %s200 = sphi %s168, %s168
              $region102: #{custom-call.26} parent=98 // loop_header_branch
                %197 = sbr.rel (%p195) target = $region106
              $region103: #{custom-call.26} parent=98 // loop_body
                %v201 = vld [vmem:[%s199] sm:%s192]
                %202 = vst [vmem:[%s200] sm:%s192] %v201
              $region104: #{custom-call.26} parent=98 // loop_footer
                %s198 = sadd.s32 1, %s194
              $region105: #{custom-call.26} parent=98 // loop_footer_branch
                %193 = sbr.rel target = $region101
              $region106: #{custom-call.26} parent=98 // loop_exit
                _
            $region99: #{custom-call.26} parent=83 // pred_fallthru
              _
          $region84: #{custom-call.26} parent=79 // pred_fallthru
            _
          // Predicated region
          $region85: #{custom-call.26} parent=79 // pred_check
            _
          $region86: #{custom-call.26} parent=79 // pred_check_branch
            %176 = sbr.rel (0) target = $region88
          $region87: #{custom-call.26} parent=79 // pred_region
            %s178 = ssub.s32 4, 1
            loop: start=0, step=1, limit=1
            $region89: #{custom-call.26} parent=87 // loop_pre_header
              _
            $region90: #{custom-call.26} parent=87 // loop_header
              %s180 = sphi 0, %s184
              %p181 = scmp.ge.s32.totalorder %s180, 1
              %s185 = sphi %s170, %s170
              %s186 = sphi %s168, %s168
            $region91: #{custom-call.26} parent=87 // loop_header_branch
              %183 = sbr.rel (%p181) target = $region95
            $region92: #{custom-call.26} parent=87 // loop_body
              %v187 = vld [vmem:[%s185] sm:%s178]
              %188 = vst [vmem:[%s186] sm:%s178] %v187
            $region93: #{custom-call.26} parent=87 // loop_footer
              %s184 = sadd.s32 1, %s180
            $region94: #{custom-call.26} parent=87 // loop_footer_branch
              %179 = sbr.rel target = $region90
            $region95: #{custom-call.26} parent=87 // loop_exit
              _
          $region88: #{custom-call.26} parent=79 // pred_fallthru
            _
        $region80: #{custom-call.26} parent=15 // pred_fallthru
          _
        %203 = vnop
        %s204 = sand.u32 %s12, 1
        %s205 = sand.u32 %s12, 1
        %s206 = smul.addr %s205, 2
        %s207 = scalar_lea.vmem [#allocation7], %s206
        %s208 = smul.addr %s12, 2
        %s209 = scalar_lea.vmem %s3, %s208
        // Predicated region
        $region107: #{custom-call.26} parent=15 // pred_check
          _
        $region108: #{custom-call.26} parent=15 // pred_check_branch
          %211 = sbr.rel (0) target = $region110
        $region109: #{custom-call.26} parent=15 // pred_region
          // Predicated region
          $region111: #{custom-call.26} parent=109 // pred_check
            _
          $region112: #{custom-call.26} parent=109 // pred_check_branch
            %213 = sbr.rel target = $region114
          $region113: #{custom-call.26} parent=109 // pred_region
            // Predicated region
            $region126: #{custom-call.26} parent=113 // pred_check
              _
            $region127: #{custom-call.26} parent=113 // pred_check_branch
              %229 = sbr.rel (0) target = $region129
            $region128: #{custom-call.26} parent=113 // pred_region
              %s231 = ssub.s32 4, 1
              loop: start=0, step=1, limit=1
              $region130: #{custom-call.26} parent=128 // loop_pre_header
                _
              $region131: #{custom-call.26} parent=128 // loop_header
                %s233 = sphi 0, %s237
                %p234 = scmp.ge.s32.totalorder %s233, 1
                %s238 = sphi %s209, %s209
                %s239 = sphi %s207, %s207
              $region132: #{custom-call.26} parent=128 // loop_header_branch
                %236 = sbr.rel (%p234) target = $region136
              $region133: #{custom-call.26} parent=128 // loop_body
                %v240 = vld [vmem:[%s238] sm:%s231]
                %241 = vst [vmem:[%s239] sm:%s231] %v240
              $region134: #{custom-call.26} parent=128 // loop_footer
                %s237 = sadd.s32 1, %s233
              $region135: #{custom-call.26} parent=128 // loop_footer_branch
                %232 = sbr.rel target = $region131
              $region136: #{custom-call.26} parent=128 // loop_exit
                _
            $region129: #{custom-call.26} parent=113 // pred_fallthru
              _
          $region114: #{custom-call.26} parent=109 // pred_fallthru
            _
          // Predicated region
          $region115: #{custom-call.26} parent=109 // pred_check
            _
          $region116: #{custom-call.26} parent=109 // pred_check_branch
            %215 = sbr.rel (0) target = $region118
          $region117: #{custom-call.26} parent=109 // pred_region
            %s217 = ssub.s32 4, 1
            loop: start=0, step=1, limit=1
            $region119: #{custom-call.26} parent=117 // loop_pre_header
              _
            $region120: #{custom-call.26} parent=117 // loop_header
              %s219 = sphi 0, %s223
              %p220 = scmp.ge.s32.totalorder %s219, 1
              %s224 = sphi %s209, %s209
              %s225 = sphi %s207, %s207
            $region121: #{custom-call.26} parent=117 // loop_header_branch
              %222 = sbr.rel (%p220) target = $region125
            $region122: #{custom-call.26} parent=117 // loop_body
              %v226 = vld [vmem:[%s224] sm:%s217]
              %227 = vst [vmem:[%s225] sm:%s217] %v226
            $region123: #{custom-call.26} parent=117 // loop_footer
              %s223 = sadd.s32 1, %s219
            $region124: #{custom-call.26} parent=117 // loop_footer_branch
              %218 = sbr.rel target = $region120
            $region125: #{custom-call.26} parent=117 // loop_exit
              _
          $region118: #{custom-call.26} parent=109 // pred_fallthru
            _
        $region110: #{custom-call.26} parent=15 // pred_fallthru
          _
        %242 = vnop
      $region16: #{custom-call.26} parent=5 // pred_fallthru
        _
      %p243 = scmp.le.s32.totalorder 1, %s12
      %p244 = scmp.lt.s32.totalorder %s12, 3
      %p245 = pnand %p243, %p244
      %p246 = pneg %p245
      // Predicated region
      $region137: #{custom-call.26} parent=5 // pred_check
        _
      $region138: #{custom-call.26} parent=5 // pred_check_branch
        %248 = sbr.rel (%p245) target = $region140
      $region139: #{custom-call.26} parent=5 // pred_region
        #allocation20 [shape = 'f32[2,2]{1,0}', space=vmem, size = 0x1000, scoped, tag = 'a top-left matrix']
        #allocation21 [shape = 'f32[2,2]{1,0}', space=vmem, size = 0x1000, scoped, tag = 'a top-right matrix']
        #allocation22 [shape = 'f32[2,2]{1,0}', space=vmem, size = 0x1000, scoped, tag = 'a bottom-left matrix']
        #allocation23 [shape = 'f32[2,2]{1,0}', space=vmem, size = 0x1000, scoped, tag = 'a bottom-right matrix']
        %s249 = ssub.s32 %s12, 1
        %s250 = sand.u32 %s17, 1
        %s251 = sand.u32 %s17, 1
        %s252 = smul.addr %s251, 2
        %s253 = scalar_lea.vmem [#allocation1], %s252
        %s254 = sand.u32 %s17, 1
        %s255 = sand.u32 %s17, 1
        %s256 = smul.addr %s255, 2
        %s257 = scalar_lea.vmem [#allocation3], %s256
        %s258 = sand.u32 %s17, 1
        %s259 = sand.u32 %s17, 1
        %s260 = smul.addr %s259, 2
        %s261 = scalar_lea.vmem [#allocation5], %s260
        %s262 = sand.u32 %s17, 1
        %s263 = sand.u32 %s17, 1
        %s264 = smul.addr %s263, 2
        %s265 = scalar_lea.vmem [#allocation7], %s264
        %s266 = sand.u32 %s17, 1
        %s267 = sand.u32 %s17, 1
        %s268 = smul.addr %s267, 2
        %s269 = scalar_lea.vmem [#allocation1], %s268
        %s270 = sand.u32 %s17, 1
        %s271 = sand.u32 %s17, 1
        %s272 = smul.addr %s271, 2
        %s273 = scalar_lea.vmem [#allocation3], %s272
        %s274 = sand.u32 %s17, 1
        %s275 = sand.u32 %s17, 1
        %s276 = smul.addr %s275, 2
        %s277 = scalar_lea.vmem [#allocation5], %s276
        %s278 = sand.u32 %s17, 1
        %s279 = sand.u32 %s17, 1
        %s280 = smul.addr %s279, 2
        %s281 = scalar_lea.vmem [#allocation7], %s280
        %p282 = pneg %p40
        %p283 = pneg %p37
        %s284 = sand.u32 %s27, 1
        %s285 = sand.u32 %s27, 1
        %s286 = smul.addr %s285, 2
        %s287 = scalar_lea.vmem [#allocation9], %s286
        %p288 = pneg %p68
        %p289 = pneg %p65
        %s290 = sand.u32 %s55, 1
        %s291 = sand.u32 %s55, 1
        %s292 = smul.addr %s291, 2
        %s293 = scalar_lea.vmem [#allocation11], %s292
        %s294 = sand.u32 %s17, 1
        %s295 = sand.u32 %s17, 1
        %s296 = smul.addr %s295, 2
        %s297 = scalar_lea.vmem [#allocation13], %s296
        %s298 = sand.u32 %s17, 1
        %s299 = sand.u32 %s17, 1
        %s300 = smul.addr %s299, 2
        %s301 = scalar_lea.vmem [#allocation15], %s300
        %s302 = sand.u32 %s17, 1
        %s303 = sand.u32 %s17, 1
        %s304 = smul.addr %s303, 2
        %s305 = scalar_lea.vmem [#allocation17], %s304
        %s306 = sand.u32 %s17, 1
        %s307 = sand.u32 %s17, 1
        %s308 = smul.addr %s307, 2
        %s309 = scalar_lea.vmem [#allocation19], %s308
        %s311 = ssub.s32 4, 1
        %v312 = vld [vmem:[%s269] sm:%s311]
        %313 = vst [vmem:[#allocation0] sm:%s311] %v312
        %s315 = ssub.s32 4, 1
        %v316 = vld [vmem:[%s273] sm:%s315]
        %317 = vst [vmem:[#allocation2] sm:%s315] %v316
        %s319 = ssub.s32 4, 1
        %v320 = vld [vmem:[%s277] sm:%s319]
        %321 = vst [vmem:[#allocation4] sm:%s319] %v320
        %s323 = ssub.s32 4, 1
        %v324 = vld [vmem:[%s281] sm:%s323]
        %325 = vst [vmem:[#allocation6] sm:%s323] %v324
        %s326 = sshrl.u32 %s17, 3
        %s327 = sshrl.u32 %s17, 3
        %s328 = smov [#allocation20]
        %v329 = vld [vmem:[#allocation0] sm:$0xff]
        %330 = vst [vmem:[%s328] sm:$0xff] %v329
        %s331 = smov [#allocation21]
        %v332 = vld [vmem:[#allocation2] sm:$0xff]
        %333 = vst [vmem:[%s331] sm:$0xff] %v332
        %s334 = smov [#allocation22]
        %v335 = vld [vmem:[#allocation4] sm:$0xff]
        %336 = vst [vmem:[%s334] sm:$0xff] %v335
        %s337 = smov [#allocation23]
        %v338 = vld [vmem:[#allocation6] sm:$0xff]
        %339 = vst [vmem:[%s337] sm:$0xff] %v338
        %340 = vst [vmem:[#allocation12] sm:$0xff] 0.0
        %341 = vst [vmem:[#allocation14] sm:$0xff] 0.0
        %342 = vst [vmem:[#allocation16] sm:$0xff] 0.0
        %343 = vst [vmem:[#allocation18] sm:$0xff] 0.0
        %s344 = smov [#allocation12]
        %v345 = vlaneseq
        %v346 = vand.u32 %v345, 127
        %v347 = vmov %v346
        %v348 = vlaneseq
        %v349 = vshrl.u32 %v348, 7
        %v350 = vmov %v349
        %v351 = vld [vmem:[%s344] sm:$0x3]
        %vm354 = vcmp.eq.s32.totalorder %v350, %v347
        %v355 = vsel %vm354, 1.0, %v351
        %356 = vst [vmem:[%s344] sm:$0x3] %v355
        %s357 = smov [#allocation18]
        %v358 = vlaneseq
        %v359 = vand.u32 %v358, 127
        %v360 = vmov %v359
        %v361 = vlaneseq
        %v362 = vshrl.u32 %v361, 7
        %v363 = vmov %v362
        %v364 = vld [vmem:[%s357] sm:$0x3]
        %vm367 = vcmp.eq.s32.totalorder %v363, %v360
        %v368 = vsel %vm367, 1.0, %v364
        %369 = vst [vmem:[%s357] sm:$0x3] %v368
        // While loop
        $region141: #{custom-call.26} parent=139 // loop_pre_header
          _
        $region142: #{custom-call.26} parent=139 // loop_header
          %s371 = sphi 0, %s953
          %v372 = vlaneseq
          %v373 = vand.u32 %v372, 127
          %v374 = vmov %v373
          %v375 = vlaneseq
          %v376 = vshrl.u32 %v375, 7
          %v377 = vmov %v376
          %s378 = smov [#allocation20]
          %v379 = vlaneseq
          %v380 = vand.u32 %v379, 127
          %vm381 = vcmp.ge.s32.totalorder %v380, 0
          %vm382 = vcmp.lt.s32.totalorder %v380, 2
          %vm383 = vmand %vm381, %vm382
          %v384 = vld [vmem:[%s378] sm:$0x3]
          %v385 = vsel %vm383, %v384, 0.0
          %v386 = vmul.f32 %v385, %v385
          %vm389 = vcmp.eq.s32.totalorder %v377, %v374
          %v390 = vsel %vm389, 0.0, %v386
          %v391 = vlaneseq
          %v392 = vand.u32 %v391, 127
          %v393 = vmov %v392
          %v394 = vlaneseq
          %v395 = vshrl.u32 %v394, 7
          %v396 = vmov %v395
          %s397 = smov [#allocation21]
          %v398 = vlaneseq
          %v399 = vand.u32 %v398, 127
          %vm400 = vcmp.ge.s32.totalorder %v399, 0
          %vm401 = vcmp.lt.s32.totalorder %v399, 2
          %vm402 = vmand %vm400, %vm401
          %v403 = vld [vmem:[%s397] sm:$0x3]
          %v404 = vsel %vm402, %v403, 0.0
          %v405 = vmul.f32 %v404, %v404
          %v406 = vadd.f32 %v390, %v405
          %v407 = vadd.f32 %v386, %v405
          %v408 = vlaneseq
          %v409 = vand.u32 %v408, 127
          %v410 = vmov %v409
          %v411 = vlaneseq
          %v412 = vshrl.u32 %v411, 7
          %v413 = vmov %v412
          %s414 = smov [#allocation22]
          %v415 = vlaneseq
          %v416 = vand.u32 %v415, 127
          %vm417 = vcmp.ge.s32.totalorder %v416, 0
          %vm418 = vcmp.lt.s32.totalorder %v416, 2
          %vm419 = vmand %vm417, %vm418
          %v420 = vld [vmem:[%s414] sm:$0x3]
          %v421 = vsel %vm419, %v420, 0.0
          %v422 = vmul.f32 %v421, %v421
          %v423 = vadd.f32 %v406, %v422
          %v424 = vadd.f32 %v407, %v422
          %v425 = vlaneseq
          %v426 = vand.u32 %v425, 127
          %v427 = vmov %v426
          %v428 = vlaneseq
          %v429 = vshrl.u32 %v428, 7
          %v430 = vmov %v429
          %s431 = smov [#allocation23]
          %v432 = vlaneseq
          %v433 = vand.u32 %v432, 127
          %vm434 = vcmp.ge.s32.totalorder %v433, 0
          %vm435 = vcmp.lt.s32.totalorder %v433, 2
          %vm436 = vmand %vm434, %vm435
          %v437 = vld [vmem:[%s431] sm:$0x3]
          %v438 = vsel %vm436, %v437, 0.0
          %v439 = vmul.f32 %v438, %v438
          %vm442 = vcmp.eq.s32.totalorder %v430, %v427
          %v443 = vsel %vm442, 0.0, %v439
          %v444 = vadd.f32 %v423, %v443
          %v445 = vadd.f32 %v424, %v439
          %446 = vadd.xlane.f32.xlu0 %v445
          %v447 = vpop.xlane.xlu0 %446
          %v448 = vrot.slane %v447, 4
          %v449 = vadd.f32 %v447, %v448
          %v450 = vrot.slane %v449, 2
          %v451 = vadd.f32 %v449, %v450
          %v452 = vrot.slane %v451, 1
          %v453 = vadd.f32 %v451, %v452
          %454 = vadd.xlane.f32.xlu0 %v444
          %v455 = vpop.xlane.xlu0 %454
          %v456 = vrot.slane %v455, 4
          %v457 = vadd.f32 %v455, %v456
          %v458 = vrot.slane %v457, 2
          %v459 = vadd.f32 %v457, %v458
          %v460 = vrot.slane %v459, 1
          %v461 = vadd.f32 %v459, %v460
          %s462 = vtos %v461
          %s463 = vtos %v453
          %s464 = smul.f32 1e-10, %s463
          %p465 = scmp.le.f32.partialorder %s462, %s464
          %p466 = scmp.ge.s32.totalorder %s371, 15
          %p467 = por %p465, %p466
        $region143: #{custom-call.26} parent=139 // loop_header_branch
          %955 = sbr.rel (%p467) target = $region147
        $region144: #{custom-call.26} parent=139 // loop_body
          loop: start=0, step=1, limit=3
          $region148: #{custom-call.26} parent=144 // loop_pre_header
            _
          $region149: #{custom-call.26} parent=144 // loop_header
            %s469 = sphi 0, %s473
            %p470 = scmp.ge.s32.totalorder %s469, 3
          $region150: #{custom-call.26} parent=144 // loop_header_branch
            %472 = sbr.rel (%p470) target = $region154
          $region151: #{custom-call.26} parent=144 // loop_body
            #allocation24 [shape = 'f32[1024]{0}', space=vmem, size = 0x1000, scoped, tag = 'a_tl_diag vmem']
            #allocation25 [shape = 'f32[1024]{0}', space=vmem, size = 0x1000, scoped, tag = 'a_tr_diag vmem']
            #allocation26 [shape = 'f32[1024]{0}', space=vmem, size = 0x1000, scoped, tag = 'a_br_diag vmem']
            #allocation27 [shape = 'f32[1024]{0}', space=vmem, size = 0x1000, scoped, tag = 'rt1 vmem']
            #allocation28 [shape = 'f32[1024]{0}', space=vmem, size = 0x1000, scoped, tag = 'rt2 vmem']
            #allocation29 [shape = 'f32[1024]{0}', space=vmem, size = 0x1000, scoped, tag = 'c vmem']
            #allocation30 [shape = 'f32[1024]{0}', space=vmem, size = 0x1000, scoped, tag = 's vmem']
            #allocation31 [shape = 'f32[4096]{0}', space=vmem, size = 0x4000, scoped, tag = 'c broadcast']
            #allocation32 [shape = 'f32[4096]{0}', space=vmem, size = 0x4000, scoped, tag = 's broadcast']
            %s474 = smov [#allocation20]
            %s475 = smov [#allocation24]
            %v476 = vlaneseq
            %v477 = vand.u32 %v476, 127
            %v478 = vmov %v477
            %v479 = vlaneseq
            %v480 = vshrl.u32 %v479, 7
            %v481 = vmov %v480
            %v482 = vld [vmem:[%s474] sm:$0x3]
            %vm485 = vcmp.eq.s32.totalorder %v481, %v478
            %v486 = vsel %vm485, %v482, 0.0
            %v487 = vrot.slane %v486, 4
            %v488 = vadd.f32 %v486, %v487
            %v489 = vrot.slane %v488, 2
            %v490 = vadd.f32 %v488, %v489
            %v491 = vrot.slane %v490, 1
            %v492 = vadd.f32 %v490, %v491
            %493 = vst [vmem:[%s475] sm:$0x1] %v492
            %s494 = smov [#allocation21]
            %s495 = smov [#allocation25]
            %v496 = vlaneseq
            %v497 = vand.u32 %v496, 127
            %v498 = vmov %v497
            %v499 = vlaneseq
            %v500 = vshrl.u32 %v499, 7
            %v501 = vmov %v500
            %v502 = vld [vmem:[%s494] sm:$0x3]
            %vm505 = vcmp.eq.s32.totalorder %v501, %v498
            %v506 = vsel %vm505, %v502, 0.0
            %v507 = vrot.slane %v506, 4
            %v508 = vadd.f32 %v506, %v507
            %v509 = vrot.slane %v508, 2
            %v510 = vadd.f32 %v508, %v509
            %v511 = vrot.slane %v510, 1
            %v512 = vadd.f32 %v510, %v511
            %513 = vst [vmem:[%s495] sm:$0x1] %v512
            %s514 = smov [#allocation23]
            %s515 = smov [#allocation26]
            %v516 = vlaneseq
            %v517 = vand.u32 %v516, 127
            %v518 = vmov %v517
            %v519 = vlaneseq
            %v520 = vshrl.u32 %v519, 7
            %v521 = vmov %v520
            %v522 = vld [vmem:[%s514] sm:$0x3]
            %vm525 = vcmp.eq.s32.totalorder %v521, %v518
            %v526 = vsel %vm525, %v522, 0.0
            %v527 = vrot.slane %v526, 4
            %v528 = vadd.f32 %v526, %v527
            %v529 = vrot.slane %v528, 2
            %v530 = vadd.f32 %v528, %v529
            %v531 = vrot.slane %v530, 1
            %v532 = vadd.f32 %v530, %v531
            %533 = vst [vmem:[%s515] sm:$0x1] %v532
            %s534 = smov [#allocation29]
            %s535 = smov [#allocation30]
            %s536 = smov [#allocation24]
            %v537 = vld [vmem:[%s536] sm:$0xff]
            %s538 = smov [#allocation25]
            %v539 = vld [vmem:[%s538] sm:$0xff]
            %s540 = smov [#allocation26]
            %v541 = vld [vmem:[%s540] sm:$0xff]
            %v542 = vsub.f32 %v541, %v537
            %v543 = vmul.f32 2.0, %v539
            %v544 = vrcp.pop %v543
            %v545 = vmul.f32 %v543, %v544
            %v546 = vsub.f32 1.0, %v545
            %v547 = vmul.f32 %v544, %v546
            %v548 = vadd.f32 %v544, %v547
            %vm549 = vweird.f32 %v543
            %vm550 = vweird.f32 %v544
            %vm551 = vmor %vm549, %vm550
            %v552 = vsel %vm551, %v544, %v548
            %v553 = vand.u32 2147483647, %v543
            %vm554 = vcmp.eq.f32.partialorder %v553, 8.507059e+37
            %v555 = vand.u32 %v543, 2147483648
            %v556 = vor.u32 1.1754944e-38, %v555
            %v557 = vsel %vm554, %v556, %v552
            %v558 = vmul.f32 %v542, %v557
            %vm559 = vcmp.ge.f32.partialorder %v558, 0.0
            %v560 = vmul.f32 %v558, %v558
            %v561 = vadd.f32 1.0, %v560
            %v562 = vrsqrt.pop %v561
            %v563 = vmul.f32 %v562, %v561
            %v564 = vmul.f32 %v563, %v562
            %v565 = vmul.f32 0.5, %v564
            %v566 = vsub.f32 1.5, %v565
            %v567 = vmul.f32 %v562, %v566
            %v568 = vmul.f32 %v561, %v567
            %vm569 = vcmp.eq.f32.partialorder %v561, inf
            %v570 = vsel %vm569, %v561, %v568
            %vm571 = vcmp.eq.f32.partialorder %v561, 0.0
            %v572 = vand.u32 %v561, 2147483648
            %v573 = vsel %vm571, %v572, %v570
            %v574 = vxor.u32 %v573, 2147483648
            %v575 = vsel %vm559, %v573, %v574
            %v576 = vadd.f32 %v558, %v575
            %v577 = vrcp.pop %v576
            %v578 = vmul.f32 %v576, %v577
            %v579 = vsub.f32 1.0, %v578
            %v580 = vmul.f32 %v577, %v579
            %v581 = vadd.f32 %v577, %v580
            %vm582 = vweird.f32 %v576
            %vm583 = vweird.f32 %v577
            %vm584 = vmor %vm582, %vm583
            %v585 = vsel %vm584, %v577, %v581
            %v586 = vand.u32 2147483647, %v576
            %vm587 = vcmp.eq.f32.partialorder %v586, 8.507059e+37
            %v588 = vand.u32 %v576, 2147483648
            %v589 = vor.u32 1.1754944e-38, %v588
            %v590 = vsel %vm587, %v589, %v585
            %v591 = vand.u32 2147483647, %v537
            %v592 = vand.u32 2147483647, %v539
            %v593 = vand.u32 2147483647, %v541
            %v594 = vmin.f32 %v591, %v593
            %v595 = vmul.f32 1.1920929e-08, %v594
            %vm596 = vcmp.le.f32.partialorder %v592, %v595
            %v597 = vsel %vm596, 0.0, %v590
            %v598 = vmul.f32 %v597, %v597
            %v599 = vadd.f32 1.0, %v598
            %v600 = vrsqrt.pop %v599
            %v601 = vmul.f32 %v600, %v599
            %v602 = vmul.f32 %v601, %v600
            %v603 = vmul.f32 0.5, %v602
            %v604 = vsub.f32 1.5, %v603
            %v605 = vmul.f32 %v600, %v604
            %vm606 = vweird.f32 %v599
            %vm607 = vweird.f32 %v600
            %vm608 = vmor %vm606, %vm607
            %v609 = vsel %vm608, %v600, %v605
            %v610 = vmul.f32 %v597, %v609
            %v611 = vmul.f32 %v597, %v539
            %v612 = vsub.f32 %v537, %v611
            %v613 = vmul.f32 %v597, %v539
            %v614 = vadd.f32 %v541, %v613
            %s615 = smov [#allocation27]
            %616 = vst [vmem:[%s615] sm:$0xff] %v612
            %s617 = smov [#allocation28]
            %618 = vst [vmem:[%s617] sm:$0xff] %v614
            %s619 = smov %s534
            %620 = vst [vmem:[%s619] sm:$0xff] %v609
            %s621 = smov %s535
            %622 = vst [vmem:[%s621] sm:$0xff] %v610
            %s623 = smov [#allocation29]
            %v624 = vld [vmem:[%s623] ss:$0 sm:$0xff]
            %v625 = vlaneseq
            %v626 = vand.u32 %v625, 127
            %v627 = vmov %v626
            %v628 = vlaneseq
            %v629 = vshrl.u32 %v628, 7
            %v630 = vmov %v629
            %vm632 = vcmp.eq.s32.totalorder %v630, %v627
            %v633 = vsel %vm632, %v624, 0.0
            %634 = vadd.xlane.f32.xlu0 %v633
            %v635 = vpop.xlane.xlu0 %634
            %s636 = smov [#allocation31]
            %637 = vst [vmem:[%s636] sm:$0xff] %v635
            %s638 = smov [#allocation30]
            %v639 = vld [vmem:[%s638] ss:$0 sm:$0xff]
            %v640 = vlaneseq
            %v641 = vand.u32 %v640, 127
            %v642 = vmov %v641
            %v643 = vlaneseq
            %v644 = vshrl.u32 %v643, 7
            %v645 = vmov %v644
            %vm647 = vcmp.eq.s32.totalorder %v645, %v642
            %v648 = vsel %vm647, %v639, 0.0
            %649 = vadd.xlane.f32.xlu0 %v648
            %v650 = vpop.xlane.xlu0 %649
            %s651 = smov [#allocation32]
            %652 = vst [vmem:[%s651] sm:$0xff] %v650
            %s653 = smov [#allocation31]
            %v654 = vld [vmem:[%s653] sm:$0xff]
            %s655 = smov [#allocation32]
            %v656 = vld [vmem:[%s655] sm:$0xff]
            %s657 = smov [#allocation20]
            %s658 = smov [#allocation21]
            %s659 = smov [#allocation22]
            %s660 = smov [#allocation23]
            %v661 = vld [vmem:[%s657] sm:$0x3]
            %v662 = vld [vmem:[%s658] sm:$0x3]
            %v663 = vld [vmem:[%s659] sm:$0x3]
            %v664 = vld [vmem:[%s660] sm:$0x3]
            %v665 = vmul.f32 %v654, %v661
            %v666 = vmul.f32 %v656, %v663
            %v667 = vsub.f32 %v665, %v666
            %v668 = vmul.f32 %v654, %v662
            %v669 = vmul.f32 %v656, %v664
            %v670 = vsub.f32 %v668, %v669
            %v671 = vmul.f32 %v656, %v661
            %v672 = vmul.f32 %v654, %v663
            %v673 = vadd.f32 %v671, %v672
            %v674 = vmul.f32 %v656, %v662
            %v675 = vmul.f32 %v654, %v664
            %v676 = vadd.f32 %v674, %v675
            %677 = vst [vmem:[%s657] sm:$0x3] %v667
            %678 = vst [vmem:[%s658] sm:$0x3] %v670
            %679 = vst [vmem:[%s659] sm:$0x3] %v673
            %680 = vst [vmem:[%s660] sm:$0x3] %v676
            %s681 = smov [#allocation29]
            %v682 = vld [vmem:[%s681] ss:$0 sm:$0xff]
            %s683 = smov [#allocation30]
            %v684 = vld [vmem:[%s683] ss:$0 sm:$0xff]
            %s685 = smov [#allocation20]
            %s686 = smov [#allocation21]
            %s687 = smov [#allocation22]
            %s688 = smov [#allocation23]
            %v689 = vld [vmem:[%s685] sm:$0x3]
            %v690 = vld [vmem:[%s686] sm:$0x3]
            %v691 = vld [vmem:[%s687] sm:$0x3]
            %v692 = vld [vmem:[%s688] sm:$0x3]
            %v693 = vmul.f32 %v682, %v689
            %v694 = vmul.f32 %v684, %v690
            %v695 = vsub.f32 %v693, %v694
            %v696 = vmul.f32 %v684, %v689
            %v697 = vmul.f32 %v682, %v690
            %v698 = vadd.f32 %v696, %v697
            %v699 = vmul.f32 %v682, %v691
            %v700 = vmul.f32 %v684, %v692
            %v701 = vsub.f32 %v699, %v700
            %v702 = vmul.f32 %v684, %v691
            %v703 = vmul.f32 %v682, %v692
            %v704 = vadd.f32 %v702, %v703
            %705 = vst [vmem:[%s685] sm:$0x3] %v695
            %706 = vst [vmem:[%s686] sm:$0x3] %v698
            %707 = vst [vmem:[%s687] sm:$0x3] %v701
            %708 = vst [vmem:[%s688] sm:$0x3] %v704
            %s709 = smov [#allocation20]
            %s710 = smov [#allocation27]
            %v711 = vlaneseq
            %v712 = vand.u32 %v711, 127
            %v713 = vmov %v712
            %v714 = vlaneseq
            %v715 = vshrl.u32 %v714, 7
            %v716 = vmov %v715
            %v717 = vld [vmem:[%s710] ss:$0 sm:$0xff]
            %v718 = vld [vmem:[%s709] sm:$0x3]
            %vm721 = vcmp.eq.s32.totalorder %v716, %v713
            %v722 = vsel %vm721, %v717, %v718
            %723 = vst [vmem:[%s709] sm:$0x3] %v722
            %s724 = smov [#allocation21]
            %v725 = vlaneseq
            %v726 = vand.u32 %v725, 127
            %v727 = vmov %v726
            %v728 = vlaneseq
            %v729 = vshrl.u32 %v728, 7
            %v730 = vmov %v729
            %v731 = vld [vmem:[%s724] sm:$0x3]
            %vm734 = vcmp.eq.s32.totalorder %v730, %v727
            %v735 = vsel %vm734, 0.0, %v731
            %736 = vst [vmem:[%s724] sm:$0x3] %v735
            %s737 = smov [#allocation22]
            %v738 = vlaneseq
            %v739 = vand.u32 %v738, 127
            %v740 = vmov %v739
            %v741 = vlaneseq
            %v742 = vshrl.u32 %v741, 7
            %v743 = vmov %v742
            %v744 = vld [vmem:[%s737] sm:$0x3]
            %vm747 = vcmp.eq.s32.totalorder %v743, %v740
            %v748 = vsel %vm747, 0.0, %v744
            %749 = vst [vmem:[%s737] sm:$0x3] %v748
            %s750 = smov [#allocation23]
            %s751 = smov [#allocation28]
            %v752 = vlaneseq
            %v753 = vand.u32 %v752, 127
            %v754 = vmov %v753
            %v755 = vlaneseq
            %v756 = vshrl.u32 %v755, 7
            %v757 = vmov %v756
            %v758 = vld [vmem:[%s751] ss:$0 sm:$0xff]
            %v759 = vld [vmem:[%s750] sm:$0x3]
            %vm762 = vcmp.eq.s32.totalorder %v757, %v754
            %v763 = vsel %vm762, %v758, %v759
            %764 = vst [vmem:[%s750] sm:$0x3] %v763
            %s765 = smov [#allocation20]
            %s766 = smov [#allocation21]
            %v767 = vld [vmem:[%s766] sm:$0x3]
            %768 = vrot.lane.b32.xlu0 %v767, 1
            %v769 = vpop.permute.xlu0 %768
            %v770 = vld [vmem:[%s765] sm:$0x3]
            %v771 = vld [vmem:[%s765] sm:$0x3]
            %772 = vrot.lane.b32.xlu0 %v771, 1
            %v773 = vpop.permute.xlu0 %772
            %v774 = vlaneseq
            %v775 = vand.u32 %v774, 127
            %vm776 = vcmp.eq.s32.totalorder %v775, 0
            %v777 = vsel %vm776, %v771, %v773
            %v778 = vlaneseq
            %v779 = vand.u32 %v778, 127
            %vm780 = vcmp.eq.s32.totalorder %v779, 1
            %v781 = vsel %vm780, %v769, %v777
            %v782 = vlaneseq
            %v783 = vand.u32 %v782, 127
            %vm784 = vcmp.ge.s32.totalorder %v783, 0
            %vm785 = vcmp.lt.s32.totalorder %v783, 2
            %vm786 = vmand %vm784, %vm785
            %v787 = vsel %vm786, %v781, 0.0
            %v788 = vld [vmem:[%s766] sm:$0x3]
            %789 = vrot.lane.b32.xlu0 %v788, 127
            %v790 = vpop.permute.xlu0 %789
            %v791 = vlaneseq
            %v792 = vand.u32 %v791, 127
            %vm793 = vcmp.eq.s32.totalorder %v792, 1
            %v794 = vsel %vm793, %v770, %v790
            %795 = vst [vmem:[%s765] sm:$0x3] %v787
            %796 = vst [vmem:[%s766] sm:$0x3] %v794
            %s797 = smov [#allocation22]
            %s798 = smov [#allocation23]
            %v799 = vld [vmem:[%s798] sm:$0x3]
            %800 = vrot.lane.b32.xlu0 %v799, 1
            %v801 = vpop.permute.xlu0 %800
            %v802 = vld [vmem:[%s797] sm:$0x3]
            %v803 = vld [vmem:[%s797] sm:$0x3]
            %804 = vrot.lane.b32.xlu0 %v803, 1
            %v805 = vpop.permute.xlu0 %804
            %v806 = vlaneseq
            %v807 = vand.u32 %v806, 127
            %vm808 = vcmp.eq.s32.totalorder %v807, 0
            %v809 = vsel %vm808, %v803, %v805
            %v810 = vlaneseq
            %v811 = vand.u32 %v810, 127
            %vm812 = vcmp.eq.s32.totalorder %v811, 1
            %v813 = vsel %vm812, %v801, %v809
            %v814 = vlaneseq
            %v815 = vand.u32 %v814, 127
            %vm816 = vcmp.ge.s32.totalorder %v815, 0
            %vm817 = vcmp.lt.s32.totalorder %v815, 2
            %vm818 = vmand %vm816, %vm817
            %v819 = vsel %vm818, %v813, 0.0
            %v820 = vld [vmem:[%s798] sm:$0x3]
            %821 = vrot.lane.b32.xlu0 %v820, 127
            %v822 = vpop.permute.xlu0 %821
            %v823 = vlaneseq
            %v824 = vand.u32 %v823, 127
            %vm825 = vcmp.eq.s32.totalorder %v824, 1
            %v826 = vsel %vm825, %v802, %v822
            %827 = vst [vmem:[%s797] sm:$0x3] %v819
            %828 = vst [vmem:[%s798] sm:$0x3] %v826
            %s829 = smov [#allocation20]
            %s830 = smov [#allocation22]
            %v831 = vld [vmem:[%s829] ss:$0 sm:$0xff]
            %s833 = scalar_lea.vmem %s829, 4294967295
            %v834 = vld [vmem:[%s833] sm:$0x2]
            %v835 = vlaneseq
            %v836 = vshrl.u32 %v835, 7
            %vm837 = vcmp.eq.s32.totalorder %v836, 0
            %v838 = vsel %vm837, %v831, %v834
            %s839 = scalar_lea.vmem %s829, 1
            %v840 = vld [vmem:[%s839] ss:$0 sm:$0xff]
            %841 = vst [vmem:[%s829] sm:$0x3] %v838
            %v842 = vld [vmem:[%s830] ss:$0 sm:$0xff]
            %s843 = scalar_lea.vmem %s829, 1
            %844 = vst [vmem:[%s843] sm:$0x1] %v842
            %s845 = scalar_lea.vmem %s830, 1
            %v846 = vld [vmem:[%s845] sm:$0x1]
            %v847 = vlaneseq
            %v848 = vshrl.u32 %v847, 7
            %vm849 = vcmp.eq.s32.totalorder %v848, 1
            %v850 = vsel %vm849, %v840, %v846
            %v851 = vld [vmem:[%s830] ss:$0 sm:$0xff]
            %852 = vst [vmem:[%s830] sm:$0x3] %v850
            %s853 = smov [#allocation21]
            %s854 = smov [#allocation23]
            %v855 = vld [vmem:[%s853] ss:$0 sm:$0xff]
            %s857 = scalar_lea.vmem %s853, 4294967295
            %v858 = vld [vmem:[%s857] sm:$0x2]
            %v859 = vlaneseq
            %v860 = vshrl.u32 %v859, 7
            %vm861 = vcmp.eq.s32.totalorder %v860, 0
            %v862 = vsel %vm861, %v855, %v858
            %s863 = scalar_lea.vmem %s853, 1
            %v864 = vld [vmem:[%s863] ss:$0 sm:$0xff]
            %865 = vst [vmem:[%s853] sm:$0x3] %v862
            %v866 = vld [vmem:[%s854] ss:$0 sm:$0xff]
            %s867 = scalar_lea.vmem %s853, 1
            %868 = vst [vmem:[%s867] sm:$0x1] %v866
            %s869 = scalar_lea.vmem %s854, 1
            %v870 = vld [vmem:[%s869] sm:$0x1]
            %v871 = vlaneseq
            %v872 = vshrl.u32 %v871, 7
            %vm873 = vcmp.eq.s32.totalorder %v872, 1
            %v874 = vsel %vm873, %v864, %v870
            %v875 = vld [vmem:[%s854] ss:$0 sm:$0xff]
            %876 = vst [vmem:[%s854] sm:$0x3] %v874
            %s877 = smov [#allocation31]
            %v878 = vld [vmem:[%s877] sm:$0xff]
            %s879 = smov [#allocation32]
            %v880 = vld [vmem:[%s879] sm:$0xff]
            %s881 = smov [#allocation12]
            %s882 = smov [#allocation14]
            %s883 = smov [#allocation16]
            %s884 = smov [#allocation18]
            %v885 = vld [vmem:[%s881] sm:$0x3]
            %v886 = vld [vmem:[%s882] sm:$0x3]
            %v887 = vld [vmem:[%s883] sm:$0x3]
            %v888 = vld [vmem:[%s884] sm:$0x3]
            %v889 = vmul.f32 %v878, %v885
            %v890 = vmul.f32 %v880, %v887
            %v891 = vsub.f32 %v889, %v890
            %v892 = vmul.f32 %v878, %v886
            %v893 = vmul.f32 %v880, %v888
            %v894 = vsub.f32 %v892, %v893
            %v895 = vmul.f32 %v880, %v885
            %v896 = vmul.f32 %v878, %v887
            %v897 = vadd.f32 %v895, %v896
            %v898 = vmul.f32 %v880, %v886
            %v899 = vmul.f32 %v878, %v888
            %v900 = vadd.f32 %v898, %v899
            %901 = vst [vmem:[%s881] sm:$0x3] %v891
            %902 = vst [vmem:[%s882] sm:$0x3] %v894
            %903 = vst [vmem:[%s883] sm:$0x3] %v897
            %904 = vst [vmem:[%s884] sm:$0x3] %v900
            %s905 = smov [#allocation12]
            %s906 = smov [#allocation16]
            %v907 = vld [vmem:[%s905] ss:$0 sm:$0xff]
            %s909 = scalar_lea.vmem %s905, 4294967295
            %v910 = vld [vmem:[%s909] sm:$0x2]
            %v911 = vlaneseq
            %v912 = vshrl.u32 %v911, 7
            %vm913 = vcmp.eq.s32.totalorder %v912, 0
            %v914 = vsel %vm913, %v907, %v910
            %s915 = scalar_lea.vmem %s905, 1
            %v916 = vld [vmem:[%s915] ss:$0 sm:$0xff]
            %917 = vst [vmem:[%s905] sm:$0x3] %v914
            %v918 = vld [vmem:[%s906] ss:$0 sm:$0xff]
            %s919 = scalar_lea.vmem %s905, 1
            %920 = vst [vmem:[%s919] sm:$0x1] %v918
            %s921 = scalar_lea.vmem %s906, 1
            %v922 = vld [vmem:[%s921] sm:$0x1]
            %v923 = vlaneseq
            %v924 = vshrl.u32 %v923, 7
            %vm925 = vcmp.eq.s32.totalorder %v924, 1
            %v926 = vsel %vm925, %v916, %v922
            %v927 = vld [vmem:[%s906] ss:$0 sm:$0xff]
            %928 = vst [vmem:[%s906] sm:$0x3] %v926
            %s929 = smov [#allocation14]
            %s930 = smov [#allocation18]
            %v931 = vld [vmem:[%s929] ss:$0 sm:$0xff]
            %s933 = scalar_lea.vmem %s929, 4294967295
            %v934 = vld [vmem:[%s933] sm:$0x2]
            %v935 = vlaneseq
            %v936 = vshrl.u32 %v935, 7
            %vm937 = vcmp.eq.s32.totalorder %v936, 0
            %v938 = vsel %vm937, %v931, %v934
            %s939 = scalar_lea.vmem %s929, 1
            %v940 = vld [vmem:[%s939] ss:$0 sm:$0xff]
            %941 = vst [vmem:[%s929] sm:$0x3] %v938
            %v942 = vld [vmem:[%s930] ss:$0 sm:$0xff]
            %s943 = scalar_lea.vmem %s929, 1
            %944 = vst [vmem:[%s943] sm:$0x1] %v942
            %s945 = scalar_lea.vmem %s930, 1
            %v946 = vld [vmem:[%s945] sm:$0x1]
            %v947 = vlaneseq
            %v948 = vshrl.u32 %v947, 7
            %vm949 = vcmp.eq.s32.totalorder %v948, 1
            %v950 = vsel %vm949, %v940, %v946
            %v951 = vld [vmem:[%s930] ss:$0 sm:$0xff]
            %952 = vst [vmem:[%s930] sm:$0x3] %v950
          $region152: #{custom-call.26} parent=144 // loop_footer
            %s473 = sadd.s32 1, %s469
          $region153: #{custom-call.26} parent=144 // loop_footer_branch
            %468 = sbr.rel target = $region149
          $region154: #{custom-call.26} parent=144 // loop_exit
            _
          %s953 = sadd.s32 %s371, 1
        $region145: #{custom-call.26} parent=139 // loop_footer
          _
        $region146: #{custom-call.26} parent=139 // loop_footer_branch
          %370 = sbr.rel target = $region142
        $region147: #{custom-call.26} parent=139 // loop_exit
          _
        %s956 = sand.u32 %s17, 7
        %s957 = scalar_lea.vmem [#allocation8], %s956
        %s958 = sand.u32 %s17, 7
        %s959 = scalar_lea.vmem [#allocation10], %s958
        %s960 = smov [#allocation20]
        %s961 = smov %s957
        %v962 = vlaneseq
        %v963 = vand.u32 %v962, 127
        %v964 = vmov %v963
        %v965 = vlaneseq
        %v966 = vshrl.u32 %v965, 7
        %v967 = vmov %v966
        %v968 = vld [vmem:[%s960] sm:$0x3]
        %vm971 = vcmp.eq.s32.totalorder %v967, %v964
        %v972 = vsel %vm971, %v968, 0.0
        %v973 = vrot.slane %v972, 4
        %v974 = vadd.f32 %v972, %v973
        %v975 = vrot.slane %v974, 2
        %v976 = vadd.f32 %v974, %v975
        %v977 = vrot.slane %v976, 1
        %v978 = vadd.f32 %v976, %v977
        %979 = vst [vmem:[%s961] sm:$0x1] %v978
        %s980 = smov [#allocation23]
        %s981 = smov %s959
        %v982 = vlaneseq
        %v983 = vand.u32 %v982, 127
        %v984 = vmov %v983
        %v985 = vlaneseq
        %v986 = vshrl.u32 %v985, 7
        %v987 = vmov %v986
        %v988 = vld [vmem:[%s980] sm:$0x3]
        %vm991 = vcmp.eq.s32.totalorder %v987, %v984
        %v992 = vsel %vm991, %v988, 0.0
        %v993 = vrot.slane %v992, 4
        %v994 = vadd.f32 %v992, %v993
        %v995 = vrot.slane %v994, 2
        %v996 = vadd.f32 %v994, %v995
        %v997 = vrot.slane %v996, 1
        %v998 = vadd.f32 %v996, %v997
        %999 = vst [vmem:[%s981] sm:$0x1] %v998
        %s1001 = ssub.s32 4, 1
        %v1002 = vld [vmem:[#allocation8] sm:%s1001]
        %s1004 = ssub.s32 4, 1
        %1005 = vst [vmem:[%s287] sm:%s1004] %v1002
        %s1007 = ssub.s32 4, 1
        %v1008 = vld [vmem:[#allocation10] sm:%s1007]
        %s1010 = ssub.s32 4, 1
        %1011 = vst [vmem:[%s293] sm:%s1010] %v1008
        %s1013 = ssub.s32 4, 1
        %v1014 = vld [vmem:[#allocation12] sm:%s1013]
        %s1016 = ssub.s32 4, 1
        %1017 = vst [vmem:[%s297] sm:%s1016] %v1014
        %s1019 = ssub.s32 4, 1
        %v1020 = vld [vmem:[#allocation14] sm:%s1019]
        %s1022 = ssub.s32 4, 1
        %1023 = vst [vmem:[%s301] sm:%s1022] %v1020
        %s1025 = ssub.s32 4, 1
        %v1026 = vld [vmem:[#allocation16] sm:%s1025]
        %s1028 = ssub.s32 4, 1
        %1029 = vst [vmem:[%s305] sm:%s1028] %v1026
        %s1031 = ssub.s32 4, 1
        %v1032 = vld [vmem:[#allocation18] sm:%s1031]
        %s1034 = ssub.s32 4, 1
        %1035 = vst [vmem:[%s309] sm:%s1034] %v1032
        %s1036 = sand.u32 %s27, 1
        %s1037 = sand.u32 %s27, 1
        %s1038 = smul.addr %s1037, 2
        %s1039 = scalar_lea.vmem [#allocation9], %s1038
        %s1040 = sand.u32 %s55, 1
        %s1041 = sand.u32 %s55, 1
        %s1042 = smul.addr %s1041, 2
        %s1043 = scalar_lea.vmem [#allocation11], %s1042
        %s1044 = sand.u32 %s17, 1
        %s1045 = sand.u32 %s17, 1
        %s1046 = smul.addr %s1045, 2
        %s1047 = scalar_lea.vmem [#allocation13], %s1046
        %s1048 = sand.u32 %s17, 1
        %s1049 = sand.u32 %s17, 1
        %s1050 = smul.addr %s1049, 2
        %s1051 = scalar_lea.vmem [#allocation15], %s1050
        %s1052 = sand.u32 %s17, 1
        %s1053 = sand.u32 %s17, 1
        %s1054 = smul.addr %s1053, 2
        %s1055 = scalar_lea.vmem [#allocation17], %s1054
        %s1056 = sand.u32 %s17, 1
        %s1057 = sand.u32 %s17, 1
        %s1058 = smul.addr %s1057, 2
        %s1059 = scalar_lea.vmem [#allocation19], %s1058
        // Predicated region
        $region155: #{custom-call.26} parent=139 // pred_check
          %p1060 = pneg %p37
        $region156: #{custom-call.26} parent=139 // pred_check_branch
          %1062 = sbr.rel (%p1060) target = $region158
        $region157: #{custom-call.26} parent=139 // pred_region
          %s1063 = sshrl.u32 %s17, 3
          %s1064 = smul.addr %s1063, 2
          %s1065 = scalar_lea.vmem %s4, %s1064
          // Predicated region
          $region159: #{custom-call.26} parent=157 // pred_check
            _
          $region160: #{custom-call.26} parent=157 // pred_check_branch
            %1067 = sbr.rel (0) target = $region162
          $region161: #{custom-call.26} parent=157 // pred_region
            // Predicated region
            $region163: #{custom-call.26} parent=161 // pred_check
              _
            $region164: #{custom-call.26} parent=161 // pred_check_branch
              %1069 = sbr.rel target = $region166
            $region165: #{custom-call.26} parent=161 // pred_region
              // Predicated region
              $region178: #{custom-call.26} parent=165 // pred_check
                _
              $region179: #{custom-call.26} parent=165 // pred_check_branch
                %1085 = sbr.rel (0) target = $region181
              $region180: #{custom-call.26} parent=165 // pred_region
                %s1087 = ssub.s32 4, 1
                loop: start=0, step=1, limit=1
                $region182: #{custom-call.26} parent=180 // loop_pre_header
                  _
                $region183: #{custom-call.26} parent=180 // loop_header
                  %s1089 = sphi 0, %s1093
                  %p1090 = scmp.ge.s32.totalorder %s1089, 1
                  %s1094 = sphi %s1039, %s1039
                  %s1095 = sphi %s1065, %s1065
                $region184: #{custom-call.26} parent=180 // loop_header_branch
                  %1092 = sbr.rel (%p1090) target = $region188
                $region185: #{custom-call.26} parent=180 // loop_body
                  %v1096 = vld [vmem:[%s1094] sm:%s1087]
                  %1097 = vst [vmem:[%s1095] sm:%s1087] %v1096
                $region186: #{custom-call.26} parent=180 // loop_footer
                  %s1093 = sadd.s32 1, %s1089
                $region187: #{custom-call.26} parent=180 // loop_footer_branch
                  %1088 = sbr.rel target = $region183
                $region188: #{custom-call.26} parent=180 // loop_exit
                  _
              $region181: #{custom-call.26} parent=165 // pred_fallthru
                _
            $region166: #{custom-call.26} parent=161 // pred_fallthru
              _
            // Predicated region
            $region167: #{custom-call.26} parent=161 // pred_check
              _
            $region168: #{custom-call.26} parent=161 // pred_check_branch
              %1071 = sbr.rel (0) target = $region170
            $region169: #{custom-call.26} parent=161 // pred_region
              %s1073 = ssub.s32 4, 1
              loop: start=0, step=1, limit=1
              $region171: #{custom-call.26} parent=169 // loop_pre_header
                _
              $region172: #{custom-call.26} parent=169 // loop_header
                %s1075 = sphi 0, %s1079
                %p1076 = scmp.ge.s32.totalorder %s1075, 1
                %s1080 = sphi %s1039, %s1039
                %s1081 = sphi %s1065, %s1065
              $region173: #{custom-call.26} parent=169 // loop_header_branch
                %1078 = sbr.rel (%p1076) target = $region177
              $region174: #{custom-call.26} parent=169 // loop_body
                %v1082 = vld [vmem:[%s1080] sm:%s1073]
                %1083 = vst [vmem:[%s1081] sm:%s1073] %v1082
              $region175: #{custom-call.26} parent=169 // loop_footer
                %s1079 = sadd.s32 1, %s1075
              $region176: #{custom-call.26} parent=169 // loop_footer_branch
                %1074 = sbr.rel target = $region172
              $region177: #{custom-call.26} parent=169 // loop_exit
                _
            $region170: #{custom-call.26} parent=161 // pred_fallthru
              _
          $region162: #{custom-call.26} parent=157 // pred_fallthru
            _
          %1098 = vnop
        $region158: #{custom-call.26} parent=139 // pred_fallthru
          _
        // Predicated region
        $region189: #{custom-call.26} parent=139 // pred_check
          %p1099 = pneg %p65
        $region190: #{custom-call.26} parent=139 // pred_check_branch
          %1101 = sbr.rel (%p1099) target = $region192
        $region191: #{custom-call.26} parent=139 // pred_region
          %s1102 = sshrl.u32 %s17, 3
          %s1103 = smul.addr %s1102, 2
          %s1104 = scalar_lea.vmem %s5, %s1103
          // Predicated region
          $region193: #{custom-call.26} parent=191 // pred_check
            _
          $region194: #{custom-call.26} parent=191 // pred_check_branch
            %1106 = sbr.rel (0) target = $region196
          $region195: #{custom-call.26} parent=191 // pred_region
            // Predicated region
            $region197: #{custom-call.26} parent=195 // pred_check
              _
            $region198: #{custom-call.26} parent=195 // pred_check_branch
              %1108 = sbr.rel target = $region200
            $region199: #{custom-call.26} parent=195 // pred_region
              // Predicated region
              $region212: #{custom-call.26} parent=199 // pred_check
                _
              $region213: #{custom-call.26} parent=199 // pred_check_branch
                %1124 = sbr.rel (0) target = $region215
              $region214: #{custom-call.26} parent=199 // pred_region
                %s1126 = ssub.s32 4, 1
                loop: start=0, step=1, limit=1
                $region216: #{custom-call.26} parent=214 // loop_pre_header
                  _
                $region217: #{custom-call.26} parent=214 // loop_header
                  %s1128 = sphi 0, %s1132
                  %p1129 = scmp.ge.s32.totalorder %s1128, 1
                  %s1133 = sphi %s1043, %s1043
                  %s1134 = sphi %s1104, %s1104
                $region218: #{custom-call.26} parent=214 // loop_header_branch
                  %1131 = sbr.rel (%p1129) target = $region222
                $region219: #{custom-call.26} parent=214 // loop_body
                  %v1135 = vld [vmem:[%s1133] sm:%s1126]
                  %1136 = vst [vmem:[%s1134] sm:%s1126] %v1135
                $region220: #{custom-call.26} parent=214 // loop_footer
                  %s1132 = sadd.s32 1, %s1128
                $region221: #{custom-call.26} parent=214 // loop_footer_branch
                  %1127 = sbr.rel target = $region217
                $region222: #{custom-call.26} parent=214 // loop_exit
                  _
              $region215: #{custom-call.26} parent=199 // pred_fallthru
                _
            $region200: #{custom-call.26} parent=195 // pred_fallthru
              _
            // Predicated region
            $region201: #{custom-call.26} parent=195 // pred_check
              _
            $region202: #{custom-call.26} parent=195 // pred_check_branch
              %1110 = sbr.rel (0) target = $region204
            $region203: #{custom-call.26} parent=195 // pred_region
              %s1112 = ssub.s32 4, 1
              loop: start=0, step=1, limit=1
              $region205: #{custom-call.26} parent=203 // loop_pre_header
                _
              $region206: #{custom-call.26} parent=203 // loop_header
                %s1114 = sphi 0, %s1118
                %p1115 = scmp.ge.s32.totalorder %s1114, 1
                %s1119 = sphi %s1043, %s1043
                %s1120 = sphi %s1104, %s1104
              $region207: #{custom-call.26} parent=203 // loop_header_branch
                %1117 = sbr.rel (%p1115) target = $region211
              $region208: #{custom-call.26} parent=203 // loop_body
                %v1121 = vld [vmem:[%s1119] sm:%s1112]
                %1122 = vst [vmem:[%s1120] sm:%s1112] %v1121
              $region209: #{custom-call.26} parent=203 // loop_footer
                %s1118 = sadd.s32 1, %s1114
              $region210: #{custom-call.26} parent=203 // loop_footer_branch
                %1113 = sbr.rel target = $region206
              $region211: #{custom-call.26} parent=203 // loop_exit
                _
            $region204: #{custom-call.26} parent=195 // pred_fallthru
              _
          $region196: #{custom-call.26} parent=191 // pred_fallthru
            _
          %1137 = vnop
        $region192: #{custom-call.26} parent=139 // pred_fallthru
          _
        %s1138 = smul.addr %s17, 2
        %s1139 = scalar_lea.vmem %s6, %s1138
        // Predicated region
        $region223: #{custom-call.26} parent=139 // pred_check
          _
        $region224: #{custom-call.26} parent=139 // pred_check_branch
          %1141 = sbr.rel (0) target = $region226
        $region225: #{custom-call.26} parent=139 // pred_region
          // Predicated region
          $region227: #{custom-call.26} parent=225 // pred_check
            _
          $region228: #{custom-call.26} parent=225 // pred_check_branch
            %1143 = sbr.rel target = $region230
          $region229: #{custom-call.26} parent=225 // pred_region
            // Predicated region
            $region242: #{custom-call.26} parent=229 // pred_check
              _
            $region243: #{custom-call.26} parent=229 // pred_check_branch
              %1159 = sbr.rel (0) target = $region245
            $region244: #{custom-call.26} parent=229 // pred_region
              %s1161 = ssub.s32 4, 1
              loop: start=0, step=1, limit=1
              $region246: #{custom-call.26} parent=244 // loop_pre_header
                _
              $region247: #{custom-call.26} parent=244 // loop_header
                %s1163 = sphi 0, %s1167
                %p1164 = scmp.ge.s32.totalorder %s1163, 1
                %s1168 = sphi %s1047, %s1047
                %s1169 = sphi %s1139, %s1139
              $region248: #{custom-call.26} parent=244 // loop_header_branch
                %1166 = sbr.rel (%p1164) target = $region252
              $region249: #{custom-call.26} parent=244 // loop_body
                %v1170 = vld [vmem:[%s1168] sm:%s1161]
                %1171 = vst [vmem:[%s1169] sm:%s1161] %v1170
              $region250: #{custom-call.26} parent=244 // loop_footer
                %s1167 = sadd.s32 1, %s1163
              $region251: #{custom-call.26} parent=244 // loop_footer_branch
                %1162 = sbr.rel target = $region247
              $region252: #{custom-call.26} parent=244 // loop_exit
                _
            $region245: #{custom-call.26} parent=229 // pred_fallthru
              _
          $region230: #{custom-call.26} parent=225 // pred_fallthru
            _
          // Predicated region
          $region231: #{custom-call.26} parent=225 // pred_check
            _
          $region232: #{custom-call.26} parent=225 // pred_check_branch
            %1145 = sbr.rel (0) target = $region234
          $region233: #{custom-call.26} parent=225 // pred_region
            %s1147 = ssub.s32 4, 1
            loop: start=0, step=1, limit=1
            $region235: #{custom-call.26} parent=233 // loop_pre_header
              _
            $region236: #{custom-call.26} parent=233 // loop_header
              %s1149 = sphi 0, %s1153
              %p1150 = scmp.ge.s32.totalorder %s1149, 1
              %s1154 = sphi %s1047, %s1047
              %s1155 = sphi %s1139, %s1139
            $region237: #{custom-call.26} parent=233 // loop_header_branch
              %1152 = sbr.rel (%p1150) target = $region241
            $region238: #{custom-call.26} parent=233 // loop_body
              %v1156 = vld [vmem:[%s1154] sm:%s1147]
              %1157 = vst [vmem:[%s1155] sm:%s1147] %v1156
            $region239: #{custom-call.26} parent=233 // loop_footer
              %s1153 = sadd.s32 1, %s1149
            $region240: #{custom-call.26} parent=233 // loop_footer_branch
              %1148 = sbr.rel target = $region236
            $region241: #{custom-call.26} parent=233 // loop_exit
              _
          $region234: #{custom-call.26} parent=225 // pred_fallthru
            _
        $region226: #{custom-call.26} parent=139 // pred_fallthru
          _
        %1172 = vnop
        %s1173 = smul.addr %s17, 2
        %s1174 = scalar_lea.vmem %s7, %s1173
        // Predicated region
        $region253: #{custom-call.26} parent=139 // pred_check
          _
        $region254: #{custom-call.26} parent=139 // pred_check_branch
          %1176 = sbr.rel (0) target = $region256
        $region255: #{custom-call.26} parent=139 // pred_region
          // Predicated region
          $region257: #{custom-call.26} parent=255 // pred_check
            _
          $region258: #{custom-call.26} parent=255 // pred_check_branch
            %1178 = sbr.rel target = $region260
          $region259: #{custom-call.26} parent=255 // pred_region
            // Predicated region
            $region272: #{custom-call.26} parent=259 // pred_check
              _
            $region273: #{custom-call.26} parent=259 // pred_check_branch
              %1194 = sbr.rel (0) target = $region275
            $region274: #{custom-call.26} parent=259 // pred_region
              %s1196 = ssub.s32 4, 1
              loop: start=0, step=1, limit=1
              $region276: #{custom-call.26} parent=274 // loop_pre_header
                _
              $region277: #{custom-call.26} parent=274 // loop_header
                %s1198 = sphi 0, %s1202
                %p1199 = scmp.ge.s32.totalorder %s1198, 1
                %s1203 = sphi %s1051, %s1051
                %s1204 = sphi %s1174, %s1174
              $region278: #{custom-call.26} parent=274 // loop_header_branch
                %1201 = sbr.rel (%p1199) target = $region282
              $region279: #{custom-call.26} parent=274 // loop_body
                %v1205 = vld [vmem:[%s1203] sm:%s1196]
                %1206 = vst [vmem:[%s1204] sm:%s1196] %v1205
              $region280: #{custom-call.26} parent=274 // loop_footer
                %s1202 = sadd.s32 1, %s1198
              $region281: #{custom-call.26} parent=274 // loop_footer_branch
                %1197 = sbr.rel target = $region277
              $region282: #{custom-call.26} parent=274 // loop_exit
                _
            $region275: #{custom-call.26} parent=259 // pred_fallthru
              _
          $region260: #{custom-call.26} parent=255 // pred_fallthru
            _
          // Predicated region
          $region261: #{custom-call.26} parent=255 // pred_check
            _
          $region262: #{custom-call.26} parent=255 // pred_check_branch
            %1180 = sbr.rel (0) target = $region264
          $region263: #{custom-call.26} parent=255 // pred_region
            %s1182 = ssub.s32 4, 1
            loop: start=0, step=1, limit=1
            $region265: #{custom-call.26} parent=263 // loop_pre_header
              _
            $region266: #{custom-call.26} parent=263 // loop_header
              %s1184 = sphi 0, %s1188
              %p1185 = scmp.ge.s32.totalorder %s1184, 1
              %s1189 = sphi %s1051, %s1051
              %s1190 = sphi %s1174, %s1174
            $region267: #{custom-call.26} parent=263 // loop_header_branch
              %1187 = sbr.rel (%p1185) target = $region271
            $region268: #{custom-call.26} parent=263 // loop_body
              %v1191 = vld [vmem:[%s1189] sm:%s1182]
              %1192 = vst [vmem:[%s1190] sm:%s1182] %v1191
            $region269: #{custom-call.26} parent=263 // loop_footer
              %s1188 = sadd.s32 1, %s1184
            $region270: #{custom-call.26} parent=263 // loop_footer_branch
              %1183 = sbr.rel target = $region266
            $region271: #{custom-call.26} parent=263 // loop_exit
              _
          $region264: #{custom-call.26} parent=255 // pred_fallthru
            _
        $region256: #{custom-call.26} parent=139 // pred_fallthru
          _
        %1207 = vnop
        %s1208 = smul.addr %s17, 2
        %s1209 = scalar_lea.vmem %s8, %s1208
        // Predicated region
        $region283: #{custom-call.26} parent=139 // pred_check
          _
        $region284: #{custom-call.26} parent=139 // pred_check_branch
          %1211 = sbr.rel (0) target = $region286
        $region285: #{custom-call.26} parent=139 // pred_region
          // Predicated region
          $region287: #{custom-call.26} parent=285 // pred_check
            _
          $region288: #{custom-call.26} parent=285 // pred_check_branch
            %1213 = sbr.rel target = $region290
          $region289: #{custom-call.26} parent=285 // pred_region
            // Predicated region
            $region302: #{custom-call.26} parent=289 // pred_check
              _
            $region303: #{custom-call.26} parent=289 // pred_check_branch
              %1229 = sbr.rel (0) target = $region305
            $region304: #{custom-call.26} parent=289 // pred_region
              %s1231 = ssub.s32 4, 1
              loop: start=0, step=1, limit=1
              $region306: #{custom-call.26} parent=304 // loop_pre_header
                _
              $region307: #{custom-call.26} parent=304 // loop_header
                %s1233 = sphi 0, %s1237
                %p1234 = scmp.ge.s32.totalorder %s1233, 1
                %s1238 = sphi %s1055, %s1055
                %s1239 = sphi %s1209, %s1209
              $region308: #{custom-call.26} parent=304 // loop_header_branch
                %1236 = sbr.rel (%p1234) target = $region312
              $region309: #{custom-call.26} parent=304 // loop_body
                %v1240 = vld [vmem:[%s1238] sm:%s1231]
                %1241 = vst [vmem:[%s1239] sm:%s1231] %v1240
              $region310: #{custom-call.26} parent=304 // loop_footer
                %s1237 = sadd.s32 1, %s1233
              $region311: #{custom-call.26} parent=304 // loop_footer_branch
                %1232 = sbr.rel target = $region307
              $region312: #{custom-call.26} parent=304 // loop_exit
                _
            $region305: #{custom-call.26} parent=289 // pred_fallthru
              _
          $region290: #{custom-call.26} parent=285 // pred_fallthru
            _
          // Predicated region
          $region291: #{custom-call.26} parent=285 // pred_check
            _
          $region292: #{custom-call.26} parent=285 // pred_check_branch
            %1215 = sbr.rel (0) target = $region294
          $region293: #{custom-call.26} parent=285 // pred_region
            %s1217 = ssub.s32 4, 1
            loop: start=0, step=1, limit=1
            $region295: #{custom-call.26} parent=293 // loop_pre_header
              _
            $region296: #{custom-call.26} parent=293 // loop_header
              %s1219 = sphi 0, %s1223
              %p1220 = scmp.ge.s32.totalorder %s1219, 1
              %s1224 = sphi %s1055, %s1055
              %s1225 = sphi %s1209, %s1209
            $region297: #{custom-call.26} parent=293 // loop_header_branch
              %1222 = sbr.rel (%p1220) target = $region301
            $region298: #{custom-call.26} parent=293 // loop_body
              %v1226 = vld [vmem:[%s1224] sm:%s1217]
              %1227 = vst [vmem:[%s1225] sm:%s1217] %v1226
            $region299: #{custom-call.26} parent=293 // loop_footer
              %s1223 = sadd.s32 1, %s1219
            $region300: #{custom-call.26} parent=293 // loop_footer_branch
              %1218 = sbr.rel target = $region296
            $region301: #{custom-call.26} parent=293 // loop_exit
              _
          $region294: #{custom-call.26} parent=285 // pred_fallthru
            _
        $region286: #{custom-call.26} parent=139 // pred_fallthru
          _
        %1242 = vnop
        %s1243 = smul.addr %s17, 2
        %s1244 = scalar_lea.vmem %s9, %s1243
        // Predicated region
        $region313: #{custom-call.26} parent=139 // pred_check
          _
        $region314: #{custom-call.26} parent=139 // pred_check_branch
          %1246 = sbr.rel (0) target = $region316
        $region315: #{custom-call.26} parent=139 // pred_region
          // Predicated region
          $region317: #{custom-call.26} parent=315 // pred_check
            _
          $region318: #{custom-call.26} parent=315 // pred_check_branch
            %1248 = sbr.rel target = $region320
          $region319: #{custom-call.26} parent=315 // pred_region
            // Predicated region
            $region332: #{custom-call.26} parent=319 // pred_check
              _
            $region333: #{custom-call.26} parent=319 // pred_check_branch
              %1264 = sbr.rel (0) target = $region335
            $region334: #{custom-call.26} parent=319 // pred_region
              %s1266 = ssub.s32 4, 1
              loop: start=0, step=1, limit=1
              $region336: #{custom-call.26} parent=334 // loop_pre_header
                _
              $region337: #{custom-call.26} parent=334 // loop_header
                %s1268 = sphi 0, %s1272
                %p1269 = scmp.ge.s32.totalorder %s1268, 1
                %s1273 = sphi %s1059, %s1059
                %s1274 = sphi %s1244, %s1244
              $region338: #{custom-call.26} parent=334 // loop_header_branch
                %1271 = sbr.rel (%p1269) target = $region342
              $region339: #{custom-call.26} parent=334 // loop_body
                %v1275 = vld [vmem:[%s1273] sm:%s1266]
                %1276 = vst [vmem:[%s1274] sm:%s1266] %v1275
              $region340: #{custom-call.26} parent=334 // loop_footer
                %s1272 = sadd.s32 1, %s1268
              $region341: #{custom-call.26} parent=334 // loop_footer_branch
                %1267 = sbr.rel target = $region337
              $region342: #{custom-call.26} parent=334 // loop_exit
                _
            $region335: #{custom-call.26} parent=319 // pred_fallthru
              _
          $region320: #{custom-call.26} parent=315 // pred_fallthru
            _
          // Predicated region
          $region321: #{custom-call.26} parent=315 // pred_check
            _
          $region322: #{custom-call.26} parent=315 // pred_check_branch
            %1250 = sbr.rel (0) target = $region324
          $region323: #{custom-call.26} parent=315 // pred_region
            %s1252 = ssub.s32 4, 1
            loop: start=0, step=1, limit=1
            $region325: #{custom-call.26} parent=323 // loop_pre_header
              _
            $region326: #{custom-call.26} parent=323 // loop_header
              %s1254 = sphi 0, %s1258
              %p1255 = scmp.ge.s32.totalorder %s1254, 1
              %s1259 = sphi %s1059, %s1059
              %s1260 = sphi %s1244, %s1244
            $region327: #{custom-call.26} parent=323 // loop_header_branch
              %1257 = sbr.rel (%p1255) target = $region331
            $region328: #{custom-call.26} parent=323 // loop_body
              %v1261 = vld [vmem:[%s1259] sm:%s1252]
              %1262 = vst [vmem:[%s1260] sm:%s1252] %v1261
            $region329: #{custom-call.26} parent=323 // loop_footer
              %s1258 = sadd.s32 1, %s1254
            $region330: #{custom-call.26} parent=323 // loop_footer_branch
              %1253 = sbr.rel target = $region326
            $region331: #{custom-call.26} parent=323 // loop_exit
              _
          $region324: #{custom-call.26} parent=315 // pred_fallthru
            _
        $region316: #{custom-call.26} parent=139 // pred_fallthru
          _
        %1277 = vnop
      $region140: #{custom-call.26} parent=5 // pred_fallthru
        _
      %p1278 = scmp.le.s32.totalorder 2, %s12
      // Predicated region
      $region343: #{custom-call.26} parent=5 // pred_check
        %p1279 = pneg %p1278
      $region344: #{custom-call.26} parent=5 // pred_check_branch
        %1281 = sbr.rel (%p1279) target = $region346
      $region345: #{custom-call.26} parent=5 // pred_region
        %s1282 = ssub.s32 %s12, 2
        // Predicated region
        $region347: #{custom-call.26} parent=345 // pred_check
          %p1283 = pneg %p43
        $region348: #{custom-call.26} parent=345 // pred_check_branch
          %1285 = sbr.rel (%p1283) target = $region350
        $region349: #{custom-call.26} parent=345 // pred_region
          %s1286 = sand.u32 %s28, 1
          %s1287 = sand.u32 %s28, 1
          %s1288 = smul.addr %s1287, 2
          %s1289 = scalar_lea.vmem [#allocation9], %s1288
        $region350: #{custom-call.26} parent=345 // pred_fallthru
          _
        // Predicated region
        $region351: #{custom-call.26} parent=345 // pred_check
          %p1290 = pneg %p71
        $region352: #{custom-call.26} parent=345 // pred_check_branch
          %1292 = sbr.rel (%p1290) target = $region354
        $region353: #{custom-call.26} parent=345 // pred_region
          %s1293 = sand.u32 %s56, 1
          %s1294 = sand.u32 %s56, 1
          %s1295 = smul.addr %s1294, 2
          %s1296 = scalar_lea.vmem [#allocation11], %s1295
        $region354: #{custom-call.26} parent=345 // pred_fallthru
          _
        %s1297 = sand.u32 %s18, 1
        %s1298 = sand.u32 %s18, 1
        %s1299 = smul.addr %s1298, 2
        %s1300 = scalar_lea.vmem [#allocation13], %s1299
        %s1301 = sand.u32 %s18, 1
        %s1302 = sand.u32 %s18, 1
        %s1303 = smul.addr %s1302, 2
        %s1304 = scalar_lea.vmem [#allocation15], %s1303
        %s1305 = sand.u32 %s18, 1
        %s1306 = sand.u32 %s18, 1
        %s1307 = smul.addr %s1306, 2
        %s1308 = scalar_lea.vmem [#allocation17], %s1307
        %s1309 = sand.u32 %s18, 1
        %s1310 = sand.u32 %s18, 1
        %s1311 = smul.addr %s1310, 2
        %s1312 = scalar_lea.vmem [#allocation19], %s1311
      $region346: #{custom-call.26} parent=5 // pred_fallthru
        _
    $region6: #{custom-call.26} parent=1 // loop_footer
      %s16 = sadd.s32 1, %s12
    $region7: #{custom-call.26} parent=1 // loop_footer_branch
      %11 = sbr.rel target = $region3
    $region8: #{custom-call.26} parent=1 // loop_exit
      _

// kernel: custom-call.27
$region0: #{custom-call.27}
  %s0 = inlined_call_operand.vmem [shape: f32[2,8,2,2], index: 0, kind: input, shape index: {}]
  %s1 = inlined_call_operand.vmem [shape: f32[2,8,2,2], index: 1, kind: input, shape index: {}]
  %s2 = inlined_call_operand.vmem [shape: f32[2,8,2,2], index: 2, kind: input, shape index: {}]
  %s3 = inlined_call_operand.vmem [shape: f32[2,8,2,2], index: 3, kind: input, shape index: {}]
  %s4 = inlined_call_operand.vmem [shape: f32[2,8,2], index: 4, kind: output, shape index: {0}]
  %s5 = inlined_call_operand.vmem [shape: f32[2,8,2], index: 5, kind: output, shape index: {1}]
  %s6 = inlined_call_operand.vmem [shape: f32[2,8,2,2], index: 6, kind: output, shape index: {2}]
  %s7 = inlined_call_operand.vmem [shape: f32[2,8,2,2], index: 7, kind: output, shape index: {3}]
  %s8 = inlined_call_operand.vmem [shape: f32[2,8,2,2], index: 8, kind: output, shape index: {4}]
  %s9 = inlined_call_operand.vmem [shape: f32[2,8,2,2], index: 9, kind: output, shape index: {5}]
  %10 = xla_tuple %s4, %s5, %s6, %s7, %s8, %s9
  $region1: #{custom-call.27} parent=0
    #allocation0 [shape = 'u8[4096]{0}', space=vmem, size = 0x1000, scoped, tag = 'operand span for operand 0']
    #allocation1 [shape = 'u8[2048]{0}', space=vmem, size = 0x800, scoped, tag = 'packed  for operand 0']
    #allocation2 [shape = 'u8[4096]{0}', space=vmem, size = 0x1000, scoped, tag = 'operand span for operand 1']
    #allocation3 [shape = 'u8[2048]{0}', space=vmem, size = 0x800, scoped, tag = 'packed  for operand 1']
    #allocation4 [shape = 'u8[4096]{0}', space=vmem, size = 0x1000, scoped, tag = 'operand span for operand 2']
    #allocation5 [shape = 'u8[2048]{0}', space=vmem, size = 0x800, scoped, tag = 'packed  for operand 2']
    #allocation6 [shape = 'u8[4096]{0}', space=vmem, size = 0x1000, scoped, tag = 'operand span for operand 3']
    #allocation7 [shape = 'u8[2048]{0}', space=vmem, size = 0x800, scoped, tag = 'packed  for operand 3']
    #allocation8 [shape = 'u8[8192]{0}', space=vmem, size = 0x2000, scoped, tag = 'operand span for operand 4']
    #allocation9 [shape = 'u8[8192]{0}', space=vmem, size = 0x2000, scoped, tag = 'operand span for operand 5']
    #allocation10 [shape = 'u8[4096]{0}', space=vmem, size = 0x1000, scoped, tag = 'operand span for operand 6']
    #allocation11 [shape = 'u8[2048]{0}', space=vmem, size = 0x800, scoped, tag = 'packed  for operand 6']
    #allocation12 [shape = 'u8[4096]{0}', space=vmem, size = 0x1000, scoped, tag = 'operand span for operand 7']
    #allocation13 [shape = 'u8[2048]{0}', space=vmem, size = 0x800, scoped, tag = 'packed  for operand 7']
    #allocation14 [shape = 'u8[4096]{0}', space=vmem, size = 0x1000, scoped, tag = 'operand span for operand 8']
    #allocation15 [shape = 'u8[2048]{0}', space=vmem, size = 0x800, scoped, tag = 'packed  for operand 8']
    #allocation16 [shape = 'u8[4096]{0}', space=vmem, size = 0x1000, scoped, tag = 'operand span for operand 9']
    #allocation17 [shape = 'u8[2048]{0}', space=vmem, size = 0x800, scoped, tag = 'packed  for operand 9']
    loop: start=0, step=1, limit=18
    $region2: #{custom-call.27} parent=1 // loop_pre_header
      _
    $region3: #{custom-call.27} parent=1 // loop_header
      %s12 = sphi 0, %s16
      %p13 = scmp.ge.s32.totalorder %s12, 18
      %s19 = sphi 0, %s31
      %s20 = sphi 0, %s27
      %s21 = sphi 0, %s19
      %s22 = sphi 0, %s20
      %s23 = sphi 0, %s21
      %s24 = sphi 0, %s22
      %s38 = sphi 0, %s40
      %s41 = sphi 0, %s38
      %s42 = sphi 0, %s41
      %s58 = sphi 0, %s42
      %s68 = sphi 0, %s70
      %s71 = sphi 0, %s68
      %s72 = sphi 0, %s71
      %s88 = sphi 0, %s72
    $region4: #{custom-call.27} parent=1 // loop_header_branch
      %15 = sbr.rel (%p13) target = $region8
    $region5: #{custom-call.27} parent=1 // loop_body
      %s17 = ssub.s32 %s12, 1
      %s18 = ssub.s32 %s12, 2
      %s25 = sadd.s32 1, %s20
      %p26 = scmp.ge.s32.totalorder %s25, 8
      %s27 = scalar_select %p26, 0, %s25
      %s28 = sadd.s32 1, %s19
      %s29 = scalar_select %p26, %s28, %s19
      %p30 = scmp.ge.s32.totalorder %s29, 2
      %s31 = scalar_select %p30, 0, %s29
      %s32 = sshrl.u32 %s20, 3
      %s33 = sshrl.u32 %s27, 3
      %s34 = ssub.s32 %s19, %s31
      %s35 = ssub.s32 %s32, %s33
      %s36 = sor.u32 %s34, %s35
      %p37 = scmp.eq.s32.totalorder %s36, 0
      %s39 = sadd.s32 %s38, 1
      %s40 = scalar_select %p37, %s38, %s39
      %p43 = pneg %p37
      %p44 = scmp.eq.s32.totalorder %s12, 15
      %p45 = por %p43, %p44
      %p46 = scmp.ne.s32.totalorder %s38, %s41
      %p47 = scmp.eq.s32.totalorder %s12, 0
      %p48 = por %p46, %p47
      %p49 = scmp.ne.s32.totalorder %s38, %s41
      %p50 = scmp.eq.s32.totalorder %s17, 15
      %p51 = por %p49, %p50
      %p52 = scmp.ne.s32.totalorder %s41, %s42
      %p53 = scmp.eq.s32.totalorder %s17, 0
      %p54 = por %p52, %p53
      %p55 = scmp.ne.s32.totalorder %s41, %s42
      %p56 = scmp.eq.s32.totalorder %s18, 15
      %p57 = por %p55, %p56
      %p59 = scmp.ne.s32.totalorder %s42, %s58
      %p60 = scmp.eq.s32.totalorder %s18, 0
      %p61 = por %p59, %p60
      %s62 = sshrl.u32 %s20, 3
      %s63 = sshrl.u32 %s27, 3
      %s64 = ssub.s32 %s19, %s31
      %s65 = ssub.s32 %s62, %s63
      %s66 = sor.u32 %s64, %s65
      %p67 = scmp.eq.s32.totalorder %s66, 0
      %s69 = sadd.s32 %s68, 1
      %s70 = scalar_select %p67, %s68, %s69
      %p73 = pneg %p67
      %p74 = scmp.eq.s32.totalorder %s12, 15
      %p75 = por %p73, %p74
      %p76 = scmp.ne.s32.totalorder %s68, %s71
      %p77 = scmp.eq.s32.totalorder %s12, 0
      %p78 = por %p76, %p77
      %p79 = scmp.ne.s32.totalorder %s68, %s71
      %p80 = scmp.eq.s32.totalorder %s17, 15
      %p81 = por %p79, %p80
      %p82 = scmp.ne.s32.totalorder %s71, %s72
      %p83 = scmp.eq.s32.totalorder %s17, 0
      %p84 = por %p82, %p83
      %p85 = scmp.ne.s32.totalorder %s71, %s72
      %p86 = scmp.eq.s32.totalorder %s18, 15
      %p87 = por %p85, %p86
      %p89 = scmp.ne.s32.totalorder %s72, %s88
      %p90 = scmp.eq.s32.totalorder %s18, 0
      %p91 = por %p89, %p90
      %p92 = scmp.le.s32.totalorder 1, %s12
      %p93 = scmp.lt.s32.totalorder %s12, 17
      %p94 = pnand %p92, %p93
      %p95 = pneg %p94
      // Predicated region
      $region9: #{custom-call.27} parent=5 // pred_check
        _
      $region10: #{custom-call.27} parent=5 // pred_check_branch
        %97 = sbr.rel (%p94) target = $region12
      $region11: #{custom-call.27} parent=5 // pred_region
        %s98 = ssub.s32 %s12, 1
      $region12: #{custom-call.27} parent=5 // pred_fallthru
        _
      %p99 = scmp.lt.s32.totalorder %s12, 16
      // Predicated region
      $region13: #{custom-call.27} parent=5 // pred_check
        %p100 = pneg %p99
      $region14: #{custom-call.27} parent=5 // pred_check_branch
        %102 = sbr.rel (%p100) target = $region16
      $region15: #{custom-call.27} parent=5 // pred_region
        %s103 = sand.u32 %s12, 1
        %s104 = sand.u32 %s12, 1
        %s105 = smul.addr %s104, 2
        %s106 = scalar_lea.vmem [#allocation1], %s105
        %s107 = smul.addr %s19, 8
        %s108 = sadd.s32 %s20, %s107
        %s109 = smul.addr %s108, 2
        %s110 = scalar_lea.vmem %s0, %s109
        // Predicated region
        $region17: #{custom-call.27} parent=15 // pred_check
          _
        $region18: #{custom-call.27} parent=15 // pred_check_branch
          %112 = sbr.rel (0) target = $region20
        $region19: #{custom-call.27} parent=15 // pred_region
          // Predicated region
          $region21: #{custom-call.27} parent=19 // pred_check
            _
          $region22: #{custom-call.27} parent=19 // pred_check_branch
            %114 = sbr.rel target = $region24
          $region23: #{custom-call.27} parent=19 // pred_region
            // Predicated region
            $region36: #{custom-call.27} parent=23 // pred_check
              _
            $region37: #{custom-call.27} parent=23 // pred_check_branch
              %130 = sbr.rel (0) target = $region39
            $region38: #{custom-call.27} parent=23 // pred_region
              %s132 = ssub.s32 4, 1
              loop: start=0, step=1, limit=1
              $region40: #{custom-call.27} parent=38 // loop_pre_header
                _
              $region41: #{custom-call.27} parent=38 // loop_header
                %s134 = sphi 0, %s138
                %p135 = scmp.ge.s32.totalorder %s134, 1
                %s139 = sphi %s110, %s110
                %s140 = sphi %s106, %s106
              $region42: #{custom-call.27} parent=38 // loop_header_branch
                %137 = sbr.rel (%p135) target = $region46
              $region43: #{custom-call.27} parent=38 // loop_body
                %v141 = vld [vmem:[%s139] sm:%s132]
                %142 = vst [vmem:[%s140] sm:%s132] %v141
              $region44: #{custom-call.27} parent=38 // loop_footer
                %s138 = sadd.s32 1, %s134
              $region45: #{custom-call.27} parent=38 // loop_footer_branch
                %133 = sbr.rel target = $region41
              $region46: #{custom-call.27} parent=38 // loop_exit
                _
            $region39: #{custom-call.27} parent=23 // pred_fallthru
              _
          $region24: #{custom-call.27} parent=19 // pred_fallthru
            _
          // Predicated region
          $region25: #{custom-call.27} parent=19 // pred_check
            _
          $region26: #{custom-call.27} parent=19 // pred_check_branch
            %116 = sbr.rel (0) target = $region28
          $region27: #{custom-call.27} parent=19 // pred_region
            %s118 = ssub.s32 4, 1
            loop: start=0, step=1, limit=1
            $region29: #{custom-call.27} parent=27 // loop_pre_header
              _
            $region30: #{custom-call.27} parent=27 // loop_header
              %s120 = sphi 0, %s124
              %p121 = scmp.ge.s32.totalorder %s120, 1
              %s125 = sphi %s110, %s110
              %s126 = sphi %s106, %s106
            $region31: #{custom-call.27} parent=27 // loop_header_branch
              %123 = sbr.rel (%p121) target = $region35
            $region32: #{custom-call.27} parent=27 // loop_body
              %v127 = vld [vmem:[%s125] sm:%s118]
              %128 = vst [vmem:[%s126] sm:%s118] %v127
            $region33: #{custom-call.27} parent=27 // loop_footer
              %s124 = sadd.s32 1, %s120
            $region34: #{custom-call.27} parent=27 // loop_footer_branch
              %119 = sbr.rel target = $region30
            $region35: #{custom-call.27} parent=27 // loop_exit
              _
          $region28: #{custom-call.27} parent=19 // pred_fallthru
            _
        $region20: #{custom-call.27} parent=15 // pred_fallthru
          _
        %143 = vnop
        %s144 = sand.u32 %s12, 1
        %s145 = sand.u32 %s12, 1
        %s146 = smul.addr %s145, 2
        %s147 = scalar_lea.vmem [#allocation3], %s146
        %s148 = smul.addr %s19, 8
        %s149 = sadd.s32 %s20, %s148
        %s150 = smul.addr %s149, 2
        %s151 = scalar_lea.vmem %s1, %s150
        // Predicated region
        $region47: #{custom-call.27} parent=15 // pred_check
          _
        $region48: #{custom-call.27} parent=15 // pred_check_branch
          %153 = sbr.rel (0) target = $region50
        $region49: #{custom-call.27} parent=15 // pred_region
          // Predicated region
          $region51: #{custom-call.27} parent=49 // pred_check
            _
          $region52: #{custom-call.27} parent=49 // pred_check_branch
            %155 = sbr.rel target = $region54
          $region53: #{custom-call.27} parent=49 // pred_region
            // Predicated region
            $region66: #{custom-call.27} parent=53 // pred_check
              _
            $region67: #{custom-call.27} parent=53 // pred_check_branch
              %171 = sbr.rel (0) target = $region69
            $region68: #{custom-call.27} parent=53 // pred_region
              %s173 = ssub.s32 4, 1
              loop: start=0, step=1, limit=1
              $region70: #{custom-call.27} parent=68 // loop_pre_header
                _
              $region71: #{custom-call.27} parent=68 // loop_header
                %s175 = sphi 0, %s179
                %p176 = scmp.ge.s32.totalorder %s175, 1
                %s180 = sphi %s151, %s151
                %s181 = sphi %s147, %s147
              $region72: #{custom-call.27} parent=68 // loop_header_branch
                %178 = sbr.rel (%p176) target = $region76
              $region73: #{custom-call.27} parent=68 // loop_body
                %v182 = vld [vmem:[%s180] sm:%s173]
                %183 = vst [vmem:[%s181] sm:%s173] %v182
              $region74: #{custom-call.27} parent=68 // loop_footer
                %s179 = sadd.s32 1, %s175
              $region75: #{custom-call.27} parent=68 // loop_footer_branch
                %174 = sbr.rel target = $region71
              $region76: #{custom-call.27} parent=68 // loop_exit
                _
            $region69: #{custom-call.27} parent=53 // pred_fallthru
              _
          $region54: #{custom-call.27} parent=49 // pred_fallthru
            _
          // Predicated region
          $region55: #{custom-call.27} parent=49 // pred_check
            _
          $region56: #{custom-call.27} parent=49 // pred_check_branch
            %157 = sbr.rel (0) target = $region58
          $region57: #{custom-call.27} parent=49 // pred_region
            %s159 = ssub.s32 4, 1
            loop: start=0, step=1, limit=1
            $region59: #{custom-call.27} parent=57 // loop_pre_header
              _
            $region60: #{custom-call.27} parent=57 // loop_header
              %s161 = sphi 0, %s165
              %p162 = scmp.ge.s32.totalorder %s161, 1
              %s166 = sphi %s151, %s151
              %s167 = sphi %s147, %s147
            $region61: #{custom-call.27} parent=57 // loop_header_branch
              %164 = sbr.rel (%p162) target = $region65
            $region62: #{custom-call.27} parent=57 // loop_body
              %v168 = vld [vmem:[%s166] sm:%s159]
              %169 = vst [vmem:[%s167] sm:%s159] %v168
            $region63: #{custom-call.27} parent=57 // loop_footer
              %s165 = sadd.s32 1, %s161
            $region64: #{custom-call.27} parent=57 // loop_footer_branch
              %160 = sbr.rel target = $region60
            $region65: #{custom-call.27} parent=57 // loop_exit
              _
          $region58: #{custom-call.27} parent=49 // pred_fallthru
            _
        $region50: #{custom-call.27} parent=15 // pred_fallthru
          _
        %184 = vnop
        %s185 = sand.u32 %s12, 1
        %s186 = sand.u32 %s12, 1
        %s187 = smul.addr %s186, 2
        %s188 = scalar_lea.vmem [#allocation5], %s187
        %s189 = smul.addr %s19, 8
        %s190 = sadd.s32 %s20, %s189
        %s191 = smul.addr %s190, 2
        %s192 = scalar_lea.vmem %s2, %s191
        // Predicated region
        $region77: #{custom-call.27} parent=15 // pred_check
          _
        $region78: #{custom-call.27} parent=15 // pred_check_branch
          %194 = sbr.rel (0) target = $region80
        $region79: #{custom-call.27} parent=15 // pred_region
          // Predicated region
          $region81: #{custom-call.27} parent=79 // pred_check
            _
          $region82: #{custom-call.27} parent=79 // pred_check_branch
            %196 = sbr.rel target = $region84
          $region83: #{custom-call.27} parent=79 // pred_region
            // Predicated region
            $region96: #{custom-call.27} parent=83 // pred_check
              _
            $region97: #{custom-call.27} parent=83 // pred_check_branch
              %212 = sbr.rel (0) target = $region99
            $region98: #{custom-call.27} parent=83 // pred_region
              %s214 = ssub.s32 4, 1
              loop: start=0, step=1, limit=1
              $region100: #{custom-call.27} parent=98 // loop_pre_header
                _
              $region101: #{custom-call.27} parent=98 // loop_header
                %s216 = sphi 0, %s220
                %p217 = scmp.ge.s32.totalorder %s216, 1
                %s221 = sphi %s192, %s192
                %s222 = sphi %s188, %s188
              $region102: #{custom-call.27} parent=98 // loop_header_branch
                %219 = sbr.rel (%p217) target = $region106
              $region103: #{custom-call.27} parent=98 // loop_body
                %v223 = vld [vmem:[%s221] sm:%s214]
                %224 = vst [vmem:[%s222] sm:%s214] %v223
              $region104: #{custom-call.27} parent=98 // loop_footer
                %s220 = sadd.s32 1, %s216
              $region105: #{custom-call.27} parent=98 // loop_footer_branch
                %215 = sbr.rel target = $region101
              $region106: #{custom-call.27} parent=98 // loop_exit
                _
            $region99: #{custom-call.27} parent=83 // pred_fallthru
              _
          $region84: #{custom-call.27} parent=79 // pred_fallthru
            _
          // Predicated region
          $region85: #{custom-call.27} parent=79 // pred_check
            _
          $region86: #{custom-call.27} parent=79 // pred_check_branch
            %198 = sbr.rel (0) target = $region88
          $region87: #{custom-call.27} parent=79 // pred_region
            %s200 = ssub.s32 4, 1
            loop: start=0, step=1, limit=1
            $region89: #{custom-call.27} parent=87 // loop_pre_header
              _
            $region90: #{custom-call.27} parent=87 // loop_header
              %s202 = sphi 0, %s206
              %p203 = scmp.ge.s32.totalorder %s202, 1
              %s207 = sphi %s192, %s192
              %s208 = sphi %s188, %s188
            $region91: #{custom-call.27} parent=87 // loop_header_branch
              %205 = sbr.rel (%p203) target = $region95
            $region92: #{custom-call.27} parent=87 // loop_body
              %v209 = vld [vmem:[%s207] sm:%s200]
              %210 = vst [vmem:[%s208] sm:%s200] %v209
            $region93: #{custom-call.27} parent=87 // loop_footer
              %s206 = sadd.s32 1, %s202
            $region94: #{custom-call.27} parent=87 // loop_footer_branch
              %201 = sbr.rel target = $region90
            $region95: #{custom-call.27} parent=87 // loop_exit
              _
          $region88: #{custom-call.27} parent=79 // pred_fallthru
            _
        $region80: #{custom-call.27} parent=15 // pred_fallthru
          _
        %225 = vnop
        %s226 = sand.u32 %s12, 1
        %s227 = sand.u32 %s12, 1
        %s228 = smul.addr %s227, 2
        %s229 = scalar_lea.vmem [#allocation7], %s228
        %s230 = smul.addr %s19, 8
        %s231 = sadd.s32 %s20, %s230
        %s232 = smul.addr %s231, 2
        %s233 = scalar_lea.vmem %s3, %s232
        // Predicated region
        $region107: #{custom-call.27} parent=15 // pred_check
          _
        $region108: #{custom-call.27} parent=15 // pred_check_branch
          %235 = sbr.rel (0) target = $region110
        $region109: #{custom-call.27} parent=15 // pred_region
          // Predicated region
          $region111: #{custom-call.27} parent=109 // pred_check
            _
          $region112: #{custom-call.27} parent=109 // pred_check_branch
            %237 = sbr.rel target = $region114
          $region113: #{custom-call.27} parent=109 // pred_region
            // Predicated region
            $region126: #{custom-call.27} parent=113 // pred_check
              _
            $region127: #{custom-call.27} parent=113 // pred_check_branch
              %253 = sbr.rel (0) target = $region129
            $region128: #{custom-call.27} parent=113 // pred_region
              %s255 = ssub.s32 4, 1
              loop: start=0, step=1, limit=1
              $region130: #{custom-call.27} parent=128 // loop_pre_header
                _
              $region131: #{custom-call.27} parent=128 // loop_header
                %s257 = sphi 0, %s261
                %p258 = scmp.ge.s32.totalorder %s257, 1
                %s262 = sphi %s233, %s233
                %s263 = sphi %s229, %s229
              $region132: #{custom-call.27} parent=128 // loop_header_branch
                %260 = sbr.rel (%p258) target = $region136
              $region133: #{custom-call.27} parent=128 // loop_body
                %v264 = vld [vmem:[%s262] sm:%s255]
                %265 = vst [vmem:[%s263] sm:%s255] %v264
              $region134: #{custom-call.27} parent=128 // loop_footer
                %s261 = sadd.s32 1, %s257
              $region135: #{custom-call.27} parent=128 // loop_footer_branch
                %256 = sbr.rel target = $region131
              $region136: #{custom-call.27} parent=128 // loop_exit
                _
            $region129: #{custom-call.27} parent=113 // pred_fallthru
              _
          $region114: #{custom-call.27} parent=109 // pred_fallthru
            _
          // Predicated region
          $region115: #{custom-call.27} parent=109 // pred_check
            _
          $region116: #{custom-call.27} parent=109 // pred_check_branch
            %239 = sbr.rel (0) target = $region118
          $region117: #{custom-call.27} parent=109 // pred_region
            %s241 = ssub.s32 4, 1
            loop: start=0, step=1, limit=1
            $region119: #{custom-call.27} parent=117 // loop_pre_header
              _
            $region120: #{custom-call.27} parent=117 // loop_header
              %s243 = sphi 0, %s247
              %p244 = scmp.ge.s32.totalorder %s243, 1
              %s248 = sphi %s233, %s233
              %s249 = sphi %s229, %s229
            $region121: #{custom-call.27} parent=117 // loop_header_branch
              %246 = sbr.rel (%p244) target = $region125
            $region122: #{custom-call.27} parent=117 // loop_body
              %v250 = vld [vmem:[%s248] sm:%s241]
              %251 = vst [vmem:[%s249] sm:%s241] %v250
            $region123: #{custom-call.27} parent=117 // loop_footer
              %s247 = sadd.s32 1, %s243
            $region124: #{custom-call.27} parent=117 // loop_footer_branch
              %242 = sbr.rel target = $region120
            $region125: #{custom-call.27} parent=117 // loop_exit
              _
          $region118: #{custom-call.27} parent=109 // pred_fallthru
            _
        $region110: #{custom-call.27} parent=15 // pred_fallthru
          _
        %266 = vnop
      $region16: #{custom-call.27} parent=5 // pred_fallthru
        _
      %p267 = scmp.le.s32.totalorder 1, %s12
      %p268 = scmp.lt.s32.totalorder %s12, 17
      %p269 = pnand %p267, %p268
      %p270 = pneg %p269
      // Predicated region
      $region137: #{custom-call.27} parent=5 // pred_check
        _
      $region138: #{custom-call.27} parent=5 // pred_check_branch
        %272 = sbr.rel (%p269) target = $region140
      $region139: #{custom-call.27} parent=5 // pred_region
        #allocation18 [shape = 'f32[2,2]{1,0}', space=vmem, size = 0x1000, scoped, tag = 'a top-left matrix']
        #allocation19 [shape = 'f32[2,2]{1,0}', space=vmem, size = 0x1000, scoped, tag = 'a top-right matrix']
        #allocation20 [shape = 'f32[2,2]{1,0}', space=vmem, size = 0x1000, scoped, tag = 'a bottom-left matrix']
        #allocation21 [shape = 'f32[2,2]{1,0}', space=vmem, size = 0x1000, scoped, tag = 'a bottom-right matrix']
        %s273 = ssub.s32 %s12, 1
        %s274 = sand.u32 %s17, 1
        %s275 = sand.u32 %s17, 1
        %s276 = smul.addr %s275, 2
        %s277 = scalar_lea.vmem [#allocation1], %s276
        %s278 = sand.u32 %s17, 1
        %s279 = sand.u32 %s17, 1
        %s280 = smul.addr %s279, 2
        %s281 = scalar_lea.vmem [#allocation3], %s280
        %s282 = sand.u32 %s17, 1
        %s283 = sand.u32 %s17, 1
        %s284 = smul.addr %s283, 2
        %s285 = scalar_lea.vmem [#allocation5], %s284
        %s286 = sand.u32 %s17, 1
        %s287 = sand.u32 %s17, 1
        %s288 = smul.addr %s287, 2
        %s289 = scalar_lea.vmem [#allocation7], %s288
        %s290 = sand.u32 %s17, 1
        %s291 = sand.u32 %s17, 1
        %s292 = smul.addr %s291, 2
        %s293 = scalar_lea.vmem [#allocation1], %s292
        %s294 = sand.u32 %s17, 1
        %s295 = sand.u32 %s17, 1
        %s296 = smul.addr %s295, 2
        %s297 = scalar_lea.vmem [#allocation3], %s296
        %s298 = sand.u32 %s17, 1
        %s299 = sand.u32 %s17, 1
        %s300 = smul.addr %s299, 2
        %s301 = scalar_lea.vmem [#allocation5], %s300
        %s302 = sand.u32 %s17, 1
        %s303 = sand.u32 %s17, 1
        %s304 = smul.addr %s303, 2
        %s305 = scalar_lea.vmem [#allocation7], %s304
        %p306 = pneg %p54
        %p307 = pneg %p51
        %s308 = sand.u32 %s41, 1
        %s309 = sand.u32 %s41, 1
        %s310 = smul.addr %s309, 8
        %s311 = scalar_lea.vmem [#allocation8], %s310
        %p312 = pneg %p84
        %p313 = pneg %p81
        %s314 = sand.u32 %s71, 1
        %s315 = sand.u32 %s71, 1
        %s316 = smul.addr %s315, 8
        %s317 = scalar_lea.vmem [#allocation9], %s316
        %s318 = sand.u32 %s17, 1
        %s319 = sand.u32 %s17, 1
        %s320 = smul.addr %s319, 2
        %s321 = scalar_lea.vmem [#allocation11], %s320
        %s322 = sand.u32 %s17, 1
        %s323 = sand.u32 %s17, 1
        %s324 = smul.addr %s323, 2
        %s325 = scalar_lea.vmem [#allocation13], %s324
        %s326 = sand.u32 %s17, 1
        %s327 = sand.u32 %s17, 1
        %s328 = smul.addr %s327, 2
        %s329 = scalar_lea.vmem [#allocation15], %s328
        %s330 = sand.u32 %s17, 1
        %s331 = sand.u32 %s17, 1
        %s332 = smul.addr %s331, 2
        %s333 = scalar_lea.vmem [#allocation17], %s332
        %s335 = ssub.s32 4, 1
        %v336 = vld [vmem:[%s293] sm:%s335]
        %337 = vst [vmem:[#allocation0] sm:%s335] %v336
        %s339 = ssub.s32 4, 1
        %v340 = vld [vmem:[%s297] sm:%s339]
        %341 = vst [vmem:[#allocation2] sm:%s339] %v340
        %s343 = ssub.s32 4, 1
        %v344 = vld [vmem:[%s301] sm:%s343]
        %345 = vst [vmem:[#allocation4] sm:%s343] %v344
        %s347 = ssub.s32 4, 1
        %v348 = vld [vmem:[%s305] sm:%s347]
        %349 = vst [vmem:[#allocation6] sm:%s347] %v348
        %s350 = sshrl.u32 %s22, 3
        %s351 = sshrl.u32 %s22, 3
        %s352 = smov [#allocation18]
        %v353 = vld [vmem:[#allocation0] sm:$0xff]
        %354 = vst [vmem:[%s352] sm:$0xff] %v353
        %s355 = smov [#allocation19]
        %v356 = vld [vmem:[#allocation2] sm:$0xff]
        %357 = vst [vmem:[%s355] sm:$0xff] %v356
        %s358 = smov [#allocation20]
        %v359 = vld [vmem:[#allocation4] sm:$0xff]
        %360 = vst [vmem:[%s358] sm:$0xff] %v359
        %s361 = smov [#allocation21]
        %v362 = vld [vmem:[#allocation6] sm:$0xff]
        %363 = vst [vmem:[%s361] sm:$0xff] %v362
        %364 = vst [vmem:[#allocation10] sm:$0xff] 0.0
        %365 = vst [vmem:[#allocation12] sm:$0xff] 0.0
        %366 = vst [vmem:[#allocation14] sm:$0xff] 0.0
        %367 = vst [vmem:[#allocation16] sm:$0xff] 0.0
        %s368 = smov [#allocation10]
        %v369 = vlaneseq
        %v370 = vand.u32 %v369, 127
        %v371 = vmov %v370
        %v372 = vlaneseq
        %v373 = vshrl.u32 %v372, 7
        %v374 = vmov %v373
        %v375 = vld [vmem:[%s368] sm:$0x3]
        %vm378 = vcmp.eq.s32.totalorder %v374, %v371
        %v379 = vsel %vm378, 1.0, %v375
        %380 = vst [vmem:[%s368] sm:$0x3] %v379
        %s381 = smov [#allocation16]
        %v382 = vlaneseq
        %v383 = vand.u32 %v382, 127
        %v384 = vmov %v383
        %v385 = vlaneseq
        %v386 = vshrl.u32 %v385, 7
        %v387 = vmov %v386
        %v388 = vld [vmem:[%s381] sm:$0x3]
        %vm391 = vcmp.eq.s32.totalorder %v387, %v384
        %v392 = vsel %vm391, 1.0, %v388
        %393 = vst [vmem:[%s381] sm:$0x3] %v392
        // While loop
        $region141: #{custom-call.27} parent=139 // loop_pre_header
          _
        $region142: #{custom-call.27} parent=139 // loop_header
          %s395 = sphi 0, %s977
          %v396 = vlaneseq
          %v397 = vand.u32 %v396, 127
          %v398 = vmov %v397
          %v399 = vlaneseq
          %v400 = vshrl.u32 %v399, 7
          %v401 = vmov %v400
          %s402 = smov [#allocation18]
          %v403 = vlaneseq
          %v404 = vand.u32 %v403, 127
          %vm405 = vcmp.ge.s32.totalorder %v404, 0
          %vm406 = vcmp.lt.s32.totalorder %v404, 2
          %vm407 = vmand %vm405, %vm406
          %v408 = vld [vmem:[%s402] sm:$0x3]
          %v409 = vsel %vm407, %v408, 0.0
          %v410 = vmul.f32 %v409, %v409
          %vm413 = vcmp.eq.s32.totalorder %v401, %v398
          %v414 = vsel %vm413, 0.0, %v410
          %v415 = vlaneseq
          %v416 = vand.u32 %v415, 127
          %v417 = vmov %v416
          %v418 = vlaneseq
          %v419 = vshrl.u32 %v418, 7
          %v420 = vmov %v419
          %s421 = smov [#allocation19]
          %v422 = vlaneseq
          %v423 = vand.u32 %v422, 127
          %vm424 = vcmp.ge.s32.totalorder %v423, 0
          %vm425 = vcmp.lt.s32.totalorder %v423, 2
          %vm426 = vmand %vm424, %vm425
          %v427 = vld [vmem:[%s421] sm:$0x3]
          %v428 = vsel %vm426, %v427, 0.0
          %v429 = vmul.f32 %v428, %v428
          %v430 = vadd.f32 %v414, %v429
          %v431 = vadd.f32 %v410, %v429
          %v432 = vlaneseq
          %v433 = vand.u32 %v432, 127
          %v434 = vmov %v433
          %v435 = vlaneseq
          %v436 = vshrl.u32 %v435, 7
          %v437 = vmov %v436
          %s438 = smov [#allocation20]
          %v439 = vlaneseq
          %v440 = vand.u32 %v439, 127
          %vm441 = vcmp.ge.s32.totalorder %v440, 0
          %vm442 = vcmp.lt.s32.totalorder %v440, 2
          %vm443 = vmand %vm441, %vm442
          %v444 = vld [vmem:[%s438] sm:$0x3]
          %v445 = vsel %vm443, %v444, 0.0
          %v446 = vmul.f32 %v445, %v445
          %v447 = vadd.f32 %v430, %v446
          %v448 = vadd.f32 %v431, %v446
          %v449 = vlaneseq
          %v450 = vand.u32 %v449, 127
          %v451 = vmov %v450
          %v452 = vlaneseq
          %v453 = vshrl.u32 %v452, 7
          %v454 = vmov %v453
          %s455 = smov [#allocation21]
          %v456 = vlaneseq
          %v457 = vand.u32 %v456, 127
          %vm458 = vcmp.ge.s32.totalorder %v457, 0
          %vm459 = vcmp.lt.s32.totalorder %v457, 2
          %vm460 = vmand %vm458, %vm459
          %v461 = vld [vmem:[%s455] sm:$0x3]
          %v462 = vsel %vm460, %v461, 0.0
          %v463 = vmul.f32 %v462, %v462
          %vm466 = vcmp.eq.s32.totalorder %v454, %v451
          %v467 = vsel %vm466, 0.0, %v463
          %v468 = vadd.f32 %v447, %v467
          %v469 = vadd.f32 %v448, %v463
          %470 = vadd.xlane.f32.xlu0 %v469
          %v471 = vpop.xlane.xlu0 %470
          %v472 = vrot.slane %v471, 4
          %v473 = vadd.f32 %v471, %v472
          %v474 = vrot.slane %v473, 2
          %v475 = vadd.f32 %v473, %v474
          %v476 = vrot.slane %v475, 1
          %v477 = vadd.f32 %v475, %v476
          %478 = vadd.xlane.f32.xlu0 %v468
          %v479 = vpop.xlane.xlu0 %478
          %v480 = vrot.slane %v479, 4
          %v481 = vadd.f32 %v479, %v480
          %v482 = vrot.slane %v481, 2
          %v483 = vadd.f32 %v481, %v482
          %v484 = vrot.slane %v483, 1
          %v485 = vadd.f32 %v483, %v484
          %s486 = vtos %v485
          %s487 = vtos %v477
          %s488 = smul.f32 1e-10, %s487
          %p489 = scmp.le.f32.partialorder %s486, %s488
          %p490 = scmp.ge.s32.totalorder %s395, 15
          %p491 = por %p489, %p490
        $region143: #{custom-call.27} parent=139 // loop_header_branch
          %979 = sbr.rel (%p491) target = $region147
        $region144: #{custom-call.27} parent=139 // loop_body
          loop: start=0, step=1, limit=3
          $region148: #{custom-call.27} parent=144 // loop_pre_header
            _
          $region149: #{custom-call.27} parent=144 // loop_header
            %s493 = sphi 0, %s497
            %p494 = scmp.ge.s32.totalorder %s493, 3
          $region150: #{custom-call.27} parent=144 // loop_header_branch
            %496 = sbr.rel (%p494) target = $region154
          $region151: #{custom-call.27} parent=144 // loop_body
            #allocation22 [shape = 'f32[1024]{0}', space=vmem, size = 0x1000, scoped, tag = 'a_tl_diag vmem']
            #allocation23 [shape = 'f32[1024]{0}', space=vmem, size = 0x1000, scoped, tag = 'a_tr_diag vmem']
            #allocation24 [shape = 'f32[1024]{0}', space=vmem, size = 0x1000, scoped, tag = 'a_br_diag vmem']
            #allocation25 [shape = 'f32[1024]{0}', space=vmem, size = 0x1000, scoped, tag = 'rt1 vmem']
            #allocation26 [shape = 'f32[1024]{0}', space=vmem, size = 0x1000, scoped, tag = 'rt2 vmem']
            #allocation27 [shape = 'f32[1024]{0}', space=vmem, size = 0x1000, scoped, tag = 'c vmem']
            #allocation28 [shape = 'f32[1024]{0}', space=vmem, size = 0x1000, scoped, tag = 's vmem']
            #allocation29 [shape = 'f32[4096]{0}', space=vmem, size = 0x4000, scoped, tag = 'c broadcast']
            #allocation30 [shape = 'f32[4096]{0}', space=vmem, size = 0x4000, scoped, tag = 's broadcast']
            %s498 = smov [#allocation18]
            %s499 = smov [#allocation22]
            %v500 = vlaneseq
            %v501 = vand.u32 %v500, 127
            %v502 = vmov %v501
            %v503 = vlaneseq
            %v504 = vshrl.u32 %v503, 7
            %v505 = vmov %v504
            %v506 = vld [vmem:[%s498] sm:$0x3]
            %vm509 = vcmp.eq.s32.totalorder %v505, %v502
            %v510 = vsel %vm509, %v506, 0.0
            %v511 = vrot.slane %v510, 4
            %v512 = vadd.f32 %v510, %v511
            %v513 = vrot.slane %v512, 2
            %v514 = vadd.f32 %v512, %v513
            %v515 = vrot.slane %v514, 1
            %v516 = vadd.f32 %v514, %v515
            %517 = vst [vmem:[%s499] sm:$0x1] %v516
            %s518 = smov [#allocation19]
            %s519 = smov [#allocation23]
            %v520 = vlaneseq
            %v521 = vand.u32 %v520, 127
            %v522 = vmov %v521
            %v523 = vlaneseq
            %v524 = vshrl.u32 %v523, 7
            %v525 = vmov %v524
            %v526 = vld [vmem:[%s518] sm:$0x3]
            %vm529 = vcmp.eq.s32.totalorder %v525, %v522
            %v530 = vsel %vm529, %v526, 0.0
            %v531 = vrot.slane %v530, 4
            %v532 = vadd.f32 %v530, %v531
            %v533 = vrot.slane %v532, 2
            %v534 = vadd.f32 %v532, %v533
            %v535 = vrot.slane %v534, 1
            %v536 = vadd.f32 %v534, %v535
            %537 = vst [vmem:[%s519] sm:$0x1] %v536
            %s538 = smov [#allocation21]
            %s539 = smov [#allocation24]
            %v540 = vlaneseq
            %v541 = vand.u32 %v540, 127
            %v542 = vmov %v541
            %v543 = vlaneseq
            %v544 = vshrl.u32 %v543, 7
            %v545 = vmov %v544
            %v546 = vld [vmem:[%s538] sm:$0x3]
            %vm549 = vcmp.eq.s32.totalorder %v545, %v542
            %v550 = vsel %vm549, %v546, 0.0
            %v551 = vrot.slane %v550, 4
            %v552 = vadd.f32 %v550, %v551
            %v553 = vrot.slane %v552, 2
            %v554 = vadd.f32 %v552, %v553
            %v555 = vrot.slane %v554, 1
            %v556 = vadd.f32 %v554, %v555
            %557 = vst [vmem:[%s539] sm:$0x1] %v556
            %s558 = smov [#allocation27]
            %s559 = smov [#allocation28]
            %s560 = smov [#allocation22]
            %v561 = vld [vmem:[%s560] sm:$0xff]
            %s562 = smov [#allocation23]
            %v563 = vld [vmem:[%s562] sm:$0xff]
            %s564 = smov [#allocation24]
            %v565 = vld [vmem:[%s564] sm:$0xff]
            %v566 = vsub.f32 %v565, %v561
            %v567 = vmul.f32 2.0, %v563
            %v568 = vrcp.pop %v567
            %v569 = vmul.f32 %v567, %v568
            %v570 = vsub.f32 1.0, %v569
            %v571 = vmul.f32 %v568, %v570
            %v572 = vadd.f32 %v568, %v571
            %vm573 = vweird.f32 %v567
            %vm574 = vweird.f32 %v568
            %vm575 = vmor %vm573, %vm574
            %v576 = vsel %vm575, %v568, %v572
            %v577 = vand.u32 2147483647, %v567
            %vm578 = vcmp.eq.f32.partialorder %v577, 8.507059e+37
            %v579 = vand.u32 %v567, 2147483648
            %v580 = vor.u32 1.1754944e-38, %v579
            %v581 = vsel %vm578, %v580, %v576
            %v582 = vmul.f32 %v566, %v581
            %vm583 = vcmp.ge.f32.partialorder %v582, 0.0
            %v584 = vmul.f32 %v582, %v582
            %v585 = vadd.f32 1.0, %v584
            %v586 = vrsqrt.pop %v585
            %v587 = vmul.f32 %v586, %v585
            %v588 = vmul.f32 %v587, %v586
            %v589 = vmul.f32 0.5, %v588
            %v590 = vsub.f32 1.5, %v589
            %v591 = vmul.f32 %v586, %v590
            %v592 = vmul.f32 %v585, %v591
            %vm593 = vcmp.eq.f32.partialorder %v585, inf
            %v594 = vsel %vm593, %v585, %v592
            %vm595 = vcmp.eq.f32.partialorder %v585, 0.0
            %v596 = vand.u32 %v585, 2147483648
            %v597 = vsel %vm595, %v596, %v594
            %v598 = vxor.u32 %v597, 2147483648
            %v599 = vsel %vm583, %v597, %v598
            %v600 = vadd.f32 %v582, %v599
            %v601 = vrcp.pop %v600
            %v602 = vmul.f32 %v600, %v601
            %v603 = vsub.f32 1.0, %v602
            %v604 = vmul.f32 %v601, %v603
            %v605 = vadd.f32 %v601, %v604
            %vm606 = vweird.f32 %v600
            %vm607 = vweird.f32 %v601
            %vm608 = vmor %vm606, %vm607
            %v609 = vsel %vm608, %v601, %v605
            %v610 = vand.u32 2147483647, %v600
            %vm611 = vcmp.eq.f32.partialorder %v610, 8.507059e+37
            %v612 = vand.u32 %v600, 2147483648
            %v613 = vor.u32 1.1754944e-38, %v612
            %v614 = vsel %vm611, %v613, %v609
            %v615 = vand.u32 2147483647, %v561
            %v616 = vand.u32 2147483647, %v563
            %v617 = vand.u32 2147483647, %v565
            %v618 = vmin.f32 %v615, %v617
            %v619 = vmul.f32 1.1920929e-08, %v618
            %vm620 = vcmp.le.f32.partialorder %v616, %v619
            %v621 = vsel %vm620, 0.0, %v614
            %v622 = vmul.f32 %v621, %v621
            %v623 = vadd.f32 1.0, %v622
            %v624 = vrsqrt.pop %v623
            %v625 = vmul.f32 %v624, %v623
            %v626 = vmul.f32 %v625, %v624
            %v627 = vmul.f32 0.5, %v626
            %v628 = vsub.f32 1.5, %v627
            %v629 = vmul.f32 %v624, %v628
            %vm630 = vweird.f32 %v623
            %vm631 = vweird.f32 %v624
            %vm632 = vmor %vm630, %vm631
            %v633 = vsel %vm632, %v624, %v629
            %v634 = vmul.f32 %v621, %v633
            %v635 = vmul.f32 %v621, %v563
            %v636 = vsub.f32 %v561, %v635
            %v637 = vmul.f32 %v621, %v563
            %v638 = vadd.f32 %v565, %v637
            %s639 = smov [#allocation25]
            %640 = vst [vmem:[%s639] sm:$0xff] %v636
            %s641 = smov [#allocation26]
            %642 = vst [vmem:[%s641] sm:$0xff] %v638
            %s643 = smov %s558
            %644 = vst [vmem:[%s643] sm:$0xff] %v633
            %s645 = smov %s559
            %646 = vst [vmem:[%s645] sm:$0xff] %v634
            %s647 = smov [#allocation27]
            %v648 = vld [vmem:[%s647] ss:$0 sm:$0xff]
            %v649 = vlaneseq
            %v650 = vand.u32 %v649, 127
            %v651 = vmov %v650
            %v652 = vlaneseq
            %v653 = vshrl.u32 %v652, 7
            %v654 = vmov %v653
            %vm656 = vcmp.eq.s32.totalorder %v654, %v651
            %v657 = vsel %vm656, %v648, 0.0
            %658 = vadd.xlane.f32.xlu0 %v657
            %v659 = vpop.xlane.xlu0 %658
            %s660 = smov [#allocation29]
            %661 = vst [vmem:[%s660] sm:$0xff] %v659
            %s662 = smov [#allocation28]
            %v663 = vld [vmem:[%s662] ss:$0 sm:$0xff]
            %v664 = vlaneseq
            %v665 = vand.u32 %v664, 127
            %v666 = vmov %v665
            %v667 = vlaneseq
            %v668 = vshrl.u32 %v667, 7
            %v669 = vmov %v668
            %vm671 = vcmp.eq.s32.totalorder %v669, %v666
            %v672 = vsel %vm671, %v663, 0.0
            %673 = vadd.xlane.f32.xlu0 %v672
            %v674 = vpop.xlane.xlu0 %673
            %s675 = smov [#allocation30]
            %676 = vst [vmem:[%s675] sm:$0xff] %v674
            %s677 = smov [#allocation29]
            %v678 = vld [vmem:[%s677] sm:$0xff]
            %s679 = smov [#allocation30]
            %v680 = vld [vmem:[%s679] sm:$0xff]
            %s681 = smov [#allocation18]
            %s682 = smov [#allocation19]
            %s683 = smov [#allocation20]
            %s684 = smov [#allocation21]
            %v685 = vld [vmem:[%s681] sm:$0x3]
            %v686 = vld [vmem:[%s682] sm:$0x3]
            %v687 = vld [vmem:[%s683] sm:$0x3]
            %v688 = vld [vmem:[%s684] sm:$0x3]
            %v689 = vmul.f32 %v678, %v685
            %v690 = vmul.f32 %v680, %v687
            %v691 = vsub.f32 %v689, %v690
            %v692 = vmul.f32 %v678, %v686
            %v693 = vmul.f32 %v680, %v688
            %v694 = vsub.f32 %v692, %v693
            %v695 = vmul.f32 %v680, %v685
            %v696 = vmul.f32 %v678, %v687
            %v697 = vadd.f32 %v695, %v696
            %v698 = vmul.f32 %v680, %v686
            %v699 = vmul.f32 %v678, %v688
            %v700 = vadd.f32 %v698, %v699
            %701 = vst [vmem:[%s681] sm:$0x3] %v691
            %702 = vst [vmem:[%s682] sm:$0x3] %v694
            %703 = vst [vmem:[%s683] sm:$0x3] %v697
            %704 = vst [vmem:[%s684] sm:$0x3] %v700
            %s705 = smov [#allocation27]
            %v706 = vld [vmem:[%s705] ss:$0 sm:$0xff]
            %s707 = smov [#allocation28]
            %v708 = vld [vmem:[%s707] ss:$0 sm:$0xff]
            %s709 = smov [#allocation18]
            %s710 = smov [#allocation19]
            %s711 = smov [#allocation20]
            %s712 = smov [#allocation21]
            %v713 = vld [vmem:[%s709] sm:$0x3]
            %v714 = vld [vmem:[%s710] sm:$0x3]
            %v715 = vld [vmem:[%s711] sm:$0x3]
            %v716 = vld [vmem:[%s712] sm:$0x3]
            %v717 = vmul.f32 %v706, %v713
            %v718 = vmul.f32 %v708, %v714
            %v719 = vsub.f32 %v717, %v718
            %v720 = vmul.f32 %v708, %v713
            %v721 = vmul.f32 %v706, %v714
            %v722 = vadd.f32 %v720, %v721
            %v723 = vmul.f32 %v706, %v715
            %v724 = vmul.f32 %v708, %v716
            %v725 = vsub.f32 %v723, %v724
            %v726 = vmul.f32 %v708, %v715
            %v727 = vmul.f32 %v706, %v716
            %v728 = vadd.f32 %v726, %v727
            %729 = vst [vmem:[%s709] sm:$0x3] %v719
            %730 = vst [vmem:[%s710] sm:$0x3] %v722
            %731 = vst [vmem:[%s711] sm:$0x3] %v725
            %732 = vst [vmem:[%s712] sm:$0x3] %v728
            %s733 = smov [#allocation18]
            %s734 = smov [#allocation25]
            %v735 = vlaneseq
            %v736 = vand.u32 %v735, 127
            %v737 = vmov %v736
            %v738 = vlaneseq
            %v739 = vshrl.u32 %v738, 7
            %v740 = vmov %v739
            %v741 = vld [vmem:[%s734] ss:$0 sm:$0xff]
            %v742 = vld [vmem:[%s733] sm:$0x3]
            %vm745 = vcmp.eq.s32.totalorder %v740, %v737
            %v746 = vsel %vm745, %v741, %v742
            %747 = vst [vmem:[%s733] sm:$0x3] %v746
            %s748 = smov [#allocation19]
            %v749 = vlaneseq
            %v750 = vand.u32 %v749, 127
            %v751 = vmov %v750
            %v752 = vlaneseq
            %v753 = vshrl.u32 %v752, 7
            %v754 = vmov %v753
            %v755 = vld [vmem:[%s748] sm:$0x3]
            %vm758 = vcmp.eq.s32.totalorder %v754, %v751
            %v759 = vsel %vm758, 0.0, %v755
            %760 = vst [vmem:[%s748] sm:$0x3] %v759
            %s761 = smov [#allocation20]
            %v762 = vlaneseq
            %v763 = vand.u32 %v762, 127
            %v764 = vmov %v763
            %v765 = vlaneseq
            %v766 = vshrl.u32 %v765, 7
            %v767 = vmov %v766
            %v768 = vld [vmem:[%s761] sm:$0x3]
            %vm771 = vcmp.eq.s32.totalorder %v767, %v764
            %v772 = vsel %vm771, 0.0, %v768
            %773 = vst [vmem:[%s761] sm:$0x3] %v772
            %s774 = smov [#allocation21]
            %s775 = smov [#allocation26]
            %v776 = vlaneseq
            %v777 = vand.u32 %v776, 127
            %v778 = vmov %v777
            %v779 = vlaneseq
            %v780 = vshrl.u32 %v779, 7
            %v781 = vmov %v780
            %v782 = vld [vmem:[%s775] ss:$0 sm:$0xff]
            %v783 = vld [vmem:[%s774] sm:$0x3]
            %vm786 = vcmp.eq.s32.totalorder %v781, %v778
            %v787 = vsel %vm786, %v782, %v783
            %788 = vst [vmem:[%s774] sm:$0x3] %v787
            %s789 = smov [#allocation18]
            %s790 = smov [#allocation19]
            %v791 = vld [vmem:[%s790] sm:$0x3]
            %792 = vrot.lane.b32.xlu0 %v791, 1
            %v793 = vpop.permute.xlu0 %792
            %v794 = vld [vmem:[%s789] sm:$0x3]
            %v795 = vld [vmem:[%s789] sm:$0x3]
            %796 = vrot.lane.b32.xlu0 %v795, 1
            %v797 = vpop.permute.xlu0 %796
            %v798 = vlaneseq
            %v799 = vand.u32 %v798, 127
            %vm800 = vcmp.eq.s32.totalorder %v799, 0
            %v801 = vsel %vm800, %v795, %v797
            %v802 = vlaneseq
            %v803 = vand.u32 %v802, 127
            %vm804 = vcmp.eq.s32.totalorder %v803, 1
            %v805 = vsel %vm804, %v793, %v801
            %v806 = vlaneseq
            %v807 = vand.u32 %v806, 127
            %vm808 = vcmp.ge.s32.totalorder %v807, 0
            %vm809 = vcmp.lt.s32.totalorder %v807, 2
            %vm810 = vmand %vm808, %vm809
            %v811 = vsel %vm810, %v805, 0.0
            %v812 = vld [vmem:[%s790] sm:$0x3]
            %813 = vrot.lane.b32.xlu0 %v812, 127
            %v814 = vpop.permute.xlu0 %813
            %v815 = vlaneseq
            %v816 = vand.u32 %v815, 127
            %vm817 = vcmp.eq.s32.totalorder %v816, 1
            %v818 = vsel %vm817, %v794, %v814
            %819 = vst [vmem:[%s789] sm:$0x3] %v811
            %820 = vst [vmem:[%s790] sm:$0x3] %v818
            %s821 = smov [#allocation20]
            %s822 = smov [#allocation21]
            %v823 = vld [vmem:[%s822] sm:$0x3]
            %824 = vrot.lane.b32.xlu0 %v823, 1
            %v825 = vpop.permute.xlu0 %824
            %v826 = vld [vmem:[%s821] sm:$0x3]
            %v827 = vld [vmem:[%s821] sm:$0x3]
            %828 = vrot.lane.b32.xlu0 %v827, 1
            %v829 = vpop.permute.xlu0 %828
            %v830 = vlaneseq
            %v831 = vand.u32 %v830, 127
            %vm832 = vcmp.eq.s32.totalorder %v831, 0
            %v833 = vsel %vm832, %v827, %v829
            %v834 = vlaneseq
            %v835 = vand.u32 %v834, 127
            %vm836 = vcmp.eq.s32.totalorder %v835, 1
            %v837 = vsel %vm836, %v825, %v833
            %v838 = vlaneseq
            %v839 = vand.u32 %v838, 127
            %vm840 = vcmp.ge.s32.totalorder %v839, 0
            %vm841 = vcmp.lt.s32.totalorder %v839, 2
            %vm842 = vmand %vm840, %vm841
            %v843 = vsel %vm842, %v837, 0.0
            %v844 = vld [vmem:[%s822] sm:$0x3]
            %845 = vrot.lane.b32.xlu0 %v844, 127
            %v846 = vpop.permute.xlu0 %845
            %v847 = vlaneseq
            %v848 = vand.u32 %v847, 127
            %vm849 = vcmp.eq.s32.totalorder %v848, 1
            %v850 = vsel %vm849, %v826, %v846
            %851 = vst [vmem:[%s821] sm:$0x3] %v843
            %852 = vst [vmem:[%s822] sm:$0x3] %v850
            %s853 = smov [#allocation18]
            %s854 = smov [#allocation20]
            %v855 = vld [vmem:[%s853] ss:$0 sm:$0xff]
            %s857 = scalar_lea.vmem %s853, 4294967295
            %v858 = vld [vmem:[%s857] sm:$0x2]
            %v859 = vlaneseq
            %v860 = vshrl.u32 %v859, 7
            %vm861 = vcmp.eq.s32.totalorder %v860, 0
            %v862 = vsel %vm861, %v855, %v858
            %s863 = scalar_lea.vmem %s853, 1
            %v864 = vld [vmem:[%s863] ss:$0 sm:$0xff]
            %865 = vst [vmem:[%s853] sm:$0x3] %v862
            %v866 = vld [vmem:[%s854] ss:$0 sm:$0xff]
            %s867 = scalar_lea.vmem %s853, 1
            %868 = vst [vmem:[%s867] sm:$0x1] %v866
            %s869 = scalar_lea.vmem %s854, 1
            %v870 = vld [vmem:[%s869] sm:$0x1]
            %v871 = vlaneseq
            %v872 = vshrl.u32 %v871, 7
            %vm873 = vcmp.eq.s32.totalorder %v872, 1
            %v874 = vsel %vm873, %v864, %v870
            %v875 = vld [vmem:[%s854] ss:$0 sm:$0xff]
            %876 = vst [vmem:[%s854] sm:$0x3] %v874
            %s877 = smov [#allocation19]
            %s878 = smov [#allocation21]
            %v879 = vld [vmem:[%s877] ss:$0 sm:$0xff]
            %s881 = scalar_lea.vmem %s877, 4294967295
            %v882 = vld [vmem:[%s881] sm:$0x2]
            %v883 = vlaneseq
            %v884 = vshrl.u32 %v883, 7
            %vm885 = vcmp.eq.s32.totalorder %v884, 0
            %v886 = vsel %vm885, %v879, %v882
            %s887 = scalar_lea.vmem %s877, 1
            %v888 = vld [vmem:[%s887] ss:$0 sm:$0xff]
            %889 = vst [vmem:[%s877] sm:$0x3] %v886
            %v890 = vld [vmem:[%s878] ss:$0 sm:$0xff]
            %s891 = scalar_lea.vmem %s877, 1
            %892 = vst [vmem:[%s891] sm:$0x1] %v890
            %s893 = scalar_lea.vmem %s878, 1
            %v894 = vld [vmem:[%s893] sm:$0x1]
            %v895 = vlaneseq
            %v896 = vshrl.u32 %v895, 7
            %vm897 = vcmp.eq.s32.totalorder %v896, 1
            %v898 = vsel %vm897, %v888, %v894
            %v899 = vld [vmem:[%s878] ss:$0 sm:$0xff]
            %900 = vst [vmem:[%s878] sm:$0x3] %v898
            %s901 = smov [#allocation29]
            %v902 = vld [vmem:[%s901] sm:$0xff]
            %s903 = smov [#allocation30]
            %v904 = vld [vmem:[%s903] sm:$0xff]
            %s905 = smov [#allocation10]
            %s906 = smov [#allocation12]
            %s907 = smov [#allocation14]
            %s908 = smov [#allocation16]
            %v909 = vld [vmem:[%s905] sm:$0x3]
            %v910 = vld [vmem:[%s906] sm:$0x3]
            %v911 = vld [vmem:[%s907] sm:$0x3]
            %v912 = vld [vmem:[%s908] sm:$0x3]
            %v913 = vmul.f32 %v902, %v909
            %v914 = vmul.f32 %v904, %v911
            %v915 = vsub.f32 %v913, %v914
            %v916 = vmul.f32 %v902, %v910
            %v917 = vmul.f32 %v904, %v912
            %v918 = vsub.f32 %v916, %v917
            %v919 = vmul.f32 %v904, %v909
            %v920 = vmul.f32 %v902, %v911
            %v921 = vadd.f32 %v919, %v920
            %v922 = vmul.f32 %v904, %v910
            %v923 = vmul.f32 %v902, %v912
            %v924 = vadd.f32 %v922, %v923
            %925 = vst [vmem:[%s905] sm:$0x3] %v915
            %926 = vst [vmem:[%s906] sm:$0x3] %v918
            %927 = vst [vmem:[%s907] sm:$0x3] %v921
            %928 = vst [vmem:[%s908] sm:$0x3] %v924
            %s929 = smov [#allocation10]
            %s930 = smov [#allocation14]
            %v931 = vld [vmem:[%s929] ss:$0 sm:$0xff]
            %s933 = scalar_lea.vmem %s929, 4294967295
            %v934 = vld [vmem:[%s933] sm:$0x2]
            %v935 = vlaneseq
            %v936 = vshrl.u32 %v935, 7
            %vm937 = vcmp.eq.s32.totalorder %v936, 0
            %v938 = vsel %vm937, %v931, %v934
            %s939 = scalar_lea.vmem %s929, 1
            %v940 = vld [vmem:[%s939] ss:$0 sm:$0xff]
            %941 = vst [vmem:[%s929] sm:$0x3] %v938
            %v942 = vld [vmem:[%s930] ss:$0 sm:$0xff]
            %s943 = scalar_lea.vmem %s929, 1
            %944 = vst [vmem:[%s943] sm:$0x1] %v942
            %s945 = scalar_lea.vmem %s930, 1
            %v946 = vld [vmem:[%s945] sm:$0x1]
            %v947 = vlaneseq
            %v948 = vshrl.u32 %v947, 7
            %vm949 = vcmp.eq.s32.totalorder %v948, 1
            %v950 = vsel %vm949, %v940, %v946
            %v951 = vld [vmem:[%s930] ss:$0 sm:$0xff]
            %952 = vst [vmem:[%s930] sm:$0x3] %v950
            %s953 = smov [#allocation12]
            %s954 = smov [#allocation16]
            %v955 = vld [vmem:[%s953] ss:$0 sm:$0xff]
            %s957 = scalar_lea.vmem %s953, 4294967295
            %v958 = vld [vmem:[%s957] sm:$0x2]
            %v959 = vlaneseq
            %v960 = vshrl.u32 %v959, 7
            %vm961 = vcmp.eq.s32.totalorder %v960, 0
            %v962 = vsel %vm961, %v955, %v958
            %s963 = scalar_lea.vmem %s953, 1
            %v964 = vld [vmem:[%s963] ss:$0 sm:$0xff]
            %965 = vst [vmem:[%s953] sm:$0x3] %v962
            %v966 = vld [vmem:[%s954] ss:$0 sm:$0xff]
            %s967 = scalar_lea.vmem %s953, 1
            %968 = vst [vmem:[%s967] sm:$0x1] %v966
            %s969 = scalar_lea.vmem %s954, 1
            %v970 = vld [vmem:[%s969] sm:$0x1]
            %v971 = vlaneseq
            %v972 = vshrl.u32 %v971, 7
            %vm973 = vcmp.eq.s32.totalorder %v972, 1
            %v974 = vsel %vm973, %v964, %v970
            %v975 = vld [vmem:[%s954] ss:$0 sm:$0xff]
            %976 = vst [vmem:[%s954] sm:$0x3] %v974
          $region152: #{custom-call.27} parent=144 // loop_footer
            %s497 = sadd.s32 1, %s493
          $region153: #{custom-call.27} parent=144 // loop_footer_branch
            %492 = sbr.rel target = $region149
          $region154: #{custom-call.27} parent=144 // loop_exit
            _
          %s977 = sadd.s32 %s395, 1
        $region145: #{custom-call.27} parent=139 // loop_footer
          _
        $region146: #{custom-call.27} parent=139 // loop_footer_branch
          %394 = sbr.rel target = $region142
        $region147: #{custom-call.27} parent=139 // loop_exit
          _
        %s980 = sand.u32 %s22, 7
        %s981 = scalar_lea.vmem %s311, %s980 [#allocation8]
        %s982 = sand.u32 %s22, 7
        %s983 = scalar_lea.vmem %s317, %s982 [#allocation9]
        %s984 = smov [#allocation18]
        %s985 = smov %s981
        %v986 = vlaneseq
        %v987 = vand.u32 %v986, 127
        %v988 = vmov %v987
        %v989 = vlaneseq
        %v990 = vshrl.u32 %v989, 7
        %v991 = vmov %v990
        %v992 = vld [vmem:[%s984] sm:$0x3]
        %vm995 = vcmp.eq.s32.totalorder %v991, %v988
        %v996 = vsel %vm995, %v992, 0.0
        %v997 = vrot.slane %v996, 4
        %v998 = vadd.f32 %v996, %v997
        %v999 = vrot.slane %v998, 2
        %v1000 = vadd.f32 %v998, %v999
        %v1001 = vrot.slane %v1000, 1
        %v1002 = vadd.f32 %v1000, %v1001
        %1003 = vst [vmem:[%s985] sm:$0x1] %v1002
        %s1004 = smov [#allocation21]
        %s1005 = smov %s983
        %v1006 = vlaneseq
        %v1007 = vand.u32 %v1006, 127
        %v1008 = vmov %v1007
        %v1009 = vlaneseq
        %v1010 = vshrl.u32 %v1009, 7
        %v1011 = vmov %v1010
        %v1012 = vld [vmem:[%s1004] sm:$0x3]
        %vm1015 = vcmp.eq.s32.totalorder %v1011, %v1008
        %v1016 = vsel %vm1015, %v1012, 0.0
        %v1017 = vrot.slane %v1016, 4
        %v1018 = vadd.f32 %v1016, %v1017
        %v1019 = vrot.slane %v1018, 2
        %v1020 = vadd.f32 %v1018, %v1019
        %v1021 = vrot.slane %v1020, 1
        %v1022 = vadd.f32 %v1020, %v1021
        %1023 = vst [vmem:[%s1005] sm:$0x1] %v1022
        %s1025 = ssub.s32 4, 1
        %v1026 = vld [vmem:[#allocation10] sm:%s1025]
        %s1028 = ssub.s32 4, 1
        %1029 = vst [vmem:[%s321] sm:%s1028] %v1026
        %s1031 = ssub.s32 4, 1
        %v1032 = vld [vmem:[#allocation12] sm:%s1031]
        %s1034 = ssub.s32 4, 1
        %1035 = vst [vmem:[%s325] sm:%s1034] %v1032
        %s1037 = ssub.s32 4, 1
        %v1038 = vld [vmem:[#allocation14] sm:%s1037]
        %s1040 = ssub.s32 4, 1
        %1041 = vst [vmem:[%s329] sm:%s1040] %v1038
        %s1043 = ssub.s32 4, 1
        %v1044 = vld [vmem:[#allocation16] sm:%s1043]
        %s1046 = ssub.s32 4, 1
        %1047 = vst [vmem:[%s333] sm:%s1046] %v1044
        %s1048 = sand.u32 %s41, 1
        %s1049 = sand.u32 %s41, 1
        %s1050 = smul.addr %s1049, 8
        %s1051 = scalar_lea.vmem [#allocation8], %s1050
        %s1052 = sand.u32 %s71, 1
        %s1053 = sand.u32 %s71, 1
        %s1054 = smul.addr %s1053, 8
        %s1055 = scalar_lea.vmem [#allocation9], %s1054
        %s1056 = sand.u32 %s17, 1
        %s1057 = sand.u32 %s17, 1
        %s1058 = smul.addr %s1057, 2
        %s1059 = scalar_lea.vmem [#allocation11], %s1058
        %s1060 = sand.u32 %s17, 1
        %s1061 = sand.u32 %s17, 1
        %s1062 = smul.addr %s1061, 2
        %s1063 = scalar_lea.vmem [#allocation13], %s1062
        %s1064 = sand.u32 %s17, 1
        %s1065 = sand.u32 %s17, 1
        %s1066 = smul.addr %s1065, 2
        %s1067 = scalar_lea.vmem [#allocation15], %s1066
        %s1068 = sand.u32 %s17, 1
        %s1069 = sand.u32 %s17, 1
        %s1070 = smul.addr %s1069, 2
        %s1071 = scalar_lea.vmem [#allocation17], %s1070
        // Predicated region
        $region155: #{custom-call.27} parent=139 // pred_check
          %p1072 = pneg %p51
        $region156: #{custom-call.27} parent=139 // pred_check_branch
          %1074 = sbr.rel (%p1072) target = $region158
        $region157: #{custom-call.27} parent=139 // pred_region
          %s1075 = sshrl.u32 %s22, 3
          %s1076 = sadd.s32 %s1075, %s21
          %s1077 = smul.addr %s1076, 8
          %s1078 = scalar_lea.vmem %s4, %s1077
          // Predicated region
          $region159: #{custom-call.27} parent=157 // pred_check
            _
          $region160: #{custom-call.27} parent=157 // pred_check_branch
            %1080 = sbr.rel (0) target = $region162
          $region161: #{custom-call.27} parent=157 // pred_region
            // Predicated region
            $region163: #{custom-call.27} parent=161 // pred_check
              _
            $region164: #{custom-call.27} parent=161 // pred_check_branch
              %1082 = sbr.rel (0) target = $region166
            $region165: #{custom-call.27} parent=161 // pred_region
              // Predicated region
              $region178: #{custom-call.27} parent=165 // pred_check
                _
              $region179: #{custom-call.27} parent=165 // pred_check_branch
                %1098 = sbr.rel (0) target = $region181
              $region180: #{custom-call.27} parent=165 // pred_region
                loop: start=0, step=1, limit=1
                $region182: #{custom-call.27} parent=180 // loop_pre_header
                  _
                $region183: #{custom-call.27} parent=180 // loop_header
                  %s1100 = sphi 0, %s1104
                  %p1101 = scmp.ge.s32.totalorder %s1100, 1
                  %s1105 = sphi %s1051, %s1051
                  %s1106 = sphi %s1078, %s1078
                $region184: #{custom-call.27} parent=180 // loop_header_branch
                  %1103 = sbr.rel (%p1101) target = $region188
                $region185: #{custom-call.27} parent=180 // loop_body
                  %v1107 = vld [vmem:[%s1105] sm:$0xff]
                  %1108 = vst [vmem:[%s1106] sm:$0xff] %v1107
                $region186: #{custom-call.27} parent=180 // loop_footer
                  %s1104 = sadd.s32 1, %s1100
                $region187: #{custom-call.27} parent=180 // loop_footer_branch
                  %1099 = sbr.rel target = $region183
                $region188: #{custom-call.27} parent=180 // loop_exit
                  _
              $region181: #{custom-call.27} parent=165 // pred_fallthru
                _
              // Predicated region
              $region189: #{custom-call.27} parent=165 // pred_check
                _
              $region190: #{custom-call.27} parent=165 // pred_check_branch
                %1110 = sbr.rel target = $region192
              $region191: #{custom-call.27} parent=165 // pred_region
                _
              $region192: #{custom-call.27} parent=165 // pred_fallthru
                _
            $region166: #{custom-call.27} parent=161 // pred_fallthru
              _
            // Predicated region
            $region167: #{custom-call.27} parent=161 // pred_check
              _
            $region168: #{custom-call.27} parent=161 // pred_check_branch
              %1084 = sbr.rel target = $region170
            $region169: #{custom-call.27} parent=161 // pred_region
              %s1086 = ssub.s32 256, 1
              loop: start=0, step=1, limit=1
              $region171: #{custom-call.27} parent=169 // loop_pre_header
                _
              $region172: #{custom-call.27} parent=169 // loop_header
                %s1088 = sphi 0, %s1092
                %p1089 = scmp.ge.s32.totalorder %s1088, 1
                %s1093 = sphi %s1051, %s1051
                %s1094 = sphi %s1078, %s1078
              $region173: #{custom-call.27} parent=169 // loop_header_branch
                %1091 = sbr.rel (%p1089) target = $region177
              $region174: #{custom-call.27} parent=169 // loop_body
                %v1095 = vld [vmem:[%s1093] sm:%s1086]
                %1096 = vst [vmem:[%s1094] sm:%s1086] %v1095
              $region175: #{custom-call.27} parent=169 // loop_footer
                %s1092 = sadd.s32 1, %s1088
              $region176: #{custom-call.27} parent=169 // loop_footer_branch
                %1087 = sbr.rel target = $region172
              $region177: #{custom-call.27} parent=169 // loop_exit
                _
            $region170: #{custom-call.27} parent=161 // pred_fallthru
              _
          $region162: #{custom-call.27} parent=157 // pred_fallthru
            _
          %1111 = vnop
        $region158: #{custom-call.27} parent=139 // pred_fallthru
          _
        // Predicated region
        $region193: #{custom-call.27} parent=139 // pred_check
          %p1112 = pneg %p81
        $region194: #{custom-call.27} parent=139 // pred_check_branch
          %1114 = sbr.rel (%p1112) target = $region196
        $region195: #{custom-call.27} parent=139 // pred_region
          %s1115 = sshrl.u32 %s22, 3
          %s1116 = sadd.s32 %s1115, %s21
          %s1117 = smul.addr %s1116, 8
          %s1118 = scalar_lea.vmem %s5, %s1117
          // Predicated region
          $region197: #{custom-call.27} parent=195 // pred_check
            _
          $region198: #{custom-call.27} parent=195 // pred_check_branch
            %1120 = sbr.rel (0) target = $region200
          $region199: #{custom-call.27} parent=195 // pred_region
            // Predicated region
            $region201: #{custom-call.27} parent=199 // pred_check
              _
            $region202: #{custom-call.27} parent=199 // pred_check_branch
              %1122 = sbr.rel (0) target = $region204
            $region203: #{custom-call.27} parent=199 // pred_region
              // Predicated region
              $region216: #{custom-call.27} parent=203 // pred_check
                _
              $region217: #{custom-call.27} parent=203 // pred_check_branch
                %1138 = sbr.rel (0) target = $region219
              $region218: #{custom-call.27} parent=203 // pred_region
                loop: start=0, step=1, limit=1
                $region220: #{custom-call.27} parent=218 // loop_pre_header
                  _
                $region221: #{custom-call.27} parent=218 // loop_header
                  %s1140 = sphi 0, %s1144
                  %p1141 = scmp.ge.s32.totalorder %s1140, 1
                  %s1145 = sphi %s1055, %s1055
                  %s1146 = sphi %s1118, %s1118
                $region222: #{custom-call.27} parent=218 // loop_header_branch
                  %1143 = sbr.rel (%p1141) target = $region226
                $region223: #{custom-call.27} parent=218 // loop_body
                  %v1147 = vld [vmem:[%s1145] sm:$0xff]
                  %1148 = vst [vmem:[%s1146] sm:$0xff] %v1147
                $region224: #{custom-call.27} parent=218 // loop_footer
                  %s1144 = sadd.s32 1, %s1140
                $region225: #{custom-call.27} parent=218 // loop_footer_branch
                  %1139 = sbr.rel target = $region221
                $region226: #{custom-call.27} parent=218 // loop_exit
                  _
              $region219: #{custom-call.27} parent=203 // pred_fallthru
                _
              // Predicated region
              $region227: #{custom-call.27} parent=203 // pred_check
                _
              $region228: #{custom-call.27} parent=203 // pred_check_branch
                %1150 = sbr.rel target = $region230
              $region229: #{custom-call.27} parent=203 // pred_region
                _
              $region230: #{custom-call.27} parent=203 // pred_fallthru
                _
            $region204: #{custom-call.27} parent=199 // pred_fallthru
              _
            // Predicated region
            $region205: #{custom-call.27} parent=199 // pred_check
              _
            $region206: #{custom-call.27} parent=199 // pred_check_branch
              %1124 = sbr.rel target = $region208
            $region207: #{custom-call.27} parent=199 // pred_region
              %s1126 = ssub.s32 256, 1
              loop: start=0, step=1, limit=1
              $region209: #{custom-call.27} parent=207 // loop_pre_header
                _
              $region210: #{custom-call.27} parent=207 // loop_header
                %s1128 = sphi 0, %s1132
                %p1129 = scmp.ge.s32.totalorder %s1128, 1
                %s1133 = sphi %s1055, %s1055
                %s1134 = sphi %s1118, %s1118
              $region211: #{custom-call.27} parent=207 // loop_header_branch
                %1131 = sbr.rel (%p1129) target = $region215
              $region212: #{custom-call.27} parent=207 // loop_body
                %v1135 = vld [vmem:[%s1133] sm:%s1126]
                %1136 = vst [vmem:[%s1134] sm:%s1126] %v1135
              $region213: #{custom-call.27} parent=207 // loop_footer
                %s1132 = sadd.s32 1, %s1128
              $region214: #{custom-call.27} parent=207 // loop_footer_branch
                %1127 = sbr.rel target = $region210
              $region215: #{custom-call.27} parent=207 // loop_exit
                _
            $region208: #{custom-call.27} parent=199 // pred_fallthru
              _
          $region200: #{custom-call.27} parent=195 // pred_fallthru
            _
          %1151 = vnop
        $region196: #{custom-call.27} parent=139 // pred_fallthru
          _
        %s1152 = smul.addr %s21, 8
        %s1153 = sadd.s32 %s22, %s1152
        %s1154 = smul.addr %s1153, 2
        %s1155 = scalar_lea.vmem %s6, %s1154
        // Predicated region
        $region231: #{custom-call.27} parent=139 // pred_check
          _
        $region232: #{custom-call.27} parent=139 // pred_check_branch
          %1157 = sbr.rel (0) target = $region234
        $region233: #{custom-call.27} parent=139 // pred_region
          // Predicated region
          $region235: #{custom-call.27} parent=233 // pred_check
            _
          $region236: #{custom-call.27} parent=233 // pred_check_branch
            %1159 = sbr.rel target = $region238
          $region237: #{custom-call.27} parent=233 // pred_region
            // Predicated region
            $region250: #{custom-call.27} parent=237 // pred_check
              _
            $region251: #{custom-call.27} parent=237 // pred_check_branch
              %1175 = sbr.rel (0) target = $region253
            $region252: #{custom-call.27} parent=237 // pred_region
              %s1177 = ssub.s32 4, 1
              loop: start=0, step=1, limit=1
              $region254: #{custom-call.27} parent=252 // loop_pre_header
                _
              $region255: #{custom-call.27} parent=252 // loop_header
                %s1179 = sphi 0, %s1183
                %p1180 = scmp.ge.s32.totalorder %s1179, 1
                %s1184 = sphi %s1059, %s1059
                %s1185 = sphi %s1155, %s1155
              $region256: #{custom-call.27} parent=252 // loop_header_branch
                %1182 = sbr.rel (%p1180) target = $region260
              $region257: #{custom-call.27} parent=252 // loop_body
                %v1186 = vld [vmem:[%s1184] sm:%s1177]
                %1187 = vst [vmem:[%s1185] sm:%s1177] %v1186
              $region258: #{custom-call.27} parent=252 // loop_footer
                %s1183 = sadd.s32 1, %s1179
              $region259: #{custom-call.27} parent=252 // loop_footer_branch
                %1178 = sbr.rel target = $region255
              $region260: #{custom-call.27} parent=252 // loop_exit
                _
            $region253: #{custom-call.27} parent=237 // pred_fallthru
              _
          $region238: #{custom-call.27} parent=233 // pred_fallthru
            _
          // Predicated region
          $region239: #{custom-call.27} parent=233 // pred_check
            _
          $region240: #{custom-call.27} parent=233 // pred_check_branch
            %1161 = sbr.rel (0) target = $region242
          $region241: #{custom-call.27} parent=233 // pred_region
            %s1163 = ssub.s32 4, 1
            loop: start=0, step=1, limit=1
            $region243: #{custom-call.27} parent=241 // loop_pre_header
              _
            $region244: #{custom-call.27} parent=241 // loop_header
              %s1165 = sphi 0, %s1169
              %p1166 = scmp.ge.s32.totalorder %s1165, 1
              %s1170 = sphi %s1059, %s1059
              %s1171 = sphi %s1155, %s1155
            $region245: #{custom-call.27} parent=241 // loop_header_branch
              %1168 = sbr.rel (%p1166) target = $region249
            $region246: #{custom-call.27} parent=241 // loop_body
              %v1172 = vld [vmem:[%s1170] sm:%s1163]
              %1173 = vst [vmem:[%s1171] sm:%s1163] %v1172
            $region247: #{custom-call.27} parent=241 // loop_footer
              %s1169 = sadd.s32 1, %s1165
            $region248: #{custom-call.27} parent=241 // loop_footer_branch
              %1164 = sbr.rel target = $region244
            $region249: #{custom-call.27} parent=241 // loop_exit
              _
          $region242: #{custom-call.27} parent=233 // pred_fallthru
            _
        $region234: #{custom-call.27} parent=139 // pred_fallthru
          _
        %1188 = vnop
        %s1189 = smul.addr %s21, 8
        %s1190 = sadd.s32 %s22, %s1189
        %s1191 = smul.addr %s1190, 2
        %s1192 = scalar_lea.vmem %s7, %s1191
        // Predicated region
        $region261: #{custom-call.27} parent=139 // pred_check
          _
        $region262: #{custom-call.27} parent=139 // pred_check_branch
          %1194 = sbr.rel (0) target = $region264
        $region263: #{custom-call.27} parent=139 // pred_region
          // Predicated region
          $region265: #{custom-call.27} parent=263 // pred_check
            _
          $region266: #{custom-call.27} parent=263 // pred_check_branch
            %1196 = sbr.rel target = $region268
          $region267: #{custom-call.27} parent=263 // pred_region
            // Predicated region
            $region280: #{custom-call.27} parent=267 // pred_check
              _
            $region281: #{custom-call.27} parent=267 // pred_check_branch
              %1212 = sbr.rel (0) target = $region283
            $region282: #{custom-call.27} parent=267 // pred_region
              %s1214 = ssub.s32 4, 1
              loop: start=0, step=1, limit=1
              $region284: #{custom-call.27} parent=282 // loop_pre_header
                _
              $region285: #{custom-call.27} parent=282 // loop_header
                %s1216 = sphi 0, %s1220
                %p1217 = scmp.ge.s32.totalorder %s1216, 1
                %s1221 = sphi %s1063, %s1063
                %s1222 = sphi %s1192, %s1192
              $region286: #{custom-call.27} parent=282 // loop_header_branch
                %1219 = sbr.rel (%p1217) target = $region290
              $region287: #{custom-call.27} parent=282 // loop_body
                %v1223 = vld [vmem:[%s1221] sm:%s1214]
                %1224 = vst [vmem:[%s1222] sm:%s1214] %v1223
              $region288: #{custom-call.27} parent=282 // loop_footer
                %s1220 = sadd.s32 1, %s1216
              $region289: #{custom-call.27} parent=282 // loop_footer_branch
                %1215 = sbr.rel target = $region285
              $region290: #{custom-call.27} parent=282 // loop_exit
                _
            $region283: #{custom-call.27} parent=267 // pred_fallthru
              _
          $region268: #{custom-call.27} parent=263 // pred_fallthru
            _
          // Predicated region
          $region269: #{custom-call.27} parent=263 // pred_check
            _
          $region270: #{custom-call.27} parent=263 // pred_check_branch
            %1198 = sbr.rel (0) target = $region272
          $region271: #{custom-call.27} parent=263 // pred_region
            %s1200 = ssub.s32 4, 1
            loop: start=0, step=1, limit=1
            $region273: #{custom-call.27} parent=271 // loop_pre_header
              _
            $region274: #{custom-call.27} parent=271 // loop_header
              %s1202 = sphi 0, %s1206
              %p1203 = scmp.ge.s32.totalorder %s1202, 1
              %s1207 = sphi %s1063, %s1063
              %s1208 = sphi %s1192, %s1192
            $region275: #{custom-call.27} parent=271 // loop_header_branch
              %1205 = sbr.rel (%p1203) target = $region279
            $region276: #{custom-call.27} parent=271 // loop_body
              %v1209 = vld [vmem:[%s1207] sm:%s1200]
              %1210 = vst [vmem:[%s1208] sm:%s1200] %v1209
            $region277: #{custom-call.27} parent=271 // loop_footer
              %s1206 = sadd.s32 1, %s1202
            $region278: #{custom-call.27} parent=271 // loop_footer_branch
              %1201 = sbr.rel target = $region274
            $region279: #{custom-call.27} parent=271 // loop_exit
              _
          $region272: #{custom-call.27} parent=263 // pred_fallthru
            _
        $region264: #{custom-call.27} parent=139 // pred_fallthru
          _
        %1225 = vnop
        %s1226 = smul.addr %s21, 8
        %s1227 = sadd.s32 %s22, %s1226
        %s1228 = smul.addr %s1227, 2
        %s1229 = scalar_lea.vmem %s8, %s1228
        // Predicated region
        $region291: #{custom-call.27} parent=139 // pred_check
          _
        $region292: #{custom-call.27} parent=139 // pred_check_branch
          %1231 = sbr.rel (0) target = $region294
        $region293: #{custom-call.27} parent=139 // pred_region
          // Predicated region
          $region295: #{custom-call.27} parent=293 // pred_check
            _
          $region296: #{custom-call.27} parent=293 // pred_check_branch
            %1233 = sbr.rel target = $region298
          $region297: #{custom-call.27} parent=293 // pred_region
            // Predicated region
            $region310: #{custom-call.27} parent=297 // pred_check
              _
            $region311: #{custom-call.27} parent=297 // pred_check_branch
              %1249 = sbr.rel (0) target = $region313
            $region312: #{custom-call.27} parent=297 // pred_region
              %s1251 = ssub.s32 4, 1
              loop: start=0, step=1, limit=1
              $region314: #{custom-call.27} parent=312 // loop_pre_header
                _
              $region315: #{custom-call.27} parent=312 // loop_header
                %s1253 = sphi 0, %s1257
                %p1254 = scmp.ge.s32.totalorder %s1253, 1
                %s1258 = sphi %s1067, %s1067
                %s1259 = sphi %s1229, %s1229
              $region316: #{custom-call.27} parent=312 // loop_header_branch
                %1256 = sbr.rel (%p1254) target = $region320
              $region317: #{custom-call.27} parent=312 // loop_body
                %v1260 = vld [vmem:[%s1258] sm:%s1251]
                %1261 = vst [vmem:[%s1259] sm:%s1251] %v1260
              $region318: #{custom-call.27} parent=312 // loop_footer
                %s1257 = sadd.s32 1, %s1253
              $region319: #{custom-call.27} parent=312 // loop_footer_branch
                %1252 = sbr.rel target = $region315
              $region320: #{custom-call.27} parent=312 // loop_exit
                _
            $region313: #{custom-call.27} parent=297 // pred_fallthru
              _
          $region298: #{custom-call.27} parent=293 // pred_fallthru
            _
          // Predicated region
          $region299: #{custom-call.27} parent=293 // pred_check
            _
          $region300: #{custom-call.27} parent=293 // pred_check_branch
            %1235 = sbr.rel (0) target = $region302
          $region301: #{custom-call.27} parent=293 // pred_region
            %s1237 = ssub.s32 4, 1
            loop: start=0, step=1, limit=1
            $region303: #{custom-call.27} parent=301 // loop_pre_header
              _
            $region304: #{custom-call.27} parent=301 // loop_header
              %s1239 = sphi 0, %s1243
              %p1240 = scmp.ge.s32.totalorder %s1239, 1
              %s1244 = sphi %s1067, %s1067
              %s1245 = sphi %s1229, %s1229
            $region305: #{custom-call.27} parent=301 // loop_header_branch
              %1242 = sbr.rel (%p1240) target = $region309
            $region306: #{custom-call.27} parent=301 // loop_body
              %v1246 = vld [vmem:[%s1244] sm:%s1237]
              %1247 = vst [vmem:[%s1245] sm:%s1237] %v1246
            $region307: #{custom-call.27} parent=301 // loop_footer
              %s1243 = sadd.s32 1, %s1239
            $region308: #{custom-call.27} parent=301 // loop_footer_branch
              %1238 = sbr.rel target = $region304
            $region309: #{custom-call.27} parent=301 // loop_exit
              _
          $region302: #{custom-call.27} parent=293 // pred_fallthru
            _
        $region294: #{custom-call.27} parent=139 // pred_fallthru
          _
        %1262 = vnop
        %s1263 = smul.addr %s21, 8
        %s1264 = sadd.s32 %s22, %s1263
        %s1265 = smul.addr %s1264, 2
        %s1266 = scalar_lea.vmem %s9, %s1265
        // Predicated region
        $region321: #{custom-call.27} parent=139 // pred_check
          _
        $region322: #{custom-call.27} parent=139 // pred_check_branch
          %1268 = sbr.rel (0) target = $region324
        $region323: #{custom-call.27} parent=139 // pred_region
          // Predicated region
          $region325: #{custom-call.27} parent=323 // pred_check
            _
          $region326: #{custom-call.27} parent=323 // pred_check_branch
            %1270 = sbr.rel target = $region328
          $region327: #{custom-call.27} parent=323 // pred_region
            // Predicated region
            $region340: #{custom-call.27} parent=327 // pred_check
              _
            $region341: #{custom-call.27} parent=327 // pred_check_branch
              %1286 = sbr.rel (0) target = $region343
            $region342: #{custom-call.27} parent=327 // pred_region
              %s1288 = ssub.s32 4, 1
              loop: start=0, step=1, limit=1
              $region344: #{custom-call.27} parent=342 // loop_pre_header
                _
              $region345: #{custom-call.27} parent=342 // loop_header
                %s1290 = sphi 0, %s1294
                %p1291 = scmp.ge.s32.totalorder %s1290, 1
                %s1295 = sphi %s1071, %s1071
                %s1296 = sphi %s1266, %s1266
              $region346: #{custom-call.27} parent=342 // loop_header_branch
                %1293 = sbr.rel (%p1291) target = $region350
              $region347: #{custom-call.27} parent=342 // loop_body
                %v1297 = vld [vmem:[%s1295] sm:%s1288]
                %1298 = vst [vmem:[%s1296] sm:%s1288] %v1297
              $region348: #{custom-call.27} parent=342 // loop_footer
                %s1294 = sadd.s32 1, %s1290
              $region349: #{custom-call.27} parent=342 // loop_footer_branch
                %1289 = sbr.rel target = $region345
              $region350: #{custom-call.27} parent=342 // loop_exit
                _
            $region343: #{custom-call.27} parent=327 // pred_fallthru
              _
          $region328: #{custom-call.27} parent=323 // pred_fallthru
            _
          // Predicated region
          $region329: #{custom-call.27} parent=323 // pred_check
            _
          $region330: #{custom-call.27} parent=323 // pred_check_branch
            %1272 = sbr.rel (0) target = $region332
          $region331: #{custom-call.27} parent=323 // pred_region
            %s1274 = ssub.s32 4, 1
            loop: start=0, step=1, limit=1
            $region333: #{custom-call.27} parent=331 // loop_pre_header
              _
            $region334: #{custom-call.27} parent=331 // loop_header
              %s1276 = sphi 0, %s1280
              %p1277 = scmp.ge.s32.totalorder %s1276, 1
              %s1281 = sphi %s1071, %s1071
              %s1282 = sphi %s1266, %s1266
            $region335: #{custom-call.27} parent=331 // loop_header_branch
              %1279 = sbr.rel (%p1277) target = $region339
            $region336: #{custom-call.27} parent=331 // loop_body
              %v1283 = vld [vmem:[%s1281] sm:%s1274]
              %1284 = vst [vmem:[%s1282] sm:%s1274] %v1283
            $region337: #{custom-call.27} parent=331 // loop_footer
              %s1280 = sadd.s32 1, %s1276
            $region338: #{custom-call.27} parent=331 // loop_footer_branch
              %1275 = sbr.rel target = $region334
            $region339: #{custom-call.27} parent=331 // loop_exit
              _
          $region332: #{custom-call.27} parent=323 // pred_fallthru
            _
        $region324: #{custom-call.27} parent=139 // pred_fallthru
          _
        %1299 = vnop
      $region140: #{custom-call.27} parent=5 // pred_fallthru
        _
      %p1300 = scmp.le.s32.totalorder 2, %s12
      // Predicated region
      $region351: #{custom-call.27} parent=5 // pred_check
        %p1301 = pneg %p1300
      $region352: #{custom-call.27} parent=5 // pred_check_branch
        %1303 = sbr.rel (%p1301) target = $region354
      $region353: #{custom-call.27} parent=5 // pred_region
        %s1304 = ssub.s32 %s12, 2
        // Predicated region
        $region355: #{custom-call.27} parent=353 // pred_check
          %p1305 = pneg %p57
        $region356: #{custom-call.27} parent=353 // pred_check_branch
          %1307 = sbr.rel (%p1305) target = $region358
        $region357: #{custom-call.27} parent=353 // pred_region
          %s1308 = sand.u32 %s42, 1
          %s1309 = sand.u32 %s42, 1
          %s1310 = smul.addr %s1309, 8
          %s1311 = scalar_lea.vmem [#allocation8], %s1310
        $region358: #{custom-call.27} parent=353 // pred_fallthru
          _
        // Predicated region
        $region359: #{custom-call.27} parent=353 // pred_check
          %p1312 = pneg %p87
        $region360: #{custom-call.27} parent=353 // pred_check_branch
          %1314 = sbr.rel (%p1312) target = $region362
        $region361: #{custom-call.27} parent=353 // pred_region
          %s1315 = sand.u32 %s72, 1
          %s1316 = sand.u32 %s72, 1
          %s1317 = smul.addr %s1316, 8
          %s1318 = scalar_lea.vmem [#allocation9], %s1317
        $region362: #{custom-call.27} parent=353 // pred_fallthru
          _
        %s1319 = sand.u32 %s18, 1
        %s1320 = sand.u32 %s18, 1
        %s1321 = smul.addr %s1320, 2
        %s1322 = scalar_lea.vmem [#allocation11], %s1321
        %s1323 = sand.u32 %s18, 1
        %s1324 = sand.u32 %s18, 1
        %s1325 = smul.addr %s1324, 2
        %s1326 = scalar_lea.vmem [#allocation13], %s1325
        %s1327 = sand.u32 %s18, 1
        %s1328 = sand.u32 %s18, 1
        %s1329 = smul.addr %s1328, 2
        %s1330 = scalar_lea.vmem [#allocation15], %s1329
        %s1331 = sand.u32 %s18, 1
        %s1332 = sand.u32 %s18, 1
        %s1333 = smul.addr %s1332, 2
        %s1334 = scalar_lea.vmem [#allocation17], %s1333
      $region354: #{custom-call.27} parent=5 // pred_fallthru
        _
    $region6: #{custom-call.27} parent=1 // loop_footer
      %s16 = sadd.s32 1, %s12
    $region7: #{custom-call.27} parent=1 // loop_footer_branch
      %11 = sbr.rel target = $region3
    $region8: #{custom-call.27} parent=1 // loop_exit
      _

// kernel: _lambda_.2
$region0: #{_lambda_.2}
  #allocation0 [shape = 'u32[]', space=smem, size = 0x4, offset = 0x4, fixed_abs, tag = 'smem constant byte address 0x4 - core index']
  #allocation1 [shape = 'u32[72,128]{1,0:T(1,128)}', space=vmem, size = 0x9000, scoped, tag = 'internal scratch']
  %s0 = inlined_call_operand.vmem [shape: f32[8,4,36], index: 0, kind: input, shape index: {}]
  %s1 = inlined_call_operand.vmem [shape: f32[4,5], index: 1, kind: input, shape index: {}]
  %s2 = inlined_call_operand.vmem [shape: f32[4,8,4], index: 2, kind: input, shape index: {}]
  %s3 = inlined_call_operand.vmem [shape: f32[8,1], index: 3, kind: input, shape index: {}]
  %s4 = inlined_call_operand.vmem [shape: f32[4,8], index: 4, kind: input, shape index: {}]
  %s5 = inlined_call_operand.vmem [shape: f32[8,4], index: 5, kind: input, shape index: {}]
  %s6 = inlined_call_operand.vmem [shape: f32[8,4,4], index: 6, kind: output, shape index: {}]
  %s7 = sld [smem:[#allocation0]]
  $region61: #{_lambda_.2} parent=0
    _
  %s9 = ssub.s32 1, %s7
  %s10 = scalar_select 0, %s9, %s7
  $region1: #{_lambda_.2} parent=0
    #allocation2 [shape = 'u8[2048]{0}', space=smem, size = 0x800, scoped, tag = 'input window, operand 1, single buffered']
    #allocation3 [shape = 's32[2]{0}', space=sflag, size = 0x8, scoped, tag = 'scoped memory for _lambda_.2']
    %11 = vsyncpa [#allocation3], 0
    loop: start=0, step=1, limit=4
    $region2: #{_lambda_.2} parent=1 // loop_pre_header
      _
    $region3: #{_lambda_.2} parent=1 // loop_header
      %s13 = sphi 0, %s17
      %p14 = scmp.ge.s32.totalorder %s13, 4
      %s23 = sphi 0, %s25
      %s26 = sphi 0, %s23
      %s27 = sphi 0, %s26
      %s43 = sphi 0, %s27
      %s47 = sphi 0, %s47
      %s49 = sphi 0, %s47
      %s50 = sphi 0, %s49
      %s64 = sphi 0, %s50
      %s68 = sphi 0, %s68
      %s70 = sphi 0, %s68
      %s71 = sphi 0, %s70
      %s85 = sphi 0, %s71
      %s89 = sphi 0, %s89
      %s91 = sphi 0, %s89
      %s92 = sphi 0, %s91
      %s106 = sphi 0, %s92
      %s110 = sphi 0, %s110
      %s112 = sphi 0, %s110
      %s113 = sphi 0, %s112
      %s127 = sphi 0, %s113
      %s131 = sphi 0, %s131
      %s133 = sphi 0, %s131
      %s134 = sphi 0, %s133
      %s148 = sphi 0, %s134
      %s154 = sphi 0, %s156
      %s157 = sphi 0, %s154
      %s158 = sphi 0, %s157
      %s174 = sphi 0, %s158
    $region4: #{_lambda_.2} parent=1 // loop_header_branch
      %16 = sbr.rel (%p14) target = $region8
    $region5: #{_lambda_.2} parent=1 // loop_body
      %s18 = ssub.s32 %s13, 1
      %s19 = ssub.s32 %s13, 2
      %s20 = sadd.s32 %s13, 1
      %s21 = ssub.s32 %s13, %s20
      %p22 = scmp.eq.s32.totalorder %s21, 0
      %s24 = sadd.s32 %s23, 1
      %s25 = scalar_select %p22, %s23, %s24
      %p28 = pneg %p22
      %p29 = scmp.eq.s32.totalorder %s13, 1
      %p30 = por %p28, %p29
      %p31 = scmp.ne.s32.totalorder %s23, %s26
      %p32 = scmp.eq.s32.totalorder %s13, 0
      %p33 = por %p31, %p32
      %p34 = scmp.ne.s32.totalorder %s23, %s26
      %p35 = scmp.eq.s32.totalorder %s18, 1
      %p36 = por %p34, %p35
      %p37 = scmp.ne.s32.totalorder %s26, %s27
      %p38 = scmp.eq.s32.totalorder %s18, 0
      %p39 = por %p37, %p38
      %p40 = scmp.ne.s32.totalorder %s26, %s27
      %p41 = scmp.eq.s32.totalorder %s19, 1
      %p42 = por %p40, %p41
      %p44 = scmp.ne.s32.totalorder %s27, %s43
      %p45 = scmp.eq.s32.totalorder %s19, 0
      %p46 = por %p44, %p45
      %s48 = sadd.s32 %s47, 1
      %p51 = scmp.eq.s32.totalorder %s13, 1
      %p52 = scmp.ne.s32.totalorder %s47, %s49
      %p53 = scmp.eq.s32.totalorder %s13, 0
      %p54 = por %p52, %p53
      %p55 = scmp.ne.s32.totalorder %s47, %s49
      %p56 = scmp.eq.s32.totalorder %s18, 1
      %p57 = por %p55, %p56
      %p58 = scmp.ne.s32.totalorder %s49, %s50
      %p59 = scmp.eq.s32.totalorder %s18, 0
      %p60 = por %p58, %p59
      %p61 = scmp.ne.s32.totalorder %s49, %s50
      %p62 = scmp.eq.s32.totalorder %s19, 1
      %p63 = por %p61, %p62
      %p65 = scmp.ne.s32.totalorder %s50, %s64
      %p66 = scmp.eq.s32.totalorder %s19, 0
      %p67 = por %p65, %p66
      %s69 = sadd.s32 %s68, 1
      %p72 = scmp.eq.s32.totalorder %s13, 1
      %p73 = scmp.ne.s32.totalorder %s68, %s70
      %p74 = scmp.eq.s32.totalorder %s13, 0
      %p75 = por %p73, %p74
      %p76 = scmp.ne.s32.totalorder %s68, %s70
      %p77 = scmp.eq.s32.totalorder %s18, 1
      %p78 = por %p76, %p77
      %p79 = scmp.ne.s32.totalorder %s70, %s71
      %p80 = scmp.eq.s32.totalorder %s18, 0
      %p81 = por %p79, %p80
      %p82 = scmp.ne.s32.totalorder %s70, %s71
      %p83 = scmp.eq.s32.totalorder %s19, 1
      %p84 = por %p82, %p83
      %p86 = scmp.ne.s32.totalorder %s71, %s85
      %p87 = scmp.eq.s32.totalorder %s19, 0
      %p88 = por %p86, %p87
      %s90 = sadd.s32 %s89, 1
      %p93 = scmp.eq.s32.totalorder %s13, 1
      %p94 = scmp.ne.s32.totalorder %s89, %s91
      %p95 = scmp.eq.s32.totalorder %s13, 0
      %p96 = por %p94, %p95
      %p97 = scmp.ne.s32.totalorder %s89, %s91
      %p98 = scmp.eq.s32.totalorder %s18, 1
      %p99 = por %p97, %p98
      %p100 = scmp.ne.s32.totalorder %s91, %s92
      %p101 = scmp.eq.s32.totalorder %s18, 0
      %p102 = por %p100, %p101
      %p103 = scmp.ne.s32.totalorder %s91, %s92
      %p104 = scmp.eq.s32.totalorder %s19, 1
      %p105 = por %p103, %p104
      %p107 = scmp.ne.s32.totalorder %s92, %s106
      %p108 = scmp.eq.s32.totalorder %s19, 0
      %p109 = por %p107, %p108
      %s111 = sadd.s32 %s110, 1
      %p114 = scmp.eq.s32.totalorder %s13, 1
      %p115 = scmp.ne.s32.totalorder %s110, %s112
      %p116 = scmp.eq.s32.totalorder %s13, 0
      %p117 = por %p115, %p116
      %p118 = scmp.ne.s32.totalorder %s110, %s112
      %p119 = scmp.eq.s32.totalorder %s18, 1
      %p120 = por %p118, %p119
      %p121 = scmp.ne.s32.totalorder %s112, %s113
      %p122 = scmp.eq.s32.totalorder %s18, 0
      %p123 = por %p121, %p122
      %p124 = scmp.ne.s32.totalorder %s112, %s113
      %p125 = scmp.eq.s32.totalorder %s19, 1
      %p126 = por %p124, %p125
      %p128 = scmp.ne.s32.totalorder %s113, %s127
      %p129 = scmp.eq.s32.totalorder %s19, 0
      %p130 = por %p128, %p129
      %s132 = sadd.s32 %s131, 1
      %p135 = scmp.eq.s32.totalorder %s13, 1
      %p136 = scmp.ne.s32.totalorder %s131, %s133
      %p137 = scmp.eq.s32.totalorder %s13, 0
      %p138 = por %p136, %p137
      %p139 = scmp.ne.s32.totalorder %s131, %s133
      %p140 = scmp.eq.s32.totalorder %s18, 1
      %p141 = por %p139, %p140
      %p142 = scmp.ne.s32.totalorder %s133, %s134
      %p143 = scmp.eq.s32.totalorder %s18, 0
      %p144 = por %p142, %p143
      %p145 = scmp.ne.s32.totalorder %s133, %s134
      %p146 = scmp.eq.s32.totalorder %s19, 1
      %p147 = por %p145, %p146
      %p149 = scmp.ne.s32.totalorder %s134, %s148
      %p150 = scmp.eq.s32.totalorder %s19, 0
      %p151 = por %p149, %p150
      %s152 = ssub.s32 %s13, %s20
      %p153 = scmp.eq.s32.totalorder %s152, 0
      %s155 = sadd.s32 %s154, 1
      %s156 = scalar_select %p153, %s154, %s155
      %p159 = pneg %p153
      %p160 = scmp.eq.s32.totalorder %s13, 1
      %p161 = por %p159, %p160
      %p162 = scmp.ne.s32.totalorder %s154, %s157
      %p163 = scmp.eq.s32.totalorder %s13, 0
      %p164 = por %p162, %p163
      %p165 = scmp.ne.s32.totalorder %s154, %s157
      %p166 = scmp.eq.s32.totalorder %s18, 1
      %p167 = por %p165, %p166
      %p168 = scmp.ne.s32.totalorder %s157, %s158
      %p169 = scmp.eq.s32.totalorder %s18, 0
      %p170 = por %p168, %p169
      %p171 = scmp.ne.s32.totalorder %s157, %s158
      %p172 = scmp.eq.s32.totalorder %s19, 1
      %p173 = por %p171, %p172
      %p175 = scmp.ne.s32.totalorder %s158, %s174
      %p176 = scmp.eq.s32.totalorder %s19, 0
      %p177 = por %p175, %p176
      %p178 = scmp.le.s32.totalorder 1, %s13
      %p179 = scmp.lt.s32.totalorder %s13, 3
      %p180 = pnand %p178, %p179
      %p181 = pneg %p180
      // Predicated region
      $region9: #{_lambda_.2} parent=5 // pred_check
        _
      $region10: #{_lambda_.2} parent=5 // pred_check_branch
        %183 = sbr.rel (%p180) target = $region12
      $region11: #{_lambda_.2} parent=5 // pred_region
        %s184 = ssub.s32 %s13, 1
        // Predicated region
        $region13: #{_lambda_.2} parent=11 // pred_check
          %p185 = pneg %p60
        $region14: #{_lambda_.2} parent=11 // pred_check_branch
          %187 = sbr.rel (%p185) target = $region16
        $region15: #{_lambda_.2} parent=11 // pred_region
          %189 = vsyncadd [#allocation3], 0
          %s191 = sshll.u32 %s1, 4
          %s192 = int_to_ptr.vmem [resolvable:$true] %s191
          %194 = dma.vmem_to_smem %s192, 64, [#allocation2], [#allocation3]
        $region16: #{_lambda_.2} parent=11 // pred_fallthru
          _
        // Predicated region
        $region17: #{_lambda_.2} parent=11 // pred_check
          %p195 = pneg %p81
        $region18: #{_lambda_.2} parent=11 // pred_check_branch
          %197 = sbr.rel (%p195) target = $region20
        $region19: #{_lambda_.2} parent=11 // pred_region
          _
        $region20: #{_lambda_.2} parent=11 // pred_fallthru
          _
        // Predicated region
        $region21: #{_lambda_.2} parent=11 // pred_check
          %p198 = pneg %p102
        $region22: #{_lambda_.2} parent=11 // pred_check_branch
          %200 = sbr.rel (%p198) target = $region24
        $region23: #{_lambda_.2} parent=11 // pred_region
          _
        $region24: #{_lambda_.2} parent=11 // pred_fallthru
          _
        // Predicated region
        $region25: #{_lambda_.2} parent=11 // pred_check
          %p201 = pneg %p123
        $region26: #{_lambda_.2} parent=11 // pred_check_branch
          %203 = sbr.rel (%p201) target = $region28
        $region27: #{_lambda_.2} parent=11 // pred_region
          _
        $region28: #{_lambda_.2} parent=11 // pred_fallthru
          _
        // Predicated region
        $region29: #{_lambda_.2} parent=11 // pred_check
          %p204 = pneg %p144
        $region30: #{_lambda_.2} parent=11 // pred_check_branch
          %206 = sbr.rel (%p204) target = $region32
        $region31: #{_lambda_.2} parent=11 // pred_region
          _
        $region32: #{_lambda_.2} parent=11 // pred_fallthru
          _
      $region12: #{_lambda_.2} parent=5 // pred_fallthru
        _
      %p207 = scmp.lt.s32.totalorder %s13, 2
      // Predicated region
      $region33: #{_lambda_.2} parent=5 // pred_check
        %p208 = pneg %p207
      $region34: #{_lambda_.2} parent=5 // pred_check_branch
        %210 = sbr.rel (%p208) target = $region36
      $region35: #{_lambda_.2} parent=5 // pred_region
        // Predicated region
        $region37: #{_lambda_.2} parent=35 // pred_check
          %p211 = pneg %p33
        $region38: #{_lambda_.2} parent=35 // pred_check_branch
          %213 = sbr.rel (%p211) target = $region40
        $region39: #{_lambda_.2} parent=35 // pred_region
          %s214 = smul.u32 4, %s13
          %p215 = scmp.lt.s32.totalorder %s214, 7
          %s216 = scalar_select %p215, %s214, 7
          %s217 = smul.addr %s216, 4
          %s218 = scalar_lea.vmem %s0, %s217
          %s219 = smul.u32 4, %s13
        $region40: #{_lambda_.2} parent=35 // pred_fallthru
          _
      $region36: #{_lambda_.2} parent=5 // pred_fallthru
        _
      %p220 = scmp.le.s32.totalorder 1, %s13
      %p221 = scmp.lt.s32.totalorder %s13, 3
      %p222 = pnand %p220, %p221
      %p223 = pneg %p222
      // Predicated region
      $region41: #{_lambda_.2} parent=5 // pred_check
        _
      $region42: #{_lambda_.2} parent=5 // pred_check_branch
        %225 = sbr.rel (%p222) target = $region44
      $region43: #{_lambda_.2} parent=5 // pred_region
        %s226 = ssub.s32 %s13, 1
        // Predicated region
        $region45: #{_lambda_.2} parent=43 // pred_check
          %p227 = pneg %p60
        $region46: #{_lambda_.2} parent=43 // pred_check_branch
          %229 = sbr.rel (%p227) target = $region48
        $region47: #{_lambda_.2} parent=43 // pred_region
          %231 = dma.done [#allocation3], 64
        $region48: #{_lambda_.2} parent=43 // pred_fallthru
          _
        %232 = sfence
        %s233 = smul.u32 4, %s18
        %p234 = scmp.lt.s32.totalorder %s233, 7
        %s235 = scalar_select %p234, %s233, 7
        %s236 = smul.addr %s235, 4
        %s237 = scalar_lea.vmem %s0, %s236
        %p238 = pneg %p39
        %p239 = pneg %p36
        %p240 = pneg %p60
        %p241 = pneg %p57
        %p242 = pneg %p81
        %p243 = pneg %p78
        %p244 = pneg %p102
        %p245 = pneg %p99
        %p246 = pneg %p123
        %p247 = pneg %p120
        %p248 = pneg %p144
        %p249 = pneg %p141
        %p250 = pneg %p170
        %p251 = pneg %p167
        %s252 = smul.u32 4, %s18
        %p253 = scmp.lt.s32.totalorder %s252, 7
        %s254 = scalar_select %p253, %s252, 7
        %s255 = smul.addr %s254, 4
        %s256 = scalar_lea.vmem %s6, %s255
        %s257 = smul.u32 4, %s18
        %p258 = scmp.lt.s32.totalorder %s257, 7
        %s259 = scalar_select %p258, %s257, 7
        %s260 = smul.addr %s259, 4
        %s261 = scalar_lea.vmem %s0, %s260
        %s262 = smul.u32 4, %s18
        %s263 = smul.u32 4, %s18
        %p264 = scmp.lt.s32.totalorder %s263, 7
        %s265 = scalar_select %p264, %s263, 7
        %s266 = smul.addr %s265, 4
        %s267 = scalar_lea.vmem %s6, %s266
        %s268 = smul.u32 4, %s18
        %v269 = vld [vmem:[%s261] sm:$0xf]
        %v270 = vld [vmem:[%s261 + $0x4] sm:$0xf]
        %v271 = vld [vmem:[%s261 + $0x8] sm:$0xf]
        %v272 = vld [vmem:[%s261 + $0xc] sm:$0xf]
        %s273 = sld [smem:[#allocation2]]
        %v274 = vstv %s273
        %v275 = vmul.f32 %v274, %v269
        %v276 = vmul.f32 %v274, %v270
        %v277 = vmul.f32 %v274, %v271
        %v278 = vmul.f32 %v274, %v272
        %s279 = sld [smem:[#allocation2 + $0x80]]
        %v280 = vstv %s279
        %v281 = vmul.f32 %v280, %v269
        %v282 = vmul.f32 %v280, %v270
        %v283 = vmul.f32 %v280, %v271
        %v284 = vmul.f32 %v280, %v272
        %s285 = sld [smem:[#allocation2 + $0x100]]
        %v286 = vstv %s285
        %v287 = vmul.f32 %v286, %v269
        %v288 = vmul.f32 %v286, %v270
        %v289 = vmul.f32 %v286, %v271
        %v290 = vmul.f32 %v286, %v272
        %s291 = sld [smem:[#allocation2 + $0x180]]
        %v292 = vstv %s291
        %v293 = vmul.f32 %v292, %v269
        %v294 = vmul.f32 %v292, %v270
        %v295 = vmul.f32 %v292, %v271
        %v296 = vmul.f32 %v292, %v272
        %s297 = sld [smem:[#allocation2 + $0x1]]
        %v298 = vstv %s297
        %v299 = vmul.f32 %v298, %v269
        %v300 = vmul.f32 %v298, %v270
        %v301 = vmul.f32 %v298, %v271
        %v302 = vmul.f32 %v298, %v272
        %307 = vrot.lane.b32.xlu0 %v299, 127
        %v308 = vpop.permute.xlu0 %307
        %309 = vrot.lane.b32.xlu0 %v300, 127
        %v310 = vpop.permute.xlu0 %309
        %311 = vrot.lane.b32.xlu0 %v301, 127
        %v312 = vpop.permute.xlu0 %311
        %313 = vrot.lane.b32.xlu0 %v302, 127
        %v314 = vpop.permute.xlu0 %313
        %v319 = vadd.f32 %v275, %v308
        %v320 = vadd.f32 %v276, %v310
        %v321 = vadd.f32 %v277, %v312
        %v322 = vadd.f32 %v278, %v314
        %s323 = sld [smem:[#allocation2 + $0x81]]
        %v324 = vstv %s323
        %v325 = vmul.f32 %v324, %v269
        %v326 = vmul.f32 %v324, %v270
        %v327 = vmul.f32 %v324, %v271
        %v328 = vmul.f32 %v324, %v272
        %333 = vrot.lane.b32.xlu0 %v325, 127
        %v334 = vpop.permute.xlu0 %333
        %335 = vrot.lane.b32.xlu0 %v326, 127
        %v336 = vpop.permute.xlu0 %335
        %337 = vrot.lane.b32.xlu0 %v327, 127
        %v338 = vpop.permute.xlu0 %337
        %339 = vrot.lane.b32.xlu0 %v328, 127
        %v340 = vpop.permute.xlu0 %339
        %v345 = vadd.f32 %v281, %v334
        %v346 = vadd.f32 %v282, %v336
        %v347 = vadd.f32 %v283, %v338
        %v348 = vadd.f32 %v284, %v340
        %s349 = sld [smem:[#allocation2 + $0x101]]
        %v350 = vstv %s349
        %v351 = vmul.f32 %v350, %v269
        %v352 = vmul.f32 %v350, %v270
        %v353 = vmul.f32 %v350, %v271
        %v354 = vmul.f32 %v350, %v272
        %359 = vrot.lane.b32.xlu0 %v351, 127
        %v360 = vpop.permute.xlu0 %359
        %361 = vrot.lane.b32.xlu0 %v352, 127
        %v362 = vpop.permute.xlu0 %361
        %363 = vrot.lane.b32.xlu0 %v353, 127
        %v364 = vpop.permute.xlu0 %363
        %365 = vrot.lane.b32.xlu0 %v354, 127
        %v366 = vpop.permute.xlu0 %365
        %v371 = vadd.f32 %v287, %v360
        %v372 = vadd.f32 %v288, %v362
        %v373 = vadd.f32 %v289, %v364
        %v374 = vadd.f32 %v290, %v366
        %s375 = sld [smem:[#allocation2 + $0x181]]
        %v376 = vstv %s375
        %v377 = vmul.f32 %v376, %v269
        %v378 = vmul.f32 %v376, %v270
        %v379 = vmul.f32 %v376, %v271
        %v380 = vmul.f32 %v376, %v272
        %385 = vrot.lane.b32.xlu0 %v377, 127
        %v386 = vpop.permute.xlu0 %385
        %387 = vrot.lane.b32.xlu0 %v378, 127
        %v388 = vpop.permute.xlu0 %387
        %389 = vrot.lane.b32.xlu0 %v379, 127
        %v390 = vpop.permute.xlu0 %389
        %391 = vrot.lane.b32.xlu0 %v380, 127
        %v392 = vpop.permute.xlu0 %391
        %v397 = vadd.f32 %v293, %v386
        %v398 = vadd.f32 %v294, %v388
        %v399 = vadd.f32 %v295, %v390
        %v400 = vadd.f32 %v296, %v392
        %s401 = sld [smem:[#allocation2 + $0x2]]
        %v402 = vstv %s401
        %v403 = vmul.f32 %v402, %v269
        %v404 = vmul.f32 %v402, %v270
        %v405 = vmul.f32 %v402, %v271
        %v406 = vmul.f32 %v402, %v272
        %411 = vrot.lane.b32.xlu0 %v403, 126
        %v412 = vpop.permute.xlu0 %411
        %413 = vrot.lane.b32.xlu0 %v404, 126
        %v414 = vpop.permute.xlu0 %413
        %415 = vrot.lane.b32.xlu0 %v405, 126
        %v416 = vpop.permute.xlu0 %415
        %417 = vrot.lane.b32.xlu0 %v406, 126
        %v418 = vpop.permute.xlu0 %417
        %v423 = vadd.f32 %v319, %v412
        %v424 = vadd.f32 %v320, %v414
        %v425 = vadd.f32 %v321, %v416
        %v426 = vadd.f32 %v322, %v418
        %s427 = sld [smem:[#allocation2 + $0x82]]
        %v428 = vstv %s427
        %v429 = vmul.f32 %v428, %v269
        %v430 = vmul.f32 %v428, %v270
        %v431 = vmul.f32 %v428, %v271
        %v432 = vmul.f32 %v428, %v272
        %437 = vrot.lane.b32.xlu0 %v429, 126
        %v438 = vpop.permute.xlu0 %437
        %439 = vrot.lane.b32.xlu0 %v430, 126
        %v440 = vpop.permute.xlu0 %439
        %441 = vrot.lane.b32.xlu0 %v431, 126
        %v442 = vpop.permute.xlu0 %441
        %443 = vrot.lane.b32.xlu0 %v432, 126
        %v444 = vpop.permute.xlu0 %443
        %v449 = vadd.f32 %v345, %v438
        %v450 = vadd.f32 %v346, %v440
        %v451 = vadd.f32 %v347, %v442
        %v452 = vadd.f32 %v348, %v444
        %s453 = sld [smem:[#allocation2 + $0x102]]
        %v454 = vstv %s453
        %v455 = vmul.f32 %v454, %v269
        %v456 = vmul.f32 %v454, %v270
        %v457 = vmul.f32 %v454, %v271
        %v458 = vmul.f32 %v454, %v272
        %463 = vrot.lane.b32.xlu0 %v455, 126
        %v464 = vpop.permute.xlu0 %463
        %465 = vrot.lane.b32.xlu0 %v456, 126
        %v466 = vpop.permute.xlu0 %465
        %467 = vrot.lane.b32.xlu0 %v457, 126
        %v468 = vpop.permute.xlu0 %467
        %469 = vrot.lane.b32.xlu0 %v458, 126
        %v470 = vpop.permute.xlu0 %469
        %v475 = vadd.f32 %v371, %v464
        %v476 = vadd.f32 %v372, %v466
        %v477 = vadd.f32 %v373, %v468
        %v478 = vadd.f32 %v374, %v470
        %s479 = sld [smem:[#allocation2 + $0x182]]
        %v480 = vstv %s479
        %v481 = vmul.f32 %v480, %v269
        %v482 = vmul.f32 %v480, %v270
        %v483 = vmul.f32 %v480, %v271
        %v484 = vmul.f32 %v480, %v272
        %489 = vrot.lane.b32.xlu0 %v481, 126
        %v490 = vpop.permute.xlu0 %489
        %491 = vrot.lane.b32.xlu0 %v482, 126
        %v492 = vpop.permute.xlu0 %491
        %493 = vrot.lane.b32.xlu0 %v483, 126
        %v494 = vpop.permute.xlu0 %493
        %495 = vrot.lane.b32.xlu0 %v484, 126
        %v496 = vpop.permute.xlu0 %495
        %v501 = vadd.f32 %v397, %v490
        %v502 = vadd.f32 %v398, %v492
        %v503 = vadd.f32 %v399, %v494
        %v504 = vadd.f32 %v400, %v496
        %s505 = sld [smem:[#allocation2 + $0x3]]
        %v506 = vstv %s505
        %v507 = vmul.f32 %v506, %v269
        %v508 = vmul.f32 %v506, %v270
        %v509 = vmul.f32 %v506, %v271
        %v510 = vmul.f32 %v506, %v272
        %515 = vrot.lane.b32.xlu0 %v507, 125
        %v516 = vpop.permute.xlu0 %515
        %517 = vrot.lane.b32.xlu0 %v508, 125
        %v518 = vpop.permute.xlu0 %517
        %519 = vrot.lane.b32.xlu0 %v509, 125
        %v520 = vpop.permute.xlu0 %519
        %521 = vrot.lane.b32.xlu0 %v510, 125
        %v522 = vpop.permute.xlu0 %521
        %v527 = vadd.f32 %v423, %v516
        %v528 = vadd.f32 %v424, %v518
        %v529 = vadd.f32 %v425, %v520
        %v530 = vadd.f32 %v426, %v522
        %s531 = sld [smem:[#allocation2 + $0x83]]
        %v532 = vstv %s531
        %v533 = vmul.f32 %v532, %v269
        %v534 = vmul.f32 %v532, %v270
        %v535 = vmul.f32 %v532, %v271
        %v536 = vmul.f32 %v532, %v272
        %541 = vrot.lane.b32.xlu0 %v533, 125
        %v542 = vpop.permute.xlu0 %541
        %543 = vrot.lane.b32.xlu0 %v534, 125
        %v544 = vpop.permute.xlu0 %543
        %545 = vrot.lane.b32.xlu0 %v535, 125
        %v546 = vpop.permute.xlu0 %545
        %547 = vrot.lane.b32.xlu0 %v536, 125
        %v548 = vpop.permute.xlu0 %547
        %v553 = vadd.f32 %v449, %v542
        %v554 = vadd.f32 %v450, %v544
        %v555 = vadd.f32 %v451, %v546
        %v556 = vadd.f32 %v452, %v548
        %s557 = sld [smem:[#allocation2 + $0x103]]
        %v558 = vstv %s557
        %v559 = vmul.f32 %v558, %v269
        %v560 = vmul.f32 %v558, %v270
        %v561 = vmul.f32 %v558, %v271
        %v562 = vmul.f32 %v558, %v272
        %567 = vrot.lane.b32.xlu0 %v559, 125
        %v568 = vpop.permute.xlu0 %567
        %569 = vrot.lane.b32.xlu0 %v560, 125
        %v570 = vpop.permute.xlu0 %569
        %571 = vrot.lane.b32.xlu0 %v561, 125
        %v572 = vpop.permute.xlu0 %571
        %573 = vrot.lane.b32.xlu0 %v562, 125
        %v574 = vpop.permute.xlu0 %573
        %v579 = vadd.f32 %v475, %v568
        %v580 = vadd.f32 %v476, %v570
        %v581 = vadd.f32 %v477, %v572
        %v582 = vadd.f32 %v478, %v574
        %s583 = sld [smem:[#allocation2 + $0x183]]
        %v584 = vstv %s583
        %v585 = vmul.f32 %v584, %v269
        %v586 = vmul.f32 %v584, %v270
        %v587 = vmul.f32 %v584, %v271
        %v588 = vmul.f32 %v584, %v272
        %593 = vrot.lane.b32.xlu0 %v585, 125
        %v594 = vpop.permute.xlu0 %593
        %595 = vrot.lane.b32.xlu0 %v586, 125
        %v596 = vpop.permute.xlu0 %595
        %597 = vrot.lane.b32.xlu0 %v587, 125
        %v598 = vpop.permute.xlu0 %597
        %599 = vrot.lane.b32.xlu0 %v588, 125
        %v600 = vpop.permute.xlu0 %599
        %v605 = vadd.f32 %v501, %v594
        %v606 = vadd.f32 %v502, %v596
        %v607 = vadd.f32 %v503, %v598
        %v608 = vadd.f32 %v504, %v600
        %s609 = sld [smem:[#allocation2 + $0x4]]
        %v610 = vstv %s609
        %v611 = vmul.f32 %v610, %v269
        %v612 = vmul.f32 %v610, %v270
        %v613 = vmul.f32 %v610, %v271
        %v614 = vmul.f32 %v610, %v272
        %619 = vrot.lane.b32.xlu0 %v611, 124
        %v620 = vpop.permute.xlu0 %619
        %621 = vrot.lane.b32.xlu0 %v612, 124
        %v622 = vpop.permute.xlu0 %621
        %623 = vrot.lane.b32.xlu0 %v613, 124
        %v624 = vpop.permute.xlu0 %623
        %625 = vrot.lane.b32.xlu0 %v614, 124
        %v626 = vpop.permute.xlu0 %625
        %v631 = vadd.f32 %v527, %v620
        %v632 = vadd.f32 %v528, %v622
        %v633 = vadd.f32 %v529, %v624
        %v634 = vadd.f32 %v530, %v626
        %s635 = sld [smem:[#allocation2 + $0x84]]
        %v636 = vstv %s635
        %v637 = vmul.f32 %v636, %v269
        %v638 = vmul.f32 %v636, %v270
        %v639 = vmul.f32 %v636, %v271
        %v640 = vmul.f32 %v636, %v272
        %645 = vrot.lane.b32.xlu0 %v637, 124
        %v646 = vpop.permute.xlu0 %645
        %647 = vrot.lane.b32.xlu0 %v638, 124
        %v648 = vpop.permute.xlu0 %647
        %649 = vrot.lane.b32.xlu0 %v639, 124
        %v650 = vpop.permute.xlu0 %649
        %651 = vrot.lane.b32.xlu0 %v640, 124
        %v652 = vpop.permute.xlu0 %651
        %v657 = vadd.f32 %v553, %v646
        %v658 = vadd.f32 %v554, %v648
        %v659 = vadd.f32 %v555, %v650
        %v660 = vadd.f32 %v556, %v652
        %s661 = sld [smem:[#allocation2 + $0x104]]
        %v662 = vstv %s661
        %v663 = vmul.f32 %v662, %v269
        %v664 = vmul.f32 %v662, %v270
        %v665 = vmul.f32 %v662, %v271
        %v666 = vmul.f32 %v662, %v272
        %671 = vrot.lane.b32.xlu0 %v663, 124
        %v672 = vpop.permute.xlu0 %671
        %673 = vrot.lane.b32.xlu0 %v664, 124
        %v674 = vpop.permute.xlu0 %673
        %675 = vrot.lane.b32.xlu0 %v665, 124
        %v676 = vpop.permute.xlu0 %675
        %677 = vrot.lane.b32.xlu0 %v666, 124
        %v678 = vpop.permute.xlu0 %677
        %v683 = vadd.f32 %v579, %v672
        %v684 = vadd.f32 %v580, %v674
        %v685 = vadd.f32 %v581, %v676
        %v686 = vadd.f32 %v582, %v678
        %s687 = sld [smem:[#allocation2 + $0x184]]
        %v688 = vstv %s687
        %v689 = vmul.f32 %v688, %v269
        %v690 = vmul.f32 %v688, %v270
        %v691 = vmul.f32 %v688, %v271
        %v692 = vmul.f32 %v688, %v272
        %697 = vrot.lane.b32.xlu0 %v689, 124
        %v698 = vpop.permute.xlu0 %697
        %699 = vrot.lane.b32.xlu0 %v690, 124
        %v700 = vpop.permute.xlu0 %699
        %701 = vrot.lane.b32.xlu0 %v691, 124
        %v702 = vpop.permute.xlu0 %701
        %703 = vrot.lane.b32.xlu0 %v692, 124
        %v704 = vpop.permute.xlu0 %703
        %v709 = vadd.f32 %v605, %v698
        %v710 = vadd.f32 %v606, %v700
        %v711 = vadd.f32 %v607, %v702
        %v712 = vadd.f32 %v608, %v704
        %v713 = vld [vmem:[%s2] sm:$0xff]
        %s714 = scalar_lea.vmem %s2, 8
        %v715 = vld [vmem:[%s714] sm:$0xff]
        %vm716 = vcmask 31744
        %v718 = vsel %vm716, %v715, 0
        %vm720 = vcmask 1043456
        %v722 = vsel %vm720, %v657, 0
        %724 = vmatpush.msra.mxu0 0.0
        %725 = vmatpush.msra.mxu0 0.0
        %726 = vmatpush.msra.mxu0 0.0
        %727 = vmatpush.msra.mxu0 0.0
        %728 = vmatpush.msra.mxu0 0.0
        %729 = vmatpush.msra.mxu0 0.0
        %730 = vmatpush.msra.mxu0 0.0
        %731 = vmatpush.msra.mxu0 0.0
        %732 = vmatpush.msra.mxu0 0.0
        %733 = vmatpush.msra.mxu0 0.0
        %734 = vmatpush.msra.mxu0 0.0
        %735 = vmatpush.msra.mxu0 0.0
        %736 = vmatpush.msra.mxu0 0.0
        %737 = vmatpush.msra.mxu0 0.0
        %738 = vmatpush.msra.mxu0 0.0
        %739 = vmatpush.msra.mxu0 %v722
        %740 = vmatmul.f32.gmra.mxu0 %v718
        %v741 = vpop.f32.mrf.mxu0
        %v742 = vadd.f32 0.0, %v741
        %743 = vdwg.mxu0
        %v745 = vsel %vm720, %v658, 0
        %747 = vmatpush.msra.mxu0 0.0
        %748 = vmatpush.msra.mxu0 0.0
        %749 = vmatpush.msra.mxu0 0.0
        %750 = vmatpush.msra.mxu0 0.0
        %751 = vmatpush.msra.mxu0 0.0
        %752 = vmatpush.msra.mxu0 0.0
        %753 = vmatpush.msra.mxu0 0.0
        %754 = vmatpush.msra.mxu0 0.0
        %755 = vmatpush.msra.mxu0 0.0
        %756 = vmatpush.msra.mxu0 0.0
        %757 = vmatpush.msra.mxu0 0.0
        %758 = vmatpush.msra.mxu0 0.0
        %759 = vmatpush.msra.mxu0 0.0
        %760 = vmatpush.msra.mxu0 0.0
        %761 = vmatpush.msra.mxu0 0.0
        %762 = vmatpush.msra.mxu0 %v745
        %763 = vmatmul.f32.gmra.mxu0 %v718
        %v764 = vpop.f32.mrf.mxu0
        %v765 = vadd.f32 0.0, %v764
        %766 = vdwg.mxu0
        %v768 = vsel %vm720, %v659, 0
        %770 = vmatpush.msra.mxu0 0.0
        %771 = vmatpush.msra.mxu0 0.0
        %772 = vmatpush.msra.mxu0 0.0
        %773 = vmatpush.msra.mxu0 0.0
        %774 = vmatpush.msra.mxu0 0.0
        %775 = vmatpush.msra.mxu0 0.0
        %776 = vmatpush.msra.mxu0 0.0
        %777 = vmatpush.msra.mxu0 0.0
        %778 = vmatpush.msra.mxu0 0.0
        %779 = vmatpush.msra.mxu0 0.0
        %780 = vmatpush.msra.mxu0 0.0
        %781 = vmatpush.msra.mxu0 0.0
        %782 = vmatpush.msra.mxu0 0.0
        %783 = vmatpush.msra.mxu0 0.0
        %784 = vmatpush.msra.mxu0 0.0
        %785 = vmatpush.msra.mxu0 %v768
        %786 = vmatmul.f32.gmra.mxu0 %v718
        %v787 = vpop.f32.mrf.mxu0
        %v788 = vadd.f32 0.0, %v787
        %789 = vdwg.mxu0
        %v791 = vsel %vm720, %v660, 0
        %793 = vmatpush.msra.mxu0 0.0
        %794 = vmatpush.msra.mxu0 0.0
        %795 = vmatpush.msra.mxu0 0.0
        %796 = vmatpush.msra.mxu0 0.0
        %797 = vmatpush.msra.mxu0 0.0
        %798 = vmatpush.msra.mxu0 0.0
        %799 = vmatpush.msra.mxu0 0.0
        %800 = vmatpush.msra.mxu0 0.0
        %801 = vmatpush.msra.mxu0 0.0
        %802 = vmatpush.msra.mxu0 0.0
        %803 = vmatpush.msra.mxu0 0.0
        %804 = vmatpush.msra.mxu0 0.0
        %805 = vmatpush.msra.mxu0 0.0
        %806 = vmatpush.msra.mxu0 0.0
        %807 = vmatpush.msra.mxu0 0.0
        %808 = vmatpush.msra.mxu0 %v791
        %809 = vmatmul.f32.gmra.mxu0 %v718
        %v810 = vpop.f32.mrf.mxu0
        %v811 = vadd.f32 0.0, %v810
        %812 = vdwg.mxu0
        %v814 = vsel %vm716, %v713, 0
        %v817 = vsel %vm720, %v631, 0
        %819 = vmatpush.msra.mxu0 0.0
        %820 = vmatpush.msra.mxu0 0.0
        %821 = vmatpush.msra.mxu0 0.0
        %822 = vmatpush.msra.mxu0 0.0
        %823 = vmatpush.msra.mxu0 0.0
        %824 = vmatpush.msra.mxu0 0.0
        %825 = vmatpush.msra.mxu0 0.0
        %826 = vmatpush.msra.mxu0 0.0
        %827 = vmatpush.msra.mxu0 0.0
        %828 = vmatpush.msra.mxu0 0.0
        %829 = vmatpush.msra.mxu0 0.0
        %830 = vmatpush.msra.mxu0 0.0
        %831 = vmatpush.msra.mxu0 0.0
        %832 = vmatpush.msra.mxu0 0.0
        %833 = vmatpush.msra.mxu0 0.0
        %834 = vmatpush.msra.mxu0 %v817
        %835 = vmatmul.f32.gmra.mxu0 %v814
        %v836 = vpop.f32.mrf.mxu0
        %v837 = vadd.f32 %v742, %v836
        %838 = vdwg.mxu0
        %v840 = vsel %vm720, %v632, 0
        %842 = vmatpush.msra.mxu0 0.0
        %843 = vmatpush.msra.mxu0 0.0
        %844 = vmatpush.msra.mxu0 0.0
        %845 = vmatpush.msra.mxu0 0.0
        %846 = vmatpush.msra.mxu0 0.0
        %847 = vmatpush.msra.mxu0 0.0
        %848 = vmatpush.msra.mxu0 0.0
        %849 = vmatpush.msra.mxu0 0.0
        %850 = vmatpush.msra.mxu0 0.0
        %851 = vmatpush.msra.mxu0 0.0
        %852 = vmatpush.msra.mxu0 0.0
        %853 = vmatpush.msra.mxu0 0.0
        %854 = vmatpush.msra.mxu0 0.0
        %855 = vmatpush.msra.mxu0 0.0
        %856 = vmatpush.msra.mxu0 0.0
        %857 = vmatpush.msra.mxu0 %v840
        %858 = vmatmul.f32.gmra.mxu0 %v814
        %v859 = vpop.f32.mrf.mxu0
        %v860 = vadd.f32 %v765, %v859
        %861 = vdwg.mxu0
        %v863 = vsel %vm720, %v633, 0
        %865 = vmatpush.msra.mxu0 0.0
        %866 = vmatpush.msra.mxu0 0.0
        %867 = vmatpush.msra.mxu0 0.0
        %868 = vmatpush.msra.mxu0 0.0
        %869 = vmatpush.msra.mxu0 0.0
        %870 = vmatpush.msra.mxu0 0.0
        %871 = vmatpush.msra.mxu0 0.0
        %872 = vmatpush.msra.mxu0 0.0
        %873 = vmatpush.msra.mxu0 0.0
        %874 = vmatpush.msra.mxu0 0.0
        %875 = vmatpush.msra.mxu0 0.0
        %876 = vmatpush.msra.mxu0 0.0
        %877 = vmatpush.msra.mxu0 0.0
        %878 = vmatpush.msra.mxu0 0.0
        %879 = vmatpush.msra.mxu0 0.0
        %880 = vmatpush.msra.mxu0 %v863
        %881 = vmatmul.f32.gmra.mxu0 %v814
        %v882 = vpop.f32.mrf.mxu0
        %v883 = vadd.f32 %v788, %v882
        %884 = vdwg.mxu0
        %v886 = vsel %vm720, %v634, 0
        %888 = vmatpush.msra.mxu0 0.0
        %889 = vmatpush.msra.mxu0 0.0
        %890 = vmatpush.msra.mxu0 0.0
        %891 = vmatpush.msra.mxu0 0.0
        %892 = vmatpush.msra.mxu0 0.0
        %893 = vmatpush.msra.mxu0 0.0
        %894 = vmatpush.msra.mxu0 0.0
        %895 = vmatpush.msra.mxu0 0.0
        %896 = vmatpush.msra.mxu0 0.0
        %897 = vmatpush.msra.mxu0 0.0
        %898 = vmatpush.msra.mxu0 0.0
        %899 = vmatpush.msra.mxu0 0.0
        %900 = vmatpush.msra.mxu0 0.0
        %901 = vmatpush.msra.mxu0 0.0
        %902 = vmatpush.msra.mxu0 0.0
        %903 = vmatpush.msra.mxu0 %v886
        %904 = vmatmul.f32.gmra.mxu0 %v814
        %v905 = vpop.f32.mrf.mxu0
        %v906 = vadd.f32 %v811, %v905
        %907 = vdwg.mxu0
        %s908 = scalar_lea.vmem %s2, 16
        %v909 = vld [vmem:[%s908] sm:$0xff]
        %v911 = vsel %vm716, %v909, 0
        %v914 = vsel %vm720, %v683, 0
        %916 = vmatpush.msra.mxu0 0.0
        %917 = vmatpush.msra.mxu0 0.0
        %918 = vmatpush.msra.mxu0 0.0
        %919 = vmatpush.msra.mxu0 0.0
        %920 = vmatpush.msra.mxu0 0.0
        %921 = vmatpush.msra.mxu0 0.0
        %922 = vmatpush.msra.mxu0 0.0
        %923 = vmatpush.msra.mxu0 0.0
        %924 = vmatpush.msra.mxu0 0.0
        %925 = vmatpush.msra.mxu0 0.0
        %926 = vmatpush.msra.mxu0 0.0
        %927 = vmatpush.msra.mxu0 0.0
        %928 = vmatpush.msra.mxu0 0.0
        %929 = vmatpush.msra.mxu0 0.0
        %930 = vmatpush.msra.mxu0 0.0
        %931 = vmatpush.msra.mxu0 %v914
        %932 = vmatmul.f32.gmra.mxu0 %v911
        %v933 = vpop.f32.mrf.mxu0
        %v934 = vadd.f32 0.0, %v933
        %935 = vdwg.mxu0
        %v937 = vsel %vm720, %v684, 0
        %939 = vmatpush.msra.mxu0 0.0
        %940 = vmatpush.msra.mxu0 0.0
        %941 = vmatpush.msra.mxu0 0.0
        %942 = vmatpush.msra.mxu0 0.0
        %943 = vmatpush.msra.mxu0 0.0
        %944 = vmatpush.msra.mxu0 0.0
        %945 = vmatpush.msra.mxu0 0.0
        %946 = vmatpush.msra.mxu0 0.0
        %947 = vmatpush.msra.mxu0 0.0
        %948 = vmatpush.msra.mxu0 0.0
        %949 = vmatpush.msra.mxu0 0.0
        %950 = vmatpush.msra.mxu0 0.0
        %951 = vmatpush.msra.mxu0 0.0
        %952 = vmatpush.msra.mxu0 0.0
        %953 = vmatpush.msra.mxu0 0.0
        %954 = vmatpush.msra.mxu0 %v937
        %955 = vmatmul.f32.gmra.mxu0 %v911
        %v956 = vpop.f32.mrf.mxu0
        %v957 = vadd.f32 0.0, %v956
        %958 = vdwg.mxu0
        %v960 = vsel %vm720, %v685, 0
        %962 = vmatpush.msra.mxu0 0.0
        %963 = vmatpush.msra.mxu0 0.0
        %964 = vmatpush.msra.mxu0 0.0
        %965 = vmatpush.msra.mxu0 0.0
        %966 = vmatpush.msra.mxu0 0.0
        %967 = vmatpush.msra.mxu0 0.0
        %968 = vmatpush.msra.mxu0 0.0
        %969 = vmatpush.msra.mxu0 0.0
        %970 = vmatpush.msra.mxu0 0.0
        %971 = vmatpush.msra.mxu0 0.0
        %972 = vmatpush.msra.mxu0 0.0
        %973 = vmatpush.msra.mxu0 0.0
        %974 = vmatpush.msra.mxu0 0.0
        %975 = vmatpush.msra.mxu0 0.0
        %976 = vmatpush.msra.mxu0 0.0
        %977 = vmatpush.msra.mxu0 %v960
        %978 = vmatmul.f32.gmra.mxu0 %v911
        %v979 = vpop.f32.mrf.mxu0
        %v980 = vadd.f32 0.0, %v979
        %981 = vdwg.mxu0
        %v983 = vsel %vm720, %v686, 0
        %985 = vmatpush.msra.mxu0 0.0
        %986 = vmatpush.msra.mxu0 0.0
        %987 = vmatpush.msra.mxu0 0.0
        %988 = vmatpush.msra.mxu0 0.0
        %989 = vmatpush.msra.mxu0 0.0
        %990 = vmatpush.msra.mxu0 0.0
        %991 = vmatpush.msra.mxu0 0.0
        %992 = vmatpush.msra.mxu0 0.0
        %993 = vmatpush.msra.mxu0 0.0
        %994 = vmatpush.msra.mxu0 0.0
        %995 = vmatpush.msra.mxu0 0.0
        %996 = vmatpush.msra.mxu0 0.0
        %997 = vmatpush.msra.mxu0 0.0
        %998 = vmatpush.msra.mxu0 0.0
        %999 = vmatpush.msra.mxu0 0.0
        %1000 = vmatpush.msra.mxu0 %v983
        %1001 = vmatmul.f32.gmra.mxu0 %v911
        %v1002 = vpop.f32.mrf.mxu0
        %v1003 = vadd.f32 0.0, %v1002
        %1004 = vdwg.mxu0
        %v1005 = vadd.f32 %v837, %v934
        %v1006 = vadd.f32 %v860, %v957
        %v1007 = vadd.f32 %v883, %v980
        %v1008 = vadd.f32 %v906, %v1003
        %s1009 = scalar_lea.vmem %s2, 24
        %v1010 = vld [vmem:[%s1009] sm:$0xff]
        %v1012 = vsel %vm716, %v1010, 0
        %v1015 = vsel %vm720, %v709, 0
        %1017 = vmatpush.msra.mxu0 0.0
        %1018 = vmatpush.msra.mxu0 0.0
        %1019 = vmatpush.msra.mxu0 0.0
        %1020 = vmatpush.msra.mxu0 0.0
        %1021 = vmatpush.msra.mxu0 0.0
        %1022 = vmatpush.msra.mxu0 0.0
        %1023 = vmatpush.msra.mxu0 0.0
        %1024 = vmatpush.msra.mxu0 0.0
        %1025 = vmatpush.msra.mxu0 0.0
        %1026 = vmatpush.msra.mxu0 0.0
        %1027 = vmatpush.msra.mxu0 0.0
        %1028 = vmatpush.msra.mxu0 0.0
        %1029 = vmatpush.msra.mxu0 0.0
        %1030 = vmatpush.msra.mxu0 0.0
        %1031 = vmatpush.msra.mxu0 0.0
        %1032 = vmatpush.msra.mxu0 %v1015
        %1033 = vmatmul.f32.gmra.mxu0 %v1012
        %v1034 = vpop.f32.mrf.mxu0
        %v1035 = vadd.f32 0.0, %v1034
        %1036 = vdwg.mxu0
        %v1038 = vsel %vm720, %v710, 0
        %1040 = vmatpush.msra.mxu0 0.0
        %1041 = vmatpush.msra.mxu0 0.0
        %1042 = vmatpush.msra.mxu0 0.0
        %1043 = vmatpush.msra.mxu0 0.0
        %1044 = vmatpush.msra.mxu0 0.0
        %1045 = vmatpush.msra.mxu0 0.0
        %1046 = vmatpush.msra.mxu0 0.0
        %1047 = vmatpush.msra.mxu0 0.0
        %1048 = vmatpush.msra.mxu0 0.0
        %1049 = vmatpush.msra.mxu0 0.0
        %1050 = vmatpush.msra.mxu0 0.0
        %1051 = vmatpush.msra.mxu0 0.0
        %1052 = vmatpush.msra.mxu0 0.0
        %1053 = vmatpush.msra.mxu0 0.0
        %1054 = vmatpush.msra.mxu0 0.0
        %1055 = vmatpush.msra.mxu0 %v1038
        %1056 = vmatmul.f32.gmra.mxu0 %v1012
        %v1057 = vpop.f32.mrf.mxu0
        %v1058 = vadd.f32 0.0, %v1057
        %1059 = vdwg.mxu0
        %v1061 = vsel %vm720, %v711, 0
        %1063 = vmatpush.msra.mxu0 0.0
        %1064 = vmatpush.msra.mxu0 0.0
        %1065 = vmatpush.msra.mxu0 0.0
        %1066 = vmatpush.msra.mxu0 0.0
        %1067 = vmatpush.msra.mxu0 0.0
        %1068 = vmatpush.msra.mxu0 0.0
        %1069 = vmatpush.msra.mxu0 0.0
        %1070 = vmatpush.msra.mxu0 0.0
        %1071 = vmatpush.msra.mxu0 0.0
        %1072 = vmatpush.msra.mxu0 0.0
        %1073 = vmatpush.msra.mxu0 0.0
        %1074 = vmatpush.msra.mxu0 0.0
        %1075 = vmatpush.msra.mxu0 0.0
        %1076 = vmatpush.msra.mxu0 0.0
        %1077 = vmatpush.msra.mxu0 0.0
        %1078 = vmatpush.msra.mxu0 %v1061
        %1079 = vmatmul.f32.gmra.mxu0 %v1012
        %v1080 = vpop.f32.mrf.mxu0
        %v1081 = vadd.f32 0.0, %v1080
        %1082 = vdwg.mxu0
        %v1084 = vsel %vm720, %v712, 0
        %1086 = vmatpush.msra.mxu0 0.0
        %1087 = vmatpush.msra.mxu0 0.0
        %1088 = vmatpush.msra.mxu0 0.0
        %1089 = vmatpush.msra.mxu0 0.0
        %1090 = vmatpush.msra.mxu0 0.0
        %1091 = vmatpush.msra.mxu0 0.0
        %1092 = vmatpush.msra.mxu0 0.0
        %1093 = vmatpush.msra.mxu0 0.0
        %1094 = vmatpush.msra.mxu0 0.0
        %1095 = vmatpush.msra.mxu0 0.0
        %1096 = vmatpush.msra.mxu0 0.0
        %1097 = vmatpush.msra.mxu0 0.0
        %1098 = vmatpush.msra.mxu0 0.0
        %1099 = vmatpush.msra.mxu0 0.0
        %1100 = vmatpush.msra.mxu0 0.0
        %1101 = vmatpush.msra.mxu0 %v1084
        %1102 = vmatmul.f32.gmra.mxu0 %v1012
        %v1103 = vpop.f32.mrf.mxu0
        %v1104 = vadd.f32 0.0, %v1103
        %1105 = vdwg.mxu0
        %v1106 = vadd.f32 %v1005, %v1035
        %v1107 = vadd.f32 %v1006, %v1058
        %v1108 = vadd.f32 %v1007, %v1081
        %v1109 = vadd.f32 %v1008, %v1104
        %v1110 = vld [vmem:[%s3] sm:$0xff]
        %1112 = vset.pattern.permute.xlu0 0
        %1113 = vperm.xlu0 %1112, %v1110
        %v1114 = vpop.permute.xlu0 %1113
        %v1116 = vadd.f32 %v1106, %v1114
        %v1117 = vadd.f32 %v1107, %v1114
        %v1118 = vadd.f32 %v1108, %v1114
        %v1119 = vadd.f32 %v1109, %v1114
        %vm1120 = vcmask 261120
        %v1121 = vsel %vm1120, %v1116, 0.0
        %1122 = vadd.xlane.f32.xlu0 %v1121
        %v1123 = vpop.xlane.xlu0 %1122
        %v1124 = vsel %vm1120, %v1117, 0.0
        %1125 = vadd.xlane.f32.xlu0 %v1124
        %v1126 = vpop.xlane.xlu0 %1125
        %v1127 = vsel %vm1120, %v1118, 0.0
        %1128 = vadd.xlane.f32.xlu0 %v1127
        %v1129 = vpop.xlane.xlu0 %1128
        %v1130 = vsel %vm1120, %v1119, 0.0
        %1131 = vadd.xlane.f32.xlu0 %v1130
        %v1132 = vpop.xlane.xlu0 %1131
        %v1133 = vrcp.pop 32.0
        %v1134 = vmul.f32 32.0, %v1133
        %v1135 = vsub.f32 1.0, %v1134
        %v1136 = vmul.f32 %v1133, %v1135
        %v1137 = vadd.f32 %v1133, %v1136
        %vm1138 = vweird.f32 %v1133
        %v1139 = vsel %vm1138, %v1133, %v1137
        %v1140 = vmul.f32 %v1123, %v1139
        %v1141 = vmul.f32 %v1126, %v1139
        %v1142 = vmul.f32 %v1129, %v1139
        %v1143 = vmul.f32 %v1132, %v1139
        %v1144 = vsub.f32 %v1116, %v1140
        %v1145 = vsub.f32 %v1117, %v1141
        %v1146 = vsub.f32 %v1118, %v1142
        %v1147 = vsub.f32 %v1119, %v1143
        %v1149 = vsel %vm1120, %v1144, 0
        %1151 = vmatpush.xpose.msra.mxu0 0.0
        %1152 = vmatpush.xpose.msra.mxu0 0.0
        %1153 = vmatpush.xpose.msra.mxu0 0.0
        %1154 = vmatpush.xpose.msra.mxu0 0.0
        %1155 = vmatpush.xpose.msra.mxu0 0.0
        %1156 = vmatpush.xpose.msra.mxu0 0.0
        %1157 = vmatpush.xpose.msra.mxu0 0.0
        %1158 = vmatpush.xpose.msra.mxu0 0.0
        %1159 = vmatpush.xpose.msra.mxu0 0.0
        %1160 = vmatpush.xpose.msra.mxu0 0.0
        %1161 = vmatpush.xpose.msra.mxu0 0.0
        %1162 = vmatpush.xpose.msra.mxu0 0.0
        %1163 = vmatpush.xpose.msra.mxu0 0.0
        %1164 = vmatpush.xpose.msra.mxu0 0.0
        %1165 = vmatpush.xpose.msra.mxu0 0.0
        %v1166 = vand.u32 %v1149, 4294901760
        %1167 = vmatpush.xpose.msra.mxu0 %v1166
        %v1168 = vand.u32 %v1149, 4294901760
        %v1169 = vsub.f32 %v1149, %v1168
        %v1170 = vand.u32 %v1169, 4294901760
        %v1171 = vsub.f32 %v1169, %v1170
        %v1172 = vand.u32 %v1171, 4294901760
        %1173 = vmatmul.f32.gmra.mxu0 %v1172
        %v1174 = vpop.f32.mrf.mxu0
        %v1175 = vadd.f32 0.0, %v1174
        %1176 = vdwg.mxu0
        %1177 = vmatpush.xpose.msra.mxu0 0.0
        %1178 = vmatpush.xpose.msra.mxu0 0.0
        %1179 = vmatpush.xpose.msra.mxu0 0.0
        %1180 = vmatpush.xpose.msra.mxu0 0.0
        %1181 = vmatpush.xpose.msra.mxu0 0.0
        %1182 = vmatpush.xpose.msra.mxu0 0.0
        %1183 = vmatpush.xpose.msra.mxu0 0.0
        %1184 = vmatpush.xpose.msra.mxu0 0.0
        %1185 = vmatpush.xpose.msra.mxu0 0.0
        %1186 = vmatpush.xpose.msra.mxu0 0.0
        %1187 = vmatpush.xpose.msra.mxu0 0.0
        %1188 = vmatpush.xpose.msra.mxu0 0.0
        %1189 = vmatpush.xpose.msra.mxu0 0.0
        %1190 = vmatpush.xpose.msra.mxu0 0.0
        %1191 = vmatpush.xpose.msra.mxu0 0.0
        %v1192 = vand.u32 %v1149, 4294901760
        %v1193 = vsub.f32 %v1149, %v1192
        %v1194 = vand.u32 %v1193, 4294901760
        %v1195 = vsub.f32 %v1193, %v1194
        %v1196 = vand.u32 %v1195, 4294901760
        %1197 = vmatpush.xpose.msra.mxu0 %v1196
        %v1198 = vand.u32 %v1149, 4294901760
        %1199 = vmatmul.f32.gmra.mxu0 %v1198
        %v1200 = vpop.f32.mrf.mxu0
        %v1201 = vadd.f32 %v1175, %v1200
        %1202 = vdwg.mxu0
        %1203 = vmatpush.xpose.msra.mxu0 0.0
        %1204 = vmatpush.xpose.msra.mxu0 0.0
        %1205 = vmatpush.xpose.msra.mxu0 0.0
        %1206 = vmatpush.xpose.msra.mxu0 0.0
        %1207 = vmatpush.xpose.msra.mxu0 0.0
        %1208 = vmatpush.xpose.msra.mxu0 0.0
        %1209 = vmatpush.xpose.msra.mxu0 0.0
        %1210 = vmatpush.xpose.msra.mxu0 0.0
        %1211 = vmatpush.xpose.msra.mxu0 0.0
        %1212 = vmatpush.xpose.msra.mxu0 0.0
        %1213 = vmatpush.xpose.msra.mxu0 0.0
        %1214 = vmatpush.xpose.msra.mxu0 0.0
        %1215 = vmatpush.xpose.msra.mxu0 0.0
        %1216 = vmatpush.xpose.msra.mxu0 0.0
        %1217 = vmatpush.xpose.msra.mxu0 0.0
        %v1218 = vand.u32 %v1149, 4294901760
        %v1219 = vsub.f32 %v1149, %v1218
        %1220 = vmatpush.xpose.msra.mxu0 %v1219
        %v1221 = vand.u32 %v1149, 4294901760
        %v1222 = vsub.f32 %v1149, %v1221
        %1223 = vmatmul.f32.gmra.mxu0 %v1222
        %v1224 = vpop.f32.mrf.mxu0
        %v1225 = vadd.f32 %v1201, %v1224
        %1226 = vdwg.mxu0
        %1227 = vmatpush.xpose.msra.mxu0 0.0
        %1228 = vmatpush.xpose.msra.mxu0 0.0
        %1229 = vmatpush.xpose.msra.mxu0 0.0
        %1230 = vmatpush.xpose.msra.mxu0 0.0
        %1231 = vmatpush.xpose.msra.mxu0 0.0
        %1232 = vmatpush.xpose.msra.mxu0 0.0
        %1233 = vmatpush.xpose.msra.mxu0 0.0
        %1234 = vmatpush.xpose.msra.mxu0 0.0
        %1235 = vmatpush.xpose.msra.mxu0 0.0
        %1236 = vmatpush.xpose.msra.mxu0 0.0
        %1237 = vmatpush.xpose.msra.mxu0 0.0
        %1238 = vmatpush.xpose.msra.mxu0 0.0
        %1239 = vmatpush.xpose.msra.mxu0 0.0
        %1240 = vmatpush.xpose.msra.mxu0 0.0
        %1241 = vmatpush.xpose.msra.mxu0 0.0
        %v1242 = vand.u32 %v1149, 4294901760
        %1243 = vmatpush.xpose.msra.mxu0 %v1242
        %v1244 = vand.u32 %v1149, 4294901760
        %v1245 = vsub.f32 %v1149, %v1244
        %v1246 = vand.u32 %v1245, 4294901760
        %1247 = vmatmul.f32.gmra.mxu0 %v1246
        %v1248 = vpop.f32.mrf.mxu0
        %v1249 = vadd.f32 %v1225, %v1248
        %1250 = vdwg.mxu0
        %1251 = vmatpush.xpose.msra.mxu0 0.0
        %1252 = vmatpush.xpose.msra.mxu0 0.0
        %1253 = vmatpush.xpose.msra.mxu0 0.0
        %1254 = vmatpush.xpose.msra.mxu0 0.0
        %1255 = vmatpush.xpose.msra.mxu0 0.0
        %1256 = vmatpush.xpose.msra.mxu0 0.0
        %1257 = vmatpush.xpose.msra.mxu0 0.0
        %1258 = vmatpush.xpose.msra.mxu0 0.0
        %1259 = vmatpush.xpose.msra.mxu0 0.0
        %1260 = vmatpush.xpose.msra.mxu0 0.0
        %1261 = vmatpush.xpose.msra.mxu0 0.0
        %1262 = vmatpush.xpose.msra.mxu0 0.0
        %1263 = vmatpush.xpose.msra.mxu0 0.0
        %1264 = vmatpush.xpose.msra.mxu0 0.0
        %1265 = vmatpush.xpose.msra.mxu0 0.0
        %v1266 = vand.u32 %v1149, 4294901760
        %v1267 = vsub.f32 %v1149, %v1266
        %v1268 = vand.u32 %v1267, 4294901760
        %1269 = vmatpush.xpose.msra.mxu0 %v1268
        %v1270 = vand.u32 %v1149, 4294901760
        %1271 = vmatmul.f32.gmra.mxu0 %v1270
        %v1272 = vpop.f32.mrf.mxu0
        %v1273 = vadd.f32 %v1249, %v1272
        %1274 = vdwg.mxu0
        %1275 = vmatpush.xpose.msra.mxu0 0.0
        %1276 = vmatpush.xpose.msra.mxu0 0.0
        %1277 = vmatpush.xpose.msra.mxu0 0.0
        %1278 = vmatpush.xpose.msra.mxu0 0.0
        %1279 = vmatpush.xpose.msra.mxu0 0.0
        %1280 = vmatpush.xpose.msra.mxu0 0.0
        %1281 = vmatpush.xpose.msra.mxu0 0.0
        %1282 = vmatpush.xpose.msra.mxu0 0.0
        %1283 = vmatpush.xpose.msra.mxu0 0.0
        %1284 = vmatpush.xpose.msra.mxu0 0.0
        %1285 = vmatpush.xpose.msra.mxu0 0.0
        %1286 = vmatpush.xpose.msra.mxu0 0.0
        %1287 = vmatpush.xpose.msra.mxu0 0.0
        %1288 = vmatpush.xpose.msra.mxu0 0.0
        %1289 = vmatpush.xpose.msra.mxu0 0.0
        %v1290 = vand.u32 %v1149, 4294901760
        %1291 = vmatpush.xpose.msra.mxu0 %v1290
        %v1292 = vand.u32 %v1149, 4294901760
        %1293 = vmatmul.f32.gmra.mxu0 %v1292
        %v1294 = vpop.f32.mrf.mxu0
        %v1295 = vadd.f32 %v1273, %v1294
        %1296 = vdwg.mxu0
        %v1298 = vsel %vm1120, %v1145, 0
        %1300 = vmatpush.xpose.msra.mxu0 0.0
        %1301 = vmatpush.xpose.msra.mxu0 0.0
        %1302 = vmatpush.xpose.msra.mxu0 0.0
        %1303 = vmatpush.xpose.msra.mxu0 0.0
        %1304 = vmatpush.xpose.msra.mxu0 0.0
        %1305 = vmatpush.xpose.msra.mxu0 0.0
        %1306 = vmatpush.xpose.msra.mxu0 0.0
        %1307 = vmatpush.xpose.msra.mxu0 0.0
        %1308 = vmatpush.xpose.msra.mxu0 0.0
        %1309 = vmatpush.xpose.msra.mxu0 0.0
        %1310 = vmatpush.xpose.msra.mxu0 0.0
        %1311 = vmatpush.xpose.msra.mxu0 0.0
        %1312 = vmatpush.xpose.msra.mxu0 0.0
        %1313 = vmatpush.xpose.msra.mxu0 0.0
        %1314 = vmatpush.xpose.msra.mxu0 0.0
        %v1315 = vand.u32 %v1298, 4294901760
        %1316 = vmatpush.xpose.msra.mxu0 %v1315
        %v1317 = vand.u32 %v1298, 4294901760
        %v1318 = vsub.f32 %v1298, %v1317
        %v1319 = vand.u32 %v1318, 4294901760
        %v1320 = vsub.f32 %v1318, %v1319
        %v1321 = vand.u32 %v1320, 4294901760
        %1322 = vmatmul.f32.gmra.mxu0 %v1321
        %v1323 = vpop.f32.mrf.mxu0
        %v1324 = vadd.f32 0.0, %v1323
        %1325 = vdwg.mxu0
        %1326 = vmatpush.xpose.msra.mxu0 0.0
        %1327 = vmatpush.xpose.msra.mxu0 0.0
        %1328 = vmatpush.xpose.msra.mxu0 0.0
        %1329 = vmatpush.xpose.msra.mxu0 0.0
        %1330 = vmatpush.xpose.msra.mxu0 0.0
        %1331 = vmatpush.xpose.msra.mxu0 0.0
        %1332 = vmatpush.xpose.msra.mxu0 0.0
        %1333 = vmatpush.xpose.msra.mxu0 0.0
        %1334 = vmatpush.xpose.msra.mxu0 0.0
        %1335 = vmatpush.xpose.msra.mxu0 0.0
        %1336 = vmatpush.xpose.msra.mxu0 0.0
        %1337 = vmatpush.xpose.msra.mxu0 0.0
        %1338 = vmatpush.xpose.msra.mxu0 0.0
        %1339 = vmatpush.xpose.msra.mxu0 0.0
        %1340 = vmatpush.xpose.msra.mxu0 0.0
        %v1341 = vand.u32 %v1298, 4294901760
        %v1342 = vsub.f32 %v1298, %v1341
        %v1343 = vand.u32 %v1342, 4294901760
        %v1344 = vsub.f32 %v1342, %v1343
        %v1345 = vand.u32 %v1344, 4294901760
        %1346 = vmatpush.xpose.msra.mxu0 %v1345
        %v1347 = vand.u32 %v1298, 4294901760
        %1348 = vmatmul.f32.gmra.mxu0 %v1347
        %v1349 = vpop.f32.mrf.mxu0
        %v1350 = vadd.f32 %v1324, %v1349
        %1351 = vdwg.mxu0
        %1352 = vmatpush.xpose.msra.mxu0 0.0
        %1353 = vmatpush.xpose.msra.mxu0 0.0
        %1354 = vmatpush.xpose.msra.mxu0 0.0
        %1355 = vmatpush.xpose.msra.mxu0 0.0
        %1356 = vmatpush.xpose.msra.mxu0 0.0
        %1357 = vmatpush.xpose.msra.mxu0 0.0
        %1358 = vmatpush.xpose.msra.mxu0 0.0
        %1359 = vmatpush.xpose.msra.mxu0 0.0
        %1360 = vmatpush.xpose.msra.mxu0 0.0
        %1361 = vmatpush.xpose.msra.mxu0 0.0
        %1362 = vmatpush.xpose.msra.mxu0 0.0
        %1363 = vmatpush.xpose.msra.mxu0 0.0
        %1364 = vmatpush.xpose.msra.mxu0 0.0
        %1365 = vmatpush.xpose.msra.mxu0 0.0
        %1366 = vmatpush.xpose.msra.mxu0 0.0
        %v1367 = vand.u32 %v1298, 4294901760
        %v1368 = vsub.f32 %v1298, %v1367
        %1369 = vmatpush.xpose.msra.mxu0 %v1368
        %v1370 = vand.u32 %v1298, 4294901760
        %v1371 = vsub.f32 %v1298, %v1370
        %1372 = vmatmul.f32.gmra.mxu0 %v1371
        %v1373 = vpop.f32.mrf.mxu0
        %v1374 = vadd.f32 %v1350, %v1373
        %1375 = vdwg.mxu0
        %1376 = vmatpush.xpose.msra.mxu0 0.0
        %1377 = vmatpush.xpose.msra.mxu0 0.0
        %1378 = vmatpush.xpose.msra.mxu0 0.0
        %1379 = vmatpush.xpose.msra.mxu0 0.0
        %1380 = vmatpush.xpose.msra.mxu0 0.0
        %1381 = vmatpush.xpose.msra.mxu0 0.0
        %1382 = vmatpush.xpose.msra.mxu0 0.0
        %1383 = vmatpush.xpose.msra.mxu0 0.0
        %1384 = vmatpush.xpose.msra.mxu0 0.0
        %1385 = vmatpush.xpose.msra.mxu0 0.0
        %1386 = vmatpush.xpose.msra.mxu0 0.0
        %1387 = vmatpush.xpose.msra.mxu0 0.0
        %1388 = vmatpush.xpose.msra.mxu0 0.0
        %1389 = vmatpush.xpose.msra.mxu0 0.0
        %1390 = vmatpush.xpose.msra.mxu0 0.0
        %v1391 = vand.u32 %v1298, 4294901760
        %1392 = vmatpush.xpose.msra.mxu0 %v1391
        %v1393 = vand.u32 %v1298, 4294901760
        %v1394 = vsub.f32 %v1298, %v1393
        %v1395 = vand.u32 %v1394, 4294901760
        %1396 = vmatmul.f32.gmra.mxu0 %v1395
        %v1397 = vpop.f32.mrf.mxu0
        %v1398 = vadd.f32 %v1374, %v1397
        %1399 = vdwg.mxu0
        %1400 = vmatpush.xpose.msra.mxu0 0.0
        %1401 = vmatpush.xpose.msra.mxu0 0.0
        %1402 = vmatpush.xpose.msra.mxu0 0.0
        %1403 = vmatpush.xpose.msra.mxu0 0.0
        %1404 = vmatpush.xpose.msra.mxu0 0.0
        %1405 = vmatpush.xpose.msra.mxu0 0.0
        %1406 = vmatpush.xpose.msra.mxu0 0.0
        %1407 = vmatpush.xpose.msra.mxu0 0.0
        %1408 = vmatpush.xpose.msra.mxu0 0.0
        %1409 = vmatpush.xpose.msra.mxu0 0.0
        %1410 = vmatpush.xpose.msra.mxu0 0.0
        %1411 = vmatpush.xpose.msra.mxu0 0.0
        %1412 = vmatpush.xpose.msra.mxu0 0.0
        %1413 = vmatpush.xpose.msra.mxu0 0.0
        %1414 = vmatpush.xpose.msra.mxu0 0.0
        %v1415 = vand.u32 %v1298, 4294901760
        %v1416 = vsub.f32 %v1298, %v1415
        %v1417 = vand.u32 %v1416, 4294901760
        %1418 = vmatpush.xpose.msra.mxu0 %v1417
        %v1419 = vand.u32 %v1298, 4294901760
        %1420 = vmatmul.f32.gmra.mxu0 %v1419
        %v1421 = vpop.f32.mrf.mxu0
        %v1422 = vadd.f32 %v1398, %v1421
        %1423 = vdwg.mxu0
        %1424 = vmatpush.xpose.msra.mxu0 0.0
        %1425 = vmatpush.xpose.msra.mxu0 0.0
        %1426 = vmatpush.xpose.msra.mxu0 0.0
        %1427 = vmatpush.xpose.msra.mxu0 0.0
        %1428 = vmatpush.xpose.msra.mxu0 0.0
        %1429 = vmatpush.xpose.msra.mxu0 0.0
        %1430 = vmatpush.xpose.msra.mxu0 0.0
        %1431 = vmatpush.xpose.msra.mxu0 0.0
        %1432 = vmatpush.xpose.msra.mxu0 0.0
        %1433 = vmatpush.xpose.msra.mxu0 0.0
        %1434 = vmatpush.xpose.msra.mxu0 0.0
        %1435 = vmatpush.xpose.msra.mxu0 0.0
        %1436 = vmatpush.xpose.msra.mxu0 0.0
        %1437 = vmatpush.xpose.msra.mxu0 0.0
        %1438 = vmatpush.xpose.msra.mxu0 0.0
        %v1439 = vand.u32 %v1298, 4294901760
        %1440 = vmatpush.xpose.msra.mxu0 %v1439
        %v1441 = vand.u32 %v1298, 4294901760
        %1442 = vmatmul.f32.gmra.mxu0 %v1441
        %v1443 = vpop.f32.mrf.mxu0
        %v1444 = vadd.f32 %v1422, %v1443
        %1445 = vdwg.mxu0
        %v1447 = vsel %vm1120, %v1146, 0
        %1449 = vmatpush.xpose.msra.mxu0 0.0
        %1450 = vmatpush.xpose.msra.mxu0 0.0
        %1451 = vmatpush.xpose.msra.mxu0 0.0
        %1452 = vmatpush.xpose.msra.mxu0 0.0
        %1453 = vmatpush.xpose.msra.mxu0 0.0
        %1454 = vmatpush.xpose.msra.mxu0 0.0
        %1455 = vmatpush.xpose.msra.mxu0 0.0
        %1456 = vmatpush.xpose.msra.mxu0 0.0
        %1457 = vmatpush.xpose.msra.mxu0 0.0
        %1458 = vmatpush.xpose.msra.mxu0 0.0
        %1459 = vmatpush.xpose.msra.mxu0 0.0
        %1460 = vmatpush.xpose.msra.mxu0 0.0
        %1461 = vmatpush.xpose.msra.mxu0 0.0
        %1462 = vmatpush.xpose.msra.mxu0 0.0
        %1463 = vmatpush.xpose.msra.mxu0 0.0
        %v1464 = vand.u32 %v1447, 4294901760
        %1465 = vmatpush.xpose.msra.mxu0 %v1464
        %v1466 = vand.u32 %v1447, 4294901760
        %v1467 = vsub.f32 %v1447, %v1466
        %v1468 = vand.u32 %v1467, 4294901760
        %v1469 = vsub.f32 %v1467, %v1468
        %v1470 = vand.u32 %v1469, 4294901760
        %1471 = vmatmul.f32.gmra.mxu0 %v1470
        %v1472 = vpop.f32.mrf.mxu0
        %v1473 = vadd.f32 0.0, %v1472
        %1474 = vdwg.mxu0
        %1475 = vmatpush.xpose.msra.mxu0 0.0
        %1476 = vmatpush.xpose.msra.mxu0 0.0
        %1477 = vmatpush.xpose.msra.mxu0 0.0
        %1478 = vmatpush.xpose.msra.mxu0 0.0
        %1479 = vmatpush.xpose.msra.mxu0 0.0
        %1480 = vmatpush.xpose.msra.mxu0 0.0
        %1481 = vmatpush.xpose.msra.mxu0 0.0
        %1482 = vmatpush.xpose.msra.mxu0 0.0
        %1483 = vmatpush.xpose.msra.mxu0 0.0
        %1484 = vmatpush.xpose.msra.mxu0 0.0
        %1485 = vmatpush.xpose.msra.mxu0 0.0
        %1486 = vmatpush.xpose.msra.mxu0 0.0
        %1487 = vmatpush.xpose.msra.mxu0 0.0
        %1488 = vmatpush.xpose.msra.mxu0 0.0
        %1489 = vmatpush.xpose.msra.mxu0 0.0
        %v1490 = vand.u32 %v1447, 4294901760
        %v1491 = vsub.f32 %v1447, %v1490
        %v1492 = vand.u32 %v1491, 4294901760
        %v1493 = vsub.f32 %v1491, %v1492
        %v1494 = vand.u32 %v1493, 4294901760
        %1495 = vmatpush.xpose.msra.mxu0 %v1494
        %v1496 = vand.u32 %v1447, 4294901760
        %1497 = vmatmul.f32.gmra.mxu0 %v1496
        %v1498 = vpop.f32.mrf.mxu0
        %v1499 = vadd.f32 %v1473, %v1498
        %1500 = vdwg.mxu0
        %1501 = vmatpush.xpose.msra.mxu0 0.0
        %1502 = vmatpush.xpose.msra.mxu0 0.0
        %1503 = vmatpush.xpose.msra.mxu0 0.0
        %1504 = vmatpush.xpose.msra.mxu0 0.0
        %1505 = vmatpush.xpose.msra.mxu0 0.0
        %1506 = vmatpush.xpose.msra.mxu0 0.0
        %1507 = vmatpush.xpose.msra.mxu0 0.0
        %1508 = vmatpush.xpose.msra.mxu0 0.0
        %1509 = vmatpush.xpose.msra.mxu0 0.0
        %1510 = vmatpush.xpose.msra.mxu0 0.0
        %1511 = vmatpush.xpose.msra.mxu0 0.0
        %1512 = vmatpush.xpose.msra.mxu0 0.0
        %1513 = vmatpush.xpose.msra.mxu0 0.0
        %1514 = vmatpush.xpose.msra.mxu0 0.0
        %1515 = vmatpush.xpose.msra.mxu0 0.0
        %v1516 = vand.u32 %v1447, 4294901760
        %v1517 = vsub.f32 %v1447, %v1516
        %1518 = vmatpush.xpose.msra.mxu0 %v1517
        %v1519 = vand.u32 %v1447, 4294901760
        %v1520 = vsub.f32 %v1447, %v1519
        %1521 = vmatmul.f32.gmra.mxu0 %v1520
        %v1522 = vpop.f32.mrf.mxu0
        %v1523 = vadd.f32 %v1499, %v1522
        %1524 = vdwg.mxu0
        %1525 = vmatpush.xpose.msra.mxu0 0.0
        %1526 = vmatpush.xpose.msra.mxu0 0.0
        %1527 = vmatpush.xpose.msra.mxu0 0.0
        %1528 = vmatpush.xpose.msra.mxu0 0.0
        %1529 = vmatpush.xpose.msra.mxu0 0.0
        %1530 = vmatpush.xpose.msra.mxu0 0.0
        %1531 = vmatpush.xpose.msra.mxu0 0.0
        %1532 = vmatpush.xpose.msra.mxu0 0.0
        %1533 = vmatpush.xpose.msra.mxu0 0.0
        %1534 = vmatpush.xpose.msra.mxu0 0.0
        %1535 = vmatpush.xpose.msra.mxu0 0.0
        %1536 = vmatpush.xpose.msra.mxu0 0.0
        %1537 = vmatpush.xpose.msra.mxu0 0.0
        %1538 = vmatpush.xpose.msra.mxu0 0.0
        %1539 = vmatpush.xpose.msra.mxu0 0.0
        %v1540 = vand.u32 %v1447, 4294901760
        %1541 = vmatpush.xpose.msra.mxu0 %v1540
        %v1542 = vand.u32 %v1447, 4294901760
        %v1543 = vsub.f32 %v1447, %v1542
        %v1544 = vand.u32 %v1543, 4294901760
        %1545 = vmatmul.f32.gmra.mxu0 %v1544
        %v1546 = vpop.f32.mrf.mxu0
        %v1547 = vadd.f32 %v1523, %v1546
        %1548 = vdwg.mxu0
        %1549 = vmatpush.xpose.msra.mxu0 0.0
        %1550 = vmatpush.xpose.msra.mxu0 0.0
        %1551 = vmatpush.xpose.msra.mxu0 0.0
        %1552 = vmatpush.xpose.msra.mxu0 0.0
        %1553 = vmatpush.xpose.msra.mxu0 0.0
        %1554 = vmatpush.xpose.msra.mxu0 0.0
        %1555 = vmatpush.xpose.msra.mxu0 0.0
        %1556 = vmatpush.xpose.msra.mxu0 0.0
        %1557 = vmatpush.xpose.msra.mxu0 0.0
        %1558 = vmatpush.xpose.msra.mxu0 0.0
        %1559 = vmatpush.xpose.msra.mxu0 0.0
        %1560 = vmatpush.xpose.msra.mxu0 0.0
        %1561 = vmatpush.xpose.msra.mxu0 0.0
        %1562 = vmatpush.xpose.msra.mxu0 0.0
        %1563 = vmatpush.xpose.msra.mxu0 0.0
        %v1564 = vand.u32 %v1447, 4294901760
        %v1565 = vsub.f32 %v1447, %v1564
        %v1566 = vand.u32 %v1565, 4294901760
        %1567 = vmatpush.xpose.msra.mxu0 %v1566
        %v1568 = vand.u32 %v1447, 4294901760
        %1569 = vmatmul.f32.gmra.mxu0 %v1568
        %v1570 = vpop.f32.mrf.mxu0
        %v1571 = vadd.f32 %v1547, %v1570
        %1572 = vdwg.mxu0
        %1573 = vmatpush.xpose.msra.mxu0 0.0
        %1574 = vmatpush.xpose.msra.mxu0 0.0
        %1575 = vmatpush.xpose.msra.mxu0 0.0
        %1576 = vmatpush.xpose.msra.mxu0 0.0
        %1577 = vmatpush.xpose.msra.mxu0 0.0
        %1578 = vmatpush.xpose.msra.mxu0 0.0
        %1579 = vmatpush.xpose.msra.mxu0 0.0
        %1580 = vmatpush.xpose.msra.mxu0 0.0
        %1581 = vmatpush.xpose.msra.mxu0 0.0
        %1582 = vmatpush.xpose.msra.mxu0 0.0
        %1583 = vmatpush.xpose.msra.mxu0 0.0
        %1584 = vmatpush.xpose.msra.mxu0 0.0
        %1585 = vmatpush.xpose.msra.mxu0 0.0
        %1586 = vmatpush.xpose.msra.mxu0 0.0
        %1587 = vmatpush.xpose.msra.mxu0 0.0
        %v1588 = vand.u32 %v1447, 4294901760
        %1589 = vmatpush.xpose.msra.mxu0 %v1588
        %v1590 = vand.u32 %v1447, 4294901760
        %1591 = vmatmul.f32.gmra.mxu0 %v1590
        %v1592 = vpop.f32.mrf.mxu0
        %v1593 = vadd.f32 %v1571, %v1592
        %1594 = vdwg.mxu0
        %v1596 = vsel %vm1120, %v1147, 0
        %1598 = vmatpush.xpose.msra.mxu0 0.0
        %1599 = vmatpush.xpose.msra.mxu0 0.0
        %1600 = vmatpush.xpose.msra.mxu0 0.0
        %1601 = vmatpush.xpose.msra.mxu0 0.0
        %1602 = vmatpush.xpose.msra.mxu0 0.0
        %1603 = vmatpush.xpose.msra.mxu0 0.0
        %1604 = vmatpush.xpose.msra.mxu0 0.0
        %1605 = vmatpush.xpose.msra.mxu0 0.0
        %1606 = vmatpush.xpose.msra.mxu0 0.0
        %1607 = vmatpush.xpose.msra.mxu0 0.0
        %1608 = vmatpush.xpose.msra.mxu0 0.0
        %1609 = vmatpush.xpose.msra.mxu0 0.0
        %1610 = vmatpush.xpose.msra.mxu0 0.0
        %1611 = vmatpush.xpose.msra.mxu0 0.0
        %1612 = vmatpush.xpose.msra.mxu0 0.0
        %v1613 = vand.u32 %v1596, 4294901760
        %1614 = vmatpush.xpose.msra.mxu0 %v1613
        %v1615 = vand.u32 %v1596, 4294901760
        %v1616 = vsub.f32 %v1596, %v1615
        %v1617 = vand.u32 %v1616, 4294901760
        %v1618 = vsub.f32 %v1616, %v1617
        %v1619 = vand.u32 %v1618, 4294901760
        %1620 = vmatmul.f32.gmra.mxu0 %v1619
        %v1621 = vpop.f32.mrf.mxu0
        %v1622 = vadd.f32 0.0, %v1621
        %1623 = vdwg.mxu0
        %1624 = vmatpush.xpose.msra.mxu0 0.0
        %1625 = vmatpush.xpose.msra.mxu0 0.0
        %1626 = vmatpush.xpose.msra.mxu0 0.0
        %1627 = vmatpush.xpose.msra.mxu0 0.0
        %1628 = vmatpush.xpose.msra.mxu0 0.0
        %1629 = vmatpush.xpose.msra.mxu0 0.0
        %1630 = vmatpush.xpose.msra.mxu0 0.0
        %1631 = vmatpush.xpose.msra.mxu0 0.0
        %1632 = vmatpush.xpose.msra.mxu0 0.0
        %1633 = vmatpush.xpose.msra.mxu0 0.0
        %1634 = vmatpush.xpose.msra.mxu0 0.0
        %1635 = vmatpush.xpose.msra.mxu0 0.0
        %1636 = vmatpush.xpose.msra.mxu0 0.0
        %1637 = vmatpush.xpose.msra.mxu0 0.0
        %1638 = vmatpush.xpose.msra.mxu0 0.0
        %v1639 = vand.u32 %v1596, 4294901760
        %v1640 = vsub.f32 %v1596, %v1639
        %v1641 = vand.u32 %v1640, 4294901760
        %v1642 = vsub.f32 %v1640, %v1641
        %v1643 = vand.u32 %v1642, 4294901760
        %1644 = vmatpush.xpose.msra.mxu0 %v1643
        %v1645 = vand.u32 %v1596, 4294901760
        %1646 = vmatmul.f32.gmra.mxu0 %v1645
        %v1647 = vpop.f32.mrf.mxu0
        %v1648 = vadd.f32 %v1622, %v1647
        %1649 = vdwg.mxu0
        %1650 = vmatpush.xpose.msra.mxu0 0.0
        %1651 = vmatpush.xpose.msra.mxu0 0.0
        %1652 = vmatpush.xpose.msra.mxu0 0.0
        %1653 = vmatpush.xpose.msra.mxu0 0.0
        %1654 = vmatpush.xpose.msra.mxu0 0.0
        %1655 = vmatpush.xpose.msra.mxu0 0.0
        %1656 = vmatpush.xpose.msra.mxu0 0.0
        %1657 = vmatpush.xpose.msra.mxu0 0.0
        %1658 = vmatpush.xpose.msra.mxu0 0.0
        %1659 = vmatpush.xpose.msra.mxu0 0.0
        %1660 = vmatpush.xpose.msra.mxu0 0.0
        %1661 = vmatpush.xpose.msra.mxu0 0.0
        %1662 = vmatpush.xpose.msra.mxu0 0.0
        %1663 = vmatpush.xpose.msra.mxu0 0.0
        %1664 = vmatpush.xpose.msra.mxu0 0.0
        %v1665 = vand.u32 %v1596, 4294901760
        %v1666 = vsub.f32 %v1596, %v1665
        %1667 = vmatpush.xpose.msra.mxu0 %v1666
        %v1668 = vand.u32 %v1596, 4294901760
        %v1669 = vsub.f32 %v1596, %v1668
        %1670 = vmatmul.f32.gmra.mxu0 %v1669
        %v1671 = vpop.f32.mrf.mxu0
        %v1672 = vadd.f32 %v1648, %v1671
        %1673 = vdwg.mxu0
        %1674 = vmatpush.xpose.msra.mxu0 0.0
        %1675 = vmatpush.xpose.msra.mxu0 0.0
        %1676 = vmatpush.xpose.msra.mxu0 0.0
        %1677 = vmatpush.xpose.msra.mxu0 0.0
        %1678 = vmatpush.xpose.msra.mxu0 0.0
        %1679 = vmatpush.xpose.msra.mxu0 0.0
        %1680 = vmatpush.xpose.msra.mxu0 0.0
        %1681 = vmatpush.xpose.msra.mxu0 0.0
        %1682 = vmatpush.xpose.msra.mxu0 0.0
        %1683 = vmatpush.xpose.msra.mxu0 0.0
        %1684 = vmatpush.xpose.msra.mxu0 0.0
        %1685 = vmatpush.xpose.msra.mxu0 0.0
        %1686 = vmatpush.xpose.msra.mxu0 0.0
        %1687 = vmatpush.xpose.msra.mxu0 0.0
        %1688 = vmatpush.xpose.msra.mxu0 0.0
        %v1689 = vand.u32 %v1596, 4294901760
        %1690 = vmatpush.xpose.msra.mxu0 %v1689
        %v1691 = vand.u32 %v1596, 4294901760
        %v1692 = vsub.f32 %v1596, %v1691
        %v1693 = vand.u32 %v1692, 4294901760
        %1694 = vmatmul.f32.gmra.mxu0 %v1693
        %v1695 = vpop.f32.mrf.mxu0
        %v1696 = vadd.f32 %v1672, %v1695
        %1697 = vdwg.mxu0
        %1698 = vmatpush.xpose.msra.mxu0 0.0
        %1699 = vmatpush.xpose.msra.mxu0 0.0
        %1700 = vmatpush.xpose.msra.mxu0 0.0
        %1701 = vmatpush.xpose.msra.mxu0 0.0
        %1702 = vmatpush.xpose.msra.mxu0 0.0
        %1703 = vmatpush.xpose.msra.mxu0 0.0
        %1704 = vmatpush.xpose.msra.mxu0 0.0
        %1705 = vmatpush.xpose.msra.mxu0 0.0
        %1706 = vmatpush.xpose.msra.mxu0 0.0
        %1707 = vmatpush.xpose.msra.mxu0 0.0
        %1708 = vmatpush.xpose.msra.mxu0 0.0
        %1709 = vmatpush.xpose.msra.mxu0 0.0
        %1710 = vmatpush.xpose.msra.mxu0 0.0
        %1711 = vmatpush.xpose.msra.mxu0 0.0
        %1712 = vmatpush.xpose.msra.mxu0 0.0
        %v1713 = vand.u32 %v1596, 4294901760
        %v1714 = vsub.f32 %v1596, %v1713
        %v1715 = vand.u32 %v1714, 4294901760
        %1716 = vmatpush.xpose.msra.mxu0 %v1715
        %v1717 = vand.u32 %v1596, 4294901760
        %1718 = vmatmul.f32.gmra.mxu0 %v1717
        %v1719 = vpop.f32.mrf.mxu0
        %v1720 = vadd.f32 %v1696, %v1719
        %1721 = vdwg.mxu0
        %1722 = vmatpush.xpose.msra.mxu0 0.0
        %1723 = vmatpush.xpose.msra.mxu0 0.0
        %1724 = vmatpush.xpose.msra.mxu0 0.0
        %1725 = vmatpush.xpose.msra.mxu0 0.0
        %1726 = vmatpush.xpose.msra.mxu0 0.0
        %1727 = vmatpush.xpose.msra.mxu0 0.0
        %1728 = vmatpush.xpose.msra.mxu0 0.0
        %1729 = vmatpush.xpose.msra.mxu0 0.0
        %1730 = vmatpush.xpose.msra.mxu0 0.0
        %1731 = vmatpush.xpose.msra.mxu0 0.0
        %1732 = vmatpush.xpose.msra.mxu0 0.0
        %1733 = vmatpush.xpose.msra.mxu0 0.0
        %1734 = vmatpush.xpose.msra.mxu0 0.0
        %1735 = vmatpush.xpose.msra.mxu0 0.0
        %1736 = vmatpush.xpose.msra.mxu0 0.0
        %v1737 = vand.u32 %v1596, 4294901760
        %1738 = vmatpush.xpose.msra.mxu0 %v1737
        %v1739 = vand.u32 %v1596, 4294901760
        %1740 = vmatmul.f32.gmra.mxu0 %v1739
        %v1741 = vpop.f32.mrf.mxu0
        %v1742 = vadd.f32 %v1720, %v1741
        %1743 = vdwg.mxu0
        %v1744 = vmul.f32 %v1295, 0.03125
        %v1745 = vmul.f32 %v1444, 0.03125
        %v1746 = vmul.f32 %v1593, 0.03125
        %v1747 = vmul.f32 %v1742, 0.03125
        %v1748 = vld [vmem:[%s4] sm:$0xf]
        %v1749 = vld [vmem:[%s5] sm:$0xff]
        %vm1750 = vcmask 64512
        %v1752 = vsel %vm1750, %v1748, 0
        %1754 = vmatpush.msra.mxu0 0.0
        %1755 = vmatpush.msra.mxu0 0.0
        %1756 = vmatpush.msra.mxu0 0.0
        %1757 = vmatpush.msra.mxu0 0.0
        %1758 = vmatpush.msra.mxu0 0.0
        %1759 = vmatpush.msra.mxu0 0.0
        %1760 = vmatpush.msra.mxu0 0.0
        %1761 = vmatpush.msra.mxu0 0.0
        %1762 = vmatpush.msra.mxu0 0.0
        %1763 = vmatpush.msra.mxu0 0.0
        %1764 = vmatpush.msra.mxu0 0.0
        %1765 = vmatpush.msra.mxu0 0.0
        %1766 = vmatpush.msra.mxu0 0.0
        %1767 = vmatpush.msra.mxu0 0.0
        %1768 = vmatpush.msra.mxu0 0.0
        %v1769 = vand.u32 %v1744, 4294901760
        %1770 = vmatpush.msra.mxu0 %v1769
        %v1771 = vand.u32 %v1752, 4294901760
        %v1772 = vsub.f32 %v1752, %v1771
        %v1773 = vand.u32 %v1772, 4294901760
        %v1774 = vsub.f32 %v1772, %v1773
        %v1775 = vand.u32 %v1774, 4294901760
        %1776 = vmatmul.f32.gmra.mxu0 %v1775
        %v1777 = vpop.f32.mrf.mxu0
        %v1778 = vadd.f32 0.0, %v1777
        %1779 = vdwg.mxu0
        %1780 = vmatpush.msra.mxu0 0.0
        %1781 = vmatpush.msra.mxu0 0.0
        %1782 = vmatpush.msra.mxu0 0.0
        %1783 = vmatpush.msra.mxu0 0.0
        %1784 = vmatpush.msra.mxu0 0.0
        %1785 = vmatpush.msra.mxu0 0.0
        %1786 = vmatpush.msra.mxu0 0.0
        %1787 = vmatpush.msra.mxu0 0.0
        %1788 = vmatpush.msra.mxu0 0.0
        %1789 = vmatpush.msra.mxu0 0.0
        %1790 = vmatpush.msra.mxu0 0.0
        %1791 = vmatpush.msra.mxu0 0.0
        %1792 = vmatpush.msra.mxu0 0.0
        %1793 = vmatpush.msra.mxu0 0.0
        %1794 = vmatpush.msra.mxu0 0.0
        %v1795 = vand.u32 %v1744, 4294901760
        %v1796 = vsub.f32 %v1744, %v1795
        %v1797 = vand.u32 %v1796, 4294901760
        %v1798 = vsub.f32 %v1796, %v1797
        %v1799 = vand.u32 %v1798, 4294901760
        %1800 = vmatpush.msra.mxu0 %v1799
        %v1801 = vand.u32 %v1752, 4294901760
        %1802 = vmatmul.f32.gmra.mxu0 %v1801
        %v1803 = vpop.f32.mrf.mxu0
        %v1804 = vadd.f32 %v1778, %v1803
        %1805 = vdwg.mxu0
        %1806 = vmatpush.msra.mxu0 0.0
        %1807 = vmatpush.msra.mxu0 0.0
        %1808 = vmatpush.msra.mxu0 0.0
        %1809 = vmatpush.msra.mxu0 0.0
        %1810 = vmatpush.msra.mxu0 0.0
        %1811 = vmatpush.msra.mxu0 0.0
        %1812 = vmatpush.msra.mxu0 0.0
        %1813 = vmatpush.msra.mxu0 0.0
        %1814 = vmatpush.msra.mxu0 0.0
        %1815 = vmatpush.msra.mxu0 0.0
        %1816 = vmatpush.msra.mxu0 0.0
        %1817 = vmatpush.msra.mxu0 0.0
        %1818 = vmatpush.msra.mxu0 0.0
        %1819 = vmatpush.msra.mxu0 0.0
        %1820 = vmatpush.msra.mxu0 0.0
        %v1821 = vand.u32 %v1744, 4294901760
        %v1822 = vsub.f32 %v1744, %v1821
        %1823 = vmatpush.msra.mxu0 %v1822
        %v1824 = vand.u32 %v1752, 4294901760
        %v1825 = vsub.f32 %v1752, %v1824
        %1826 = vmatmul.f32.gmra.mxu0 %v1825
        %v1827 = vpop.f32.mrf.mxu0
        %v1828 = vadd.f32 %v1804, %v1827
        %1829 = vdwg.mxu0
        %1830 = vmatpush.msra.mxu0 0.0
        %1831 = vmatpush.msra.mxu0 0.0
        %1832 = vmatpush.msra.mxu0 0.0
        %1833 = vmatpush.msra.mxu0 0.0
        %1834 = vmatpush.msra.mxu0 0.0
        %1835 = vmatpush.msra.mxu0 0.0
        %1836 = vmatpush.msra.mxu0 0.0
        %1837 = vmatpush.msra.mxu0 0.0
        %1838 = vmatpush.msra.mxu0 0.0
        %1839 = vmatpush.msra.mxu0 0.0
        %1840 = vmatpush.msra.mxu0 0.0
        %1841 = vmatpush.msra.mxu0 0.0
        %1842 = vmatpush.msra.mxu0 0.0
        %1843 = vmatpush.msra.mxu0 0.0
        %1844 = vmatpush.msra.mxu0 0.0
        %v1845 = vand.u32 %v1744, 4294901760
        %1846 = vmatpush.msra.mxu0 %v1845
        %v1847 = vand.u32 %v1752, 4294901760
        %v1848 = vsub.f32 %v1752, %v1847
        %v1849 = vand.u32 %v1848, 4294901760
        %1850 = vmatmul.f32.gmra.mxu0 %v1849
        %v1851 = vpop.f32.mrf.mxu0
        %v1852 = vadd.f32 %v1828, %v1851
        %1853 = vdwg.mxu0
        %1854 = vmatpush.msra.mxu0 0.0
        %1855 = vmatpush.msra.mxu0 0.0
        %1856 = vmatpush.msra.mxu0 0.0
        %1857 = vmatpush.msra.mxu0 0.0
        %1858 = vmatpush.msra.mxu0 0.0
        %1859 = vmatpush.msra.mxu0 0.0
        %1860 = vmatpush.msra.mxu0 0.0
        %1861 = vmatpush.msra.mxu0 0.0
        %1862 = vmatpush.msra.mxu0 0.0
        %1863 = vmatpush.msra.mxu0 0.0
        %1864 = vmatpush.msra.mxu0 0.0
        %1865 = vmatpush.msra.mxu0 0.0
        %1866 = vmatpush.msra.mxu0 0.0
        %1867 = vmatpush.msra.mxu0 0.0
        %1868 = vmatpush.msra.mxu0 0.0
        %v1869 = vand.u32 %v1744, 4294901760
        %v1870 = vsub.f32 %v1744, %v1869
        %v1871 = vand.u32 %v1870, 4294901760
        %1872 = vmatpush.msra.mxu0 %v1871
        %v1873 = vand.u32 %v1752, 4294901760
        %1874 = vmatmul.f32.gmra.mxu0 %v1873
        %v1875 = vpop.f32.mrf.mxu0
        %v1876 = vadd.f32 %v1852, %v1875
        %1877 = vdwg.mxu0
        %1878 = vmatpush.msra.mxu0 0.0
        %1879 = vmatpush.msra.mxu0 0.0
        %1880 = vmatpush.msra.mxu0 0.0
        %1881 = vmatpush.msra.mxu0 0.0
        %1882 = vmatpush.msra.mxu0 0.0
        %1883 = vmatpush.msra.mxu0 0.0
        %1884 = vmatpush.msra.mxu0 0.0
        %1885 = vmatpush.msra.mxu0 0.0
        %1886 = vmatpush.msra.mxu0 0.0
        %1887 = vmatpush.msra.mxu0 0.0
        %1888 = vmatpush.msra.mxu0 0.0
        %1889 = vmatpush.msra.mxu0 0.0
        %1890 = vmatpush.msra.mxu0 0.0
        %1891 = vmatpush.msra.mxu0 0.0
        %1892 = vmatpush.msra.mxu0 0.0
        %v1893 = vand.u32 %v1744, 4294901760
        %1894 = vmatpush.msra.mxu0 %v1893
        %v1895 = vand.u32 %v1752, 4294901760
        %1896 = vmatmul.f32.gmra.mxu0 %v1895
        %v1897 = vpop.f32.mrf.mxu0
        %v1898 = vadd.f32 %v1876, %v1897
        %1899 = vdwg.mxu0
        %1900 = vmatpush.msra.mxu0 0.0
        %1901 = vmatpush.msra.mxu0 0.0
        %1902 = vmatpush.msra.mxu0 0.0
        %1903 = vmatpush.msra.mxu0 0.0
        %1904 = vmatpush.msra.mxu0 0.0
        %1905 = vmatpush.msra.mxu0 0.0
        %1906 = vmatpush.msra.mxu0 0.0
        %1907 = vmatpush.msra.mxu0 0.0
        %1908 = vmatpush.msra.mxu0 0.0
        %1909 = vmatpush.msra.mxu0 0.0
        %1910 = vmatpush.msra.mxu0 0.0
        %1911 = vmatpush.msra.mxu0 0.0
        %1912 = vmatpush.msra.mxu0 0.0
        %1913 = vmatpush.msra.mxu0 0.0
        %1914 = vmatpush.msra.mxu0 0.0
        %v1915 = vand.u32 %v1745, 4294901760
        %1916 = vmatpush.msra.mxu0 %v1915
        %v1917 = vand.u32 %v1752, 4294901760
        %v1918 = vsub.f32 %v1752, %v1917
        %v1919 = vand.u32 %v1918, 4294901760
        %v1920 = vsub.f32 %v1918, %v1919
        %v1921 = vand.u32 %v1920, 4294901760
        %1922 = vmatmul.f32.gmra.mxu0 %v1921
        %v1923 = vpop.f32.mrf.mxu0
        %v1924 = vadd.f32 0.0, %v1923
        %1925 = vdwg.mxu0
        %1926 = vmatpush.msra.mxu0 0.0
        %1927 = vmatpush.msra.mxu0 0.0
        %1928 = vmatpush.msra.mxu0 0.0
        %1929 = vmatpush.msra.mxu0 0.0
        %1930 = vmatpush.msra.mxu0 0.0
        %1931 = vmatpush.msra.mxu0 0.0
        %1932 = vmatpush.msra.mxu0 0.0
        %1933 = vmatpush.msra.mxu0 0.0
        %1934 = vmatpush.msra.mxu0 0.0
        %1935 = vmatpush.msra.mxu0 0.0
        %1936 = vmatpush.msra.mxu0 0.0
        %1937 = vmatpush.msra.mxu0 0.0
        %1938 = vmatpush.msra.mxu0 0.0
        %1939 = vmatpush.msra.mxu0 0.0
        %1940 = vmatpush.msra.mxu0 0.0
        %v1941 = vand.u32 %v1745, 4294901760
        %v1942 = vsub.f32 %v1745, %v1941
        %v1943 = vand.u32 %v1942, 4294901760
        %v1944 = vsub.f32 %v1942, %v1943
        %v1945 = vand.u32 %v1944, 4294901760
        %1946 = vmatpush.msra.mxu0 %v1945
        %v1947 = vand.u32 %v1752, 4294901760
        %1948 = vmatmul.f32.gmra.mxu0 %v1947
        %v1949 = vpop.f32.mrf.mxu0
        %v1950 = vadd.f32 %v1924, %v1949
        %1951 = vdwg.mxu0
        %1952 = vmatpush.msra.mxu0 0.0
        %1953 = vmatpush.msra.mxu0 0.0
        %1954 = vmatpush.msra.mxu0 0.0
        %1955 = vmatpush.msra.mxu0 0.0
        %1956 = vmatpush.msra.mxu0 0.0
        %1957 = vmatpush.msra.mxu0 0.0
        %1958 = vmatpush.msra.mxu0 0.0
        %1959 = vmatpush.msra.mxu0 0.0
        %1960 = vmatpush.msra.mxu0 0.0
        %1961 = vmatpush.msra.mxu0 0.0
        %1962 = vmatpush.msra.mxu0 0.0
        %1963 = vmatpush.msra.mxu0 0.0
        %1964 = vmatpush.msra.mxu0 0.0
        %1965 = vmatpush.msra.mxu0 0.0
        %1966 = vmatpush.msra.mxu0 0.0
        %v1967 = vand.u32 %v1745, 4294901760
        %v1968 = vsub.f32 %v1745, %v1967
        %1969 = vmatpush.msra.mxu0 %v1968
        %v1970 = vand.u32 %v1752, 4294901760
        %v1971 = vsub.f32 %v1752, %v1970
        %1972 = vmatmul.f32.gmra.mxu0 %v1971
        %v1973 = vpop.f32.mrf.mxu0
        %v1974 = vadd.f32 %v1950, %v1973
        %1975 = vdwg.mxu0
        %1976 = vmatpush.msra.mxu0 0.0
        %1977 = vmatpush.msra.mxu0 0.0
        %1978 = vmatpush.msra.mxu0 0.0
        %1979 = vmatpush.msra.mxu0 0.0
        %1980 = vmatpush.msra.mxu0 0.0
        %1981 = vmatpush.msra.mxu0 0.0
        %1982 = vmatpush.msra.mxu0 0.0
        %1983 = vmatpush.msra.mxu0 0.0
        %1984 = vmatpush.msra.mxu0 0.0
        %1985 = vmatpush.msra.mxu0 0.0
        %1986 = vmatpush.msra.mxu0 0.0
        %1987 = vmatpush.msra.mxu0 0.0
        %1988 = vmatpush.msra.mxu0 0.0
        %1989 = vmatpush.msra.mxu0 0.0
        %1990 = vmatpush.msra.mxu0 0.0
        %v1991 = vand.u32 %v1745, 4294901760
        %1992 = vmatpush.msra.mxu0 %v1991
        %v1993 = vand.u32 %v1752, 4294901760
        %v1994 = vsub.f32 %v1752, %v1993
        %v1995 = vand.u32 %v1994, 4294901760
        %1996 = vmatmul.f32.gmra.mxu0 %v1995
        %v1997 = vpop.f32.mrf.mxu0
        %v1998 = vadd.f32 %v1974, %v1997
        %1999 = vdwg.mxu0
        %2000 = vmatpush.msra.mxu0 0.0
        %2001 = vmatpush.msra.mxu0 0.0
        %2002 = vmatpush.msra.mxu0 0.0
        %2003 = vmatpush.msra.mxu0 0.0
        %2004 = vmatpush.msra.mxu0 0.0
        %2005 = vmatpush.msra.mxu0 0.0
        %2006 = vmatpush.msra.mxu0 0.0
        %2007 = vmatpush.msra.mxu0 0.0
        %2008 = vmatpush.msra.mxu0 0.0
        %2009 = vmatpush.msra.mxu0 0.0
        %2010 = vmatpush.msra.mxu0 0.0
        %2011 = vmatpush.msra.mxu0 0.0
        %2012 = vmatpush.msra.mxu0 0.0
        %2013 = vmatpush.msra.mxu0 0.0
        %2014 = vmatpush.msra.mxu0 0.0
        %v2015 = vand.u32 %v1745, 4294901760
        %v2016 = vsub.f32 %v1745, %v2015
        %v2017 = vand.u32 %v2016, 4294901760
        %2018 = vmatpush.msra.mxu0 %v2017
        %v2019 = vand.u32 %v1752, 4294901760
        %2020 = vmatmul.f32.gmra.mxu0 %v2019
        %v2021 = vpop.f32.mrf.mxu0
        %v2022 = vadd.f32 %v1998, %v2021
        %2023 = vdwg.mxu0
        %2024 = vmatpush.msra.mxu0 0.0
        %2025 = vmatpush.msra.mxu0 0.0
        %2026 = vmatpush.msra.mxu0 0.0
        %2027 = vmatpush.msra.mxu0 0.0
        %2028 = vmatpush.msra.mxu0 0.0
        %2029 = vmatpush.msra.mxu0 0.0
        %2030 = vmatpush.msra.mxu0 0.0
        %2031 = vmatpush.msra.mxu0 0.0
        %2032 = vmatpush.msra.mxu0 0.0
        %2033 = vmatpush.msra.mxu0 0.0
        %2034 = vmatpush.msra.mxu0 0.0
        %2035 = vmatpush.msra.mxu0 0.0
        %2036 = vmatpush.msra.mxu0 0.0
        %2037 = vmatpush.msra.mxu0 0.0
        %2038 = vmatpush.msra.mxu0 0.0
        %v2039 = vand.u32 %v1745, 4294901760
        %2040 = vmatpush.msra.mxu0 %v2039
        %v2041 = vand.u32 %v1752, 4294901760
        %2042 = vmatmul.f32.gmra.mxu0 %v2041
        %v2043 = vpop.f32.mrf.mxu0
        %v2044 = vadd.f32 %v2022, %v2043
        %2045 = vdwg.mxu0
        %2046 = vmatpush.msra.mxu0 0.0
        %2047 = vmatpush.msra.mxu0 0.0
        %2048 = vmatpush.msra.mxu0 0.0
        %2049 = vmatpush.msra.mxu0 0.0
        %2050 = vmatpush.msra.mxu0 0.0
        %2051 = vmatpush.msra.mxu0 0.0
        %2052 = vmatpush.msra.mxu0 0.0
        %2053 = vmatpush.msra.mxu0 0.0
        %2054 = vmatpush.msra.mxu0 0.0
        %2055 = vmatpush.msra.mxu0 0.0
        %2056 = vmatpush.msra.mxu0 0.0
        %2057 = vmatpush.msra.mxu0 0.0
        %2058 = vmatpush.msra.mxu0 0.0
        %2059 = vmatpush.msra.mxu0 0.0
        %2060 = vmatpush.msra.mxu0 0.0
        %v2061 = vand.u32 %v1746, 4294901760
        %2062 = vmatpush.msra.mxu0 %v2061
        %v2063 = vand.u32 %v1752, 4294901760
        %v2064 = vsub.f32 %v1752, %v2063
        %v2065 = vand.u32 %v2064, 4294901760
        %v2066 = vsub.f32 %v2064, %v2065
        %v2067 = vand.u32 %v2066, 4294901760
        %2068 = vmatmul.f32.gmra.mxu0 %v2067
        %v2069 = vpop.f32.mrf.mxu0
        %v2070 = vadd.f32 0.0, %v2069
        %2071 = vdwg.mxu0
        %2072 = vmatpush.msra.mxu0 0.0
        %2073 = vmatpush.msra.mxu0 0.0
        %2074 = vmatpush.msra.mxu0 0.0
        %2075 = vmatpush.msra.mxu0 0.0
        %2076 = vmatpush.msra.mxu0 0.0
        %2077 = vmatpush.msra.mxu0 0.0
        %2078 = vmatpush.msra.mxu0 0.0
        %2079 = vmatpush.msra.mxu0 0.0
        %2080 = vmatpush.msra.mxu0 0.0
        %2081 = vmatpush.msra.mxu0 0.0
        %2082 = vmatpush.msra.mxu0 0.0
        %2083 = vmatpush.msra.mxu0 0.0
        %2084 = vmatpush.msra.mxu0 0.0
        %2085 = vmatpush.msra.mxu0 0.0
        %2086 = vmatpush.msra.mxu0 0.0
        %v2087 = vand.u32 %v1746, 4294901760
        %v2088 = vsub.f32 %v1746, %v2087
        %v2089 = vand.u32 %v2088, 4294901760
        %v2090 = vsub.f32 %v2088, %v2089
        %v2091 = vand.u32 %v2090, 4294901760
        %2092 = vmatpush.msra.mxu0 %v2091
        %v2093 = vand.u32 %v1752, 4294901760
        %2094 = vmatmul.f32.gmra.mxu0 %v2093
        %v2095 = vpop.f32.mrf.mxu0
        %v2096 = vadd.f32 %v2070, %v2095
        %2097 = vdwg.mxu0
        %2098 = vmatpush.msra.mxu0 0.0
        %2099 = vmatpush.msra.mxu0 0.0
        %2100 = vmatpush.msra.mxu0 0.0
        %2101 = vmatpush.msra.mxu0 0.0
        %2102 = vmatpush.msra.mxu0 0.0
        %2103 = vmatpush.msra.mxu0 0.0
        %2104 = vmatpush.msra.mxu0 0.0
        %2105 = vmatpush.msra.mxu0 0.0
        %2106 = vmatpush.msra.mxu0 0.0
        %2107 = vmatpush.msra.mxu0 0.0
        %2108 = vmatpush.msra.mxu0 0.0
        %2109 = vmatpush.msra.mxu0 0.0
        %2110 = vmatpush.msra.mxu0 0.0
        %2111 = vmatpush.msra.mxu0 0.0
        %2112 = vmatpush.msra.mxu0 0.0
        %v2113 = vand.u32 %v1746, 4294901760
        %v2114 = vsub.f32 %v1746, %v2113
        %2115 = vmatpush.msra.mxu0 %v2114
        %v2116 = vand.u32 %v1752, 4294901760
        %v2117 = vsub.f32 %v1752, %v2116
        %2118 = vmatmul.f32.gmra.mxu0 %v2117
        %v2119 = vpop.f32.mrf.mxu0
        %v2120 = vadd.f32 %v2096, %v2119
        %2121 = vdwg.mxu0
        %2122 = vmatpush.msra.mxu0 0.0
        %2123 = vmatpush.msra.mxu0 0.0
        %2124 = vmatpush.msra.mxu0 0.0
        %2125 = vmatpush.msra.mxu0 0.0
        %2126 = vmatpush.msra.mxu0 0.0
        %2127 = vmatpush.msra.mxu0 0.0
        %2128 = vmatpush.msra.mxu0 0.0
        %2129 = vmatpush.msra.mxu0 0.0
        %2130 = vmatpush.msra.mxu0 0.0
        %2131 = vmatpush.msra.mxu0 0.0
        %2132 = vmatpush.msra.mxu0 0.0
        %2133 = vmatpush.msra.mxu0 0.0
        %2134 = vmatpush.msra.mxu0 0.0
        %2135 = vmatpush.msra.mxu0 0.0
        %2136 = vmatpush.msra.mxu0 0.0
        %v2137 = vand.u32 %v1746, 4294901760
        %2138 = vmatpush.msra.mxu0 %v2137
        %v2139 = vand.u32 %v1752, 4294901760
        %v2140 = vsub.f32 %v1752, %v2139
        %v2141 = vand.u32 %v2140, 4294901760
        %2142 = vmatmul.f32.gmra.mxu0 %v2141
        %v2143 = vpop.f32.mrf.mxu0
        %v2144 = vadd.f32 %v2120, %v2143
        %2145 = vdwg.mxu0
        %2146 = vmatpush.msra.mxu0 0.0
        %2147 = vmatpush.msra.mxu0 0.0
        %2148 = vmatpush.msra.mxu0 0.0
        %2149 = vmatpush.msra.mxu0 0.0
        %2150 = vmatpush.msra.mxu0 0.0
        %2151 = vmatpush.msra.mxu0 0.0
        %2152 = vmatpush.msra.mxu0 0.0
        %2153 = vmatpush.msra.mxu0 0.0
        %2154 = vmatpush.msra.mxu0 0.0
        %2155 = vmatpush.msra.mxu0 0.0
        %2156 = vmatpush.msra.mxu0 0.0
        %2157 = vmatpush.msra.mxu0 0.0
        %2158 = vmatpush.msra.mxu0 0.0
        %2159 = vmatpush.msra.mxu0 0.0
        %2160 = vmatpush.msra.mxu0 0.0
        %v2161 = vand.u32 %v1746, 4294901760
        %v2162 = vsub.f32 %v1746, %v2161
        %v2163 = vand.u32 %v2162, 4294901760
        %2164 = vmatpush.msra.mxu0 %v2163
        %v2165 = vand.u32 %v1752, 4294901760
        %2166 = vmatmul.f32.gmra.mxu0 %v2165
        %v2167 = vpop.f32.mrf.mxu0
        %v2168 = vadd.f32 %v2144, %v2167
        %2169 = vdwg.mxu0
        %2170 = vmatpush.msra.mxu0 0.0
        %2171 = vmatpush.msra.mxu0 0.0
        %2172 = vmatpush.msra.mxu0 0.0
        %2173 = vmatpush.msra.mxu0 0.0
        %2174 = vmatpush.msra.mxu0 0.0
        %2175 = vmatpush.msra.mxu0 0.0
        %2176 = vmatpush.msra.mxu0 0.0
        %2177 = vmatpush.msra.mxu0 0.0
        %2178 = vmatpush.msra.mxu0 0.0
        %2179 = vmatpush.msra.mxu0 0.0
        %2180 = vmatpush.msra.mxu0 0.0
        %2181 = vmatpush.msra.mxu0 0.0
        %2182 = vmatpush.msra.mxu0 0.0
        %2183 = vmatpush.msra.mxu0 0.0
        %2184 = vmatpush.msra.mxu0 0.0
        %v2185 = vand.u32 %v1746, 4294901760
        %2186 = vmatpush.msra.mxu0 %v2185
        %v2187 = vand.u32 %v1752, 4294901760
        %2188 = vmatmul.f32.gmra.mxu0 %v2187
        %v2189 = vpop.f32.mrf.mxu0
        %v2190 = vadd.f32 %v2168, %v2189
        %2191 = vdwg.mxu0
        %2192 = vmatpush.msra.mxu0 0.0
        %2193 = vmatpush.msra.mxu0 0.0
        %2194 = vmatpush.msra.mxu0 0.0
        %2195 = vmatpush.msra.mxu0 0.0
        %2196 = vmatpush.msra.mxu0 0.0
        %2197 = vmatpush.msra.mxu0 0.0
        %2198 = vmatpush.msra.mxu0 0.0
        %2199 = vmatpush.msra.mxu0 0.0
        %2200 = vmatpush.msra.mxu0 0.0
        %2201 = vmatpush.msra.mxu0 0.0
        %2202 = vmatpush.msra.mxu0 0.0
        %2203 = vmatpush.msra.mxu0 0.0
        %2204 = vmatpush.msra.mxu0 0.0
        %2205 = vmatpush.msra.mxu0 0.0
        %2206 = vmatpush.msra.mxu0 0.0
        %v2207 = vand.u32 %v1747, 4294901760
        %2208 = vmatpush.msra.mxu0 %v2207
        %v2209 = vand.u32 %v1752, 4294901760
        %v2210 = vsub.f32 %v1752, %v2209
        %v2211 = vand.u32 %v2210, 4294901760
        %v2212 = vsub.f32 %v2210, %v2211
        %v2213 = vand.u32 %v2212, 4294901760
        %2214 = vmatmul.f32.gmra.mxu0 %v2213
        %v2215 = vpop.f32.mrf.mxu0
        %v2216 = vadd.f32 0.0, %v2215
        %2217 = vdwg.mxu0
        %2218 = vmatpush.msra.mxu0 0.0
        %2219 = vmatpush.msra.mxu0 0.0
        %2220 = vmatpush.msra.mxu0 0.0
        %2221 = vmatpush.msra.mxu0 0.0
        %2222 = vmatpush.msra.mxu0 0.0
        %2223 = vmatpush.msra.mxu0 0.0
        %2224 = vmatpush.msra.mxu0 0.0
        %2225 = vmatpush.msra.mxu0 0.0
        %2226 = vmatpush.msra.mxu0 0.0
        %2227 = vmatpush.msra.mxu0 0.0
        %2228 = vmatpush.msra.mxu0 0.0
        %2229 = vmatpush.msra.mxu0 0.0
        %2230 = vmatpush.msra.mxu0 0.0
        %2231 = vmatpush.msra.mxu0 0.0
        %2232 = vmatpush.msra.mxu0 0.0
        %v2233 = vand.u32 %v1747, 4294901760
        %v2234 = vsub.f32 %v1747, %v2233
        %v2235 = vand.u32 %v2234, 4294901760
        %v2236 = vsub.f32 %v2234, %v2235
        %v2237 = vand.u32 %v2236, 4294901760
        %2238 = vmatpush.msra.mxu0 %v2237
        %v2239 = vand.u32 %v1752, 4294901760
        %2240 = vmatmul.f32.gmra.mxu0 %v2239
        %v2241 = vpop.f32.mrf.mxu0
        %v2242 = vadd.f32 %v2216, %v2241
        %2243 = vdwg.mxu0
        %2244 = vmatpush.msra.mxu0 0.0
        %2245 = vmatpush.msra.mxu0 0.0
        %2246 = vmatpush.msra.mxu0 0.0
        %2247 = vmatpush.msra.mxu0 0.0
        %2248 = vmatpush.msra.mxu0 0.0
        %2249 = vmatpush.msra.mxu0 0.0
        %2250 = vmatpush.msra.mxu0 0.0
        %2251 = vmatpush.msra.mxu0 0.0
        %2252 = vmatpush.msra.mxu0 0.0
        %2253 = vmatpush.msra.mxu0 0.0
        %2254 = vmatpush.msra.mxu0 0.0
        %2255 = vmatpush.msra.mxu0 0.0
        %2256 = vmatpush.msra.mxu0 0.0
        %2257 = vmatpush.msra.mxu0 0.0
        %2258 = vmatpush.msra.mxu0 0.0
        %v2259 = vand.u32 %v1747, 4294901760
        %v2260 = vsub.f32 %v1747, %v2259
        %2261 = vmatpush.msra.mxu0 %v2260
        %v2262 = vand.u32 %v1752, 4294901760
        %v2263 = vsub.f32 %v1752, %v2262
        %2264 = vmatmul.f32.gmra.mxu0 %v2263
        %v2265 = vpop.f32.mrf.mxu0
        %v2266 = vadd.f32 %v2242, %v2265
        %2267 = vdwg.mxu0
        %2268 = vmatpush.msra.mxu0 0.0
        %2269 = vmatpush.msra.mxu0 0.0
        %2270 = vmatpush.msra.mxu0 0.0
        %2271 = vmatpush.msra.mxu0 0.0
        %2272 = vmatpush.msra.mxu0 0.0
        %2273 = vmatpush.msra.mxu0 0.0
        %2274 = vmatpush.msra.mxu0 0.0
        %2275 = vmatpush.msra.mxu0 0.0
        %2276 = vmatpush.msra.mxu0 0.0
        %2277 = vmatpush.msra.mxu0 0.0
        %2278 = vmatpush.msra.mxu0 0.0
        %2279 = vmatpush.msra.mxu0 0.0
        %2280 = vmatpush.msra.mxu0 0.0
        %2281 = vmatpush.msra.mxu0 0.0
        %2282 = vmatpush.msra.mxu0 0.0
        %v2283 = vand.u32 %v1747, 4294901760
        %2284 = vmatpush.msra.mxu0 %v2283
        %v2285 = vand.u32 %v1752, 4294901760
        %v2286 = vsub.f32 %v1752, %v2285
        %v2287 = vand.u32 %v2286, 4294901760
        %2288 = vmatmul.f32.gmra.mxu0 %v2287
        %v2289 = vpop.f32.mrf.mxu0
        %v2290 = vadd.f32 %v2266, %v2289
        %2291 = vdwg.mxu0
        %2292 = vmatpush.msra.mxu0 0.0
        %2293 = vmatpush.msra.mxu0 0.0
        %2294 = vmatpush.msra.mxu0 0.0
        %2295 = vmatpush.msra.mxu0 0.0
        %2296 = vmatpush.msra.mxu0 0.0
        %2297 = vmatpush.msra.mxu0 0.0
        %2298 = vmatpush.msra.mxu0 0.0
        %2299 = vmatpush.msra.mxu0 0.0
        %2300 = vmatpush.msra.mxu0 0.0
        %2301 = vmatpush.msra.mxu0 0.0
        %2302 = vmatpush.msra.mxu0 0.0
        %2303 = vmatpush.msra.mxu0 0.0
        %2304 = vmatpush.msra.mxu0 0.0
        %2305 = vmatpush.msra.mxu0 0.0
        %2306 = vmatpush.msra.mxu0 0.0
        %v2307 = vand.u32 %v1747, 4294901760
        %v2308 = vsub.f32 %v1747, %v2307
        %v2309 = vand.u32 %v2308, 4294901760
        %2310 = vmatpush.msra.mxu0 %v2309
        %v2311 = vand.u32 %v1752, 4294901760
        %2312 = vmatmul.f32.gmra.mxu0 %v2311
        %v2313 = vpop.f32.mrf.mxu0
        %v2314 = vadd.f32 %v2290, %v2313
        %2315 = vdwg.mxu0
        %2316 = vmatpush.msra.mxu0 0.0
        %2317 = vmatpush.msra.mxu0 0.0
        %2318 = vmatpush.msra.mxu0 0.0
        %2319 = vmatpush.msra.mxu0 0.0
        %2320 = vmatpush.msra.mxu0 0.0
        %2321 = vmatpush.msra.mxu0 0.0
        %2322 = vmatpush.msra.mxu0 0.0
        %2323 = vmatpush.msra.mxu0 0.0
        %2324 = vmatpush.msra.mxu0 0.0
        %2325 = vmatpush.msra.mxu0 0.0
        %2326 = vmatpush.msra.mxu0 0.0
        %2327 = vmatpush.msra.mxu0 0.0
        %2328 = vmatpush.msra.mxu0 0.0
        %2329 = vmatpush.msra.mxu0 0.0
        %2330 = vmatpush.msra.mxu0 0.0
        %v2331 = vand.u32 %v1747, 4294901760
        %2332 = vmatpush.msra.mxu0 %v2331
        %v2333 = vand.u32 %v1752, 4294901760
        %2334 = vmatmul.f32.gmra.mxu0 %v2333
        %v2335 = vpop.f32.mrf.mxu0
        %v2336 = vadd.f32 %v2314, %v2335
        %2337 = vdwg.mxu0
        %v2339 = vsel %vm1750, %v1898, 0
        %2341 = vmatpush.msra.mxu0 0.0
        %2342 = vmatpush.msra.mxu0 0.0
        %2343 = vmatpush.msra.mxu0 0.0
        %2344 = vmatpush.msra.mxu0 0.0
        %2345 = vmatpush.msra.mxu0 0.0
        %2346 = vmatpush.msra.mxu0 0.0
        %2347 = vmatpush.msra.mxu0 0.0
        %2348 = vmatpush.msra.mxu0 0.0
        %2349 = vmatpush.msra.mxu0 0.0
        %2350 = vmatpush.msra.mxu0 0.0
        %2351 = vmatpush.msra.mxu0 0.0
        %2352 = vmatpush.msra.mxu0 0.0
        %2353 = vmatpush.msra.mxu0 0.0
        %2354 = vmatpush.msra.mxu0 0.0
        %2355 = vmatpush.msra.mxu0 0.0
        %v2356 = vand.u32 %v1749, 4294901760
        %2357 = vmatpush.msra.mxu0 %v2356
        %v2358 = vand.u32 %v2339, 4294901760
        %v2359 = vsub.f32 %v2339, %v2358
        %v2360 = vand.u32 %v2359, 4294901760
        %v2361 = vsub.f32 %v2359, %v2360
        %v2362 = vand.u32 %v2361, 4294901760
        %2363 = vmatmul.f32.gmra.mxu0 %v2362
        %v2364 = vpop.f32.mrf.mxu0
        %v2365 = vadd.f32 0.0, %v2364
        %2366 = vdwg.mxu0
        %2367 = vmatpush.msra.mxu0 0.0
        %2368 = vmatpush.msra.mxu0 0.0
        %2369 = vmatpush.msra.mxu0 0.0
        %2370 = vmatpush.msra.mxu0 0.0
        %2371 = vmatpush.msra.mxu0 0.0
        %2372 = vmatpush.msra.mxu0 0.0
        %2373 = vmatpush.msra.mxu0 0.0
        %2374 = vmatpush.msra.mxu0 0.0
        %2375 = vmatpush.msra.mxu0 0.0
        %2376 = vmatpush.msra.mxu0 0.0
        %2377 = vmatpush.msra.mxu0 0.0
        %2378 = vmatpush.msra.mxu0 0.0
        %2379 = vmatpush.msra.mxu0 0.0
        %2380 = vmatpush.msra.mxu0 0.0
        %2381 = vmatpush.msra.mxu0 0.0
        %v2382 = vand.u32 %v1749, 4294901760
        %v2383 = vsub.f32 %v1749, %v2382
        %v2384 = vand.u32 %v2383, 4294901760
        %v2385 = vsub.f32 %v2383, %v2384
        %v2386 = vand.u32 %v2385, 4294901760
        %2387 = vmatpush.msra.mxu0 %v2386
        %v2388 = vand.u32 %v2339, 4294901760
        %2389 = vmatmul.f32.gmra.mxu0 %v2388
        %v2390 = vpop.f32.mrf.mxu0
        %v2391 = vadd.f32 %v2365, %v2390
        %2392 = vdwg.mxu0
        %2393 = vmatpush.msra.mxu0 0.0
        %2394 = vmatpush.msra.mxu0 0.0
        %2395 = vmatpush.msra.mxu0 0.0
        %2396 = vmatpush.msra.mxu0 0.0
        %2397 = vmatpush.msra.mxu0 0.0
        %2398 = vmatpush.msra.mxu0 0.0
        %2399 = vmatpush.msra.mxu0 0.0
        %2400 = vmatpush.msra.mxu0 0.0
        %2401 = vmatpush.msra.mxu0 0.0
        %2402 = vmatpush.msra.mxu0 0.0
        %2403 = vmatpush.msra.mxu0 0.0
        %2404 = vmatpush.msra.mxu0 0.0
        %2405 = vmatpush.msra.mxu0 0.0
        %2406 = vmatpush.msra.mxu0 0.0
        %2407 = vmatpush.msra.mxu0 0.0
        %v2408 = vand.u32 %v1749, 4294901760
        %v2409 = vsub.f32 %v1749, %v2408
        %2410 = vmatpush.msra.mxu0 %v2409
        %v2411 = vand.u32 %v2339, 4294901760
        %v2412 = vsub.f32 %v2339, %v2411
        %2413 = vmatmul.f32.gmra.mxu0 %v2412
        %v2414 = vpop.f32.mrf.mxu0
        %v2415 = vadd.f32 %v2391, %v2414
        %2416 = vdwg.mxu0
        %2417 = vmatpush.msra.mxu0 0.0
        %2418 = vmatpush.msra.mxu0 0.0
        %2419 = vmatpush.msra.mxu0 0.0
        %2420 = vmatpush.msra.mxu0 0.0
        %2421 = vmatpush.msra.mxu0 0.0
        %2422 = vmatpush.msra.mxu0 0.0
        %2423 = vmatpush.msra.mxu0 0.0
        %2424 = vmatpush.msra.mxu0 0.0
        %2425 = vmatpush.msra.mxu0 0.0
        %2426 = vmatpush.msra.mxu0 0.0
        %2427 = vmatpush.msra.mxu0 0.0
        %2428 = vmatpush.msra.mxu0 0.0
        %2429 = vmatpush.msra.mxu0 0.0
        %2430 = vmatpush.msra.mxu0 0.0
        %2431 = vmatpush.msra.mxu0 0.0
        %v2432 = vand.u32 %v1749, 4294901760
        %2433 = vmatpush.msra.mxu0 %v2432
        %v2434 = vand.u32 %v2339, 4294901760
        %v2435 = vsub.f32 %v2339, %v2434
        %v2436 = vand.u32 %v2435, 4294901760
        %2437 = vmatmul.f32.gmra.mxu0 %v2436
        %v2438 = vpop.f32.mrf.mxu0
        %v2439 = vadd.f32 %v2415, %v2438
        %2440 = vdwg.mxu0
        %2441 = vmatpush.msra.mxu0 0.0
        %2442 = vmatpush.msra.mxu0 0.0
        %2443 = vmatpush.msra.mxu0 0.0
        %2444 = vmatpush.msra.mxu0 0.0
        %2445 = vmatpush.msra.mxu0 0.0
        %2446 = vmatpush.msra.mxu0 0.0
        %2447 = vmatpush.msra.mxu0 0.0
        %2448 = vmatpush.msra.mxu0 0.0
        %2449 = vmatpush.msra.mxu0 0.0
        %2450 = vmatpush.msra.mxu0 0.0
        %2451 = vmatpush.msra.mxu0 0.0
        %2452 = vmatpush.msra.mxu0 0.0
        %2453 = vmatpush.msra.mxu0 0.0
        %2454 = vmatpush.msra.mxu0 0.0
        %2455 = vmatpush.msra.mxu0 0.0
        %v2456 = vand.u32 %v1749, 4294901760
        %v2457 = vsub.f32 %v1749, %v2456
        %v2458 = vand.u32 %v2457, 4294901760
        %2459 = vmatpush.msra.mxu0 %v2458
        %v2460 = vand.u32 %v2339, 4294901760
        %2461 = vmatmul.f32.gmra.mxu0 %v2460
        %v2462 = vpop.f32.mrf.mxu0
        %v2463 = vadd.f32 %v2439, %v2462
        %2464 = vdwg.mxu0
        %2465 = vmatpush.msra.mxu0 0.0
        %2466 = vmatpush.msra.mxu0 0.0
        %2467 = vmatpush.msra.mxu0 0.0
        %2468 = vmatpush.msra.mxu0 0.0
        %2469 = vmatpush.msra.mxu0 0.0
        %2470 = vmatpush.msra.mxu0 0.0
        %2471 = vmatpush.msra.mxu0 0.0
        %2472 = vmatpush.msra.mxu0 0.0
        %2473 = vmatpush.msra.mxu0 0.0
        %2474 = vmatpush.msra.mxu0 0.0
        %2475 = vmatpush.msra.mxu0 0.0
        %2476 = vmatpush.msra.mxu0 0.0
        %2477 = vmatpush.msra.mxu0 0.0
        %2478 = vmatpush.msra.mxu0 0.0
        %2479 = vmatpush.msra.mxu0 0.0
        %v2480 = vand.u32 %v1749, 4294901760
        %2481 = vmatpush.msra.mxu0 %v2480
        %v2482 = vand.u32 %v2339, 4294901760
        %2483 = vmatmul.f32.gmra.mxu0 %v2482
        %v2484 = vpop.f32.mrf.mxu0
        %v2485 = vadd.f32 %v2463, %v2484
        %2486 = vdwg.mxu0
        %v2488 = vsel %vm1750, %v2044, 0
        %2490 = vmatpush.msra.mxu0 0.0
        %2491 = vmatpush.msra.mxu0 0.0
        %2492 = vmatpush.msra.mxu0 0.0
        %2493 = vmatpush.msra.mxu0 0.0
        %2494 = vmatpush.msra.mxu0 0.0
        %2495 = vmatpush.msra.mxu0 0.0
        %2496 = vmatpush.msra.mxu0 0.0
        %2497 = vmatpush.msra.mxu0 0.0
        %2498 = vmatpush.msra.mxu0 0.0
        %2499 = vmatpush.msra.mxu0 0.0
        %2500 = vmatpush.msra.mxu0 0.0
        %2501 = vmatpush.msra.mxu0 0.0
        %2502 = vmatpush.msra.mxu0 0.0
        %2503 = vmatpush.msra.mxu0 0.0
        %2504 = vmatpush.msra.mxu0 0.0
        %v2505 = vand.u32 %v1749, 4294901760
        %2506 = vmatpush.msra.mxu0 %v2505
        %v2507 = vand.u32 %v2488, 4294901760
        %v2508 = vsub.f32 %v2488, %v2507
        %v2509 = vand.u32 %v2508, 4294901760
        %v2510 = vsub.f32 %v2508, %v2509
        %v2511 = vand.u32 %v2510, 4294901760
        %2512 = vmatmul.f32.gmra.mxu0 %v2511
        %v2513 = vpop.f32.mrf.mxu0
        %v2514 = vadd.f32 0.0, %v2513
        %2515 = vdwg.mxu0
        %2516 = vmatpush.msra.mxu0 0.0
        %2517 = vmatpush.msra.mxu0 0.0
        %2518 = vmatpush.msra.mxu0 0.0
        %2519 = vmatpush.msra.mxu0 0.0
        %2520 = vmatpush.msra.mxu0 0.0
        %2521 = vmatpush.msra.mxu0 0.0
        %2522 = vmatpush.msra.mxu0 0.0
        %2523 = vmatpush.msra.mxu0 0.0
        %2524 = vmatpush.msra.mxu0 0.0
        %2525 = vmatpush.msra.mxu0 0.0
        %2526 = vmatpush.msra.mxu0 0.0
        %2527 = vmatpush.msra.mxu0 0.0
        %2528 = vmatpush.msra.mxu0 0.0
        %2529 = vmatpush.msra.mxu0 0.0
        %2530 = vmatpush.msra.mxu0 0.0
        %v2531 = vand.u32 %v1749, 4294901760
        %v2532 = vsub.f32 %v1749, %v2531
        %v2533 = vand.u32 %v2532, 4294901760
        %v2534 = vsub.f32 %v2532, %v2533
        %v2535 = vand.u32 %v2534, 4294901760
        %2536 = vmatpush.msra.mxu0 %v2535
        %v2537 = vand.u32 %v2488, 4294901760
        %2538 = vmatmul.f32.gmra.mxu0 %v2537
        %v2539 = vpop.f32.mrf.mxu0
        %v2540 = vadd.f32 %v2514, %v2539
        %2541 = vdwg.mxu0
        %2542 = vmatpush.msra.mxu0 0.0
        %2543 = vmatpush.msra.mxu0 0.0
        %2544 = vmatpush.msra.mxu0 0.0
        %2545 = vmatpush.msra.mxu0 0.0
        %2546 = vmatpush.msra.mxu0 0.0
        %2547 = vmatpush.msra.mxu0 0.0
        %2548 = vmatpush.msra.mxu0 0.0
        %2549 = vmatpush.msra.mxu0 0.0
        %2550 = vmatpush.msra.mxu0 0.0
        %2551 = vmatpush.msra.mxu0 0.0
        %2552 = vmatpush.msra.mxu0 0.0
        %2553 = vmatpush.msra.mxu0 0.0
        %2554 = vmatpush.msra.mxu0 0.0
        %2555 = vmatpush.msra.mxu0 0.0
        %2556 = vmatpush.msra.mxu0 0.0
        %v2557 = vand.u32 %v1749, 4294901760
        %v2558 = vsub.f32 %v1749, %v2557
        %2559 = vmatpush.msra.mxu0 %v2558
        %v2560 = vand.u32 %v2488, 4294901760
        %v2561 = vsub.f32 %v2488, %v2560
        %2562 = vmatmul.f32.gmra.mxu0 %v2561
        %v2563 = vpop.f32.mrf.mxu0
        %v2564 = vadd.f32 %v2540, %v2563
        %2565 = vdwg.mxu0
        %2566 = vmatpush.msra.mxu0 0.0
        %2567 = vmatpush.msra.mxu0 0.0
        %2568 = vmatpush.msra.mxu0 0.0
        %2569 = vmatpush.msra.mxu0 0.0
        %2570 = vmatpush.msra.mxu0 0.0
        %2571 = vmatpush.msra.mxu0 0.0
        %2572 = vmatpush.msra.mxu0 0.0
        %2573 = vmatpush.msra.mxu0 0.0
        %2574 = vmatpush.msra.mxu0 0.0
        %2575 = vmatpush.msra.mxu0 0.0
        %2576 = vmatpush.msra.mxu0 0.0
        %2577 = vmatpush.msra.mxu0 0.0
        %2578 = vmatpush.msra.mxu0 0.0
        %2579 = vmatpush.msra.mxu0 0.0
        %2580 = vmatpush.msra.mxu0 0.0
        %v2581 = vand.u32 %v1749, 4294901760
        %2582 = vmatpush.msra.mxu0 %v2581
        %v2583 = vand.u32 %v2488, 4294901760
        %v2584 = vsub.f32 %v2488, %v2583
        %v2585 = vand.u32 %v2584, 4294901760
        %2586 = vmatmul.f32.gmra.mxu0 %v2585
        %v2587 = vpop.f32.mrf.mxu0
        %v2588 = vadd.f32 %v2564, %v2587
        %2589 = vdwg.mxu0
        %2590 = vmatpush.msra.mxu0 0.0
        %2591 = vmatpush.msra.mxu0 0.0
        %2592 = vmatpush.msra.mxu0 0.0
        %2593 = vmatpush.msra.mxu0 0.0
        %2594 = vmatpush.msra.mxu0 0.0
        %2595 = vmatpush.msra.mxu0 0.0
        %2596 = vmatpush.msra.mxu0 0.0
        %2597 = vmatpush.msra.mxu0 0.0
        %2598 = vmatpush.msra.mxu0 0.0
        %2599 = vmatpush.msra.mxu0 0.0
        %2600 = vmatpush.msra.mxu0 0.0
        %2601 = vmatpush.msra.mxu0 0.0
        %2602 = vmatpush.msra.mxu0 0.0
        %2603 = vmatpush.msra.mxu0 0.0
        %2604 = vmatpush.msra.mxu0 0.0
        %v2605 = vand.u32 %v1749, 4294901760
        %v2606 = vsub.f32 %v1749, %v2605
        %v2607 = vand.u32 %v2606, 4294901760
        %2608 = vmatpush.msra.mxu0 %v2607
        %v2609 = vand.u32 %v2488, 4294901760
        %2610 = vmatmul.f32.gmra.mxu0 %v2609
        %v2611 = vpop.f32.mrf.mxu0
        %v2612 = vadd.f32 %v2588, %v2611
        %2613 = vdwg.mxu0
        %2614 = vmatpush.msra.mxu0 0.0
        %2615 = vmatpush.msra.mxu0 0.0
        %2616 = vmatpush.msra.mxu0 0.0
        %2617 = vmatpush.msra.mxu0 0.0
        %2618 = vmatpush.msra.mxu0 0.0
        %2619 = vmatpush.msra.mxu0 0.0
        %2620 = vmatpush.msra.mxu0 0.0
        %2621 = vmatpush.msra.mxu0 0.0
        %2622 = vmatpush.msra.mxu0 0.0
        %2623 = vmatpush.msra.mxu0 0.0
        %2624 = vmatpush.msra.mxu0 0.0
        %2625 = vmatpush.msra.mxu0 0.0
        %2626 = vmatpush.msra.mxu0 0.0
        %2627 = vmatpush.msra.mxu0 0.0
        %2628 = vmatpush.msra.mxu0 0.0
        %v2629 = vand.u32 %v1749, 4294901760
        %2630 = vmatpush.msra.mxu0 %v2629
        %v2631 = vand.u32 %v2488, 4294901760
        %2632 = vmatmul.f32.gmra.mxu0 %v2631
        %v2633 = vpop.f32.mrf.mxu0
        %v2634 = vadd.f32 %v2612, %v2633
        %2635 = vdwg.mxu0
        %v2637 = vsel %vm1750, %v2190, 0
        %2639 = vmatpush.msra.mxu0 0.0
        %2640 = vmatpush.msra.mxu0 0.0
        %2641 = vmatpush.msra.mxu0 0.0
        %2642 = vmatpush.msra.mxu0 0.0
        %2643 = vmatpush.msra.mxu0 0.0
        %2644 = vmatpush.msra.mxu0 0.0
        %2645 = vmatpush.msra.mxu0 0.0
        %2646 = vmatpush.msra.mxu0 0.0
        %2647 = vmatpush.msra.mxu0 0.0
        %2648 = vmatpush.msra.mxu0 0.0
        %2649 = vmatpush.msra.mxu0 0.0
        %2650 = vmatpush.msra.mxu0 0.0
        %2651 = vmatpush.msra.mxu0 0.0
        %2652 = vmatpush.msra.mxu0 0.0
        %2653 = vmatpush.msra.mxu0 0.0
        %v2654 = vand.u32 %v1749, 4294901760
        %2655 = vmatpush.msra.mxu0 %v2654
        %v2656 = vand.u32 %v2637, 4294901760
        %v2657 = vsub.f32 %v2637, %v2656
        %v2658 = vand.u32 %v2657, 4294901760
        %v2659 = vsub.f32 %v2657, %v2658
        %v2660 = vand.u32 %v2659, 4294901760
        %2661 = vmatmul.f32.gmra.mxu0 %v2660
        %v2662 = vpop.f32.mrf.mxu0
        %v2663 = vadd.f32 0.0, %v2662
        %2664 = vdwg.mxu0
        %2665 = vmatpush.msra.mxu0 0.0
        %2666 = vmatpush.msra.mxu0 0.0
        %2667 = vmatpush.msra.mxu0 0.0
        %2668 = vmatpush.msra.mxu0 0.0
        %2669 = vmatpush.msra.mxu0 0.0
        %2670 = vmatpush.msra.mxu0 0.0
        %2671 = vmatpush.msra.mxu0 0.0
        %2672 = vmatpush.msra.mxu0 0.0
        %2673 = vmatpush.msra.mxu0 0.0
        %2674 = vmatpush.msra.mxu0 0.0
        %2675 = vmatpush.msra.mxu0 0.0
        %2676 = vmatpush.msra.mxu0 0.0
        %2677 = vmatpush.msra.mxu0 0.0
        %2678 = vmatpush.msra.mxu0 0.0
        %2679 = vmatpush.msra.mxu0 0.0
        %v2680 = vand.u32 %v1749, 4294901760
        %v2681 = vsub.f32 %v1749, %v2680
        %v2682 = vand.u32 %v2681, 4294901760
        %v2683 = vsub.f32 %v2681, %v2682
        %v2684 = vand.u32 %v2683, 4294901760
        %2685 = vmatpush.msra.mxu0 %v2684
        %v2686 = vand.u32 %v2637, 4294901760
        %2687 = vmatmul.f32.gmra.mxu0 %v2686
        %v2688 = vpop.f32.mrf.mxu0
        %v2689 = vadd.f32 %v2663, %v2688
        %2690 = vdwg.mxu0
        %2691 = vmatpush.msra.mxu0 0.0
        %2692 = vmatpush.msra.mxu0 0.0
        %2693 = vmatpush.msra.mxu0 0.0
        %2694 = vmatpush.msra.mxu0 0.0
        %2695 = vmatpush.msra.mxu0 0.0
        %2696 = vmatpush.msra.mxu0 0.0
        %2697 = vmatpush.msra.mxu0 0.0
        %2698 = vmatpush.msra.mxu0 0.0
        %2699 = vmatpush.msra.mxu0 0.0
        %2700 = vmatpush.msra.mxu0 0.0
        %2701 = vmatpush.msra.mxu0 0.0
        %2702 = vmatpush.msra.mxu0 0.0
        %2703 = vmatpush.msra.mxu0 0.0
        %2704 = vmatpush.msra.mxu0 0.0
        %2705 = vmatpush.msra.mxu0 0.0
        %v2706 = vand.u32 %v1749, 4294901760
        %v2707 = vsub.f32 %v1749, %v2706
        %2708 = vmatpush.msra.mxu0 %v2707
        %v2709 = vand.u32 %v2637, 4294901760
        %v2710 = vsub.f32 %v2637, %v2709
        %2711 = vmatmul.f32.gmra.mxu0 %v2710
        %v2712 = vpop.f32.mrf.mxu0
        %v2713 = vadd.f32 %v2689, %v2712
        %2714 = vdwg.mxu0
        %2715 = vmatpush.msra.mxu0 0.0
        %2716 = vmatpush.msra.mxu0 0.0
        %2717 = vmatpush.msra.mxu0 0.0
        %2718 = vmatpush.msra.mxu0 0.0
        %2719 = vmatpush.msra.mxu0 0.0
        %2720 = vmatpush.msra.mxu0 0.0
        %2721 = vmatpush.msra.mxu0 0.0
        %2722 = vmatpush.msra.mxu0 0.0
        %2723 = vmatpush.msra.mxu0 0.0
        %2724 = vmatpush.msra.mxu0 0.0
        %2725 = vmatpush.msra.mxu0 0.0
        %2726 = vmatpush.msra.mxu0 0.0
        %2727 = vmatpush.msra.mxu0 0.0
        %2728 = vmatpush.msra.mxu0 0.0
        %2729 = vmatpush.msra.mxu0 0.0
        %v2730 = vand.u32 %v1749, 4294901760
        %2731 = vmatpush.msra.mxu0 %v2730
        %v2732 = vand.u32 %v2637, 4294901760
        %v2733 = vsub.f32 %v2637, %v2732
        %v2734 = vand.u32 %v2733, 4294901760
        %2735 = vmatmul.f32.gmra.mxu0 %v2734
        %v2736 = vpop.f32.mrf.mxu0
        %v2737 = vadd.f32 %v2713, %v2736
        %2738 = vdwg.mxu0
        %2739 = vmatpush.msra.mxu0 0.0
        %2740 = vmatpush.msra.mxu0 0.0
        %2741 = vmatpush.msra.mxu0 0.0
        %2742 = vmatpush.msra.mxu0 0.0
        %2743 = vmatpush.msra.mxu0 0.0
        %2744 = vmatpush.msra.mxu0 0.0
        %2745 = vmatpush.msra.mxu0 0.0
        %2746 = vmatpush.msra.mxu0 0.0
        %2747 = vmatpush.msra.mxu0 0.0
        %2748 = vmatpush.msra.mxu0 0.0
        %2749 = vmatpush.msra.mxu0 0.0
        %2750 = vmatpush.msra.mxu0 0.0
        %2751 = vmatpush.msra.mxu0 0.0
        %2752 = vmatpush.msra.mxu0 0.0
        %2753 = vmatpush.msra.mxu0 0.0
        %v2754 = vand.u32 %v1749, 4294901760
        %v2755 = vsub.f32 %v1749, %v2754
        %v2756 = vand.u32 %v2755, 4294901760
        %2757 = vmatpush.msra.mxu0 %v2756
        %v2758 = vand.u32 %v2637, 4294901760
        %2759 = vmatmul.f32.gmra.mxu0 %v2758
        %v2760 = vpop.f32.mrf.mxu0
        %v2761 = vadd.f32 %v2737, %v2760
        %2762 = vdwg.mxu0
        %2763 = vmatpush.msra.mxu0 0.0
        %2764 = vmatpush.msra.mxu0 0.0
        %2765 = vmatpush.msra.mxu0 0.0
        %2766 = vmatpush.msra.mxu0 0.0
        %2767 = vmatpush.msra.mxu0 0.0
        %2768 = vmatpush.msra.mxu0 0.0
        %2769 = vmatpush.msra.mxu0 0.0
        %2770 = vmatpush.msra.mxu0 0.0
        %2771 = vmatpush.msra.mxu0 0.0
        %2772 = vmatpush.msra.mxu0 0.0
        %2773 = vmatpush.msra.mxu0 0.0
        %2774 = vmatpush.msra.mxu0 0.0
        %2775 = vmatpush.msra.mxu0 0.0
        %2776 = vmatpush.msra.mxu0 0.0
        %2777 = vmatpush.msra.mxu0 0.0
        %v2778 = vand.u32 %v1749, 4294901760
        %2779 = vmatpush.msra.mxu0 %v2778
        %v2780 = vand.u32 %v2637, 4294901760
        %2781 = vmatmul.f32.gmra.mxu0 %v2780
        %v2782 = vpop.f32.mrf.mxu0
        %v2783 = vadd.f32 %v2761, %v2782
        %2784 = vdwg.mxu0
        %v2786 = vsel %vm1750, %v2336, 0
        %2788 = vmatpush.msra.mxu0 0.0
        %2789 = vmatpush.msra.mxu0 0.0
        %2790 = vmatpush.msra.mxu0 0.0
        %2791 = vmatpush.msra.mxu0 0.0
        %2792 = vmatpush.msra.mxu0 0.0
        %2793 = vmatpush.msra.mxu0 0.0
        %2794 = vmatpush.msra.mxu0 0.0
        %2795 = vmatpush.msra.mxu0 0.0
        %2796 = vmatpush.msra.mxu0 0.0
        %2797 = vmatpush.msra.mxu0 0.0
        %2798 = vmatpush.msra.mxu0 0.0
        %2799 = vmatpush.msra.mxu0 0.0
        %2800 = vmatpush.msra.mxu0 0.0
        %2801 = vmatpush.msra.mxu0 0.0
        %2802 = vmatpush.msra.mxu0 0.0
        %v2803 = vand.u32 %v1749, 4294901760
        %2804 = vmatpush.msra.mxu0 %v2803
        %v2805 = vand.u32 %v2786, 4294901760
        %v2806 = vsub.f32 %v2786, %v2805
        %v2807 = vand.u32 %v2806, 4294901760
        %v2808 = vsub.f32 %v2806, %v2807
        %v2809 = vand.u32 %v2808, 4294901760
        %2810 = vmatmul.f32.gmra.mxu0 %v2809
        %v2811 = vpop.f32.mrf.mxu0
        %v2812 = vadd.f32 0.0, %v2811
        %2813 = vdwg.mxu0
        %2814 = vmatpush.msra.mxu0 0.0
        %2815 = vmatpush.msra.mxu0 0.0
        %2816 = vmatpush.msra.mxu0 0.0
        %2817 = vmatpush.msra.mxu0 0.0
        %2818 = vmatpush.msra.mxu0 0.0
        %2819 = vmatpush.msra.mxu0 0.0
        %2820 = vmatpush.msra.mxu0 0.0
        %2821 = vmatpush.msra.mxu0 0.0
        %2822 = vmatpush.msra.mxu0 0.0
        %2823 = vmatpush.msra.mxu0 0.0
        %2824 = vmatpush.msra.mxu0 0.0
        %2825 = vmatpush.msra.mxu0 0.0
        %2826 = vmatpush.msra.mxu0 0.0
        %2827 = vmatpush.msra.mxu0 0.0
        %2828 = vmatpush.msra.mxu0 0.0
        %v2829 = vand.u32 %v1749, 4294901760
        %v2830 = vsub.f32 %v1749, %v2829
        %v2831 = vand.u32 %v2830, 4294901760
        %v2832 = vsub.f32 %v2830, %v2831
        %v2833 = vand.u32 %v2832, 4294901760
        %2834 = vmatpush.msra.mxu0 %v2833
        %v2835 = vand.u32 %v2786, 4294901760
        %2836 = vmatmul.f32.gmra.mxu0 %v2835
        %v2837 = vpop.f32.mrf.mxu0
        %v2838 = vadd.f32 %v2812, %v2837
        %2839 = vdwg.mxu0
        %2840 = vmatpush.msra.mxu0 0.0
        %2841 = vmatpush.msra.mxu0 0.0
        %2842 = vmatpush.msra.mxu0 0.0
        %2843 = vmatpush.msra.mxu0 0.0
        %2844 = vmatpush.msra.mxu0 0.0
        %2845 = vmatpush.msra.mxu0 0.0
        %2846 = vmatpush.msra.mxu0 0.0
        %2847 = vmatpush.msra.mxu0 0.0
        %2848 = vmatpush.msra.mxu0 0.0
        %2849 = vmatpush.msra.mxu0 0.0
        %2850 = vmatpush.msra.mxu0 0.0
        %2851 = vmatpush.msra.mxu0 0.0
        %2852 = vmatpush.msra.mxu0 0.0
        %2853 = vmatpush.msra.mxu0 0.0
        %2854 = vmatpush.msra.mxu0 0.0
        %v2855 = vand.u32 %v1749, 4294901760
        %v2856 = vsub.f32 %v1749, %v2855
        %2857 = vmatpush.msra.mxu0 %v2856
        %v2858 = vand.u32 %v2786, 4294901760
        %v2859 = vsub.f32 %v2786, %v2858
        %2860 = vmatmul.f32.gmra.mxu0 %v2859
        %v2861 = vpop.f32.mrf.mxu0
        %v2862 = vadd.f32 %v2838, %v2861
        %2863 = vdwg.mxu0
        %2864 = vmatpush.msra.mxu0 0.0
        %2865 = vmatpush.msra.mxu0 0.0
        %2866 = vmatpush.msra.mxu0 0.0
        %2867 = vmatpush.msra.mxu0 0.0
        %2868 = vmatpush.msra.mxu0 0.0
        %2869 = vmatpush.msra.mxu0 0.0
        %2870 = vmatpush.msra.mxu0 0.0
        %2871 = vmatpush.msra.mxu0 0.0
        %2872 = vmatpush.msra.mxu0 0.0
        %2873 = vmatpush.msra.mxu0 0.0
        %2874 = vmatpush.msra.mxu0 0.0
        %2875 = vmatpush.msra.mxu0 0.0
        %2876 = vmatpush.msra.mxu0 0.0
        %2877 = vmatpush.msra.mxu0 0.0
        %2878 = vmatpush.msra.mxu0 0.0
        %v2879 = vand.u32 %v1749, 4294901760
        %2880 = vmatpush.msra.mxu0 %v2879
        %v2881 = vand.u32 %v2786, 4294901760
        %v2882 = vsub.f32 %v2786, %v2881
        %v2883 = vand.u32 %v2882, 4294901760
        %2884 = vmatmul.f32.gmra.mxu0 %v2883
        %v2885 = vpop.f32.mrf.mxu0
        %v2886 = vadd.f32 %v2862, %v2885
        %2887 = vdwg.mxu0
        %2888 = vmatpush.msra.mxu0 0.0
        %2889 = vmatpush.msra.mxu0 0.0
        %2890 = vmatpush.msra.mxu0 0.0
        %2891 = vmatpush.msra.mxu0 0.0
        %2892 = vmatpush.msra.mxu0 0.0
        %2893 = vmatpush.msra.mxu0 0.0
        %2894 = vmatpush.msra.mxu0 0.0
        %2895 = vmatpush.msra.mxu0 0.0
        %2896 = vmatpush.msra.mxu0 0.0
        %2897 = vmatpush.msra.mxu0 0.0
        %2898 = vmatpush.msra.mxu0 0.0
        %2899 = vmatpush.msra.mxu0 0.0
        %2900 = vmatpush.msra.mxu0 0.0
        %2901 = vmatpush.msra.mxu0 0.0
        %2902 = vmatpush.msra.mxu0 0.0
        %v2903 = vand.u32 %v1749, 4294901760
        %v2904 = vsub.f32 %v1749, %v2903
        %v2905 = vand.u32 %v2904, 4294901760
        %2906 = vmatpush.msra.mxu0 %v2905
        %v2907 = vand.u32 %v2786, 4294901760
        %2908 = vmatmul.f32.gmra.mxu0 %v2907
        %v2909 = vpop.f32.mrf.mxu0
        %v2910 = vadd.f32 %v2886, %v2909
        %2911 = vdwg.mxu0
        %2912 = vmatpush.msra.mxu0 0.0
        %2913 = vmatpush.msra.mxu0 0.0
        %2914 = vmatpush.msra.mxu0 0.0
        %2915 = vmatpush.msra.mxu0 0.0
        %2916 = vmatpush.msra.mxu0 0.0
        %2917 = vmatpush.msra.mxu0 0.0
        %2918 = vmatpush.msra.mxu0 0.0
        %2919 = vmatpush.msra.mxu0 0.0
        %2920 = vmatpush.msra.mxu0 0.0
        %2921 = vmatpush.msra.mxu0 0.0
        %2922 = vmatpush.msra.mxu0 0.0
        %2923 = vmatpush.msra.mxu0 0.0
        %2924 = vmatpush.msra.mxu0 0.0
        %2925 = vmatpush.msra.mxu0 0.0
        %2926 = vmatpush.msra.mxu0 0.0
        %v2927 = vand.u32 %v1749, 4294901760
        %2928 = vmatpush.msra.mxu0 %v2927
        %v2929 = vand.u32 %v2786, 4294901760
        %2930 = vmatmul.f32.gmra.mxu0 %v2929
        %v2931 = vpop.f32.mrf.mxu0
        %v2932 = vadd.f32 %v2910, %v2931
        %2933 = vdwg.mxu0
        %vm2934 = vcmask 27648
        %2935 = vst.msk [vmem:[%s267] sm:$0xf] %vm2934, %v2485
        %2936 = vst.msk [vmem:[%s267 + $0x4] sm:$0xf] %vm2934, %v2634
        %2937 = vst.msk [vmem:[%s267 + $0x8] sm:$0xf] %vm2934, %v2783
        %2938 = vst.msk [vmem:[%s267 + $0xc] sm:$0xf] %vm2934, %v2932
        %s2939 = smul.u32 4, %s18
        %p2940 = scmp.lt.s32.totalorder %s2939, 7
        %s2941 = scalar_select %p2940, %s2939, 7
        %s2942 = smul.addr %s2941, 4
        %s2943 = scalar_lea.vmem %s6, %s2942
        // Predicated region
        $region49: #{_lambda_.2} parent=43 // pred_check
          %p2944 = pneg %p167
        $region50: #{_lambda_.2} parent=43 // pred_check_branch
          %2946 = sbr.rel (%p2944) target = $region52
        $region51: #{_lambda_.2} parent=43 // pred_region
          %s2947 = smul.u32 4, %s18
        $region52: #{_lambda_.2} parent=43 // pred_fallthru
          _
      $region44: #{_lambda_.2} parent=5 // pred_fallthru
        _
      %p2948 = scmp.le.s32.totalorder 2, %s13
      // Predicated region
      $region53: #{_lambda_.2} parent=5 // pred_check
        %p2949 = pneg %p2948
      $region54: #{_lambda_.2} parent=5 // pred_check_branch
        %2951 = sbr.rel (%p2949) target = $region56
      $region55: #{_lambda_.2} parent=5 // pred_region
        %s2952 = ssub.s32 %s13, 2
        // Predicated region
        $region57: #{_lambda_.2} parent=55 // pred_check
          %p2953 = pneg %p173
        $region58: #{_lambda_.2} parent=55 // pred_check_branch
          %2955 = sbr.rel (%p2953) target = $region60
        $region59: #{_lambda_.2} parent=55 // pred_region
          %s2956 = smul.u32 4, %s19
          %p2957 = scmp.lt.s32.totalorder %s2956, 7
          %s2958 = scalar_select %p2957, %s2956, 7
          %s2959 = smul.addr %s2958, 4
          %s2960 = scalar_lea.vmem %s6, %s2959
        $region60: #{_lambda_.2} parent=55 // pred_fallthru
          _
      $region56: #{_lambda_.2} parent=5 // pred_fallthru
        _
    $region6: #{_lambda_.2} parent=1 // loop_footer
      %s17 = sadd.s32 1, %s13
    $region7: #{_lambda_.2} parent=1 // loop_footer_branch
      %12 = sbr.rel target = $region3
    $region8: #{_lambda_.2} parent=1 // loop_exit
      _
    %2961 = vsyncpa [#allocation3], 1
    %s2962 = scalar_lea.sflag [#allocation3], 1
    %2963 = vsyncpa %s2962, 1

// kernel: _lambda_.3
$region0: #{_lambda_.3}
  #allocation0 [shape = 'u32[]', space=smem, size = 0x4, offset = 0x4, fixed_abs, tag = 'smem constant byte address 0x4 - core index']
  #allocation1 [shape = 'u32[72,128]{1,0:T(1,128)}', space=vmem, size = 0x9000, scoped, tag = 'internal scratch']
  %s0 = inlined_call_operand.vmem [shape: f32[8,10], index: 0, kind: input, shape index: {}]
  %s1 = inlined_call_operand.vmem [shape: f32[10,3], index: 1, kind: input, shape index: {}]
  %s2 = inlined_call_operand.vmem [shape: f32[1,3], index: 2, kind: input, shape index: {}]
  %s3 = inlined_call_operand.vmem [shape: f32[8,3], index: 3, kind: output, shape index: {}]
  %s4 = sld [smem:[#allocation0]]
  $region22: #{_lambda_.3} parent=0
    _
  %s6 = ssub.s32 1, %s4
  %s7 = scalar_select 0, %s6, %s4
  // Predicated region
  $region2: #{_lambda_.3} parent=0 // pred_check
    _
  $region3: #{_lambda_.3} parent=0 // pred_check_branch
    %9 = sbr.rel (0) target = $region5
  $region4: #{_lambda_.3} parent=0 // pred_region
    _
  $region5: #{_lambda_.3} parent=0 // pred_fallthru
    _
  // Predicated region
  $region6: #{_lambda_.3} parent=0 // pred_check
    _
  $region7: #{_lambda_.3} parent=0 // pred_check_branch
    %11 = sbr.rel (0) target = $region9
  $region8: #{_lambda_.3} parent=0 // pred_region
    _
  $region9: #{_lambda_.3} parent=0 // pred_fallthru
    _
  // Predicated region
  $region10: #{_lambda_.3} parent=0 // pred_check
    _
  $region11: #{_lambda_.3} parent=0 // pred_check_branch
    %13 = sbr.rel (0) target = $region13
  $region12: #{_lambda_.3} parent=0 // pred_region
    _
  $region13: #{_lambda_.3} parent=0 // pred_fallthru
    _
  %v14 = vld [vmem:[%s0] sm:$0xff]
  %v15 = vld [vmem:[%s1] sm:$0xff]
  %v16 = vld [vmem:[%s1 + $0x8] sm:$0x3]
  %v17 = vld [vmem:[%s2] sm:$0x1]
  %v19 = vperm.slane %v17, 0
  %vm21 = vcmask 80896
  %v23 = vsel %vm21, %v14, 0
  %vm25 = vcmask 1041408
  %v27 = vsel %vm25, %v16, 0
  %29 = vmatpush.msra.mxu0 0.0
  %30 = vmatpush.msra.mxu0 0.0
  %31 = vmatpush.msra.mxu0 0.0
  %32 = vmatpush.msra.mxu0 0.0
  %33 = vmatpush.msra.mxu0 0.0
  %34 = vmatpush.msra.mxu0 0.0
  %35 = vmatpush.msra.mxu0 0.0
  %36 = vmatpush.msra.mxu0 0.0
  %37 = vmatpush.msra.mxu0 0.0
  %38 = vmatpush.msra.mxu0 0.0
  %39 = vmatpush.msra.mxu0 0.0
  %40 = vmatpush.msra.mxu0 0.0
  %41 = vmatpush.msra.mxu0 0.0
  %42 = vmatpush.msra.mxu0 0.0
  %43 = vmatpush.msra.mxu0 %v27
  %44 = vmatpush.msra.mxu0 %v15
  %45 = vmatmul.f32.gmra.mxu0 %v23
  %v46 = vpop.f32.mrf.mxu0
  %v47 = vadd.f32 %v19, %v46
  %48 = vdwg.mxu0
  %vm49 = vcmask 23552
  %50 = vst.msk [vmem:[%s3] sm:$0xff] %vm49, %v47
  // Predicated region
  $region14: #{_lambda_.3} parent=0 // pred_check
    _
  $region15: #{_lambda_.3} parent=0 // pred_check_branch
    %52 = sbr.rel (0) target = $region17
  $region16: #{_lambda_.3} parent=0 // pred_region
    _
  $region17: #{_lambda_.3} parent=0 // pred_fallthru
    _
  // Predicated region
  $region18: #{_lambda_.3} parent=0 // pred_check
    _
  $region19: #{_lambda_.3} parent=0 // pred_check_branch
    %54 = sbr.rel (0) target = $region21
  $region20: #{_lambda_.3} parent=0 // pred_region
    _
  $region21: #{_lambda_.3} parent=0 // pred_fallthru
    _

</llo_original>
